<compile_context>
chip_gen: v7x
topology: tpu7x:2x2x1
jax: 0.10.0
libtpu: 0.0.40
codegen_flags: <defaults>
</compile_context>

<pallas_src>
import functools

import numpy as np
import jax
import jax.numpy as jnp
from jax.experimental import pallas as pl
from jax.experimental.pallas import tpu as pltpu

LEAKY_SLOPE = 0.01  # PyTorch LeakyReLU default negative_slope


# ---------------------------------------------------------------------------
# Pallas kernels
# ---------------------------------------------------------------------------
def _conv_pool_kernel(a_ref, w_ref, b_ref, o_ref):
    """Fused Conv3d(im2col matmul) + bias + LeakyReLU + MaxPool3d for one sample.

    a_ref: (T, P, K)  T = pool_k^3 taps of each pooling window,
                      P = Dp*Hp*Wp pooled positions, K = padded patch length
    w_ref: (K, Cout)
    b_ref: (1, Cout)
    o_ref: (P, Cout)  pooled activations in (dp, hp, wp, c) order
    """
    w = w_ref[...]
    m = jnp.dot(a_ref[0], w, preferred_element_type=jnp.float32)
    for t in range(1, a_ref.shape[0]):           # static unroll over the 8 taps
        m = jnp.maximum(m, jnp.dot(a_ref[t], w, preferred_element_type=jnp.float32))
    # bias-add and LeakyReLU are monotone -> commute with the max; apply once.
    y = m + b_ref[...]
    o_ref[...] = jnp.where(y >= 0.0, y, LEAKY_SLOPE * y)


def _fc_head_kernel(x_ref, w1_ref, b1_ref, w2_ref, b2_ref, o_ref):
    """Fused FC1 + LeakyReLU + FC2 + LeakyReLU + Softmax(last dim)."""
    h = jnp.dot(x_ref[...], w1_ref[...], preferred_element_type=jnp.float32) + b1_ref[...]
    h = jnp.where(h >= 0.0, h, LEAKY_SLOPE * h)
    z = jnp.dot(h, w2_ref[...], preferred_element_type=jnp.float32) + b2_ref[...]
    z = jnp.where(z >= 0.0, z, LEAKY_SLOPE * z)
    z = z - jnp.max(z, axis=-1, keepdims=True)
    e = jnp.exp(z)
    o_ref[...] = e / jnp.sum(e, axis=-1, keepdims=True)


# ---------------------------------------------------------------------------
# pallas_call wrappers
# ---------------------------------------------------------------------------
def conv3d_lrelu_maxpool(patches, w_mat, conv_b, rows_per_sample):
    """patches: (T, N*P, Kp); w_mat: (Kp, Cout); conv_b: (Cout,).  -> (N*P, Cout)."""
    T, NP, Kp = patches.shape
    Cout = w_mat.shape[1]
    P = rows_per_sample
    assert NP % P == 0 and P % 8 == 0
    N = NP // P
    return pl.pallas_call(
        _conv_pool_kernel,
        out_shape=jax.ShapeDtypeStruct((NP, Cout), jnp.float32),
        grid_spec=pltpu.PrefetchScalarGridSpec(
            num_scalar_prefetch=0,
            grid=(N,),                                     # 2 parallel steps (v7x: both TCs)
            in_specs=[
                pl.BlockSpec((T, P, Kp), lambda n: (0, n, 0)),
                pl.BlockSpec((Kp, Cout), lambda n: (0, 0)),
                pl.BlockSpec((1, Cout), lambda n: (0, 0)),
            ],
            out_specs=pl.BlockSpec((P, Cout), lambda n: (n, 0)),
        ),
        compiler_params=pltpu.CompilerParams(dimension_semantics=("parallel",)),
    )(patches, w_mat, conv_b.reshape(1, Cout))


def fc_head(x, w1, b1, w2, b2):
    """softmax(lrelu(lrelu(x @ w1 + b1) @ w2 + b2)) in one pallas_call."""
    M, K1 = x.shape
    H = w1.shape[1]
    C = w2.shape[1]
    return pl.pallas_call(
        _fc_head_kernel,
        out_shape=jax.ShapeDtypeStruct((M, C), jnp.float32),
        grid_spec=pltpu.PrefetchScalarGridSpec(
            num_scalar_prefetch=0,
            grid=(1,),
            in_specs=[
                pl.BlockSpec((M, K1), lambda i: (0, 0)),
                pl.BlockSpec((K1, H), lambda i: (0, 0)),
                pl.BlockSpec((1, H), lambda i: (0, 0)),
                pl.BlockSpec((H, C), lambda i: (0, 0)),
                pl.BlockSpec((1, C), lambda i: (0, 0)),
            ],
            out_specs=pl.BlockSpec((M, C), lambda i: (0, 0)),
        ),
    )(x, w1, b1.reshape(1, H), w2, b2.reshape(1, C))


# ---------------------------------------------------------------------------
# Glue: pooling-window-grouped im2col (no big runtime transposes)
# ---------------------------------------------------------------------------
def _pooled_conv_patches(x, k, pad, pool_k, pool_dims, k_padded):
    """x: NCDHW -> (pool_k^3, N*Dp*Hp*Wp, k_padded) patches.

    Axis 0 is the tap (dz,hy,wx) inside each pooling window, axis 1 the pooled
    window index (n,dp,hp,wp), axis 2 the conv patch ordered (kz,ky,kx,c) and
    zero-padded to k_padded lanes.
    """
    N, C, D, H, W = x.shape
    Dp, Hp, Wp = pool_dims
    xp = jnp.pad(x, ((0, 0), (0, 0), (pad, pad), (pad, pad), (pad, pad)))
    xpt = xp.transpose(0, 2, 3, 4, 1)          # NDHWC once (~116 KB, cheap)
    taps = []
    for dz in range(pool_k):
        for hy in range(pool_k):
            for wx in range(pool_k):
                cols = []
                for kz in range(k):
                    for ky in range(k):
                        for kx in range(k):
                            cols.append(xpt[:,
                                            dz + kz: dz + kz + pool_k * Dp: pool_k,
                                            hy + ky: hy + ky + pool_k * Hp: pool_k,
                                            wx + kx: wx + kx + pool_k * Wp: pool_k,
                                            :])                      # (N,Dp,Hp,Wp,C)
                tap = jnp.stack(cols, axis=-2)                       # (N,Dp,Hp,Wp,k^3,C)
                taps.append(tap.reshape(N * Dp * Hp * Wp, k * k * k * C))
    patches = jnp.stack(taps, axis=0)                                # (T, N*P, K)
    kdim = patches.shape[-1]
    if k_padded > kdim:
        patches = jnp.pad(patches, ((0, 0), (0, 0), (0, k_padded - kdim)))
    return patches


def prepare_params(params, frame_shape):
    """One-time (offline) conversion of PyTorch-convention params to kernel layouts."""
    N, Cin, D, H, W = frame_shape
    (cw, cb, stride, pad, pool_k) = params["conv"][0]
    assert stride == 1, "CNN3D config uses conv stride 1"
    Cout, Cin_w, k, _, _ = cw.shape
    assert Cin_w == Cin
    Do, Ho, Wo = D + 2 * pad - k + 1, H + 2 * pad - k + 1, W + 2 * pad - k + 1
    assert Do % pool_k == 0 and Ho % pool_k == 0 and Wo % pool_k == 0
    Dp, Hp, Wp = Do // pool_k, Ho // pool_k, Wo // pool_k

    # Conv weight -> (K, Cout), K ordered (kz, ky, kx, cin), zero-padded to 128.
    kdim = k * k * k * Cin
    Kp = ((kdim + 127) // 128) * 128
    w_mat = jnp.asarray(cw).transpose(2, 3, 4, 1, 0).reshape(kdim, Cout)
    w_mat = jnp.pad(w_mat, ((0, Kp - kdim), (0, 0)))

    # FC1 rows: PyTorch flattens pooled activations as (c, dp, hp, wp); the conv
    # kernel emits (dp, hp, wp, c).  Permute the weight rows once here so the
    # runtime path has no NCDHW transpose.
    (w1, b1), (w2, b2) = params["fc"]
    hidden = w1.shape[1]
    w1p = (jnp.asarray(w1).reshape(Cout, Dp, Hp, Wp, hidden)
           .transpose(1, 2, 3, 0, 4).reshape(Cout * Dp * Hp * Wp, hidden))

    arrays = (w_mat, jnp.asarray(cb), w1p, jnp.asarray(b1),
              jnp.asarray(w2), jnp.asarray(b2))
    static = dict(k=int(k), pad=int(pad), pool_k=int(pool_k),
                  pool_dims=(int(Dp), int(Hp), int(Wp)))
    return arrays, static


@functools.partial(jax.jit, static_argnames=("k", "pad", "pool_k", "pool_dims"))
def cnn3d_forward(frames, w_mat, conv_b, w1, b1, w2, b2, *, k, pad, pool_k, pool_dims):
    N = frames.shape[0]
    Dp, Hp, Wp = pool_dims
    P = Dp * Hp * Wp
    patches = _pooled_conv_patches(frames, k, pad, pool_k, pool_dims, w_mat.shape[0])
    pooled = conv3d_lrelu_maxpool(patches, w_mat, conv_b, P)   # (N*P, Cout)
    x = pooled.reshape(N, P * w_mat.shape[1])                  # free row-major reshape
    return fc_head(x, w1, b1, w2, b2)                          # (N, num_classes)


# ---------------------------------------------------------------------------
# Pure-JAX reference (PyTorch semantics, NCDHW) for verification only
# ---------------------------------------------------------------------------
def reference_forward(frames, params):
    hi = jax.lax.Precision.HIGHEST
    x = frames
    for (w, b, stride, pad, pool_k) in params["conv"]:
        y = jax.lax.conv_general_dilated(
            x, w, window_strides=(stride,) * 3, padding=[(pad, pad)] * 3,
            dimension_numbers=("NCDHW", "OIDHW", "NCDHW"), precision=hi)
        y = y + b[None, :, None, None, None]
        y = jnp.where(y >= 0, y, LEAKY_SLOPE * y)
        x = jax.lax.reduce_window(y, -jnp.inf, jax.lax.max,
                                  (1, 1, pool_k, pool_k, pool_k),
                                  (1, 1, pool_k, pool_k, pool_k), "VALID")
    x = x.reshape(x.shape[0], -1)
    for (w, b) in params["fc"]:
        x = jnp.dot(x, w, precision=hi) + b
        x = jnp.where(x >= 0, x, LEAKY_SLOPE * x)
    return jax.nn.softmax(x, axis=-1)


# ---------------------------------------------------------------------------
if __name__ == "__main__":
    key = jax.random.PRNGKey(0)
    kx, kcw, kcb, k1w, k1b, k2w, k2b = jax.random.split(key, 7)

    N, Cin, D, H, W = 2, 3, 8, 20, 20
    Cout, ksz, num_classes, hidden = 16, 3, 5, 64

    frames = jax.random.normal(kx, (N, Cin, D, H, W), jnp.float32)

    params = {
        "conv": [(
            jax.random.normal(kcw, (Cout, Cin, ksz, ksz, ksz), jnp.float32) * 0.1,
            jax.random.normal(kcb, (Cout,), jnp.float32) * 0.1,
            1,   # conv stride
            1,   # conv padding
            2,   # pool kernel
        )],
        "fc": [
            (jax.random.normal(k1w, (6400, hidden), jnp.float32) * 0.02,
             jax.random.normal(k1b, (hidden,), jnp.float32) * 0.02),
            (jax.random.normal(k2w, (hidden, num_classes), jnp.float32) * 0.1,
             jax.random.normal(k2b, (num_classes,), jnp.float32) * 0.1),
        ],
    }

    arrays, static = prepare_params(params, frames.shape)
    out = cnn3d_forward(frames, *arrays, **static)
    out = jax.block_until_ready(out)

    assert out.shape == (N, num_classes)
    assert bool(jnp.all(jnp.isfinite(out)))
    np.testing.assert_allclose(np.asarray(jnp.sum(out, axis=-1)),
                               np.ones(N, np.float32), rtol=1e-5, atol=1e-5)

    ref = jax.block_until_ready(reference_forward(frames, params))
    np.testing.assert_allclose(np.asarray(out), np.asarray(ref),
                               rtol=2e-2, atol=5e-3)

    print("KERNEL_OK")
</pallas_src>

<mosaic_0001>
module attributes {stable_mosaic.version = 11 : i64} {
  func.func @_conv_pool_kernel(%arg0: i32, %arg1: memref<8x400x128xf32, #tpu.memory_space<vmem>>, %arg2: memref<128x16xf32, #tpu.memory_space<vmem>>, %arg3: memref<1x16xf32, #tpu.memory_space<vmem>>, %arg4: memref<400x16xf32, #tpu.memory_space<vmem>>) attributes {dimension_semantics = [#tpu.dimension_semantics<parallel>], iteration_bounds = array<i64: 2>, scalar_prefetch = 0 : i64, scratch_operands = 0 : i64, tpu.core_type = #tpu.core_type<tc>, window_params = [{transform_indices = @transform_0, window_bounds = array<i64: 8, 400, 128>}, {pipeline_mode = #tpu.pipeline_mode<synchronous>, transform_indices = @transform_1, window_bounds = array<i64: 128, 16>}, {pipeline_mode = #tpu.pipeline_mode<synchronous>, transform_indices = @transform_2, window_bounds = array<i64: 1, 16>}, {transform_indices = @transform_3, window_bounds = array<i64: 400, 16>}]} {
    %c0 = arith.constant 0 : index
    %c0_0 = arith.constant 0 : index
    %0 = vector.load %arg2[%c0, %c0_0] : memref<128x16xf32, #tpu.memory_space<vmem>>, vector<128x16xf32>
    %c0_1 = arith.constant 0 : index
    %c0_2 = arith.constant 0 : index
    %c0_3 = arith.constant 0 : index
    %1 = vector.load %arg1[%c0_1, %c0_2, %c0_3] : memref<8x400x128xf32, #tpu.memory_space<vmem>>, vector<1x400x128xf32>
    %2 = vector.shape_cast %1 : vector<1x400x128xf32> to vector<400x128xf32>
    %cst = arith.constant dense<0.000000e+00> : vector<400x16xf32>
    %3 = tpu.matmul %2, %0, %cst {dimension_numbers = #tpu.dot_dimension_numbers<[1], [0], [0], [1], [0, 0, 1, 1], [], []>} : vector<400x128xf32>, vector<128x16xf32>, vector<400x16xf32> -> vector<400x16xf32>
    %c1 = arith.constant 1 : index
    %c0_4 = arith.constant 0 : index
    %c0_5 = arith.constant 0 : index
    %4 = vector.load %arg1[%c1, %c0_4, %c0_5] : memref<8x400x128xf32, #tpu.memory_space<vmem>>, vector<1x400x128xf32>
    %5 = vector.shape_cast %4 : vector<1x400x128xf32> to vector<400x128xf32>
    %cst_6 = arith.constant dense<0.000000e+00> : vector<400x16xf32>
    %6 = tpu.matmul %5, %0, %cst_6 {dimension_numbers = #tpu.dot_dimension_numbers<[1], [0], [0], [1], [0, 0, 1, 1], [], []>} : vector<400x128xf32>, vector<128x16xf32>, vector<400x16xf32> -> vector<400x16xf32>
    %7 = arith.maximumf %3, %6 : vector<400x16xf32>
    %c2 = arith.constant 2 : index
    %c0_7 = arith.constant 0 : index
    %c0_8 = arith.constant 0 : index
    %8 = vector.load %arg1[%c2, %c0_7, %c0_8] : memref<8x400x128xf32, #tpu.memory_space<vmem>>, vector<1x400x128xf32>
    %9 = vector.shape_cast %8 : vector<1x400x128xf32> to vector<400x128xf32>
    %cst_9 = arith.constant dense<0.000000e+00> : vector<400x16xf32>
    %10 = tpu.matmul %9, %0, %cst_9 {dimension_numbers = #tpu.dot_dimension_numbers<[1], [0], [0], [1], [0, 0, 1, 1], [], []>} : vector<400x128xf32>, vector<128x16xf32>, vector<400x16xf32> -> vector<400x16xf32>
    %11 = arith.maximumf %7, %10 : vector<400x16xf32>
    %c3 = arith.constant 3 : index
    %c0_10 = arith.constant 0 : index
    %c0_11 = arith.constant 0 : index
    %12 = vector.load %arg1[%c3, %c0_10, %c0_11] : memref<8x400x128xf32, #tpu.memory_space<vmem>>, vector<1x400x128xf32>
    %13 = vector.shape_cast %12 : vector<1x400x128xf32> to vector<400x128xf32>
    %cst_12 = arith.constant dense<0.000000e+00> : vector<400x16xf32>
    %14 = tpu.matmul %13, %0, %cst_12 {dimension_numbers = #tpu.dot_dimension_numbers<[1], [0], [0], [1], [0, 0, 1, 1], [], []>} : vector<400x128xf32>, vector<128x16xf32>, vector<400x16xf32> -> vector<400x16xf32>
    %15 = arith.maximumf %11, %14 : vector<400x16xf32>
    %c4 = arith.constant 4 : index
    %c0_13 = arith.constant 0 : index
    %c0_14 = arith.constant 0 : index
    %16 = vector.load %arg1[%c4, %c0_13, %c0_14] : memref<8x400x128xf32, #tpu.memory_space<vmem>>, vector<1x400x128xf32>
    %17 = vector.shape_cast %16 : vector<1x400x128xf32> to vector<400x128xf32>
    %cst_15 = arith.constant dense<0.000000e+00> : vector<400x16xf32>
    %18 = tpu.matmul %17, %0, %cst_15 {dimension_numbers = #tpu.dot_dimension_numbers<[1], [0], [0], [1], [0, 0, 1, 1], [], []>} : vector<400x128xf32>, vector<128x16xf32>, vector<400x16xf32> -> vector<400x16xf32>
    %19 = arith.maximumf %15, %18 : vector<400x16xf32>
    %c5 = arith.constant 5 : index
    %c0_16 = arith.constant 0 : index
    %c0_17 = arith.constant 0 : index
    %20 = vector.load %arg1[%c5, %c0_16, %c0_17] : memref<8x400x128xf32, #tpu.memory_space<vmem>>, vector<1x400x128xf32>
    %21 = vector.shape_cast %20 : vector<1x400x128xf32> to vector<400x128xf32>
    %cst_18 = arith.constant dense<0.000000e+00> : vector<400x16xf32>
    %22 = tpu.matmul %21, %0, %cst_18 {dimension_numbers = #tpu.dot_dimension_numbers<[1], [0], [0], [1], [0, 0, 1, 1], [], []>} : vector<400x128xf32>, vector<128x16xf32>, vector<400x16xf32> -> vector<400x16xf32>
    %23 = arith.maximumf %19, %22 : vector<400x16xf32>
    %c6 = arith.constant 6 : index
    %c0_19 = arith.constant 0 : index
    %c0_20 = arith.constant 0 : index
    %24 = vector.load %arg1[%c6, %c0_19, %c0_20] : memref<8x400x128xf32, #tpu.memory_space<vmem>>, vector<1x400x128xf32>
    %25 = vector.shape_cast %24 : vector<1x400x128xf32> to vector<400x128xf32>
    %cst_21 = arith.constant dense<0.000000e+00> : vector<400x16xf32>
    %26 = tpu.matmul %25, %0, %cst_21 {dimension_numbers = #tpu.dot_dimension_numbers<[1], [0], [0], [1], [0, 0, 1, 1], [], []>} : vector<400x128xf32>, vector<128x16xf32>, vector<400x16xf32> -> vector<400x16xf32>
    %27 = arith.maximumf %23, %26 : vector<400x16xf32>
    %c7 = arith.constant 7 : index
    %c0_22 = arith.constant 0 : index
    %c0_23 = arith.constant 0 : index
    %28 = vector.load %arg1[%c7, %c0_22, %c0_23] : memref<8x400x128xf32, #tpu.memory_space<vmem>>, vector<1x400x128xf32>
    %29 = vector.shape_cast %28 : vector<1x400x128xf32> to vector<400x128xf32>
    %cst_24 = arith.constant dense<0.000000e+00> : vector<400x16xf32>
    %30 = tpu.matmul %29, %0, %cst_24 {dimension_numbers = #tpu.dot_dimension_numbers<[1], [0], [0], [1], [0, 0, 1, 1], [], []>} : vector<400x128xf32>, vector<128x16xf32>, vector<400x16xf32> -> vector<400x16xf32>
    %31 = arith.maximumf %27, %30 : vector<400x16xf32>
    %c0_25 = arith.constant 0 : index
    %c0_26 = arith.constant 0 : index
    %32 = vector.load %arg3[%c0_25, %c0_26] : memref<1x16xf32, #tpu.memory_space<vmem>>, vector<1x16xf32>
    %33 = vector.broadcast %32 : vector<1x16xf32> to vector<400x16xf32>
    %34 = arith.addf %31, %33 : vector<400x16xf32>
    %cst_27 = arith.constant 0.000000e+00 : f32
    %35 = vector.broadcast %cst_27 : f32 to vector<400x16xf32>
    %36 = arith.cmpf oge, %34, %35 : vector<400x16xf32>
    %cst_28 = arith.constant 0.00999999977 : f32
    %37 = vector.broadcast %cst_28 : f32 to vector<400x16xf32>
    %38 = arith.mulf %37, %34 : vector<400x16xf32>
    %39 = arith.select %36, %34, %38 : vector<400x16xi1>, vector<400x16xf32>
    %c0_29 = arith.constant 0 : index
    %c0_30 = arith.constant 0 : index
    %40 = vector.load %arg4[%c0_29, %c0_30] : memref<400x16xf32, #tpu.memory_space<vmem>>, vector<400x16xf32>
    tpu.vector_store %arg4[%c0_29, %c0_30], %39 {strides = array<i32>} : memref<400x16xf32, #tpu.memory_space<vmem>>, vector<400x16xf32>,
    return
  }
  func.func @transform_0(%arg0: i32) -> (i32, i32, i32) {
    %c0_i32 = arith.constant 0 : i32
    %c0_i32_0 = arith.constant 0 : i32
    %c0_i32_1 = arith.constant 0 : i32
    return %c0_i32, %arg0, %c0_i32_0 : i32, i32, i32
  }
  func.func @transform_1(%arg0: i32) -> (i32, i32) {
    %c0_i32 = arith.constant 0 : i32
    %c0_i32_0 = arith.constant 0 : i32
    %c0_i32_1 = arith.constant 0 : i32
    return %c0_i32, %c0_i32_0 : i32, i32
  }
  func.func @transform_2(%arg0: i32) -> (i32, i32) {
    %c0_i32 = arith.constant 0 : i32
    %c0_i32_0 = arith.constant 0 : i32
    %c0_i32_1 = arith.constant 0 : i32
    return %c0_i32, %c0_i32_0 : i32, i32
  }
  func.func @transform_3(%arg0: i32) -> (i32, i32) {
    %c0_i32 = arith.constant 0 : i32
    %c0_i32_0 = arith.constant 0 : i32
    return %arg0, %c0_i32 : i32, i32
  }
}

module attributes {stable_mosaic.version = 11 : i64} {
  func.func @_fc_head_kernel(%arg0: i32, %arg1: memref<2x6400xf32, #tpu.memory_space<vmem>>, %arg2: memref<6400x64xf32, #tpu.memory_space<vmem>>, %arg3: memref<1x64xf32, #tpu.memory_space<vmem>>, %arg4: memref<64x5xf32, #tpu.memory_space<vmem>>, %arg5: memref<1x5xf32, #tpu.memory_space<vmem>>, %arg6: memref<2x5xf32, #tpu.memory_space<vmem>>) attributes {dimension_semantics = [#tpu.dimension_semantics<arbitrary>], iteration_bounds = array<i64: 1>, scalar_prefetch = 0 : i64, scratch_operands = 0 : i64, tpu.core_type = #tpu.core_type<tc>, window_params = [{pipeline_mode = #tpu.pipeline_mode<synchronous>, transform_indices = @transform_0, window_bounds = array<i64: 2, 6400>}, {pipeline_mode = #tpu.pipeline_mode<synchronous>, transform_indices = @transform_1, window_bounds = array<i64: 6400, 64>}, {pipeline_mode = #tpu.pipeline_mode<synchronous>, transform_indices = @transform_2, window_bounds = array<i64: 1, 64>}, {pipeline_mode = #tpu.pipeline_mode<synchronous>, transform_indices = @transform_3, window_bounds = array<i64: 64, 5>}, {pipeline_mode = #tpu.pipeline_mode<synchronous>, transform_indices = @transform_4, window_bounds = array<i64: 1, 5>}, {pipeline_mode = #tpu.pipeline_mode<synchronous>, transform_indices = @transform_5, window_bounds = array<i64: 2, 5>}]} {
    %c0 = arith.constant 0 : index
    %c0_0 = arith.constant 0 : index
    %0 = vector.load %arg1[%c0, %c0_0] : memref<2x6400xf32, #tpu.memory_space<vmem>>, vector<2x6400xf32>
    %c0_1 = arith.constant 0 : index
    %c0_2 = arith.constant 0 : index
    %1 = vector.load %arg2[%c0_1, %c0_2] : memref<6400x64xf32, #tpu.memory_space<vmem>>, vector<6400x64xf32>
    %cst = arith.constant dense<0.000000e+00> : vector<2x64xf32>
    %2 = tpu.matmul %0, %1, %cst {dimension_numbers = #tpu.dot_dimension_numbers<[1], [0], [0], [1], [0, 0, 1, 1], [], []>} : vector<2x6400xf32>, vector<6400x64xf32>, vector<2x64xf32> -> vector<2x64xf32>
    %c0_3 = arith.constant 0 : index
    %c0_4 = arith.constant 0 : index
    %3 = vector.load %arg3[%c0_3, %c0_4] : memref<1x64xf32, #tpu.memory_space<vmem>>, vector<1x64xf32>
    %4 = vector.broadcast %3 : vector<1x64xf32> to vector<2x64xf32>
    %5 = arith.addf %2, %4 : vector<2x64xf32>
    %cst_5 = arith.constant 0.000000e+00 : f32
    %6 = vector.broadcast %cst_5 : f32 to vector<2x64xf32>
    %7 = arith.cmpf oge, %5, %6 : vector<2x64xf32>
    %cst_6 = arith.constant 0.00999999977 : f32
    %8 = vector.broadcast %cst_6 : f32 to vector<2x64xf32>
    %9 = arith.mulf %8, %5 : vector<2x64xf32>
    %10 = arith.select %7, %5, %9 : vector<2x64xi1>, vector<2x64xf32>
    %c0_7 = arith.constant 0 : index
    %c0_8 = arith.constant 0 : index
    %11 = vector.load %arg4[%c0_7, %c0_8] : memref<64x5xf32, #tpu.memory_space<vmem>>, vector<64x5xf32>
    %cst_9 = arith.constant dense<0.000000e+00> : vector<2x5xf32>
    %12 = tpu.matmul %10, %11, %cst_9 {dimension_numbers = #tpu.dot_dimension_numbers<[1], [0], [0], [1], [0, 0, 1, 1], [], []>} : vector<2x64xf32>, vector<64x5xf32>, vector<2x5xf32> -> vector<2x5xf32>
    %c0_10 = arith.constant 0 : index
    %c0_11 = arith.constant 0 : index
    %13 = vector.load %arg5[%c0_10, %c0_11] : memref<1x5xf32, #tpu.memory_space<vmem>>, vector<1x5xf32>
    %14 = vector.broadcast %13 : vector<1x5xf32> to vector<2x5xf32>
    %15 = arith.addf %12, %14 : vector<2x5xf32>
    %cst_12 = arith.constant 0.000000e+00 : f32
    %16 = vector.broadcast %cst_12 : f32 to vector<2x5xf32>
    %17 = arith.cmpf oge, %15, %16 : vector<2x5xf32>
    %cst_13 = arith.constant 0.00999999977 : f32
    %18 = vector.broadcast %cst_13 : f32 to vector<2x5xf32>
    %19 = arith.mulf %18, %15 : vector<2x5xf32>
    %20 = arith.select %17, %15, %19 : vector<2x5xi1>, vector<2x5xf32>
    %cst_14 = arith.constant dense<0xFF800000> : vector<2xf32>
    %21 = vector.multi_reduction <maximumf>, %20, %cst_14 [1] : vector<2x5xf32> to vector<2xf32>
    %22 = vector.shape_cast %21 : vector<2xf32> to vector<2x1xf32>
    %23 = vector.broadcast %22 : vector<2x1xf32> to vector<2x5xf32>
    %24 = arith.subf %20, %23 : vector<2x5xf32>
    %25 = math.exp %24 : vector<2x5xf32>
    %cst_15 = arith.constant dense<0.000000e+00> : vector<2xf32>
    %26 = vector.multi_reduction <add>, %25, %cst_15 [1] : vector<2x5xf32> to vector<2xf32>
    %27 = vector.shape_cast %26 : vector<2xf32> to vector<2x1xf32>
    %28 = vector.broadcast %27 : vector<2x1xf32> to vector<2x5xf32>
    %29 = arith.divf %25, %28 : vector<2x5xf32>
    %c0_16 = arith.constant 0 : index
    %c0_17 = arith.constant 0 : index
    %30 = vector.load %arg6[%c0_16, %c0_17] : memref<2x5xf32, #tpu.memory_space<vmem>>, vector<2x5xf32>
    tpu.vector_store %arg6[%c0_16, %c0_17], %29 {strides = array<i32>} : memref<2x5xf32, #tpu.memory_space<vmem>>, vector<2x5xf32>,
    return
  }
  func.func @transform_0(%arg0: i32) -> (i32, i32) {
    %c0_i32 = arith.constant 0 : i32
    %c0_i32_0 = arith.constant 0 : i32
    %c0_i32_1 = arith.constant 0 : i32
    return %c0_i32, %c0_i32_0 : i32, i32
  }
  func.func @transform_1(%arg0: i32) -> (i32, i32) {
    %c0_i32 = arith.constant 0 : i32
    %c0_i32_0 = arith.constant 0 : i32
    %c0_i32_1 = arith.constant 0 : i32
    return %c0_i32, %c0_i32_0 : i32, i32
  }
  func.func @transform_2(%arg0: i32) -> (i32, i32) {
    %c0_i32 = arith.constant 0 : i32
    %c0_i32_0 = arith.constant 0 : i32
    %c0_i32_1 = arith.constant 0 : i32
    return %c0_i32, %c0_i32_0 : i32, i32
  }
  func.func @transform_3(%arg0: i32) -> (i32, i32) {
    %c0_i32 = arith.constant 0 : i32
    %c0_i32_0 = arith.constant 0 : i32
    %c0_i32_1 = arith.constant 0 : i32
    return %c0_i32, %c0_i32_0 : i32, i32
  }
  func.func @transform_4(%arg0: i32) -> (i32, i32) {
    %c0_i32 = arith.constant 0 : i32
    %c0_i32_0 = arith.constant 0 : i32
    %c0_i32_1 = arith.constant 0 : i32
    return %c0_i32, %c0_i32_0 : i32, i32
  }
  func.func @transform_5(%arg0: i32) -> (i32, i32) {
    %c0_i32 = arith.constant 0 : i32
    %c0_i32_0 = arith.constant 0 : i32
    %c0_i32_1 = arith.constant 0 : i32
    return %c0_i32, %c0_i32_0 : i32, i32
  }
}

</mosaic_0001>

<llo_original>
// kernel: cnn3d_forward.2
$region0: #{cnn3d_forward.2}
  #allocation0 [shape = 'u32[]', space=smem, size = 0x4, offset = 0x4, fixed_abs, tag = 'smem constant byte address 0x4 - core index']
  #allocation1 [shape = 'u32[144,128]{1,0:T(1,128)}', space=vmem, size = 0x12000, scoped, tag = 'internal scratch']
  %s0 = inlined_call_operand.vmem [shape: f32[8,800,128], index: 0, kind: input, shape index: {}]
  %s1 = inlined_call_operand.vmem [shape: f32[128,16], index: 1, kind: input, shape index: {}]
  %s2 = inlined_call_operand.vmem [shape: f32[1,16], index: 2, kind: input, shape index: {}]
  %s3 = inlined_call_operand.vmem [shape: f32[800,16], index: 3, kind: output, shape index: {}]
  %s4 = sld [smem:[#allocation0]]
  $region83: #{cnn3d_forward.2} parent=0
    _
  %s6 = ssub.s32 1, %s4
  %s7 = scalar_select 0, %s6, %s4
  $region1: #{cnn3d_forward.2} parent=0
    #allocation2 [shape = 'u8[3276800]{0}', space=vmem, size = 0x320000, scoped, tag = 'input window, operand 0']
    loop: start=0, step=1, limit=4
    $region2: #{cnn3d_forward.2} parent=1 // loop_pre_header
      _
    $region3: #{cnn3d_forward.2} parent=1 // loop_header
      %s9 = sphi 0, %s13
      %p10 = scmp.ge.s32.totalorder %s9, 4
      %s19 = sphi 0, %s21
      %s22 = sphi 0, %s19
      %s23 = sphi 0, %s22
      %s39 = sphi 0, %s23
      %s43 = sphi 0, %s43
      %s45 = sphi 0, %s43
      %s46 = sphi 0, %s45
      %s60 = sphi 0, %s46
      %s64 = sphi 0, %s64
      %s66 = sphi 0, %s64
      %s67 = sphi 0, %s66
      %s81 = sphi 0, %s67
      %s87 = sphi 0, %s89
      %s90 = sphi 0, %s87
      %s91 = sphi 0, %s90
      %s107 = sphi 0, %s91
    $region4: #{cnn3d_forward.2} parent=1 // loop_header_branch
      %12 = sbr.rel (%p10) target = $region8
    $region5: #{cnn3d_forward.2} parent=1 // loop_body
      %s14 = ssub.s32 %s9, 1
      %s15 = ssub.s32 %s9, 2
      %s16 = sadd.s32 %s9, 1
      %s17 = ssub.s32 %s9, %s16
      %p18 = scmp.eq.s32.totalorder %s17, 0
      %s20 = sadd.s32 %s19, 1
      %s21 = scalar_select %p18, %s19, %s20
      %p24 = pneg %p18
      %p25 = scmp.eq.s32.totalorder %s9, 1
      %p26 = por %p24, %p25
      %p27 = scmp.ne.s32.totalorder %s19, %s22
      %p28 = scmp.eq.s32.totalorder %s9, 0
      %p29 = por %p27, %p28
      %p30 = scmp.ne.s32.totalorder %s19, %s22
      %p31 = scmp.eq.s32.totalorder %s14, 1
      %p32 = por %p30, %p31
      %p33 = scmp.ne.s32.totalorder %s22, %s23
      %p34 = scmp.eq.s32.totalorder %s14, 0
      %p35 = por %p33, %p34
      %p36 = scmp.ne.s32.totalorder %s22, %s23
      %p37 = scmp.eq.s32.totalorder %s15, 1
      %p38 = por %p36, %p37
      %p40 = scmp.ne.s32.totalorder %s23, %s39
      %p41 = scmp.eq.s32.totalorder %s15, 0
      %p42 = por %p40, %p41
      %s44 = sadd.s32 %s43, 1
      %p47 = scmp.eq.s32.totalorder %s9, 1
      %p48 = scmp.ne.s32.totalorder %s43, %s45
      %p49 = scmp.eq.s32.totalorder %s9, 0
      %p50 = por %p48, %p49
      %p51 = scmp.ne.s32.totalorder %s43, %s45
      %p52 = scmp.eq.s32.totalorder %s14, 1
      %p53 = por %p51, %p52
      %p54 = scmp.ne.s32.totalorder %s45, %s46
      %p55 = scmp.eq.s32.totalorder %s14, 0
      %p56 = por %p54, %p55
      %p57 = scmp.ne.s32.totalorder %s45, %s46
      %p58 = scmp.eq.s32.totalorder %s15, 1
      %p59 = por %p57, %p58
      %p61 = scmp.ne.s32.totalorder %s46, %s60
      %p62 = scmp.eq.s32.totalorder %s15, 0
      %p63 = por %p61, %p62
      %s65 = sadd.s32 %s64, 1
      %p68 = scmp.eq.s32.totalorder %s9, 1
      %p69 = scmp.ne.s32.totalorder %s64, %s66
      %p70 = scmp.eq.s32.totalorder %s9, 0
      %p71 = por %p69, %p70
      %p72 = scmp.ne.s32.totalorder %s64, %s66
      %p73 = scmp.eq.s32.totalorder %s14, 1
      %p74 = por %p72, %p73
      %p75 = scmp.ne.s32.totalorder %s66, %s67
      %p76 = scmp.eq.s32.totalorder %s14, 0
      %p77 = por %p75, %p76
      %p78 = scmp.ne.s32.totalorder %s66, %s67
      %p79 = scmp.eq.s32.totalorder %s15, 1
      %p80 = por %p78, %p79
      %p82 = scmp.ne.s32.totalorder %s67, %s81
      %p83 = scmp.eq.s32.totalorder %s15, 0
      %p84 = por %p82, %p83
      %s85 = ssub.s32 %s9, %s16
      %p86 = scmp.eq.s32.totalorder %s85, 0
      %s88 = sadd.s32 %s87, 1
      %s89 = scalar_select %p86, %s87, %s88
      %p92 = pneg %p86
      %p93 = scmp.eq.s32.totalorder %s9, 1
      %p94 = por %p92, %p93
      %p95 = scmp.ne.s32.totalorder %s87, %s90
      %p96 = scmp.eq.s32.totalorder %s9, 0
      %p97 = por %p95, %p96
      %p98 = scmp.ne.s32.totalorder %s87, %s90
      %p99 = scmp.eq.s32.totalorder %s14, 1
      %p100 = por %p98, %p99
      %p101 = scmp.ne.s32.totalorder %s90, %s91
      %p102 = scmp.eq.s32.totalorder %s14, 0
      %p103 = por %p101, %p102
      %p104 = scmp.ne.s32.totalorder %s90, %s91
      %p105 = scmp.eq.s32.totalorder %s15, 1
      %p106 = por %p104, %p105
      %p108 = scmp.ne.s32.totalorder %s91, %s107
      %p109 = scmp.eq.s32.totalorder %s15, 0
      %p110 = por %p108, %p109
      %p111 = scmp.le.s32.totalorder 1, %s9
      %p112 = scmp.lt.s32.totalorder %s9, 3
      %p113 = pnand %p111, %p112
      %p114 = pneg %p113
      // Predicated region
      $region9: #{cnn3d_forward.2} parent=5 // pred_check
        _
      $region10: #{cnn3d_forward.2} parent=5 // pred_check_branch
        %116 = sbr.rel (%p113) target = $region12
      $region11: #{cnn3d_forward.2} parent=5 // pred_region
        %s117 = ssub.s32 %s9, 1
        // Predicated region
        $region13: #{cnn3d_forward.2} parent=11 // pred_check
          %p118 = pneg %p56
        $region14: #{cnn3d_forward.2} parent=11 // pred_check_branch
          %120 = sbr.rel (%p118) target = $region16
        $region15: #{cnn3d_forward.2} parent=11 // pred_region
          _
        $region16: #{cnn3d_forward.2} parent=11 // pred_fallthru
          _
        // Predicated region
        $region17: #{cnn3d_forward.2} parent=11 // pred_check
          %p121 = pneg %p77
        $region18: #{cnn3d_forward.2} parent=11 // pred_check_branch
          %123 = sbr.rel (%p121) target = $region20
        $region19: #{cnn3d_forward.2} parent=11 // pred_region
          _
        $region20: #{cnn3d_forward.2} parent=11 // pred_fallthru
          _
      $region12: #{cnn3d_forward.2} parent=5 // pred_fallthru
        _
      %p124 = scmp.lt.s32.totalorder %s9, 2
      // Predicated region
      $region21: #{cnn3d_forward.2} parent=5 // pred_check
        %p125 = pneg %p124
      $region22: #{cnn3d_forward.2} parent=5 // pred_check_branch
        %127 = sbr.rel (%p125) target = $region24
      $region23: #{cnn3d_forward.2} parent=5 // pred_region
        // Predicated region
        $region25: #{cnn3d_forward.2} parent=23 // pred_check
          %p128 = pneg %p29
        $region26: #{cnn3d_forward.2} parent=23 // pred_check_branch
          %130 = sbr.rel (%p128) target = $region28
        $region27: #{cnn3d_forward.2} parent=23 // pred_region
          %s131 = sand.u32 %s19, 1
          %s132 = sand.u32 %s19, 1
          %s133 = smul.addr %s132, 3200
          %s134 = scalar_lea.vmem [#allocation2], %s133
          %s135 = smul.u32 50, %s9
          %s136 = smul.addr %s135, 8
          %s137 = scalar_lea.vmem %s0, %s136
          // Predicated region
          $region29: #{cnn3d_forward.2} parent=27 // pred_check
            _
          $region30: #{cnn3d_forward.2} parent=27 // pred_check_branch
            %139 = sbr.rel (0) target = $region32
          $region31: #{cnn3d_forward.2} parent=27 // pred_region
            // Predicated region
            $region33: #{cnn3d_forward.2} parent=31 // pred_check
              _
            $region34: #{cnn3d_forward.2} parent=31 // pred_check_branch
              %141 = sbr.rel (0) target = $region36
            $region35: #{cnn3d_forward.2} parent=31 // pred_region
              // Predicated region
              $region48: #{cnn3d_forward.2} parent=35 // pred_check
                _
              $region49: #{cnn3d_forward.2} parent=35 // pred_check_branch
                %954 = sbr.rel (0) target = $region51
              $region50: #{cnn3d_forward.2} parent=35 // pred_region
                loop: start=0, step=1, limit=1
                $region52: #{cnn3d_forward.2} parent=50 // loop_pre_header
                  _
                $region53: #{cnn3d_forward.2} parent=50 // loop_header
                  %s956 = sphi 0, %s960
                  %p957 = scmp.ge.s32.totalorder %s956, 1
                  %s961 = sphi %s137, %s137
                  %s962 = sphi %s134, %s134
                $region54: #{cnn3d_forward.2} parent=50 // loop_header_branch
                  %959 = sbr.rel (%p957) target = $region58
                $region55: #{cnn3d_forward.2} parent=50 // loop_body
                  %v963 = vld [vmem:[%s961] sm:$0xff]
                  %964 = vst [vmem:[%s962] sm:$0xff] %v963
                  %v965 = vld [vmem:[%s961 + $0x8] sm:$0xff]
                  %966 = vst [vmem:[%s962 + $0x8] sm:$0xff] %v965
                  %v967 = vld [vmem:[%s961 + $0x10] sm:$0xff]
                  %968 = vst [vmem:[%s962 + $0x10] sm:$0xff] %v967
                  %v969 = vld [vmem:[%s961 + $0x18] sm:$0xff]
                  %970 = vst [vmem:[%s962 + $0x18] sm:$0xff] %v969
                  %v971 = vld [vmem:[%s961 + $0x20] sm:$0xff]
                  %972 = vst [vmem:[%s962 + $0x20] sm:$0xff] %v971
                  %v973 = vld [vmem:[%s961 + $0x28] sm:$0xff]
                  %974 = vst [vmem:[%s962 + $0x28] sm:$0xff] %v973
                  %v975 = vld [vmem:[%s961 + $0x30] sm:$0xff]
                  %976 = vst [vmem:[%s962 + $0x30] sm:$0xff] %v975
                  %v977 = vld [vmem:[%s961 + $0x38] sm:$0xff]
                  %978 = vst [vmem:[%s962 + $0x38] sm:$0xff] %v977
                  %v979 = vld [vmem:[%s961 + $0x40] sm:$0xff]
                  %980 = vst [vmem:[%s962 + $0x40] sm:$0xff] %v979
                  %v981 = vld [vmem:[%s961 + $0x48] sm:$0xff]
                  %982 = vst [vmem:[%s962 + $0x48] sm:$0xff] %v981
                  %v983 = vld [vmem:[%s961 + $0x50] sm:$0xff]
                  %984 = vst [vmem:[%s962 + $0x50] sm:$0xff] %v983
                  %v985 = vld [vmem:[%s961 + $0x58] sm:$0xff]
                  %986 = vst [vmem:[%s962 + $0x58] sm:$0xff] %v985
                  %v987 = vld [vmem:[%s961 + $0x60] sm:$0xff]
                  %988 = vst [vmem:[%s962 + $0x60] sm:$0xff] %v987
                  %v989 = vld [vmem:[%s961 + $0x68] sm:$0xff]
                  %990 = vst [vmem:[%s962 + $0x68] sm:$0xff] %v989
                  %v991 = vld [vmem:[%s961 + $0x70] sm:$0xff]
                  %992 = vst [vmem:[%s962 + $0x70] sm:$0xff] %v991
                  %v993 = vld [vmem:[%s961 + $0x78] sm:$0xff]
                  %994 = vst [vmem:[%s962 + $0x78] sm:$0xff] %v993
                  %v995 = vld [vmem:[%s961 + $0x80] sm:$0xff]
                  %996 = vst [vmem:[%s962 + $0x80] sm:$0xff] %v995
                  %v997 = vld [vmem:[%s961 + $0x88] sm:$0xff]
                  %998 = vst [vmem:[%s962 + $0x88] sm:$0xff] %v997
                  %v999 = vld [vmem:[%s961 + $0x90] sm:$0xff]
                  %1000 = vst [vmem:[%s962 + $0x90] sm:$0xff] %v999
                  %v1001 = vld [vmem:[%s961 + $0x98] sm:$0xff]
                  %1002 = vst [vmem:[%s962 + $0x98] sm:$0xff] %v1001
                  %v1003 = vld [vmem:[%s961 + $0xa0] sm:$0xff]
                  %1004 = vst [vmem:[%s962 + $0xa0] sm:$0xff] %v1003
                  %v1005 = vld [vmem:[%s961 + $0xa8] sm:$0xff]
                  %1006 = vst [vmem:[%s962 + $0xa8] sm:$0xff] %v1005
                  %v1007 = vld [vmem:[%s961 + $0xb0] sm:$0xff]
                  %1008 = vst [vmem:[%s962 + $0xb0] sm:$0xff] %v1007
                  %v1009 = vld [vmem:[%s961 + $0xb8] sm:$0xff]
                  %1010 = vst [vmem:[%s962 + $0xb8] sm:$0xff] %v1009
                  %v1011 = vld [vmem:[%s961 + $0xc0] sm:$0xff]
                  %1012 = vst [vmem:[%s962 + $0xc0] sm:$0xff] %v1011
                  %v1013 = vld [vmem:[%s961 + $0xc8] sm:$0xff]
                  %1014 = vst [vmem:[%s962 + $0xc8] sm:$0xff] %v1013
                  %v1015 = vld [vmem:[%s961 + $0xd0] sm:$0xff]
                  %1016 = vst [vmem:[%s962 + $0xd0] sm:$0xff] %v1015
                  %v1017 = vld [vmem:[%s961 + $0xd8] sm:$0xff]
                  %1018 = vst [vmem:[%s962 + $0xd8] sm:$0xff] %v1017
                  %v1019 = vld [vmem:[%s961 + $0xe0] sm:$0xff]
                  %1020 = vst [vmem:[%s962 + $0xe0] sm:$0xff] %v1019
                  %v1021 = vld [vmem:[%s961 + $0xe8] sm:$0xff]
                  %1022 = vst [vmem:[%s962 + $0xe8] sm:$0xff] %v1021
                  %v1023 = vld [vmem:[%s961 + $0xf0] sm:$0xff]
                  %1024 = vst [vmem:[%s962 + $0xf0] sm:$0xff] %v1023
                  %v1025 = vld [vmem:[%s961 + $0xf8] sm:$0xff]
                  %1026 = vst [vmem:[%s962 + $0xf8] sm:$0xff] %v1025
                  %v1027 = vld [vmem:[%s961 + $0x100] sm:$0xff]
                  %1028 = vst [vmem:[%s962 + $0x100] sm:$0xff] %v1027
                  %v1029 = vld [vmem:[%s961 + $0x108] sm:$0xff]
                  %1030 = vst [vmem:[%s962 + $0x108] sm:$0xff] %v1029
                  %v1031 = vld [vmem:[%s961 + $0x110] sm:$0xff]
                  %1032 = vst [vmem:[%s962 + $0x110] sm:$0xff] %v1031
                  %v1033 = vld [vmem:[%s961 + $0x118] sm:$0xff]
                  %1034 = vst [vmem:[%s962 + $0x118] sm:$0xff] %v1033
                  %v1035 = vld [vmem:[%s961 + $0x120] sm:$0xff]
                  %1036 = vst [vmem:[%s962 + $0x120] sm:$0xff] %v1035
                  %v1037 = vld [vmem:[%s961 + $0x128] sm:$0xff]
                  %1038 = vst [vmem:[%s962 + $0x128] sm:$0xff] %v1037
                  %v1039 = vld [vmem:[%s961 + $0x130] sm:$0xff]
                  %1040 = vst [vmem:[%s962 + $0x130] sm:$0xff] %v1039
                  %v1041 = vld [vmem:[%s961 + $0x138] sm:$0xff]
                  %1042 = vst [vmem:[%s962 + $0x138] sm:$0xff] %v1041
                  %v1043 = vld [vmem:[%s961 + $0x140] sm:$0xff]
                  %1044 = vst [vmem:[%s962 + $0x140] sm:$0xff] %v1043
                  %v1045 = vld [vmem:[%s961 + $0x148] sm:$0xff]
                  %1046 = vst [vmem:[%s962 + $0x148] sm:$0xff] %v1045
                  %v1047 = vld [vmem:[%s961 + $0x150] sm:$0xff]
                  %1048 = vst [vmem:[%s962 + $0x150] sm:$0xff] %v1047
                  %v1049 = vld [vmem:[%s961 + $0x158] sm:$0xff]
                  %1050 = vst [vmem:[%s962 + $0x158] sm:$0xff] %v1049
                  %v1051 = vld [vmem:[%s961 + $0x160] sm:$0xff]
                  %1052 = vst [vmem:[%s962 + $0x160] sm:$0xff] %v1051
                  %v1053 = vld [vmem:[%s961 + $0x168] sm:$0xff]
                  %1054 = vst [vmem:[%s962 + $0x168] sm:$0xff] %v1053
                  %v1055 = vld [vmem:[%s961 + $0x170] sm:$0xff]
                  %1056 = vst [vmem:[%s962 + $0x170] sm:$0xff] %v1055
                  %v1057 = vld [vmem:[%s961 + $0x178] sm:$0xff]
                  %1058 = vst [vmem:[%s962 + $0x178] sm:$0xff] %v1057
                  %v1059 = vld [vmem:[%s961 + $0x180] sm:$0xff]
                  %1060 = vst [vmem:[%s962 + $0x180] sm:$0xff] %v1059
                  %v1061 = vld [vmem:[%s961 + $0x188] sm:$0xff]
                  %1062 = vst [vmem:[%s962 + $0x188] sm:$0xff] %v1061
                  %v1063 = vld [vmem:[%s961 + $0x320] sm:$0xff]
                  %1064 = vst [vmem:[%s962 + $0x190] sm:$0xff] %v1063
                  %v1065 = vld [vmem:[%s961 + $0x328] sm:$0xff]
                  %1066 = vst [vmem:[%s962 + $0x198] sm:$0xff] %v1065
                  %v1067 = vld [vmem:[%s961 + $0x330] sm:$0xff]
                  %1068 = vst [vmem:[%s962 + $0x1a0] sm:$0xff] %v1067
                  %v1069 = vld [vmem:[%s961 + $0x338] sm:$0xff]
                  %1070 = vst [vmem:[%s962 + $0x1a8] sm:$0xff] %v1069
                  %v1071 = vld [vmem:[%s961 + $0x340] sm:$0xff]
                  %1072 = vst [vmem:[%s962 + $0x1b0] sm:$0xff] %v1071
                  %v1073 = vld [vmem:[%s961 + $0x348] sm:$0xff]
                  %1074 = vst [vmem:[%s962 + $0x1b8] sm:$0xff] %v1073
                  %v1075 = vld [vmem:[%s961 + $0x350] sm:$0xff]
                  %1076 = vst [vmem:[%s962 + $0x1c0] sm:$0xff] %v1075
                  %v1077 = vld [vmem:[%s961 + $0x358] sm:$0xff]
                  %1078 = vst [vmem:[%s962 + $0x1c8] sm:$0xff] %v1077
                  %v1079 = vld [vmem:[%s961 + $0x360] sm:$0xff]
                  %1080 = vst [vmem:[%s962 + $0x1d0] sm:$0xff] %v1079
                  %v1081 = vld [vmem:[%s961 + $0x368] sm:$0xff]
                  %1082 = vst [vmem:[%s962 + $0x1d8] sm:$0xff] %v1081
                  %v1083 = vld [vmem:[%s961 + $0x370] sm:$0xff]
                  %1084 = vst [vmem:[%s962 + $0x1e0] sm:$0xff] %v1083
                  %v1085 = vld [vmem:[%s961 + $0x378] sm:$0xff]
                  %1086 = vst [vmem:[%s962 + $0x1e8] sm:$0xff] %v1085
                  %v1087 = vld [vmem:[%s961 + $0x380] sm:$0xff]
                  %1088 = vst [vmem:[%s962 + $0x1f0] sm:$0xff] %v1087
                  %v1089 = vld [vmem:[%s961 + $0x388] sm:$0xff]
                  %1090 = vst [vmem:[%s962 + $0x1f8] sm:$0xff] %v1089
                  %v1091 = vld [vmem:[%s961 + $0x390] sm:$0xff]
                  %1092 = vst [vmem:[%s962 + $0x200] sm:$0xff] %v1091
                  %v1093 = vld [vmem:[%s961 + $0x398] sm:$0xff]
                  %1094 = vst [vmem:[%s962 + $0x208] sm:$0xff] %v1093
                  %v1095 = vld [vmem:[%s961 + $0x3a0] sm:$0xff]
                  %1096 = vst [vmem:[%s962 + $0x210] sm:$0xff] %v1095
                  %v1097 = vld [vmem:[%s961 + $0x3a8] sm:$0xff]
                  %1098 = vst [vmem:[%s962 + $0x218] sm:$0xff] %v1097
                  %v1099 = vld [vmem:[%s961 + $0x3b0] sm:$0xff]
                  %1100 = vst [vmem:[%s962 + $0x220] sm:$0xff] %v1099
                  %v1101 = vld [vmem:[%s961 + $0x3b8] sm:$0xff]
                  %1102 = vst [vmem:[%s962 + $0x228] sm:$0xff] %v1101
                  %v1103 = vld [vmem:[%s961 + $0x3c0] sm:$0xff]
                  %1104 = vst [vmem:[%s962 + $0x230] sm:$0xff] %v1103
                  %v1105 = vld [vmem:[%s961 + $0x3c8] sm:$0xff]
                  %1106 = vst [vmem:[%s962 + $0x238] sm:$0xff] %v1105
                  %v1107 = vld [vmem:[%s961 + $0x3d0] sm:$0xff]
                  %1108 = vst [vmem:[%s962 + $0x240] sm:$0xff] %v1107
                  %v1109 = vld [vmem:[%s961 + $0x3d8] sm:$0xff]
                  %1110 = vst [vmem:[%s962 + $0x248] sm:$0xff] %v1109
                  %v1111 = vld [vmem:[%s961 + $0x3e0] sm:$0xff]
                  %1112 = vst [vmem:[%s962 + $0x250] sm:$0xff] %v1111
                  %v1113 = vld [vmem:[%s961 + $0x3e8] sm:$0xff]
                  %1114 = vst [vmem:[%s962 + $0x258] sm:$0xff] %v1113
                  %v1115 = vld [vmem:[%s961 + $0x3f0] sm:$0xff]
                  %1116 = vst [vmem:[%s962 + $0x260] sm:$0xff] %v1115
                  %v1117 = vld [vmem:[%s961 + $0x3f8] sm:$0xff]
                  %1118 = vst [vmem:[%s962 + $0x268] sm:$0xff] %v1117
                  %v1119 = vld [vmem:[%s961 + $0x400] sm:$0xff]
                  %1120 = vst [vmem:[%s962 + $0x270] sm:$0xff] %v1119
                  %v1121 = vld [vmem:[%s961 + $0x408] sm:$0xff]
                  %1122 = vst [vmem:[%s962 + $0x278] sm:$0xff] %v1121
                  %v1123 = vld [vmem:[%s961 + $0x410] sm:$0xff]
                  %1124 = vst [vmem:[%s962 + $0x280] sm:$0xff] %v1123
                  %v1125 = vld [vmem:[%s961 + $0x418] sm:$0xff]
                  %1126 = vst [vmem:[%s962 + $0x288] sm:$0xff] %v1125
                  %v1127 = vld [vmem:[%s961 + $0x420] sm:$0xff]
                  %1128 = vst [vmem:[%s962 + $0x290] sm:$0xff] %v1127
                  %v1129 = vld [vmem:[%s961 + $0x428] sm:$0xff]
                  %1130 = vst [vmem:[%s962 + $0x298] sm:$0xff] %v1129
                  %v1131 = vld [vmem:[%s961 + $0x430] sm:$0xff]
                  %1132 = vst [vmem:[%s962 + $0x2a0] sm:$0xff] %v1131
                  %v1133 = vld [vmem:[%s961 + $0x438] sm:$0xff]
                  %1134 = vst [vmem:[%s962 + $0x2a8] sm:$0xff] %v1133
                  %v1135 = vld [vmem:[%s961 + $0x440] sm:$0xff]
                  %1136 = vst [vmem:[%s962 + $0x2b0] sm:$0xff] %v1135
                  %v1137 = vld [vmem:[%s961 + $0x448] sm:$0xff]
                  %1138 = vst [vmem:[%s962 + $0x2b8] sm:$0xff] %v1137
                  %v1139 = vld [vmem:[%s961 + $0x450] sm:$0xff]
                  %1140 = vst [vmem:[%s962 + $0x2c0] sm:$0xff] %v1139
                  %v1141 = vld [vmem:[%s961 + $0x458] sm:$0xff]
                  %1142 = vst [vmem:[%s962 + $0x2c8] sm:$0xff] %v1141
                  %v1143 = vld [vmem:[%s961 + $0x460] sm:$0xff]
                  %1144 = vst [vmem:[%s962 + $0x2d0] sm:$0xff] %v1143
                  %v1145 = vld [vmem:[%s961 + $0x468] sm:$0xff]
                  %1146 = vst [vmem:[%s962 + $0x2d8] sm:$0xff] %v1145
                  %v1147 = vld [vmem:[%s961 + $0x470] sm:$0xff]
                  %1148 = vst [vmem:[%s962 + $0x2e0] sm:$0xff] %v1147
                  %v1149 = vld [vmem:[%s961 + $0x478] sm:$0xff]
                  %1150 = vst [vmem:[%s962 + $0x2e8] sm:$0xff] %v1149
                  %v1151 = vld [vmem:[%s961 + $0x480] sm:$0xff]
                  %1152 = vst [vmem:[%s962 + $0x2f0] sm:$0xff] %v1151
                  %v1153 = vld [vmem:[%s961 + $0x488] sm:$0xff]
                  %1154 = vst [vmem:[%s962 + $0x2f8] sm:$0xff] %v1153
                  %v1155 = vld [vmem:[%s961 + $0x490] sm:$0xff]
                  %1156 = vst [vmem:[%s962 + $0x300] sm:$0xff] %v1155
                  %v1157 = vld [vmem:[%s961 + $0x498] sm:$0xff]
                  %1158 = vst [vmem:[%s962 + $0x308] sm:$0xff] %v1157
                  %v1159 = vld [vmem:[%s961 + $0x4a0] sm:$0xff]
                  %1160 = vst [vmem:[%s962 + $0x310] sm:$0xff] %v1159
                  %v1161 = vld [vmem:[%s961 + $0x4a8] sm:$0xff]
                  %1162 = vst [vmem:[%s962 + $0x318] sm:$0xff] %v1161
                  %v1163 = vld [vmem:[%s961 + $0x640] sm:$0xff]
                  %1164 = vst [vmem:[%s962 + $0x320] sm:$0xff] %v1163
                  %v1165 = vld [vmem:[%s961 + $0x648] sm:$0xff]
                  %1166 = vst [vmem:[%s962 + $0x328] sm:$0xff] %v1165
                  %v1167 = vld [vmem:[%s961 + $0x650] sm:$0xff]
                  %1168 = vst [vmem:[%s962 + $0x330] sm:$0xff] %v1167
                  %v1169 = vld [vmem:[%s961 + $0x658] sm:$0xff]
                  %1170 = vst [vmem:[%s962 + $0x338] sm:$0xff] %v1169
                  %v1171 = vld [vmem:[%s961 + $0x660] sm:$0xff]
                  %1172 = vst [vmem:[%s962 + $0x340] sm:$0xff] %v1171
                  %v1173 = vld [vmem:[%s961 + $0x668] sm:$0xff]
                  %1174 = vst [vmem:[%s962 + $0x348] sm:$0xff] %v1173
                  %v1175 = vld [vmem:[%s961 + $0x670] sm:$0xff]
                  %1176 = vst [vmem:[%s962 + $0x350] sm:$0xff] %v1175
                  %v1177 = vld [vmem:[%s961 + $0x678] sm:$0xff]
                  %1178 = vst [vmem:[%s962 + $0x358] sm:$0xff] %v1177
                  %v1179 = vld [vmem:[%s961 + $0x680] sm:$0xff]
                  %1180 = vst [vmem:[%s962 + $0x360] sm:$0xff] %v1179
                  %v1181 = vld [vmem:[%s961 + $0x688] sm:$0xff]
                  %1182 = vst [vmem:[%s962 + $0x368] sm:$0xff] %v1181
                  %v1183 = vld [vmem:[%s961 + $0x690] sm:$0xff]
                  %1184 = vst [vmem:[%s962 + $0x370] sm:$0xff] %v1183
                  %v1185 = vld [vmem:[%s961 + $0x698] sm:$0xff]
                  %1186 = vst [vmem:[%s962 + $0x378] sm:$0xff] %v1185
                  %v1187 = vld [vmem:[%s961 + $0x6a0] sm:$0xff]
                  %1188 = vst [vmem:[%s962 + $0x380] sm:$0xff] %v1187
                  %v1189 = vld [vmem:[%s961 + $0x6a8] sm:$0xff]
                  %1190 = vst [vmem:[%s962 + $0x388] sm:$0xff] %v1189
                  %v1191 = vld [vmem:[%s961 + $0x6b0] sm:$0xff]
                  %1192 = vst [vmem:[%s962 + $0x390] sm:$0xff] %v1191
                  %v1193 = vld [vmem:[%s961 + $0x6b8] sm:$0xff]
                  %1194 = vst [vmem:[%s962 + $0x398] sm:$0xff] %v1193
                  %v1195 = vld [vmem:[%s961 + $0x6c0] sm:$0xff]
                  %1196 = vst [vmem:[%s962 + $0x3a0] sm:$0xff] %v1195
                  %v1197 = vld [vmem:[%s961 + $0x6c8] sm:$0xff]
                  %1198 = vst [vmem:[%s962 + $0x3a8] sm:$0xff] %v1197
                  %v1199 = vld [vmem:[%s961 + $0x6d0] sm:$0xff]
                  %1200 = vst [vmem:[%s962 + $0x3b0] sm:$0xff] %v1199
                  %v1201 = vld [vmem:[%s961 + $0x6d8] sm:$0xff]
                  %1202 = vst [vmem:[%s962 + $0x3b8] sm:$0xff] %v1201
                  %v1203 = vld [vmem:[%s961 + $0x6e0] sm:$0xff]
                  %1204 = vst [vmem:[%s962 + $0x3c0] sm:$0xff] %v1203
                  %v1205 = vld [vmem:[%s961 + $0x6e8] sm:$0xff]
                  %1206 = vst [vmem:[%s962 + $0x3c8] sm:$0xff] %v1205
                  %v1207 = vld [vmem:[%s961 + $0x6f0] sm:$0xff]
                  %1208 = vst [vmem:[%s962 + $0x3d0] sm:$0xff] %v1207
                  %v1209 = vld [vmem:[%s961 + $0x6f8] sm:$0xff]
                  %1210 = vst [vmem:[%s962 + $0x3d8] sm:$0xff] %v1209
                  %v1211 = vld [vmem:[%s961 + $0x700] sm:$0xff]
                  %1212 = vst [vmem:[%s962 + $0x3e0] sm:$0xff] %v1211
                  %v1213 = vld [vmem:[%s961 + $0x708] sm:$0xff]
                  %1214 = vst [vmem:[%s962 + $0x3e8] sm:$0xff] %v1213
                  %v1215 = vld [vmem:[%s961 + $0x710] sm:$0xff]
                  %1216 = vst [vmem:[%s962 + $0x3f0] sm:$0xff] %v1215
                  %v1217 = vld [vmem:[%s961 + $0x718] sm:$0xff]
                  %1218 = vst [vmem:[%s962 + $0x3f8] sm:$0xff] %v1217
                  %v1219 = vld [vmem:[%s961 + $0x720] sm:$0xff]
                  %1220 = vst [vmem:[%s962 + $0x400] sm:$0xff] %v1219
                  %v1221 = vld [vmem:[%s961 + $0x728] sm:$0xff]
                  %1222 = vst [vmem:[%s962 + $0x408] sm:$0xff] %v1221
                  %v1223 = vld [vmem:[%s961 + $0x730] sm:$0xff]
                  %1224 = vst [vmem:[%s962 + $0x410] sm:$0xff] %v1223
                  %v1225 = vld [vmem:[%s961 + $0x738] sm:$0xff]
                  %1226 = vst [vmem:[%s962 + $0x418] sm:$0xff] %v1225
                  %v1227 = vld [vmem:[%s961 + $0x740] sm:$0xff]
                  %1228 = vst [vmem:[%s962 + $0x420] sm:$0xff] %v1227
                  %v1229 = vld [vmem:[%s961 + $0x748] sm:$0xff]
                  %1230 = vst [vmem:[%s962 + $0x428] sm:$0xff] %v1229
                  %v1231 = vld [vmem:[%s961 + $0x750] sm:$0xff]
                  %1232 = vst [vmem:[%s962 + $0x430] sm:$0xff] %v1231
                  %v1233 = vld [vmem:[%s961 + $0x758] sm:$0xff]
                  %1234 = vst [vmem:[%s962 + $0x438] sm:$0xff] %v1233
                  %v1235 = vld [vmem:[%s961 + $0x760] sm:$0xff]
                  %1236 = vst [vmem:[%s962 + $0x440] sm:$0xff] %v1235
                  %v1237 = vld [vmem:[%s961 + $0x768] sm:$0xff]
                  %1238 = vst [vmem:[%s962 + $0x448] sm:$0xff] %v1237
                  %v1239 = vld [vmem:[%s961 + $0x770] sm:$0xff]
                  %1240 = vst [vmem:[%s962 + $0x450] sm:$0xff] %v1239
                  %v1241 = vld [vmem:[%s961 + $0x778] sm:$0xff]
                  %1242 = vst [vmem:[%s962 + $0x458] sm:$0xff] %v1241
                  %v1243 = vld [vmem:[%s961 + $0x780] sm:$0xff]
                  %1244 = vst [vmem:[%s962 + $0x460] sm:$0xff] %v1243
                  %v1245 = vld [vmem:[%s961 + $0x788] sm:$0xff]
                  %1246 = vst [vmem:[%s962 + $0x468] sm:$0xff] %v1245
                  %v1247 = vld [vmem:[%s961 + $0x790] sm:$0xff]
                  %1248 = vst [vmem:[%s962 + $0x470] sm:$0xff] %v1247
                  %v1249 = vld [vmem:[%s961 + $0x798] sm:$0xff]
                  %1250 = vst [vmem:[%s962 + $0x478] sm:$0xff] %v1249
                  %v1251 = vld [vmem:[%s961 + $0x7a0] sm:$0xff]
                  %1252 = vst [vmem:[%s962 + $0x480] sm:$0xff] %v1251
                  %v1253 = vld [vmem:[%s961 + $0x7a8] sm:$0xff]
                  %1254 = vst [vmem:[%s962 + $0x488] sm:$0xff] %v1253
                  %v1255 = vld [vmem:[%s961 + $0x7b0] sm:$0xff]
                  %1256 = vst [vmem:[%s962 + $0x490] sm:$0xff] %v1255
                  %v1257 = vld [vmem:[%s961 + $0x7b8] sm:$0xff]
                  %1258 = vst [vmem:[%s962 + $0x498] sm:$0xff] %v1257
                  %v1259 = vld [vmem:[%s961 + $0x7c0] sm:$0xff]
                  %1260 = vst [vmem:[%s962 + $0x4a0] sm:$0xff] %v1259
                  %v1261 = vld [vmem:[%s961 + $0x7c8] sm:$0xff]
                  %1262 = vst [vmem:[%s962 + $0x4a8] sm:$0xff] %v1261
                  %v1263 = vld [vmem:[%s961 + $0x960] sm:$0xff]
                  %1264 = vst [vmem:[%s962 + $0x4b0] sm:$0xff] %v1263
                  %v1265 = vld [vmem:[%s961 + $0x968] sm:$0xff]
                  %1266 = vst [vmem:[%s962 + $0x4b8] sm:$0xff] %v1265
                  %v1267 = vld [vmem:[%s961 + $0x970] sm:$0xff]
                  %1268 = vst [vmem:[%s962 + $0x4c0] sm:$0xff] %v1267
                  %v1269 = vld [vmem:[%s961 + $0x978] sm:$0xff]
                  %1270 = vst [vmem:[%s962 + $0x4c8] sm:$0xff] %v1269
                  %v1271 = vld [vmem:[%s961 + $0x980] sm:$0xff]
                  %1272 = vst [vmem:[%s962 + $0x4d0] sm:$0xff] %v1271
                  %v1273 = vld [vmem:[%s961 + $0x988] sm:$0xff]
                  %1274 = vst [vmem:[%s962 + $0x4d8] sm:$0xff] %v1273
                  %v1275 = vld [vmem:[%s961 + $0x990] sm:$0xff]
                  %1276 = vst [vmem:[%s962 + $0x4e0] sm:$0xff] %v1275
                  %v1277 = vld [vmem:[%s961 + $0x998] sm:$0xff]
                  %1278 = vst [vmem:[%s962 + $0x4e8] sm:$0xff] %v1277
                  %v1279 = vld [vmem:[%s961 + $0x9a0] sm:$0xff]
                  %1280 = vst [vmem:[%s962 + $0x4f0] sm:$0xff] %v1279
                  %v1281 = vld [vmem:[%s961 + $0x9a8] sm:$0xff]
                  %1282 = vst [vmem:[%s962 + $0x4f8] sm:$0xff] %v1281
                  %v1283 = vld [vmem:[%s961 + $0x9b0] sm:$0xff]
                  %1284 = vst [vmem:[%s962 + $0x500] sm:$0xff] %v1283
                  %v1285 = vld [vmem:[%s961 + $0x9b8] sm:$0xff]
                  %1286 = vst [vmem:[%s962 + $0x508] sm:$0xff] %v1285
                  %v1287 = vld [vmem:[%s961 + $0x9c0] sm:$0xff]
                  %1288 = vst [vmem:[%s962 + $0x510] sm:$0xff] %v1287
                  %v1289 = vld [vmem:[%s961 + $0x9c8] sm:$0xff]
                  %1290 = vst [vmem:[%s962 + $0x518] sm:$0xff] %v1289
                  %v1291 = vld [vmem:[%s961 + $0x9d0] sm:$0xff]
                  %1292 = vst [vmem:[%s962 + $0x520] sm:$0xff] %v1291
                  %v1293 = vld [vmem:[%s961 + $0x9d8] sm:$0xff]
                  %1294 = vst [vmem:[%s962 + $0x528] sm:$0xff] %v1293
                  %v1295 = vld [vmem:[%s961 + $0x9e0] sm:$0xff]
                  %1296 = vst [vmem:[%s962 + $0x530] sm:$0xff] %v1295
                  %v1297 = vld [vmem:[%s961 + $0x9e8] sm:$0xff]
                  %1298 = vst [vmem:[%s962 + $0x538] sm:$0xff] %v1297
                  %v1299 = vld [vmem:[%s961 + $0x9f0] sm:$0xff]
                  %1300 = vst [vmem:[%s962 + $0x540] sm:$0xff] %v1299
                  %v1301 = vld [vmem:[%s961 + $0x9f8] sm:$0xff]
                  %1302 = vst [vmem:[%s962 + $0x548] sm:$0xff] %v1301
                  %v1303 = vld [vmem:[%s961 + $0xa00] sm:$0xff]
                  %1304 = vst [vmem:[%s962 + $0x550] sm:$0xff] %v1303
                  %v1305 = vld [vmem:[%s961 + $0xa08] sm:$0xff]
                  %1306 = vst [vmem:[%s962 + $0x558] sm:$0xff] %v1305
                  %v1307 = vld [vmem:[%s961 + $0xa10] sm:$0xff]
                  %1308 = vst [vmem:[%s962 + $0x560] sm:$0xff] %v1307
                  %v1309 = vld [vmem:[%s961 + $0xa18] sm:$0xff]
                  %1310 = vst [vmem:[%s962 + $0x568] sm:$0xff] %v1309
                  %v1311 = vld [vmem:[%s961 + $0xa20] sm:$0xff]
                  %1312 = vst [vmem:[%s962 + $0x570] sm:$0xff] %v1311
                  %v1313 = vld [vmem:[%s961 + $0xa28] sm:$0xff]
                  %1314 = vst [vmem:[%s962 + $0x578] sm:$0xff] %v1313
                  %v1315 = vld [vmem:[%s961 + $0xa30] sm:$0xff]
                  %1316 = vst [vmem:[%s962 + $0x580] sm:$0xff] %v1315
                  %v1317 = vld [vmem:[%s961 + $0xa38] sm:$0xff]
                  %1318 = vst [vmem:[%s962 + $0x588] sm:$0xff] %v1317
                  %v1319 = vld [vmem:[%s961 + $0xa40] sm:$0xff]
                  %1320 = vst [vmem:[%s962 + $0x590] sm:$0xff] %v1319
                  %v1321 = vld [vmem:[%s961 + $0xa48] sm:$0xff]
                  %1322 = vst [vmem:[%s962 + $0x598] sm:$0xff] %v1321
                  %v1323 = vld [vmem:[%s961 + $0xa50] sm:$0xff]
                  %1324 = vst [vmem:[%s962 + $0x5a0] sm:$0xff] %v1323
                  %v1325 = vld [vmem:[%s961 + $0xa58] sm:$0xff]
                  %1326 = vst [vmem:[%s962 + $0x5a8] sm:$0xff] %v1325
                  %v1327 = vld [vmem:[%s961 + $0xa60] sm:$0xff]
                  %1328 = vst [vmem:[%s962 + $0x5b0] sm:$0xff] %v1327
                  %v1329 = vld [vmem:[%s961 + $0xa68] sm:$0xff]
                  %1330 = vst [vmem:[%s962 + $0x5b8] sm:$0xff] %v1329
                  %v1331 = vld [vmem:[%s961 + $0xa70] sm:$0xff]
                  %1332 = vst [vmem:[%s962 + $0x5c0] sm:$0xff] %v1331
                  %v1333 = vld [vmem:[%s961 + $0xa78] sm:$0xff]
                  %1334 = vst [vmem:[%s962 + $0x5c8] sm:$0xff] %v1333
                  %v1335 = vld [vmem:[%s961 + $0xa80] sm:$0xff]
                  %1336 = vst [vmem:[%s962 + $0x5d0] sm:$0xff] %v1335
                  %v1337 = vld [vmem:[%s961 + $0xa88] sm:$0xff]
                  %1338 = vst [vmem:[%s962 + $0x5d8] sm:$0xff] %v1337
                  %v1339 = vld [vmem:[%s961 + $0xa90] sm:$0xff]
                  %1340 = vst [vmem:[%s962 + $0x5e0] sm:$0xff] %v1339
                  %v1341 = vld [vmem:[%s961 + $0xa98] sm:$0xff]
                  %1342 = vst [vmem:[%s962 + $0x5e8] sm:$0xff] %v1341
                  %v1343 = vld [vmem:[%s961 + $0xaa0] sm:$0xff]
                  %1344 = vst [vmem:[%s962 + $0x5f0] sm:$0xff] %v1343
                  %v1345 = vld [vmem:[%s961 + $0xaa8] sm:$0xff]
                  %1346 = vst [vmem:[%s962 + $0x5f8] sm:$0xff] %v1345
                  %v1347 = vld [vmem:[%s961 + $0xab0] sm:$0xff]
                  %1348 = vst [vmem:[%s962 + $0x600] sm:$0xff] %v1347
                  %v1349 = vld [vmem:[%s961 + $0xab8] sm:$0xff]
                  %1350 = vst [vmem:[%s962 + $0x608] sm:$0xff] %v1349
                  %v1351 = vld [vmem:[%s961 + $0xac0] sm:$0xff]
                  %1352 = vst [vmem:[%s962 + $0x610] sm:$0xff] %v1351
                  %v1353 = vld [vmem:[%s961 + $0xac8] sm:$0xff]
                  %1354 = vst [vmem:[%s962 + $0x618] sm:$0xff] %v1353
                  %v1355 = vld [vmem:[%s961 + $0xad0] sm:$0xff]
                  %1356 = vst [vmem:[%s962 + $0x620] sm:$0xff] %v1355
                  %v1357 = vld [vmem:[%s961 + $0xad8] sm:$0xff]
                  %1358 = vst [vmem:[%s962 + $0x628] sm:$0xff] %v1357
                  %v1359 = vld [vmem:[%s961 + $0xae0] sm:$0xff]
                  %1360 = vst [vmem:[%s962 + $0x630] sm:$0xff] %v1359
                  %v1361 = vld [vmem:[%s961 + $0xae8] sm:$0xff]
                  %1362 = vst [vmem:[%s962 + $0x638] sm:$0xff] %v1361
                  %v1363 = vld [vmem:[%s961 + $0xc80] sm:$0xff]
                  %1364 = vst [vmem:[%s962 + $0x640] sm:$0xff] %v1363
                  %v1365 = vld [vmem:[%s961 + $0xc88] sm:$0xff]
                  %1366 = vst [vmem:[%s962 + $0x648] sm:$0xff] %v1365
                  %v1367 = vld [vmem:[%s961 + $0xc90] sm:$0xff]
                  %1368 = vst [vmem:[%s962 + $0x650] sm:$0xff] %v1367
                  %v1369 = vld [vmem:[%s961 + $0xc98] sm:$0xff]
                  %1370 = vst [vmem:[%s962 + $0x658] sm:$0xff] %v1369
                  %v1371 = vld [vmem:[%s961 + $0xca0] sm:$0xff]
                  %1372 = vst [vmem:[%s962 + $0x660] sm:$0xff] %v1371
                  %v1373 = vld [vmem:[%s961 + $0xca8] sm:$0xff]
                  %1374 = vst [vmem:[%s962 + $0x668] sm:$0xff] %v1373
                  %v1375 = vld [vmem:[%s961 + $0xcb0] sm:$0xff]
                  %1376 = vst [vmem:[%s962 + $0x670] sm:$0xff] %v1375
                  %v1377 = vld [vmem:[%s961 + $0xcb8] sm:$0xff]
                  %1378 = vst [vmem:[%s962 + $0x678] sm:$0xff] %v1377
                  %v1379 = vld [vmem:[%s961 + $0xcc0] sm:$0xff]
                  %1380 = vst [vmem:[%s962 + $0x680] sm:$0xff] %v1379
                  %v1381 = vld [vmem:[%s961 + $0xcc8] sm:$0xff]
                  %1382 = vst [vmem:[%s962 + $0x688] sm:$0xff] %v1381
                  %v1383 = vld [vmem:[%s961 + $0xcd0] sm:$0xff]
                  %1384 = vst [vmem:[%s962 + $0x690] sm:$0xff] %v1383
                  %v1385 = vld [vmem:[%s961 + $0xcd8] sm:$0xff]
                  %1386 = vst [vmem:[%s962 + $0x698] sm:$0xff] %v1385
                  %v1387 = vld [vmem:[%s961 + $0xce0] sm:$0xff]
                  %1388 = vst [vmem:[%s962 + $0x6a0] sm:$0xff] %v1387
                  %v1389 = vld [vmem:[%s961 + $0xce8] sm:$0xff]
                  %1390 = vst [vmem:[%s962 + $0x6a8] sm:$0xff] %v1389
                  %v1391 = vld [vmem:[%s961 + $0xcf0] sm:$0xff]
                  %1392 = vst [vmem:[%s962 + $0x6b0] sm:$0xff] %v1391
                  %v1393 = vld [vmem:[%s961 + $0xcf8] sm:$0xff]
                  %1394 = vst [vmem:[%s962 + $0x6b8] sm:$0xff] %v1393
                  %v1395 = vld [vmem:[%s961 + $0xd00] sm:$0xff]
                  %1396 = vst [vmem:[%s962 + $0x6c0] sm:$0xff] %v1395
                  %v1397 = vld [vmem:[%s961 + $0xd08] sm:$0xff]
                  %1398 = vst [vmem:[%s962 + $0x6c8] sm:$0xff] %v1397
                  %v1399 = vld [vmem:[%s961 + $0xd10] sm:$0xff]
                  %1400 = vst [vmem:[%s962 + $0x6d0] sm:$0xff] %v1399
                  %v1401 = vld [vmem:[%s961 + $0xd18] sm:$0xff]
                  %1402 = vst [vmem:[%s962 + $0x6d8] sm:$0xff] %v1401
                  %v1403 = vld [vmem:[%s961 + $0xd20] sm:$0xff]
                  %1404 = vst [vmem:[%s962 + $0x6e0] sm:$0xff] %v1403
                  %v1405 = vld [vmem:[%s961 + $0xd28] sm:$0xff]
                  %1406 = vst [vmem:[%s962 + $0x6e8] sm:$0xff] %v1405
                  %v1407 = vld [vmem:[%s961 + $0xd30] sm:$0xff]
                  %1408 = vst [vmem:[%s962 + $0x6f0] sm:$0xff] %v1407
                  %v1409 = vld [vmem:[%s961 + $0xd38] sm:$0xff]
                  %1410 = vst [vmem:[%s962 + $0x6f8] sm:$0xff] %v1409
                  %v1411 = vld [vmem:[%s961 + $0xd40] sm:$0xff]
                  %1412 = vst [vmem:[%s962 + $0x700] sm:$0xff] %v1411
                  %v1413 = vld [vmem:[%s961 + $0xd48] sm:$0xff]
                  %1414 = vst [vmem:[%s962 + $0x708] sm:$0xff] %v1413
                  %v1415 = vld [vmem:[%s961 + $0xd50] sm:$0xff]
                  %1416 = vst [vmem:[%s962 + $0x710] sm:$0xff] %v1415
                  %v1417 = vld [vmem:[%s961 + $0xd58] sm:$0xff]
                  %1418 = vst [vmem:[%s962 + $0x718] sm:$0xff] %v1417
                  %v1419 = vld [vmem:[%s961 + $0xd60] sm:$0xff]
                  %1420 = vst [vmem:[%s962 + $0x720] sm:$0xff] %v1419
                  %v1421 = vld [vmem:[%s961 + $0xd68] sm:$0xff]
                  %1422 = vst [vmem:[%s962 + $0x728] sm:$0xff] %v1421
                  %v1423 = vld [vmem:[%s961 + $0xd70] sm:$0xff]
                  %1424 = vst [vmem:[%s962 + $0x730] sm:$0xff] %v1423
                  %v1425 = vld [vmem:[%s961 + $0xd78] sm:$0xff]
                  %1426 = vst [vmem:[%s962 + $0x738] sm:$0xff] %v1425
                  %v1427 = vld [vmem:[%s961 + $0xd80] sm:$0xff]
                  %1428 = vst [vmem:[%s962 + $0x740] sm:$0xff] %v1427
                  %v1429 = vld [vmem:[%s961 + $0xd88] sm:$0xff]
                  %1430 = vst [vmem:[%s962 + $0x748] sm:$0xff] %v1429
                  %v1431 = vld [vmem:[%s961 + $0xd90] sm:$0xff]
                  %1432 = vst [vmem:[%s962 + $0x750] sm:$0xff] %v1431
                  %v1433 = vld [vmem:[%s961 + $0xd98] sm:$0xff]
                  %1434 = vst [vmem:[%s962 + $0x758] sm:$0xff] %v1433
                  %v1435 = vld [vmem:[%s961 + $0xda0] sm:$0xff]
                  %1436 = vst [vmem:[%s962 + $0x760] sm:$0xff] %v1435
                  %v1437 = vld [vmem:[%s961 + $0xda8] sm:$0xff]
                  %1438 = vst [vmem:[%s962 + $0x768] sm:$0xff] %v1437
                  %v1439 = vld [vmem:[%s961 + $0xdb0] sm:$0xff]
                  %1440 = vst [vmem:[%s962 + $0x770] sm:$0xff] %v1439
                  %v1441 = vld [vmem:[%s961 + $0xdb8] sm:$0xff]
                  %1442 = vst [vmem:[%s962 + $0x778] sm:$0xff] %v1441
                  %v1443 = vld [vmem:[%s961 + $0xdc0] sm:$0xff]
                  %1444 = vst [vmem:[%s962 + $0x780] sm:$0xff] %v1443
                  %v1445 = vld [vmem:[%s961 + $0xdc8] sm:$0xff]
                  %1446 = vst [vmem:[%s962 + $0x788] sm:$0xff] %v1445
                  %v1447 = vld [vmem:[%s961 + $0xdd0] sm:$0xff]
                  %1448 = vst [vmem:[%s962 + $0x790] sm:$0xff] %v1447
                  %v1449 = vld [vmem:[%s961 + $0xdd8] sm:$0xff]
                  %1450 = vst [vmem:[%s962 + $0x798] sm:$0xff] %v1449
                  %v1451 = vld [vmem:[%s961 + $0xde0] sm:$0xff]
                  %1452 = vst [vmem:[%s962 + $0x7a0] sm:$0xff] %v1451
                  %v1453 = vld [vmem:[%s961 + $0xde8] sm:$0xff]
                  %1454 = vst [vmem:[%s962 + $0x7a8] sm:$0xff] %v1453
                  %v1455 = vld [vmem:[%s961 + $0xdf0] sm:$0xff]
                  %1456 = vst [vmem:[%s962 + $0x7b0] sm:$0xff] %v1455
                  %v1457 = vld [vmem:[%s961 + $0xdf8] sm:$0xff]
                  %1458 = vst [vmem:[%s962 + $0x7b8] sm:$0xff] %v1457
                  %v1459 = vld [vmem:[%s961 + $0xe00] sm:$0xff]
                  %1460 = vst [vmem:[%s962 + $0x7c0] sm:$0xff] %v1459
                  %v1461 = vld [vmem:[%s961 + $0xe08] sm:$0xff]
                  %1462 = vst [vmem:[%s962 + $0x7c8] sm:$0xff] %v1461
                  %v1463 = vld [vmem:[%s961 + $0xfa0] sm:$0xff]
                  %1464 = vst [vmem:[%s962 + $0x7d0] sm:$0xff] %v1463
                  %v1465 = vld [vmem:[%s961 + $0xfa8] sm:$0xff]
                  %1466 = vst [vmem:[%s962 + $0x7d8] sm:$0xff] %v1465
                  %v1467 = vld [vmem:[%s961 + $0xfb0] sm:$0xff]
                  %1468 = vst [vmem:[%s962 + $0x7e0] sm:$0xff] %v1467
                  %v1469 = vld [vmem:[%s961 + $0xfb8] sm:$0xff]
                  %1470 = vst [vmem:[%s962 + $0x7e8] sm:$0xff] %v1469
                  %v1471 = vld [vmem:[%s961 + $0xfc0] sm:$0xff]
                  %1472 = vst [vmem:[%s962 + $0x7f0] sm:$0xff] %v1471
                  %v1473 = vld [vmem:[%s961 + $0xfc8] sm:$0xff]
                  %1474 = vst [vmem:[%s962 + $0x7f8] sm:$0xff] %v1473
                  %v1475 = vld [vmem:[%s961 + $0xfd0] sm:$0xff]
                  %1476 = vst [vmem:[%s962 + $0x800] sm:$0xff] %v1475
                  %v1477 = vld [vmem:[%s961 + $0xfd8] sm:$0xff]
                  %1478 = vst [vmem:[%s962 + $0x808] sm:$0xff] %v1477
                  %v1479 = vld [vmem:[%s961 + $0xfe0] sm:$0xff]
                  %1480 = vst [vmem:[%s962 + $0x810] sm:$0xff] %v1479
                  %v1481 = vld [vmem:[%s961 + $0xfe8] sm:$0xff]
                  %1482 = vst [vmem:[%s962 + $0x818] sm:$0xff] %v1481
                  %v1483 = vld [vmem:[%s961 + $0xff0] sm:$0xff]
                  %1484 = vst [vmem:[%s962 + $0x820] sm:$0xff] %v1483
                  %v1485 = vld [vmem:[%s961 + $0xff8] sm:$0xff]
                  %1486 = vst [vmem:[%s962 + $0x828] sm:$0xff] %v1485
                  %v1487 = vld [vmem:[%s961 + $0x1000] sm:$0xff]
                  %1488 = vst [vmem:[%s962 + $0x830] sm:$0xff] %v1487
                  %v1489 = vld [vmem:[%s961 + $0x1008] sm:$0xff]
                  %1490 = vst [vmem:[%s962 + $0x838] sm:$0xff] %v1489
                  %v1491 = vld [vmem:[%s961 + $0x1010] sm:$0xff]
                  %1492 = vst [vmem:[%s962 + $0x840] sm:$0xff] %v1491
                  %v1493 = vld [vmem:[%s961 + $0x1018] sm:$0xff]
                  %1494 = vst [vmem:[%s962 + $0x848] sm:$0xff] %v1493
                  %v1495 = vld [vmem:[%s961 + $0x1020] sm:$0xff]
                  %1496 = vst [vmem:[%s962 + $0x850] sm:$0xff] %v1495
                  %v1497 = vld [vmem:[%s961 + $0x1028] sm:$0xff]
                  %1498 = vst [vmem:[%s962 + $0x858] sm:$0xff] %v1497
                  %v1499 = vld [vmem:[%s961 + $0x1030] sm:$0xff]
                  %1500 = vst [vmem:[%s962 + $0x860] sm:$0xff] %v1499
                  %v1501 = vld [vmem:[%s961 + $0x1038] sm:$0xff]
                  %1502 = vst [vmem:[%s962 + $0x868] sm:$0xff] %v1501
                  %v1503 = vld [vmem:[%s961 + $0x1040] sm:$0xff]
                  %1504 = vst [vmem:[%s962 + $0x870] sm:$0xff] %v1503
                  %v1505 = vld [vmem:[%s961 + $0x1048] sm:$0xff]
                  %1506 = vst [vmem:[%s962 + $0x878] sm:$0xff] %v1505
                  %v1507 = vld [vmem:[%s961 + $0x1050] sm:$0xff]
                  %1508 = vst [vmem:[%s962 + $0x880] sm:$0xff] %v1507
                  %v1509 = vld [vmem:[%s961 + $0x1058] sm:$0xff]
                  %1510 = vst [vmem:[%s962 + $0x888] sm:$0xff] %v1509
                  %v1511 = vld [vmem:[%s961 + $0x1060] sm:$0xff]
                  %1512 = vst [vmem:[%s962 + $0x890] sm:$0xff] %v1511
                  %v1513 = vld [vmem:[%s961 + $0x1068] sm:$0xff]
                  %1514 = vst [vmem:[%s962 + $0x898] sm:$0xff] %v1513
                  %v1515 = vld [vmem:[%s961 + $0x1070] sm:$0xff]
                  %1516 = vst [vmem:[%s962 + $0x8a0] sm:$0xff] %v1515
                  %v1517 = vld [vmem:[%s961 + $0x1078] sm:$0xff]
                  %1518 = vst [vmem:[%s962 + $0x8a8] sm:$0xff] %v1517
                  %v1519 = vld [vmem:[%s961 + $0x1080] sm:$0xff]
                  %1520 = vst [vmem:[%s962 + $0x8b0] sm:$0xff] %v1519
                  %v1521 = vld [vmem:[%s961 + $0x1088] sm:$0xff]
                  %1522 = vst [vmem:[%s962 + $0x8b8] sm:$0xff] %v1521
                  %v1523 = vld [vmem:[%s961 + $0x1090] sm:$0xff]
                  %1524 = vst [vmem:[%s962 + $0x8c0] sm:$0xff] %v1523
                  %v1525 = vld [vmem:[%s961 + $0x1098] sm:$0xff]
                  %1526 = vst [vmem:[%s962 + $0x8c8] sm:$0xff] %v1525
                  %v1527 = vld [vmem:[%s961 + $0x10a0] sm:$0xff]
                  %1528 = vst [vmem:[%s962 + $0x8d0] sm:$0xff] %v1527
                  %v1529 = vld [vmem:[%s961 + $0x10a8] sm:$0xff]
                  %1530 = vst [vmem:[%s962 + $0x8d8] sm:$0xff] %v1529
                  %v1531 = vld [vmem:[%s961 + $0x10b0] sm:$0xff]
                  %1532 = vst [vmem:[%s962 + $0x8e0] sm:$0xff] %v1531
                  %v1533 = vld [vmem:[%s961 + $0x10b8] sm:$0xff]
                  %1534 = vst [vmem:[%s962 + $0x8e8] sm:$0xff] %v1533
                  %v1535 = vld [vmem:[%s961 + $0x10c0] sm:$0xff]
                  %1536 = vst [vmem:[%s962 + $0x8f0] sm:$0xff] %v1535
                  %v1537 = vld [vmem:[%s961 + $0x10c8] sm:$0xff]
                  %1538 = vst [vmem:[%s962 + $0x8f8] sm:$0xff] %v1537
                  %v1539 = vld [vmem:[%s961 + $0x10d0] sm:$0xff]
                  %1540 = vst [vmem:[%s962 + $0x900] sm:$0xff] %v1539
                  %v1541 = vld [vmem:[%s961 + $0x10d8] sm:$0xff]
                  %1542 = vst [vmem:[%s962 + $0x908] sm:$0xff] %v1541
                  %v1543 = vld [vmem:[%s961 + $0x10e0] sm:$0xff]
                  %1544 = vst [vmem:[%s962 + $0x910] sm:$0xff] %v1543
                  %v1545 = vld [vmem:[%s961 + $0x10e8] sm:$0xff]
                  %1546 = vst [vmem:[%s962 + $0x918] sm:$0xff] %v1545
                  %v1547 = vld [vmem:[%s961 + $0x10f0] sm:$0xff]
                  %1548 = vst [vmem:[%s962 + $0x920] sm:$0xff] %v1547
                  %v1549 = vld [vmem:[%s961 + $0x10f8] sm:$0xff]
                  %1550 = vst [vmem:[%s962 + $0x928] sm:$0xff] %v1549
                  %v1551 = vld [vmem:[%s961 + $0x1100] sm:$0xff]
                  %1552 = vst [vmem:[%s962 + $0x930] sm:$0xff] %v1551
                  %v1553 = vld [vmem:[%s961 + $0x1108] sm:$0xff]
                  %1554 = vst [vmem:[%s962 + $0x938] sm:$0xff] %v1553
                  %v1555 = vld [vmem:[%s961 + $0x1110] sm:$0xff]
                  %1556 = vst [vmem:[%s962 + $0x940] sm:$0xff] %v1555
                  %v1557 = vld [vmem:[%s961 + $0x1118] sm:$0xff]
                  %1558 = vst [vmem:[%s962 + $0x948] sm:$0xff] %v1557
                  %v1559 = vld [vmem:[%s961 + $0x1120] sm:$0xff]
                  %1560 = vst [vmem:[%s962 + $0x950] sm:$0xff] %v1559
                  %v1561 = vld [vmem:[%s961 + $0x1128] sm:$0xff]
                  %1562 = vst [vmem:[%s962 + $0x958] sm:$0xff] %v1561
                  %v1563 = vld [vmem:[%s961 + $0x12c0] sm:$0xff]
                  %1564 = vst [vmem:[%s962 + $0x960] sm:$0xff] %v1563
                  %v1565 = vld [vmem:[%s961 + $0x12c8] sm:$0xff]
                  %1566 = vst [vmem:[%s962 + $0x968] sm:$0xff] %v1565
                  %v1567 = vld [vmem:[%s961 + $0x12d0] sm:$0xff]
                  %1568 = vst [vmem:[%s962 + $0x970] sm:$0xff] %v1567
                  %v1569 = vld [vmem:[%s961 + $0x12d8] sm:$0xff]
                  %1570 = vst [vmem:[%s962 + $0x978] sm:$0xff] %v1569
                  %v1571 = vld [vmem:[%s961 + $0x12e0] sm:$0xff]
                  %1572 = vst [vmem:[%s962 + $0x980] sm:$0xff] %v1571
                  %v1573 = vld [vmem:[%s961 + $0x12e8] sm:$0xff]
                  %1574 = vst [vmem:[%s962 + $0x988] sm:$0xff] %v1573
                  %v1575 = vld [vmem:[%s961 + $0x12f0] sm:$0xff]
                  %1576 = vst [vmem:[%s962 + $0x990] sm:$0xff] %v1575
                  %v1577 = vld [vmem:[%s961 + $0x12f8] sm:$0xff]
                  %1578 = vst [vmem:[%s962 + $0x998] sm:$0xff] %v1577
                  %v1579 = vld [vmem:[%s961 + $0x1300] sm:$0xff]
                  %1580 = vst [vmem:[%s962 + $0x9a0] sm:$0xff] %v1579
                  %v1581 = vld [vmem:[%s961 + $0x1308] sm:$0xff]
                  %1582 = vst [vmem:[%s962 + $0x9a8] sm:$0xff] %v1581
                  %v1583 = vld [vmem:[%s961 + $0x1310] sm:$0xff]
                  %1584 = vst [vmem:[%s962 + $0x9b0] sm:$0xff] %v1583
                  %v1585 = vld [vmem:[%s961 + $0x1318] sm:$0xff]
                  %1586 = vst [vmem:[%s962 + $0x9b8] sm:$0xff] %v1585
                  %v1587 = vld [vmem:[%s961 + $0x1320] sm:$0xff]
                  %1588 = vst [vmem:[%s962 + $0x9c0] sm:$0xff] %v1587
                  %v1589 = vld [vmem:[%s961 + $0x1328] sm:$0xff]
                  %1590 = vst [vmem:[%s962 + $0x9c8] sm:$0xff] %v1589
                  %v1591 = vld [vmem:[%s961 + $0x1330] sm:$0xff]
                  %1592 = vst [vmem:[%s962 + $0x9d0] sm:$0xff] %v1591
                  %v1593 = vld [vmem:[%s961 + $0x1338] sm:$0xff]
                  %1594 = vst [vmem:[%s962 + $0x9d8] sm:$0xff] %v1593
                  %v1595 = vld [vmem:[%s961 + $0x1340] sm:$0xff]
                  %1596 = vst [vmem:[%s962 + $0x9e0] sm:$0xff] %v1595
                  %v1597 = vld [vmem:[%s961 + $0x1348] sm:$0xff]
                  %1598 = vst [vmem:[%s962 + $0x9e8] sm:$0xff] %v1597
                  %v1599 = vld [vmem:[%s961 + $0x1350] sm:$0xff]
                  %1600 = vst [vmem:[%s962 + $0x9f0] sm:$0xff] %v1599
                  %v1601 = vld [vmem:[%s961 + $0x1358] sm:$0xff]
                  %1602 = vst [vmem:[%s962 + $0x9f8] sm:$0xff] %v1601
                  %v1603 = vld [vmem:[%s961 + $0x1360] sm:$0xff]
                  %1604 = vst [vmem:[%s962 + $0xa00] sm:$0xff] %v1603
                  %v1605 = vld [vmem:[%s961 + $0x1368] sm:$0xff]
                  %1606 = vst [vmem:[%s962 + $0xa08] sm:$0xff] %v1605
                  %v1607 = vld [vmem:[%s961 + $0x1370] sm:$0xff]
                  %1608 = vst [vmem:[%s962 + $0xa10] sm:$0xff] %v1607
                  %v1609 = vld [vmem:[%s961 + $0x1378] sm:$0xff]
                  %1610 = vst [vmem:[%s962 + $0xa18] sm:$0xff] %v1609
                  %v1611 = vld [vmem:[%s961 + $0x1380] sm:$0xff]
                  %1612 = vst [vmem:[%s962 + $0xa20] sm:$0xff] %v1611
                  %v1613 = vld [vmem:[%s961 + $0x1388] sm:$0xff]
                  %1614 = vst [vmem:[%s962 + $0xa28] sm:$0xff] %v1613
                  %v1615 = vld [vmem:[%s961 + $0x1390] sm:$0xff]
                  %1616 = vst [vmem:[%s962 + $0xa30] sm:$0xff] %v1615
                  %v1617 = vld [vmem:[%s961 + $0x1398] sm:$0xff]
                  %1618 = vst [vmem:[%s962 + $0xa38] sm:$0xff] %v1617
                  %v1619 = vld [vmem:[%s961 + $0x13a0] sm:$0xff]
                  %1620 = vst [vmem:[%s962 + $0xa40] sm:$0xff] %v1619
                  %v1621 = vld [vmem:[%s961 + $0x13a8] sm:$0xff]
                  %1622 = vst [vmem:[%s962 + $0xa48] sm:$0xff] %v1621
                  %v1623 = vld [vmem:[%s961 + $0x13b0] sm:$0xff]
                  %1624 = vst [vmem:[%s962 + $0xa50] sm:$0xff] %v1623
                  %v1625 = vld [vmem:[%s961 + $0x13b8] sm:$0xff]
                  %1626 = vst [vmem:[%s962 + $0xa58] sm:$0xff] %v1625
                  %v1627 = vld [vmem:[%s961 + $0x13c0] sm:$0xff]
                  %1628 = vst [vmem:[%s962 + $0xa60] sm:$0xff] %v1627
                  %v1629 = vld [vmem:[%s961 + $0x13c8] sm:$0xff]
                  %1630 = vst [vmem:[%s962 + $0xa68] sm:$0xff] %v1629
                  %v1631 = vld [vmem:[%s961 + $0x13d0] sm:$0xff]
                  %1632 = vst [vmem:[%s962 + $0xa70] sm:$0xff] %v1631
                  %v1633 = vld [vmem:[%s961 + $0x13d8] sm:$0xff]
                  %1634 = vst [vmem:[%s962 + $0xa78] sm:$0xff] %v1633
                  %v1635 = vld [vmem:[%s961 + $0x13e0] sm:$0xff]
                  %1636 = vst [vmem:[%s962 + $0xa80] sm:$0xff] %v1635
                  %v1637 = vld [vmem:[%s961 + $0x13e8] sm:$0xff]
                  %1638 = vst [vmem:[%s962 + $0xa88] sm:$0xff] %v1637
                  %v1639 = vld [vmem:[%s961 + $0x13f0] sm:$0xff]
                  %1640 = vst [vmem:[%s962 + $0xa90] sm:$0xff] %v1639
                  %v1641 = vld [vmem:[%s961 + $0x13f8] sm:$0xff]
                  %1642 = vst [vmem:[%s962 + $0xa98] sm:$0xff] %v1641
                  %v1643 = vld [vmem:[%s961 + $0x1400] sm:$0xff]
                  %1644 = vst [vmem:[%s962 + $0xaa0] sm:$0xff] %v1643
                  %v1645 = vld [vmem:[%s961 + $0x1408] sm:$0xff]
                  %1646 = vst [vmem:[%s962 + $0xaa8] sm:$0xff] %v1645
                  %v1647 = vld [vmem:[%s961 + $0x1410] sm:$0xff]
                  %1648 = vst [vmem:[%s962 + $0xab0] sm:$0xff] %v1647
                  %v1649 = vld [vmem:[%s961 + $0x1418] sm:$0xff]
                  %1650 = vst [vmem:[%s962 + $0xab8] sm:$0xff] %v1649
                  %v1651 = vld [vmem:[%s961 + $0x1420] sm:$0xff]
                  %1652 = vst [vmem:[%s962 + $0xac0] sm:$0xff] %v1651
                  %v1653 = vld [vmem:[%s961 + $0x1428] sm:$0xff]
                  %1654 = vst [vmem:[%s962 + $0xac8] sm:$0xff] %v1653
                  %v1655 = vld [vmem:[%s961 + $0x1430] sm:$0xff]
                  %1656 = vst [vmem:[%s962 + $0xad0] sm:$0xff] %v1655
                  %v1657 = vld [vmem:[%s961 + $0x1438] sm:$0xff]
                  %1658 = vst [vmem:[%s962 + $0xad8] sm:$0xff] %v1657
                  %v1659 = vld [vmem:[%s961 + $0x1440] sm:$0xff]
                  %1660 = vst [vmem:[%s962 + $0xae0] sm:$0xff] %v1659
                  %v1661 = vld [vmem:[%s961 + $0x1448] sm:$0xff]
                  %1662 = vst [vmem:[%s962 + $0xae8] sm:$0xff] %v1661
                  %v1663 = vld [vmem:[%s961 + $0x15e0] sm:$0xff]
                  %1664 = vst [vmem:[%s962 + $0xaf0] sm:$0xff] %v1663
                  %v1665 = vld [vmem:[%s961 + $0x15e8] sm:$0xff]
                  %1666 = vst [vmem:[%s962 + $0xaf8] sm:$0xff] %v1665
                  %v1667 = vld [vmem:[%s961 + $0x15f0] sm:$0xff]
                  %1668 = vst [vmem:[%s962 + $0xb00] sm:$0xff] %v1667
                  %v1669 = vld [vmem:[%s961 + $0x15f8] sm:$0xff]
                  %1670 = vst [vmem:[%s962 + $0xb08] sm:$0xff] %v1669
                  %v1671 = vld [vmem:[%s961 + $0x1600] sm:$0xff]
                  %1672 = vst [vmem:[%s962 + $0xb10] sm:$0xff] %v1671
                  %v1673 = vld [vmem:[%s961 + $0x1608] sm:$0xff]
                  %1674 = vst [vmem:[%s962 + $0xb18] sm:$0xff] %v1673
                  %v1675 = vld [vmem:[%s961 + $0x1610] sm:$0xff]
                  %1676 = vst [vmem:[%s962 + $0xb20] sm:$0xff] %v1675
                  %v1677 = vld [vmem:[%s961 + $0x1618] sm:$0xff]
                  %1678 = vst [vmem:[%s962 + $0xb28] sm:$0xff] %v1677
                  %v1679 = vld [vmem:[%s961 + $0x1620] sm:$0xff]
                  %1680 = vst [vmem:[%s962 + $0xb30] sm:$0xff] %v1679
                  %v1681 = vld [vmem:[%s961 + $0x1628] sm:$0xff]
                  %1682 = vst [vmem:[%s962 + $0xb38] sm:$0xff] %v1681
                  %v1683 = vld [vmem:[%s961 + $0x1630] sm:$0xff]
                  %1684 = vst [vmem:[%s962 + $0xb40] sm:$0xff] %v1683
                  %v1685 = vld [vmem:[%s961 + $0x1638] sm:$0xff]
                  %1686 = vst [vmem:[%s962 + $0xb48] sm:$0xff] %v1685
                  %v1687 = vld [vmem:[%s961 + $0x1640] sm:$0xff]
                  %1688 = vst [vmem:[%s962 + $0xb50] sm:$0xff] %v1687
                  %v1689 = vld [vmem:[%s961 + $0x1648] sm:$0xff]
                  %1690 = vst [vmem:[%s962 + $0xb58] sm:$0xff] %v1689
                  %v1691 = vld [vmem:[%s961 + $0x1650] sm:$0xff]
                  %1692 = vst [vmem:[%s962 + $0xb60] sm:$0xff] %v1691
                  %v1693 = vld [vmem:[%s961 + $0x1658] sm:$0xff]
                  %1694 = vst [vmem:[%s962 + $0xb68] sm:$0xff] %v1693
                  %v1695 = vld [vmem:[%s961 + $0x1660] sm:$0xff]
                  %1696 = vst [vmem:[%s962 + $0xb70] sm:$0xff] %v1695
                  %v1697 = vld [vmem:[%s961 + $0x1668] sm:$0xff]
                  %1698 = vst [vmem:[%s962 + $0xb78] sm:$0xff] %v1697
                  %v1699 = vld [vmem:[%s961 + $0x1670] sm:$0xff]
                  %1700 = vst [vmem:[%s962 + $0xb80] sm:$0xff] %v1699
                  %v1701 = vld [vmem:[%s961 + $0x1678] sm:$0xff]
                  %1702 = vst [vmem:[%s962 + $0xb88] sm:$0xff] %v1701
                  %v1703 = vld [vmem:[%s961 + $0x1680] sm:$0xff]
                  %1704 = vst [vmem:[%s962 + $0xb90] sm:$0xff] %v1703
                  %v1705 = vld [vmem:[%s961 + $0x1688] sm:$0xff]
                  %1706 = vst [vmem:[%s962 + $0xb98] sm:$0xff] %v1705
                  %v1707 = vld [vmem:[%s961 + $0x1690] sm:$0xff]
                  %1708 = vst [vmem:[%s962 + $0xba0] sm:$0xff] %v1707
                  %v1709 = vld [vmem:[%s961 + $0x1698] sm:$0xff]
                  %1710 = vst [vmem:[%s962 + $0xba8] sm:$0xff] %v1709
                  %v1711 = vld [vmem:[%s961 + $0x16a0] sm:$0xff]
                  %1712 = vst [vmem:[%s962 + $0xbb0] sm:$0xff] %v1711
                  %v1713 = vld [vmem:[%s961 + $0x16a8] sm:$0xff]
                  %1714 = vst [vmem:[%s962 + $0xbb8] sm:$0xff] %v1713
                  %v1715 = vld [vmem:[%s961 + $0x16b0] sm:$0xff]
                  %1716 = vst [vmem:[%s962 + $0xbc0] sm:$0xff] %v1715
                  %v1717 = vld [vmem:[%s961 + $0x16b8] sm:$0xff]
                  %1718 = vst [vmem:[%s962 + $0xbc8] sm:$0xff] %v1717
                  %v1719 = vld [vmem:[%s961 + $0x16c0] sm:$0xff]
                  %1720 = vst [vmem:[%s962 + $0xbd0] sm:$0xff] %v1719
                  %v1721 = vld [vmem:[%s961 + $0x16c8] sm:$0xff]
                  %1722 = vst [vmem:[%s962 + $0xbd8] sm:$0xff] %v1721
                  %v1723 = vld [vmem:[%s961 + $0x16d0] sm:$0xff]
                  %1724 = vst [vmem:[%s962 + $0xbe0] sm:$0xff] %v1723
                  %v1725 = vld [vmem:[%s961 + $0x16d8] sm:$0xff]
                  %1726 = vst [vmem:[%s962 + $0xbe8] sm:$0xff] %v1725
                  %v1727 = vld [vmem:[%s961 + $0x16e0] sm:$0xff]
                  %1728 = vst [vmem:[%s962 + $0xbf0] sm:$0xff] %v1727
                  %v1729 = vld [vmem:[%s961 + $0x16e8] sm:$0xff]
                  %1730 = vst [vmem:[%s962 + $0xbf8] sm:$0xff] %v1729
                  %v1731 = vld [vmem:[%s961 + $0x16f0] sm:$0xff]
                  %1732 = vst [vmem:[%s962 + $0xc00] sm:$0xff] %v1731
                  %v1733 = vld [vmem:[%s961 + $0x16f8] sm:$0xff]
                  %1734 = vst [vmem:[%s962 + $0xc08] sm:$0xff] %v1733
                  %v1735 = vld [vmem:[%s961 + $0x1700] sm:$0xff]
                  %1736 = vst [vmem:[%s962 + $0xc10] sm:$0xff] %v1735
                  %v1737 = vld [vmem:[%s961 + $0x1708] sm:$0xff]
                  %1738 = vst [vmem:[%s962 + $0xc18] sm:$0xff] %v1737
                  %v1739 = vld [vmem:[%s961 + $0x1710] sm:$0xff]
                  %1740 = vst [vmem:[%s962 + $0xc20] sm:$0xff] %v1739
                  %v1741 = vld [vmem:[%s961 + $0x1718] sm:$0xff]
                  %1742 = vst [vmem:[%s962 + $0xc28] sm:$0xff] %v1741
                  %v1743 = vld [vmem:[%s961 + $0x1720] sm:$0xff]
                  %1744 = vst [vmem:[%s962 + $0xc30] sm:$0xff] %v1743
                  %v1745 = vld [vmem:[%s961 + $0x1728] sm:$0xff]
                  %1746 = vst [vmem:[%s962 + $0xc38] sm:$0xff] %v1745
                  %v1747 = vld [vmem:[%s961 + $0x1730] sm:$0xff]
                  %1748 = vst [vmem:[%s962 + $0xc40] sm:$0xff] %v1747
                  %v1749 = vld [vmem:[%s961 + $0x1738] sm:$0xff]
                  %1750 = vst [vmem:[%s962 + $0xc48] sm:$0xff] %v1749
                  %v1751 = vld [vmem:[%s961 + $0x1740] sm:$0xff]
                  %1752 = vst [vmem:[%s962 + $0xc50] sm:$0xff] %v1751
                  %v1753 = vld [vmem:[%s961 + $0x1748] sm:$0xff]
                  %1754 = vst [vmem:[%s962 + $0xc58] sm:$0xff] %v1753
                  %v1755 = vld [vmem:[%s961 + $0x1750] sm:$0xff]
                  %1756 = vst [vmem:[%s962 + $0xc60] sm:$0xff] %v1755
                  %v1757 = vld [vmem:[%s961 + $0x1758] sm:$0xff]
                  %1758 = vst [vmem:[%s962 + $0xc68] sm:$0xff] %v1757
                  %v1759 = vld [vmem:[%s961 + $0x1760] sm:$0xff]
                  %1760 = vst [vmem:[%s962 + $0xc70] sm:$0xff] %v1759
                  %v1761 = vld [vmem:[%s961 + $0x1768] sm:$0xff]
                  %1762 = vst [vmem:[%s962 + $0xc78] sm:$0xff] %v1761
                $region56: #{cnn3d_forward.2} parent=50 // loop_footer
                  %s960 = sadd.s32 1, %s956
                $region57: #{cnn3d_forward.2} parent=50 // loop_footer_branch
                  %955 = sbr.rel target = $region53
                $region58: #{cnn3d_forward.2} parent=50 // loop_exit
                  _
              $region51: #{cnn3d_forward.2} parent=35 // pred_fallthru
                _
              // Predicated region
              $region59: #{cnn3d_forward.2} parent=35 // pred_check
                _
              $region60: #{cnn3d_forward.2} parent=35 // pred_check_branch
                %1764 = sbr.rel target = $region62
              $region61: #{cnn3d_forward.2} parent=35 // pred_region
                _
              $region62: #{cnn3d_forward.2} parent=35 // pred_fallthru
                _
            $region36: #{cnn3d_forward.2} parent=31 // pred_fallthru
              _
            // Predicated region
            $region37: #{cnn3d_forward.2} parent=31 // pred_check
              _
            $region38: #{cnn3d_forward.2} parent=31 // pred_check_branch
              %143 = sbr.rel target = $region40
            $region39: #{cnn3d_forward.2} parent=31 // pred_region
              loop: start=0, step=1, limit=1
              $region41: #{cnn3d_forward.2} parent=39 // loop_pre_header
                _
              $region42: #{cnn3d_forward.2} parent=39 // loop_header
                %s146 = sphi 0, %s150
                %p147 = scmp.ge.s32.totalorder %s146, 1
                %s151 = sphi %s137, %s137
                %s152 = sphi %s134, %s134
              $region43: #{cnn3d_forward.2} parent=39 // loop_header_branch
                %149 = sbr.rel (%p147) target = $region47
              $region44: #{cnn3d_forward.2} parent=39 // loop_body
                %v153 = vld [vmem:[%s151] sm:$0xff]
                %154 = vst [vmem:[%s152] sm:$0xff] %v153
                %v155 = vld [vmem:[%s151 + $0x8] sm:$0xff]
                %156 = vst [vmem:[%s152 + $0x8] sm:$0xff] %v155
                %v157 = vld [vmem:[%s151 + $0x10] sm:$0xff]
                %158 = vst [vmem:[%s152 + $0x10] sm:$0xff] %v157
                %v159 = vld [vmem:[%s151 + $0x18] sm:$0xff]
                %160 = vst [vmem:[%s152 + $0x18] sm:$0xff] %v159
                %v161 = vld [vmem:[%s151 + $0x20] sm:$0xff]
                %162 = vst [vmem:[%s152 + $0x20] sm:$0xff] %v161
                %v163 = vld [vmem:[%s151 + $0x28] sm:$0xff]
                %164 = vst [vmem:[%s152 + $0x28] sm:$0xff] %v163
                %v165 = vld [vmem:[%s151 + $0x30] sm:$0xff]
                %166 = vst [vmem:[%s152 + $0x30] sm:$0xff] %v165
                %v167 = vld [vmem:[%s151 + $0x38] sm:$0xff]
                %168 = vst [vmem:[%s152 + $0x38] sm:$0xff] %v167
                %v169 = vld [vmem:[%s151 + $0x40] sm:$0xff]
                %170 = vst [vmem:[%s152 + $0x40] sm:$0xff] %v169
                %v171 = vld [vmem:[%s151 + $0x48] sm:$0xff]
                %172 = vst [vmem:[%s152 + $0x48] sm:$0xff] %v171
                %v173 = vld [vmem:[%s151 + $0x50] sm:$0xff]
                %174 = vst [vmem:[%s152 + $0x50] sm:$0xff] %v173
                %v175 = vld [vmem:[%s151 + $0x58] sm:$0xff]
                %176 = vst [vmem:[%s152 + $0x58] sm:$0xff] %v175
                %v177 = vld [vmem:[%s151 + $0x60] sm:$0xff]
                %178 = vst [vmem:[%s152 + $0x60] sm:$0xff] %v177
                %v179 = vld [vmem:[%s151 + $0x68] sm:$0xff]
                %180 = vst [vmem:[%s152 + $0x68] sm:$0xff] %v179
                %v181 = vld [vmem:[%s151 + $0x70] sm:$0xff]
                %182 = vst [vmem:[%s152 + $0x70] sm:$0xff] %v181
                %v183 = vld [vmem:[%s151 + $0x78] sm:$0xff]
                %184 = vst [vmem:[%s152 + $0x78] sm:$0xff] %v183
                %v185 = vld [vmem:[%s151 + $0x80] sm:$0xff]
                %186 = vst [vmem:[%s152 + $0x80] sm:$0xff] %v185
                %v187 = vld [vmem:[%s151 + $0x88] sm:$0xff]
                %188 = vst [vmem:[%s152 + $0x88] sm:$0xff] %v187
                %v189 = vld [vmem:[%s151 + $0x90] sm:$0xff]
                %190 = vst [vmem:[%s152 + $0x90] sm:$0xff] %v189
                %v191 = vld [vmem:[%s151 + $0x98] sm:$0xff]
                %192 = vst [vmem:[%s152 + $0x98] sm:$0xff] %v191
                %v193 = vld [vmem:[%s151 + $0xa0] sm:$0xff]
                %194 = vst [vmem:[%s152 + $0xa0] sm:$0xff] %v193
                %v195 = vld [vmem:[%s151 + $0xa8] sm:$0xff]
                %196 = vst [vmem:[%s152 + $0xa8] sm:$0xff] %v195
                %v197 = vld [vmem:[%s151 + $0xb0] sm:$0xff]
                %198 = vst [vmem:[%s152 + $0xb0] sm:$0xff] %v197
                %v199 = vld [vmem:[%s151 + $0xb8] sm:$0xff]
                %200 = vst [vmem:[%s152 + $0xb8] sm:$0xff] %v199
                %v201 = vld [vmem:[%s151 + $0xc0] sm:$0xff]
                %202 = vst [vmem:[%s152 + $0xc0] sm:$0xff] %v201
                %v203 = vld [vmem:[%s151 + $0xc8] sm:$0xff]
                %204 = vst [vmem:[%s152 + $0xc8] sm:$0xff] %v203
                %v205 = vld [vmem:[%s151 + $0xd0] sm:$0xff]
                %206 = vst [vmem:[%s152 + $0xd0] sm:$0xff] %v205
                %v207 = vld [vmem:[%s151 + $0xd8] sm:$0xff]
                %208 = vst [vmem:[%s152 + $0xd8] sm:$0xff] %v207
                %v209 = vld [vmem:[%s151 + $0xe0] sm:$0xff]
                %210 = vst [vmem:[%s152 + $0xe0] sm:$0xff] %v209
                %v211 = vld [vmem:[%s151 + $0xe8] sm:$0xff]
                %212 = vst [vmem:[%s152 + $0xe8] sm:$0xff] %v211
                %v213 = vld [vmem:[%s151 + $0xf0] sm:$0xff]
                %214 = vst [vmem:[%s152 + $0xf0] sm:$0xff] %v213
                %v215 = vld [vmem:[%s151 + $0xf8] sm:$0xff]
                %216 = vst [vmem:[%s152 + $0xf8] sm:$0xff] %v215
                %v217 = vld [vmem:[%s151 + $0x100] sm:$0xff]
                %218 = vst [vmem:[%s152 + $0x100] sm:$0xff] %v217
                %v219 = vld [vmem:[%s151 + $0x108] sm:$0xff]
                %220 = vst [vmem:[%s152 + $0x108] sm:$0xff] %v219
                %v221 = vld [vmem:[%s151 + $0x110] sm:$0xff]
                %222 = vst [vmem:[%s152 + $0x110] sm:$0xff] %v221
                %v223 = vld [vmem:[%s151 + $0x118] sm:$0xff]
                %224 = vst [vmem:[%s152 + $0x118] sm:$0xff] %v223
                %v225 = vld [vmem:[%s151 + $0x120] sm:$0xff]
                %226 = vst [vmem:[%s152 + $0x120] sm:$0xff] %v225
                %v227 = vld [vmem:[%s151 + $0x128] sm:$0xff]
                %228 = vst [vmem:[%s152 + $0x128] sm:$0xff] %v227
                %v229 = vld [vmem:[%s151 + $0x130] sm:$0xff]
                %230 = vst [vmem:[%s152 + $0x130] sm:$0xff] %v229
                %v231 = vld [vmem:[%s151 + $0x138] sm:$0xff]
                %232 = vst [vmem:[%s152 + $0x138] sm:$0xff] %v231
                %v233 = vld [vmem:[%s151 + $0x140] sm:$0xff]
                %234 = vst [vmem:[%s152 + $0x140] sm:$0xff] %v233
                %v235 = vld [vmem:[%s151 + $0x148] sm:$0xff]
                %236 = vst [vmem:[%s152 + $0x148] sm:$0xff] %v235
                %v237 = vld [vmem:[%s151 + $0x150] sm:$0xff]
                %238 = vst [vmem:[%s152 + $0x150] sm:$0xff] %v237
                %v239 = vld [vmem:[%s151 + $0x158] sm:$0xff]
                %240 = vst [vmem:[%s152 + $0x158] sm:$0xff] %v239
                %v241 = vld [vmem:[%s151 + $0x160] sm:$0xff]
                %242 = vst [vmem:[%s152 + $0x160] sm:$0xff] %v241
                %v243 = vld [vmem:[%s151 + $0x168] sm:$0xff]
                %244 = vst [vmem:[%s152 + $0x168] sm:$0xff] %v243
                %v245 = vld [vmem:[%s151 + $0x170] sm:$0xff]
                %246 = vst [vmem:[%s152 + $0x170] sm:$0xff] %v245
                %v247 = vld [vmem:[%s151 + $0x178] sm:$0xff]
                %248 = vst [vmem:[%s152 + $0x178] sm:$0xff] %v247
                %v249 = vld [vmem:[%s151 + $0x180] sm:$0xff]
                %250 = vst [vmem:[%s152 + $0x180] sm:$0xff] %v249
                %v251 = vld [vmem:[%s151 + $0x188] sm:$0xff]
                %252 = vst [vmem:[%s152 + $0x188] sm:$0xff] %v251
                %v253 = vld [vmem:[%s151 + $0x320] sm:$0xff]
                %254 = vst [vmem:[%s152 + $0x190] sm:$0xff] %v253
                %v255 = vld [vmem:[%s151 + $0x328] sm:$0xff]
                %256 = vst [vmem:[%s152 + $0x198] sm:$0xff] %v255
                %v257 = vld [vmem:[%s151 + $0x330] sm:$0xff]
                %258 = vst [vmem:[%s152 + $0x1a0] sm:$0xff] %v257
                %v259 = vld [vmem:[%s151 + $0x338] sm:$0xff]
                %260 = vst [vmem:[%s152 + $0x1a8] sm:$0xff] %v259
                %v261 = vld [vmem:[%s151 + $0x340] sm:$0xff]
                %262 = vst [vmem:[%s152 + $0x1b0] sm:$0xff] %v261
                %v263 = vld [vmem:[%s151 + $0x348] sm:$0xff]
                %264 = vst [vmem:[%s152 + $0x1b8] sm:$0xff] %v263
                %v265 = vld [vmem:[%s151 + $0x350] sm:$0xff]
                %266 = vst [vmem:[%s152 + $0x1c0] sm:$0xff] %v265
                %v267 = vld [vmem:[%s151 + $0x358] sm:$0xff]
                %268 = vst [vmem:[%s152 + $0x1c8] sm:$0xff] %v267
                %v269 = vld [vmem:[%s151 + $0x360] sm:$0xff]
                %270 = vst [vmem:[%s152 + $0x1d0] sm:$0xff] %v269
                %v271 = vld [vmem:[%s151 + $0x368] sm:$0xff]
                %272 = vst [vmem:[%s152 + $0x1d8] sm:$0xff] %v271
                %v273 = vld [vmem:[%s151 + $0x370] sm:$0xff]
                %274 = vst [vmem:[%s152 + $0x1e0] sm:$0xff] %v273
                %v275 = vld [vmem:[%s151 + $0x378] sm:$0xff]
                %276 = vst [vmem:[%s152 + $0x1e8] sm:$0xff] %v275
                %v277 = vld [vmem:[%s151 + $0x380] sm:$0xff]
                %278 = vst [vmem:[%s152 + $0x1f0] sm:$0xff] %v277
                %v279 = vld [vmem:[%s151 + $0x388] sm:$0xff]
                %280 = vst [vmem:[%s152 + $0x1f8] sm:$0xff] %v279
                %v281 = vld [vmem:[%s151 + $0x390] sm:$0xff]
                %282 = vst [vmem:[%s152 + $0x200] sm:$0xff] %v281
                %v283 = vld [vmem:[%s151 + $0x398] sm:$0xff]
                %284 = vst [vmem:[%s152 + $0x208] sm:$0xff] %v283
                %v285 = vld [vmem:[%s151 + $0x3a0] sm:$0xff]
                %286 = vst [vmem:[%s152 + $0x210] sm:$0xff] %v285
                %v287 = vld [vmem:[%s151 + $0x3a8] sm:$0xff]
                %288 = vst [vmem:[%s152 + $0x218] sm:$0xff] %v287
                %v289 = vld [vmem:[%s151 + $0x3b0] sm:$0xff]
                %290 = vst [vmem:[%s152 + $0x220] sm:$0xff] %v289
                %v291 = vld [vmem:[%s151 + $0x3b8] sm:$0xff]
                %292 = vst [vmem:[%s152 + $0x228] sm:$0xff] %v291
                %v293 = vld [vmem:[%s151 + $0x3c0] sm:$0xff]
                %294 = vst [vmem:[%s152 + $0x230] sm:$0xff] %v293
                %v295 = vld [vmem:[%s151 + $0x3c8] sm:$0xff]
                %296 = vst [vmem:[%s152 + $0x238] sm:$0xff] %v295
                %v297 = vld [vmem:[%s151 + $0x3d0] sm:$0xff]
                %298 = vst [vmem:[%s152 + $0x240] sm:$0xff] %v297
                %v299 = vld [vmem:[%s151 + $0x3d8] sm:$0xff]
                %300 = vst [vmem:[%s152 + $0x248] sm:$0xff] %v299
                %v301 = vld [vmem:[%s151 + $0x3e0] sm:$0xff]
                %302 = vst [vmem:[%s152 + $0x250] sm:$0xff] %v301
                %v303 = vld [vmem:[%s151 + $0x3e8] sm:$0xff]
                %304 = vst [vmem:[%s152 + $0x258] sm:$0xff] %v303
                %v305 = vld [vmem:[%s151 + $0x3f0] sm:$0xff]
                %306 = vst [vmem:[%s152 + $0x260] sm:$0xff] %v305
                %v307 = vld [vmem:[%s151 + $0x3f8] sm:$0xff]
                %308 = vst [vmem:[%s152 + $0x268] sm:$0xff] %v307
                %v309 = vld [vmem:[%s151 + $0x400] sm:$0xff]
                %310 = vst [vmem:[%s152 + $0x270] sm:$0xff] %v309
                %v311 = vld [vmem:[%s151 + $0x408] sm:$0xff]
                %312 = vst [vmem:[%s152 + $0x278] sm:$0xff] %v311
                %v313 = vld [vmem:[%s151 + $0x410] sm:$0xff]
                %314 = vst [vmem:[%s152 + $0x280] sm:$0xff] %v313
                %v315 = vld [vmem:[%s151 + $0x418] sm:$0xff]
                %316 = vst [vmem:[%s152 + $0x288] sm:$0xff] %v315
                %v317 = vld [vmem:[%s151 + $0x420] sm:$0xff]
                %318 = vst [vmem:[%s152 + $0x290] sm:$0xff] %v317
                %v319 = vld [vmem:[%s151 + $0x428] sm:$0xff]
                %320 = vst [vmem:[%s152 + $0x298] sm:$0xff] %v319
                %v321 = vld [vmem:[%s151 + $0x430] sm:$0xff]
                %322 = vst [vmem:[%s152 + $0x2a0] sm:$0xff] %v321
                %v323 = vld [vmem:[%s151 + $0x438] sm:$0xff]
                %324 = vst [vmem:[%s152 + $0x2a8] sm:$0xff] %v323
                %v325 = vld [vmem:[%s151 + $0x440] sm:$0xff]
                %326 = vst [vmem:[%s152 + $0x2b0] sm:$0xff] %v325
                %v327 = vld [vmem:[%s151 + $0x448] sm:$0xff]
                %328 = vst [vmem:[%s152 + $0x2b8] sm:$0xff] %v327
                %v329 = vld [vmem:[%s151 + $0x450] sm:$0xff]
                %330 = vst [vmem:[%s152 + $0x2c0] sm:$0xff] %v329
                %v331 = vld [vmem:[%s151 + $0x458] sm:$0xff]
                %332 = vst [vmem:[%s152 + $0x2c8] sm:$0xff] %v331
                %v333 = vld [vmem:[%s151 + $0x460] sm:$0xff]
                %334 = vst [vmem:[%s152 + $0x2d0] sm:$0xff] %v333
                %v335 = vld [vmem:[%s151 + $0x468] sm:$0xff]
                %336 = vst [vmem:[%s152 + $0x2d8] sm:$0xff] %v335
                %v337 = vld [vmem:[%s151 + $0x470] sm:$0xff]
                %338 = vst [vmem:[%s152 + $0x2e0] sm:$0xff] %v337
                %v339 = vld [vmem:[%s151 + $0x478] sm:$0xff]
                %340 = vst [vmem:[%s152 + $0x2e8] sm:$0xff] %v339
                %v341 = vld [vmem:[%s151 + $0x480] sm:$0xff]
                %342 = vst [vmem:[%s152 + $0x2f0] sm:$0xff] %v341
                %v343 = vld [vmem:[%s151 + $0x488] sm:$0xff]
                %344 = vst [vmem:[%s152 + $0x2f8] sm:$0xff] %v343
                %v345 = vld [vmem:[%s151 + $0x490] sm:$0xff]
                %346 = vst [vmem:[%s152 + $0x300] sm:$0xff] %v345
                %v347 = vld [vmem:[%s151 + $0x498] sm:$0xff]
                %348 = vst [vmem:[%s152 + $0x308] sm:$0xff] %v347
                %v349 = vld [vmem:[%s151 + $0x4a0] sm:$0xff]
                %350 = vst [vmem:[%s152 + $0x310] sm:$0xff] %v349
                %v351 = vld [vmem:[%s151 + $0x4a8] sm:$0xff]
                %352 = vst [vmem:[%s152 + $0x318] sm:$0xff] %v351
                %v353 = vld [vmem:[%s151 + $0x640] sm:$0xff]
                %354 = vst [vmem:[%s152 + $0x320] sm:$0xff] %v353
                %v355 = vld [vmem:[%s151 + $0x648] sm:$0xff]
                %356 = vst [vmem:[%s152 + $0x328] sm:$0xff] %v355
                %v357 = vld [vmem:[%s151 + $0x650] sm:$0xff]
                %358 = vst [vmem:[%s152 + $0x330] sm:$0xff] %v357
                %v359 = vld [vmem:[%s151 + $0x658] sm:$0xff]
                %360 = vst [vmem:[%s152 + $0x338] sm:$0xff] %v359
                %v361 = vld [vmem:[%s151 + $0x660] sm:$0xff]
                %362 = vst [vmem:[%s152 + $0x340] sm:$0xff] %v361
                %v363 = vld [vmem:[%s151 + $0x668] sm:$0xff]
                %364 = vst [vmem:[%s152 + $0x348] sm:$0xff] %v363
                %v365 = vld [vmem:[%s151 + $0x670] sm:$0xff]
                %366 = vst [vmem:[%s152 + $0x350] sm:$0xff] %v365
                %v367 = vld [vmem:[%s151 + $0x678] sm:$0xff]
                %368 = vst [vmem:[%s152 + $0x358] sm:$0xff] %v367
                %v369 = vld [vmem:[%s151 + $0x680] sm:$0xff]
                %370 = vst [vmem:[%s152 + $0x360] sm:$0xff] %v369
                %v371 = vld [vmem:[%s151 + $0x688] sm:$0xff]
                %372 = vst [vmem:[%s152 + $0x368] sm:$0xff] %v371
                %v373 = vld [vmem:[%s151 + $0x690] sm:$0xff]
                %374 = vst [vmem:[%s152 + $0x370] sm:$0xff] %v373
                %v375 = vld [vmem:[%s151 + $0x698] sm:$0xff]
                %376 = vst [vmem:[%s152 + $0x378] sm:$0xff] %v375
                %v377 = vld [vmem:[%s151 + $0x6a0] sm:$0xff]
                %378 = vst [vmem:[%s152 + $0x380] sm:$0xff] %v377
                %v379 = vld [vmem:[%s151 + $0x6a8] sm:$0xff]
                %380 = vst [vmem:[%s152 + $0x388] sm:$0xff] %v379
                %v381 = vld [vmem:[%s151 + $0x6b0] sm:$0xff]
                %382 = vst [vmem:[%s152 + $0x390] sm:$0xff] %v381
                %v383 = vld [vmem:[%s151 + $0x6b8] sm:$0xff]
                %384 = vst [vmem:[%s152 + $0x398] sm:$0xff] %v383
                %v385 = vld [vmem:[%s151 + $0x6c0] sm:$0xff]
                %386 = vst [vmem:[%s152 + $0x3a0] sm:$0xff] %v385
                %v387 = vld [vmem:[%s151 + $0x6c8] sm:$0xff]
                %388 = vst [vmem:[%s152 + $0x3a8] sm:$0xff] %v387
                %v389 = vld [vmem:[%s151 + $0x6d0] sm:$0xff]
                %390 = vst [vmem:[%s152 + $0x3b0] sm:$0xff] %v389
                %v391 = vld [vmem:[%s151 + $0x6d8] sm:$0xff]
                %392 = vst [vmem:[%s152 + $0x3b8] sm:$0xff] %v391
                %v393 = vld [vmem:[%s151 + $0x6e0] sm:$0xff]
                %394 = vst [vmem:[%s152 + $0x3c0] sm:$0xff] %v393
                %v395 = vld [vmem:[%s151 + $0x6e8] sm:$0xff]
                %396 = vst [vmem:[%s152 + $0x3c8] sm:$0xff] %v395
                %v397 = vld [vmem:[%s151 + $0x6f0] sm:$0xff]
                %398 = vst [vmem:[%s152 + $0x3d0] sm:$0xff] %v397
                %v399 = vld [vmem:[%s151 + $0x6f8] sm:$0xff]
                %400 = vst [vmem:[%s152 + $0x3d8] sm:$0xff] %v399
                %v401 = vld [vmem:[%s151 + $0x700] sm:$0xff]
                %402 = vst [vmem:[%s152 + $0x3e0] sm:$0xff] %v401
                %v403 = vld [vmem:[%s151 + $0x708] sm:$0xff]
                %404 = vst [vmem:[%s152 + $0x3e8] sm:$0xff] %v403
                %v405 = vld [vmem:[%s151 + $0x710] sm:$0xff]
                %406 = vst [vmem:[%s152 + $0x3f0] sm:$0xff] %v405
                %v407 = vld [vmem:[%s151 + $0x718] sm:$0xff]
                %408 = vst [vmem:[%s152 + $0x3f8] sm:$0xff] %v407
                %v409 = vld [vmem:[%s151 + $0x720] sm:$0xff]
                %410 = vst [vmem:[%s152 + $0x400] sm:$0xff] %v409
                %v411 = vld [vmem:[%s151 + $0x728] sm:$0xff]
                %412 = vst [vmem:[%s152 + $0x408] sm:$0xff] %v411
                %v413 = vld [vmem:[%s151 + $0x730] sm:$0xff]
                %414 = vst [vmem:[%s152 + $0x410] sm:$0xff] %v413
                %v415 = vld [vmem:[%s151 + $0x738] sm:$0xff]
                %416 = vst [vmem:[%s152 + $0x418] sm:$0xff] %v415
                %v417 = vld [vmem:[%s151 + $0x740] sm:$0xff]
                %418 = vst [vmem:[%s152 + $0x420] sm:$0xff] %v417
                %v419 = vld [vmem:[%s151 + $0x748] sm:$0xff]
                %420 = vst [vmem:[%s152 + $0x428] sm:$0xff] %v419
                %v421 = vld [vmem:[%s151 + $0x750] sm:$0xff]
                %422 = vst [vmem:[%s152 + $0x430] sm:$0xff] %v421
                %v423 = vld [vmem:[%s151 + $0x758] sm:$0xff]
                %424 = vst [vmem:[%s152 + $0x438] sm:$0xff] %v423
                %v425 = vld [vmem:[%s151 + $0x760] sm:$0xff]
                %426 = vst [vmem:[%s152 + $0x440] sm:$0xff] %v425
                %v427 = vld [vmem:[%s151 + $0x768] sm:$0xff]
                %428 = vst [vmem:[%s152 + $0x448] sm:$0xff] %v427
                %v429 = vld [vmem:[%s151 + $0x770] sm:$0xff]
                %430 = vst [vmem:[%s152 + $0x450] sm:$0xff] %v429
                %v431 = vld [vmem:[%s151 + $0x778] sm:$0xff]
                %432 = vst [vmem:[%s152 + $0x458] sm:$0xff] %v431
                %v433 = vld [vmem:[%s151 + $0x780] sm:$0xff]
                %434 = vst [vmem:[%s152 + $0x460] sm:$0xff] %v433
                %v435 = vld [vmem:[%s151 + $0x788] sm:$0xff]
                %436 = vst [vmem:[%s152 + $0x468] sm:$0xff] %v435
                %v437 = vld [vmem:[%s151 + $0x790] sm:$0xff]
                %438 = vst [vmem:[%s152 + $0x470] sm:$0xff] %v437
                %v439 = vld [vmem:[%s151 + $0x798] sm:$0xff]
                %440 = vst [vmem:[%s152 + $0x478] sm:$0xff] %v439
                %v441 = vld [vmem:[%s151 + $0x7a0] sm:$0xff]
                %442 = vst [vmem:[%s152 + $0x480] sm:$0xff] %v441
                %v443 = vld [vmem:[%s151 + $0x7a8] sm:$0xff]
                %444 = vst [vmem:[%s152 + $0x488] sm:$0xff] %v443
                %v445 = vld [vmem:[%s151 + $0x7b0] sm:$0xff]
                %446 = vst [vmem:[%s152 + $0x490] sm:$0xff] %v445
                %v447 = vld [vmem:[%s151 + $0x7b8] sm:$0xff]
                %448 = vst [vmem:[%s152 + $0x498] sm:$0xff] %v447
                %v449 = vld [vmem:[%s151 + $0x7c0] sm:$0xff]
                %450 = vst [vmem:[%s152 + $0x4a0] sm:$0xff] %v449
                %v451 = vld [vmem:[%s151 + $0x7c8] sm:$0xff]
                %452 = vst [vmem:[%s152 + $0x4a8] sm:$0xff] %v451
                %v453 = vld [vmem:[%s151 + $0x960] sm:$0xff]
                %454 = vst [vmem:[%s152 + $0x4b0] sm:$0xff] %v453
                %v455 = vld [vmem:[%s151 + $0x968] sm:$0xff]
                %456 = vst [vmem:[%s152 + $0x4b8] sm:$0xff] %v455
                %v457 = vld [vmem:[%s151 + $0x970] sm:$0xff]
                %458 = vst [vmem:[%s152 + $0x4c0] sm:$0xff] %v457
                %v459 = vld [vmem:[%s151 + $0x978] sm:$0xff]
                %460 = vst [vmem:[%s152 + $0x4c8] sm:$0xff] %v459
                %v461 = vld [vmem:[%s151 + $0x980] sm:$0xff]
                %462 = vst [vmem:[%s152 + $0x4d0] sm:$0xff] %v461
                %v463 = vld [vmem:[%s151 + $0x988] sm:$0xff]
                %464 = vst [vmem:[%s152 + $0x4d8] sm:$0xff] %v463
                %v465 = vld [vmem:[%s151 + $0x990] sm:$0xff]
                %466 = vst [vmem:[%s152 + $0x4e0] sm:$0xff] %v465
                %v467 = vld [vmem:[%s151 + $0x998] sm:$0xff]
                %468 = vst [vmem:[%s152 + $0x4e8] sm:$0xff] %v467
                %v469 = vld [vmem:[%s151 + $0x9a0] sm:$0xff]
                %470 = vst [vmem:[%s152 + $0x4f0] sm:$0xff] %v469
                %v471 = vld [vmem:[%s151 + $0x9a8] sm:$0xff]
                %472 = vst [vmem:[%s152 + $0x4f8] sm:$0xff] %v471
                %v473 = vld [vmem:[%s151 + $0x9b0] sm:$0xff]
                %474 = vst [vmem:[%s152 + $0x500] sm:$0xff] %v473
                %v475 = vld [vmem:[%s151 + $0x9b8] sm:$0xff]
                %476 = vst [vmem:[%s152 + $0x508] sm:$0xff] %v475
                %v477 = vld [vmem:[%s151 + $0x9c0] sm:$0xff]
                %478 = vst [vmem:[%s152 + $0x510] sm:$0xff] %v477
                %v479 = vld [vmem:[%s151 + $0x9c8] sm:$0xff]
                %480 = vst [vmem:[%s152 + $0x518] sm:$0xff] %v479
                %v481 = vld [vmem:[%s151 + $0x9d0] sm:$0xff]
                %482 = vst [vmem:[%s152 + $0x520] sm:$0xff] %v481
                %v483 = vld [vmem:[%s151 + $0x9d8] sm:$0xff]
                %484 = vst [vmem:[%s152 + $0x528] sm:$0xff] %v483
                %v485 = vld [vmem:[%s151 + $0x9e0] sm:$0xff]
                %486 = vst [vmem:[%s152 + $0x530] sm:$0xff] %v485
                %v487 = vld [vmem:[%s151 + $0x9e8] sm:$0xff]
                %488 = vst [vmem:[%s152 + $0x538] sm:$0xff] %v487
                %v489 = vld [vmem:[%s151 + $0x9f0] sm:$0xff]
                %490 = vst [vmem:[%s152 + $0x540] sm:$0xff] %v489
                %v491 = vld [vmem:[%s151 + $0x9f8] sm:$0xff]
                %492 = vst [vmem:[%s152 + $0x548] sm:$0xff] %v491
                %v493 = vld [vmem:[%s151 + $0xa00] sm:$0xff]
                %494 = vst [vmem:[%s152 + $0x550] sm:$0xff] %v493
                %v495 = vld [vmem:[%s151 + $0xa08] sm:$0xff]
                %496 = vst [vmem:[%s152 + $0x558] sm:$0xff] %v495
                %v497 = vld [vmem:[%s151 + $0xa10] sm:$0xff]
                %498 = vst [vmem:[%s152 + $0x560] sm:$0xff] %v497
                %v499 = vld [vmem:[%s151 + $0xa18] sm:$0xff]
                %500 = vst [vmem:[%s152 + $0x568] sm:$0xff] %v499
                %v501 = vld [vmem:[%s151 + $0xa20] sm:$0xff]
                %502 = vst [vmem:[%s152 + $0x570] sm:$0xff] %v501
                %v503 = vld [vmem:[%s151 + $0xa28] sm:$0xff]
                %504 = vst [vmem:[%s152 + $0x578] sm:$0xff] %v503
                %v505 = vld [vmem:[%s151 + $0xa30] sm:$0xff]
                %506 = vst [vmem:[%s152 + $0x580] sm:$0xff] %v505
                %v507 = vld [vmem:[%s151 + $0xa38] sm:$0xff]
                %508 = vst [vmem:[%s152 + $0x588] sm:$0xff] %v507
                %v509 = vld [vmem:[%s151 + $0xa40] sm:$0xff]
                %510 = vst [vmem:[%s152 + $0x590] sm:$0xff] %v509
                %v511 = vld [vmem:[%s151 + $0xa48] sm:$0xff]
                %512 = vst [vmem:[%s152 + $0x598] sm:$0xff] %v511
                %v513 = vld [vmem:[%s151 + $0xa50] sm:$0xff]
                %514 = vst [vmem:[%s152 + $0x5a0] sm:$0xff] %v513
                %v515 = vld [vmem:[%s151 + $0xa58] sm:$0xff]
                %516 = vst [vmem:[%s152 + $0x5a8] sm:$0xff] %v515
                %v517 = vld [vmem:[%s151 + $0xa60] sm:$0xff]
                %518 = vst [vmem:[%s152 + $0x5b0] sm:$0xff] %v517
                %v519 = vld [vmem:[%s151 + $0xa68] sm:$0xff]
                %520 = vst [vmem:[%s152 + $0x5b8] sm:$0xff] %v519
                %v521 = vld [vmem:[%s151 + $0xa70] sm:$0xff]
                %522 = vst [vmem:[%s152 + $0x5c0] sm:$0xff] %v521
                %v523 = vld [vmem:[%s151 + $0xa78] sm:$0xff]
                %524 = vst [vmem:[%s152 + $0x5c8] sm:$0xff] %v523
                %v525 = vld [vmem:[%s151 + $0xa80] sm:$0xff]
                %526 = vst [vmem:[%s152 + $0x5d0] sm:$0xff] %v525
                %v527 = vld [vmem:[%s151 + $0xa88] sm:$0xff]
                %528 = vst [vmem:[%s152 + $0x5d8] sm:$0xff] %v527
                %v529 = vld [vmem:[%s151 + $0xa90] sm:$0xff]
                %530 = vst [vmem:[%s152 + $0x5e0] sm:$0xff] %v529
                %v531 = vld [vmem:[%s151 + $0xa98] sm:$0xff]
                %532 = vst [vmem:[%s152 + $0x5e8] sm:$0xff] %v531
                %v533 = vld [vmem:[%s151 + $0xaa0] sm:$0xff]
                %534 = vst [vmem:[%s152 + $0x5f0] sm:$0xff] %v533
                %v535 = vld [vmem:[%s151 + $0xaa8] sm:$0xff]
                %536 = vst [vmem:[%s152 + $0x5f8] sm:$0xff] %v535
                %v537 = vld [vmem:[%s151 + $0xab0] sm:$0xff]
                %538 = vst [vmem:[%s152 + $0x600] sm:$0xff] %v537
                %v539 = vld [vmem:[%s151 + $0xab8] sm:$0xff]
                %540 = vst [vmem:[%s152 + $0x608] sm:$0xff] %v539
                %v541 = vld [vmem:[%s151 + $0xac0] sm:$0xff]
                %542 = vst [vmem:[%s152 + $0x610] sm:$0xff] %v541
                %v543 = vld [vmem:[%s151 + $0xac8] sm:$0xff]
                %544 = vst [vmem:[%s152 + $0x618] sm:$0xff] %v543
                %v545 = vld [vmem:[%s151 + $0xad0] sm:$0xff]
                %546 = vst [vmem:[%s152 + $0x620] sm:$0xff] %v545
                %v547 = vld [vmem:[%s151 + $0xad8] sm:$0xff]
                %548 = vst [vmem:[%s152 + $0x628] sm:$0xff] %v547
                %v549 = vld [vmem:[%s151 + $0xae0] sm:$0xff]
                %550 = vst [vmem:[%s152 + $0x630] sm:$0xff] %v549
                %v551 = vld [vmem:[%s151 + $0xae8] sm:$0xff]
                %552 = vst [vmem:[%s152 + $0x638] sm:$0xff] %v551
                %v553 = vld [vmem:[%s151 + $0xc80] sm:$0xff]
                %554 = vst [vmem:[%s152 + $0x640] sm:$0xff] %v553
                %v555 = vld [vmem:[%s151 + $0xc88] sm:$0xff]
                %556 = vst [vmem:[%s152 + $0x648] sm:$0xff] %v555
                %v557 = vld [vmem:[%s151 + $0xc90] sm:$0xff]
                %558 = vst [vmem:[%s152 + $0x650] sm:$0xff] %v557
                %v559 = vld [vmem:[%s151 + $0xc98] sm:$0xff]
                %560 = vst [vmem:[%s152 + $0x658] sm:$0xff] %v559
                %v561 = vld [vmem:[%s151 + $0xca0] sm:$0xff]
                %562 = vst [vmem:[%s152 + $0x660] sm:$0xff] %v561
                %v563 = vld [vmem:[%s151 + $0xca8] sm:$0xff]
                %564 = vst [vmem:[%s152 + $0x668] sm:$0xff] %v563
                %v565 = vld [vmem:[%s151 + $0xcb0] sm:$0xff]
                %566 = vst [vmem:[%s152 + $0x670] sm:$0xff] %v565
                %v567 = vld [vmem:[%s151 + $0xcb8] sm:$0xff]
                %568 = vst [vmem:[%s152 + $0x678] sm:$0xff] %v567
                %v569 = vld [vmem:[%s151 + $0xcc0] sm:$0xff]
                %570 = vst [vmem:[%s152 + $0x680] sm:$0xff] %v569
                %v571 = vld [vmem:[%s151 + $0xcc8] sm:$0xff]
                %572 = vst [vmem:[%s152 + $0x688] sm:$0xff] %v571
                %v573 = vld [vmem:[%s151 + $0xcd0] sm:$0xff]
                %574 = vst [vmem:[%s152 + $0x690] sm:$0xff] %v573
                %v575 = vld [vmem:[%s151 + $0xcd8] sm:$0xff]
                %576 = vst [vmem:[%s152 + $0x698] sm:$0xff] %v575
                %v577 = vld [vmem:[%s151 + $0xce0] sm:$0xff]
                %578 = vst [vmem:[%s152 + $0x6a0] sm:$0xff] %v577
                %v579 = vld [vmem:[%s151 + $0xce8] sm:$0xff]
                %580 = vst [vmem:[%s152 + $0x6a8] sm:$0xff] %v579
                %v581 = vld [vmem:[%s151 + $0xcf0] sm:$0xff]
                %582 = vst [vmem:[%s152 + $0x6b0] sm:$0xff] %v581
                %v583 = vld [vmem:[%s151 + $0xcf8] sm:$0xff]
                %584 = vst [vmem:[%s152 + $0x6b8] sm:$0xff] %v583
                %v585 = vld [vmem:[%s151 + $0xd00] sm:$0xff]
                %586 = vst [vmem:[%s152 + $0x6c0] sm:$0xff] %v585
                %v587 = vld [vmem:[%s151 + $0xd08] sm:$0xff]
                %588 = vst [vmem:[%s152 + $0x6c8] sm:$0xff] %v587
                %v589 = vld [vmem:[%s151 + $0xd10] sm:$0xff]
                %590 = vst [vmem:[%s152 + $0x6d0] sm:$0xff] %v589
                %v591 = vld [vmem:[%s151 + $0xd18] sm:$0xff]
                %592 = vst [vmem:[%s152 + $0x6d8] sm:$0xff] %v591
                %v593 = vld [vmem:[%s151 + $0xd20] sm:$0xff]
                %594 = vst [vmem:[%s152 + $0x6e0] sm:$0xff] %v593
                %v595 = vld [vmem:[%s151 + $0xd28] sm:$0xff]
                %596 = vst [vmem:[%s152 + $0x6e8] sm:$0xff] %v595
                %v597 = vld [vmem:[%s151 + $0xd30] sm:$0xff]
                %598 = vst [vmem:[%s152 + $0x6f0] sm:$0xff] %v597
                %v599 = vld [vmem:[%s151 + $0xd38] sm:$0xff]
                %600 = vst [vmem:[%s152 + $0x6f8] sm:$0xff] %v599
                %v601 = vld [vmem:[%s151 + $0xd40] sm:$0xff]
                %602 = vst [vmem:[%s152 + $0x700] sm:$0xff] %v601
                %v603 = vld [vmem:[%s151 + $0xd48] sm:$0xff]
                %604 = vst [vmem:[%s152 + $0x708] sm:$0xff] %v603
                %v605 = vld [vmem:[%s151 + $0xd50] sm:$0xff]
                %606 = vst [vmem:[%s152 + $0x710] sm:$0xff] %v605
                %v607 = vld [vmem:[%s151 + $0xd58] sm:$0xff]
                %608 = vst [vmem:[%s152 + $0x718] sm:$0xff] %v607
                %v609 = vld [vmem:[%s151 + $0xd60] sm:$0xff]
                %610 = vst [vmem:[%s152 + $0x720] sm:$0xff] %v609
                %v611 = vld [vmem:[%s151 + $0xd68] sm:$0xff]
                %612 = vst [vmem:[%s152 + $0x728] sm:$0xff] %v611
                %v613 = vld [vmem:[%s151 + $0xd70] sm:$0xff]
                %614 = vst [vmem:[%s152 + $0x730] sm:$0xff] %v613
                %v615 = vld [vmem:[%s151 + $0xd78] sm:$0xff]
                %616 = vst [vmem:[%s152 + $0x738] sm:$0xff] %v615
                %v617 = vld [vmem:[%s151 + $0xd80] sm:$0xff]
                %618 = vst [vmem:[%s152 + $0x740] sm:$0xff] %v617
                %v619 = vld [vmem:[%s151 + $0xd88] sm:$0xff]
                %620 = vst [vmem:[%s152 + $0x748] sm:$0xff] %v619
                %v621 = vld [vmem:[%s151 + $0xd90] sm:$0xff]
                %622 = vst [vmem:[%s152 + $0x750] sm:$0xff] %v621
                %v623 = vld [vmem:[%s151 + $0xd98] sm:$0xff]
                %624 = vst [vmem:[%s152 + $0x758] sm:$0xff] %v623
                %v625 = vld [vmem:[%s151 + $0xda0] sm:$0xff]
                %626 = vst [vmem:[%s152 + $0x760] sm:$0xff] %v625
                %v627 = vld [vmem:[%s151 + $0xda8] sm:$0xff]
                %628 = vst [vmem:[%s152 + $0x768] sm:$0xff] %v627
                %v629 = vld [vmem:[%s151 + $0xdb0] sm:$0xff]
                %630 = vst [vmem:[%s152 + $0x770] sm:$0xff] %v629
                %v631 = vld [vmem:[%s151 + $0xdb8] sm:$0xff]
                %632 = vst [vmem:[%s152 + $0x778] sm:$0xff] %v631
                %v633 = vld [vmem:[%s151 + $0xdc0] sm:$0xff]
                %634 = vst [vmem:[%s152 + $0x780] sm:$0xff] %v633
                %v635 = vld [vmem:[%s151 + $0xdc8] sm:$0xff]
                %636 = vst [vmem:[%s152 + $0x788] sm:$0xff] %v635
                %v637 = vld [vmem:[%s151 + $0xdd0] sm:$0xff]
                %638 = vst [vmem:[%s152 + $0x790] sm:$0xff] %v637
                %v639 = vld [vmem:[%s151 + $0xdd8] sm:$0xff]
                %640 = vst [vmem:[%s152 + $0x798] sm:$0xff] %v639
                %v641 = vld [vmem:[%s151 + $0xde0] sm:$0xff]
                %642 = vst [vmem:[%s152 + $0x7a0] sm:$0xff] %v641
                %v643 = vld [vmem:[%s151 + $0xde8] sm:$0xff]
                %644 = vst [vmem:[%s152 + $0x7a8] sm:$0xff] %v643
                %v645 = vld [vmem:[%s151 + $0xdf0] sm:$0xff]
                %646 = vst [vmem:[%s152 + $0x7b0] sm:$0xff] %v645
                %v647 = vld [vmem:[%s151 + $0xdf8] sm:$0xff]
                %648 = vst [vmem:[%s152 + $0x7b8] sm:$0xff] %v647
                %v649 = vld [vmem:[%s151 + $0xe00] sm:$0xff]
                %650 = vst [vmem:[%s152 + $0x7c0] sm:$0xff] %v649
                %v651 = vld [vmem:[%s151 + $0xe08] sm:$0xff]
                %652 = vst [vmem:[%s152 + $0x7c8] sm:$0xff] %v651
                %v653 = vld [vmem:[%s151 + $0xfa0] sm:$0xff]
                %654 = vst [vmem:[%s152 + $0x7d0] sm:$0xff] %v653
                %v655 = vld [vmem:[%s151 + $0xfa8] sm:$0xff]
                %656 = vst [vmem:[%s152 + $0x7d8] sm:$0xff] %v655
                %v657 = vld [vmem:[%s151 + $0xfb0] sm:$0xff]
                %658 = vst [vmem:[%s152 + $0x7e0] sm:$0xff] %v657
                %v659 = vld [vmem:[%s151 + $0xfb8] sm:$0xff]
                %660 = vst [vmem:[%s152 + $0x7e8] sm:$0xff] %v659
                %v661 = vld [vmem:[%s151 + $0xfc0] sm:$0xff]
                %662 = vst [vmem:[%s152 + $0x7f0] sm:$0xff] %v661
                %v663 = vld [vmem:[%s151 + $0xfc8] sm:$0xff]
                %664 = vst [vmem:[%s152 + $0x7f8] sm:$0xff] %v663
                %v665 = vld [vmem:[%s151 + $0xfd0] sm:$0xff]
                %666 = vst [vmem:[%s152 + $0x800] sm:$0xff] %v665
                %v667 = vld [vmem:[%s151 + $0xfd8] sm:$0xff]
                %668 = vst [vmem:[%s152 + $0x808] sm:$0xff] %v667
                %v669 = vld [vmem:[%s151 + $0xfe0] sm:$0xff]
                %670 = vst [vmem:[%s152 + $0x810] sm:$0xff] %v669
                %v671 = vld [vmem:[%s151 + $0xfe8] sm:$0xff]
                %672 = vst [vmem:[%s152 + $0x818] sm:$0xff] %v671
                %v673 = vld [vmem:[%s151 + $0xff0] sm:$0xff]
                %674 = vst [vmem:[%s152 + $0x820] sm:$0xff] %v673
                %v675 = vld [vmem:[%s151 + $0xff8] sm:$0xff]
                %676 = vst [vmem:[%s152 + $0x828] sm:$0xff] %v675
                %v677 = vld [vmem:[%s151 + $0x1000] sm:$0xff]
                %678 = vst [vmem:[%s152 + $0x830] sm:$0xff] %v677
                %v679 = vld [vmem:[%s151 + $0x1008] sm:$0xff]
                %680 = vst [vmem:[%s152 + $0x838] sm:$0xff] %v679
                %v681 = vld [vmem:[%s151 + $0x1010] sm:$0xff]
                %682 = vst [vmem:[%s152 + $0x840] sm:$0xff] %v681
                %v683 = vld [vmem:[%s151 + $0x1018] sm:$0xff]
                %684 = vst [vmem:[%s152 + $0x848] sm:$0xff] %v683
                %v685 = vld [vmem:[%s151 + $0x1020] sm:$0xff]
                %686 = vst [vmem:[%s152 + $0x850] sm:$0xff] %v685
                %v687 = vld [vmem:[%s151 + $0x1028] sm:$0xff]
                %688 = vst [vmem:[%s152 + $0x858] sm:$0xff] %v687
                %v689 = vld [vmem:[%s151 + $0x1030] sm:$0xff]
                %690 = vst [vmem:[%s152 + $0x860] sm:$0xff] %v689
                %v691 = vld [vmem:[%s151 + $0x1038] sm:$0xff]
                %692 = vst [vmem:[%s152 + $0x868] sm:$0xff] %v691
                %v693 = vld [vmem:[%s151 + $0x1040] sm:$0xff]
                %694 = vst [vmem:[%s152 + $0x870] sm:$0xff] %v693
                %v695 = vld [vmem:[%s151 + $0x1048] sm:$0xff]
                %696 = vst [vmem:[%s152 + $0x878] sm:$0xff] %v695
                %v697 = vld [vmem:[%s151 + $0x1050] sm:$0xff]
                %698 = vst [vmem:[%s152 + $0x880] sm:$0xff] %v697
                %v699 = vld [vmem:[%s151 + $0x1058] sm:$0xff]
                %700 = vst [vmem:[%s152 + $0x888] sm:$0xff] %v699
                %v701 = vld [vmem:[%s151 + $0x1060] sm:$0xff]
                %702 = vst [vmem:[%s152 + $0x890] sm:$0xff] %v701
                %v703 = vld [vmem:[%s151 + $0x1068] sm:$0xff]
                %704 = vst [vmem:[%s152 + $0x898] sm:$0xff] %v703
                %v705 = vld [vmem:[%s151 + $0x1070] sm:$0xff]
                %706 = vst [vmem:[%s152 + $0x8a0] sm:$0xff] %v705
                %v707 = vld [vmem:[%s151 + $0x1078] sm:$0xff]
                %708 = vst [vmem:[%s152 + $0x8a8] sm:$0xff] %v707
                %v709 = vld [vmem:[%s151 + $0x1080] sm:$0xff]
                %710 = vst [vmem:[%s152 + $0x8b0] sm:$0xff] %v709
                %v711 = vld [vmem:[%s151 + $0x1088] sm:$0xff]
                %712 = vst [vmem:[%s152 + $0x8b8] sm:$0xff] %v711
                %v713 = vld [vmem:[%s151 + $0x1090] sm:$0xff]
                %714 = vst [vmem:[%s152 + $0x8c0] sm:$0xff] %v713
                %v715 = vld [vmem:[%s151 + $0x1098] sm:$0xff]
                %716 = vst [vmem:[%s152 + $0x8c8] sm:$0xff] %v715
                %v717 = vld [vmem:[%s151 + $0x10a0] sm:$0xff]
                %718 = vst [vmem:[%s152 + $0x8d0] sm:$0xff] %v717
                %v719 = vld [vmem:[%s151 + $0x10a8] sm:$0xff]
                %720 = vst [vmem:[%s152 + $0x8d8] sm:$0xff] %v719
                %v721 = vld [vmem:[%s151 + $0x10b0] sm:$0xff]
                %722 = vst [vmem:[%s152 + $0x8e0] sm:$0xff] %v721
                %v723 = vld [vmem:[%s151 + $0x10b8] sm:$0xff]
                %724 = vst [vmem:[%s152 + $0x8e8] sm:$0xff] %v723
                %v725 = vld [vmem:[%s151 + $0x10c0] sm:$0xff]
                %726 = vst [vmem:[%s152 + $0x8f0] sm:$0xff] %v725
                %v727 = vld [vmem:[%s151 + $0x10c8] sm:$0xff]
                %728 = vst [vmem:[%s152 + $0x8f8] sm:$0xff] %v727
                %v729 = vld [vmem:[%s151 + $0x10d0] sm:$0xff]
                %730 = vst [vmem:[%s152 + $0x900] sm:$0xff] %v729
                %v731 = vld [vmem:[%s151 + $0x10d8] sm:$0xff]
                %732 = vst [vmem:[%s152 + $0x908] sm:$0xff] %v731
                %v733 = vld [vmem:[%s151 + $0x10e0] sm:$0xff]
                %734 = vst [vmem:[%s152 + $0x910] sm:$0xff] %v733
                %v735 = vld [vmem:[%s151 + $0x10e8] sm:$0xff]
                %736 = vst [vmem:[%s152 + $0x918] sm:$0xff] %v735
                %v737 = vld [vmem:[%s151 + $0x10f0] sm:$0xff]
                %738 = vst [vmem:[%s152 + $0x920] sm:$0xff] %v737
                %v739 = vld [vmem:[%s151 + $0x10f8] sm:$0xff]
                %740 = vst [vmem:[%s152 + $0x928] sm:$0xff] %v739
                %v741 = vld [vmem:[%s151 + $0x1100] sm:$0xff]
                %742 = vst [vmem:[%s152 + $0x930] sm:$0xff] %v741
                %v743 = vld [vmem:[%s151 + $0x1108] sm:$0xff]
                %744 = vst [vmem:[%s152 + $0x938] sm:$0xff] %v743
                %v745 = vld [vmem:[%s151 + $0x1110] sm:$0xff]
                %746 = vst [vmem:[%s152 + $0x940] sm:$0xff] %v745
                %v747 = vld [vmem:[%s151 + $0x1118] sm:$0xff]
                %748 = vst [vmem:[%s152 + $0x948] sm:$0xff] %v747
                %v749 = vld [vmem:[%s151 + $0x1120] sm:$0xff]
                %750 = vst [vmem:[%s152 + $0x950] sm:$0xff] %v749
                %v751 = vld [vmem:[%s151 + $0x1128] sm:$0xff]
                %752 = vst [vmem:[%s152 + $0x958] sm:$0xff] %v751
                %v753 = vld [vmem:[%s151 + $0x12c0] sm:$0xff]
                %754 = vst [vmem:[%s152 + $0x960] sm:$0xff] %v753
                %v755 = vld [vmem:[%s151 + $0x12c8] sm:$0xff]
                %756 = vst [vmem:[%s152 + $0x968] sm:$0xff] %v755
                %v757 = vld [vmem:[%s151 + $0x12d0] sm:$0xff]
                %758 = vst [vmem:[%s152 + $0x970] sm:$0xff] %v757
                %v759 = vld [vmem:[%s151 + $0x12d8] sm:$0xff]
                %760 = vst [vmem:[%s152 + $0x978] sm:$0xff] %v759
                %v761 = vld [vmem:[%s151 + $0x12e0] sm:$0xff]
                %762 = vst [vmem:[%s152 + $0x980] sm:$0xff] %v761
                %v763 = vld [vmem:[%s151 + $0x12e8] sm:$0xff]
                %764 = vst [vmem:[%s152 + $0x988] sm:$0xff] %v763
                %v765 = vld [vmem:[%s151 + $0x12f0] sm:$0xff]
                %766 = vst [vmem:[%s152 + $0x990] sm:$0xff] %v765
                %v767 = vld [vmem:[%s151 + $0x12f8] sm:$0xff]
                %768 = vst [vmem:[%s152 + $0x998] sm:$0xff] %v767
                %v769 = vld [vmem:[%s151 + $0x1300] sm:$0xff]
                %770 = vst [vmem:[%s152 + $0x9a0] sm:$0xff] %v769
                %v771 = vld [vmem:[%s151 + $0x1308] sm:$0xff]
                %772 = vst [vmem:[%s152 + $0x9a8] sm:$0xff] %v771
                %v773 = vld [vmem:[%s151 + $0x1310] sm:$0xff]
                %774 = vst [vmem:[%s152 + $0x9b0] sm:$0xff] %v773
                %v775 = vld [vmem:[%s151 + $0x1318] sm:$0xff]
                %776 = vst [vmem:[%s152 + $0x9b8] sm:$0xff] %v775
                %v777 = vld [vmem:[%s151 + $0x1320] sm:$0xff]
                %778 = vst [vmem:[%s152 + $0x9c0] sm:$0xff] %v777
                %v779 = vld [vmem:[%s151 + $0x1328] sm:$0xff]
                %780 = vst [vmem:[%s152 + $0x9c8] sm:$0xff] %v779
                %v781 = vld [vmem:[%s151 + $0x1330] sm:$0xff]
                %782 = vst [vmem:[%s152 + $0x9d0] sm:$0xff] %v781
                %v783 = vld [vmem:[%s151 + $0x1338] sm:$0xff]
                %784 = vst [vmem:[%s152 + $0x9d8] sm:$0xff] %v783
                %v785 = vld [vmem:[%s151 + $0x1340] sm:$0xff]
                %786 = vst [vmem:[%s152 + $0x9e0] sm:$0xff] %v785
                %v787 = vld [vmem:[%s151 + $0x1348] sm:$0xff]
                %788 = vst [vmem:[%s152 + $0x9e8] sm:$0xff] %v787
                %v789 = vld [vmem:[%s151 + $0x1350] sm:$0xff]
                %790 = vst [vmem:[%s152 + $0x9f0] sm:$0xff] %v789
                %v791 = vld [vmem:[%s151 + $0x1358] sm:$0xff]
                %792 = vst [vmem:[%s152 + $0x9f8] sm:$0xff] %v791
                %v793 = vld [vmem:[%s151 + $0x1360] sm:$0xff]
                %794 = vst [vmem:[%s152 + $0xa00] sm:$0xff] %v793
                %v795 = vld [vmem:[%s151 + $0x1368] sm:$0xff]
                %796 = vst [vmem:[%s152 + $0xa08] sm:$0xff] %v795
                %v797 = vld [vmem:[%s151 + $0x1370] sm:$0xff]
                %798 = vst [vmem:[%s152 + $0xa10] sm:$0xff] %v797
                %v799 = vld [vmem:[%s151 + $0x1378] sm:$0xff]
                %800 = vst [vmem:[%s152 + $0xa18] sm:$0xff] %v799
                %v801 = vld [vmem:[%s151 + $0x1380] sm:$0xff]
                %802 = vst [vmem:[%s152 + $0xa20] sm:$0xff] %v801
                %v803 = vld [vmem:[%s151 + $0x1388] sm:$0xff]
                %804 = vst [vmem:[%s152 + $0xa28] sm:$0xff] %v803
                %v805 = vld [vmem:[%s151 + $0x1390] sm:$0xff]
                %806 = vst [vmem:[%s152 + $0xa30] sm:$0xff] %v805
                %v807 = vld [vmem:[%s151 + $0x1398] sm:$0xff]
                %808 = vst [vmem:[%s152 + $0xa38] sm:$0xff] %v807
                %v809 = vld [vmem:[%s151 + $0x13a0] sm:$0xff]
                %810 = vst [vmem:[%s152 + $0xa40] sm:$0xff] %v809
                %v811 = vld [vmem:[%s151 + $0x13a8] sm:$0xff]
                %812 = vst [vmem:[%s152 + $0xa48] sm:$0xff] %v811
                %v813 = vld [vmem:[%s151 + $0x13b0] sm:$0xff]
                %814 = vst [vmem:[%s152 + $0xa50] sm:$0xff] %v813
                %v815 = vld [vmem:[%s151 + $0x13b8] sm:$0xff]
                %816 = vst [vmem:[%s152 + $0xa58] sm:$0xff] %v815
                %v817 = vld [vmem:[%s151 + $0x13c0] sm:$0xff]
                %818 = vst [vmem:[%s152 + $0xa60] sm:$0xff] %v817
                %v819 = vld [vmem:[%s151 + $0x13c8] sm:$0xff]
                %820 = vst [vmem:[%s152 + $0xa68] sm:$0xff] %v819
                %v821 = vld [vmem:[%s151 + $0x13d0] sm:$0xff]
                %822 = vst [vmem:[%s152 + $0xa70] sm:$0xff] %v821
                %v823 = vld [vmem:[%s151 + $0x13d8] sm:$0xff]
                %824 = vst [vmem:[%s152 + $0xa78] sm:$0xff] %v823
                %v825 = vld [vmem:[%s151 + $0x13e0] sm:$0xff]
                %826 = vst [vmem:[%s152 + $0xa80] sm:$0xff] %v825
                %v827 = vld [vmem:[%s151 + $0x13e8] sm:$0xff]
                %828 = vst [vmem:[%s152 + $0xa88] sm:$0xff] %v827
                %v829 = vld [vmem:[%s151 + $0x13f0] sm:$0xff]
                %830 = vst [vmem:[%s152 + $0xa90] sm:$0xff] %v829
                %v831 = vld [vmem:[%s151 + $0x13f8] sm:$0xff]
                %832 = vst [vmem:[%s152 + $0xa98] sm:$0xff] %v831
                %v833 = vld [vmem:[%s151 + $0x1400] sm:$0xff]
                %834 = vst [vmem:[%s152 + $0xaa0] sm:$0xff] %v833
                %v835 = vld [vmem:[%s151 + $0x1408] sm:$0xff]
                %836 = vst [vmem:[%s152 + $0xaa8] sm:$0xff] %v835
                %v837 = vld [vmem:[%s151 + $0x1410] sm:$0xff]
                %838 = vst [vmem:[%s152 + $0xab0] sm:$0xff] %v837
                %v839 = vld [vmem:[%s151 + $0x1418] sm:$0xff]
                %840 = vst [vmem:[%s152 + $0xab8] sm:$0xff] %v839
                %v841 = vld [vmem:[%s151 + $0x1420] sm:$0xff]
                %842 = vst [vmem:[%s152 + $0xac0] sm:$0xff] %v841
                %v843 = vld [vmem:[%s151 + $0x1428] sm:$0xff]
                %844 = vst [vmem:[%s152 + $0xac8] sm:$0xff] %v843
                %v845 = vld [vmem:[%s151 + $0x1430] sm:$0xff]
                %846 = vst [vmem:[%s152 + $0xad0] sm:$0xff] %v845
                %v847 = vld [vmem:[%s151 + $0x1438] sm:$0xff]
                %848 = vst [vmem:[%s152 + $0xad8] sm:$0xff] %v847
                %v849 = vld [vmem:[%s151 + $0x1440] sm:$0xff]
                %850 = vst [vmem:[%s152 + $0xae0] sm:$0xff] %v849
                %v851 = vld [vmem:[%s151 + $0x1448] sm:$0xff]
                %852 = vst [vmem:[%s152 + $0xae8] sm:$0xff] %v851
                %v853 = vld [vmem:[%s151 + $0x15e0] sm:$0xff]
                %854 = vst [vmem:[%s152 + $0xaf0] sm:$0xff] %v853
                %v855 = vld [vmem:[%s151 + $0x15e8] sm:$0xff]
                %856 = vst [vmem:[%s152 + $0xaf8] sm:$0xff] %v855
                %v857 = vld [vmem:[%s151 + $0x15f0] sm:$0xff]
                %858 = vst [vmem:[%s152 + $0xb00] sm:$0xff] %v857
                %v859 = vld [vmem:[%s151 + $0x15f8] sm:$0xff]
                %860 = vst [vmem:[%s152 + $0xb08] sm:$0xff] %v859
                %v861 = vld [vmem:[%s151 + $0x1600] sm:$0xff]
                %862 = vst [vmem:[%s152 + $0xb10] sm:$0xff] %v861
                %v863 = vld [vmem:[%s151 + $0x1608] sm:$0xff]
                %864 = vst [vmem:[%s152 + $0xb18] sm:$0xff] %v863
                %v865 = vld [vmem:[%s151 + $0x1610] sm:$0xff]
                %866 = vst [vmem:[%s152 + $0xb20] sm:$0xff] %v865
                %v867 = vld [vmem:[%s151 + $0x1618] sm:$0xff]
                %868 = vst [vmem:[%s152 + $0xb28] sm:$0xff] %v867
                %v869 = vld [vmem:[%s151 + $0x1620] sm:$0xff]
                %870 = vst [vmem:[%s152 + $0xb30] sm:$0xff] %v869
                %v871 = vld [vmem:[%s151 + $0x1628] sm:$0xff]
                %872 = vst [vmem:[%s152 + $0xb38] sm:$0xff] %v871
                %v873 = vld [vmem:[%s151 + $0x1630] sm:$0xff]
                %874 = vst [vmem:[%s152 + $0xb40] sm:$0xff] %v873
                %v875 = vld [vmem:[%s151 + $0x1638] sm:$0xff]
                %876 = vst [vmem:[%s152 + $0xb48] sm:$0xff] %v875
                %v877 = vld [vmem:[%s151 + $0x1640] sm:$0xff]
                %878 = vst [vmem:[%s152 + $0xb50] sm:$0xff] %v877
                %v879 = vld [vmem:[%s151 + $0x1648] sm:$0xff]
                %880 = vst [vmem:[%s152 + $0xb58] sm:$0xff] %v879
                %v881 = vld [vmem:[%s151 + $0x1650] sm:$0xff]
                %882 = vst [vmem:[%s152 + $0xb60] sm:$0xff] %v881
                %v883 = vld [vmem:[%s151 + $0x1658] sm:$0xff]
                %884 = vst [vmem:[%s152 + $0xb68] sm:$0xff] %v883
                %v885 = vld [vmem:[%s151 + $0x1660] sm:$0xff]
                %886 = vst [vmem:[%s152 + $0xb70] sm:$0xff] %v885
                %v887 = vld [vmem:[%s151 + $0x1668] sm:$0xff]
                %888 = vst [vmem:[%s152 + $0xb78] sm:$0xff] %v887
                %v889 = vld [vmem:[%s151 + $0x1670] sm:$0xff]
                %890 = vst [vmem:[%s152 + $0xb80] sm:$0xff] %v889
                %v891 = vld [vmem:[%s151 + $0x1678] sm:$0xff]
                %892 = vst [vmem:[%s152 + $0xb88] sm:$0xff] %v891
                %v893 = vld [vmem:[%s151 + $0x1680] sm:$0xff]
                %894 = vst [vmem:[%s152 + $0xb90] sm:$0xff] %v893
                %v895 = vld [vmem:[%s151 + $0x1688] sm:$0xff]
                %896 = vst [vmem:[%s152 + $0xb98] sm:$0xff] %v895
                %v897 = vld [vmem:[%s151 + $0x1690] sm:$0xff]
                %898 = vst [vmem:[%s152 + $0xba0] sm:$0xff] %v897
                %v899 = vld [vmem:[%s151 + $0x1698] sm:$0xff]
                %900 = vst [vmem:[%s152 + $0xba8] sm:$0xff] %v899
                %v901 = vld [vmem:[%s151 + $0x16a0] sm:$0xff]
                %902 = vst [vmem:[%s152 + $0xbb0] sm:$0xff] %v901
                %v903 = vld [vmem:[%s151 + $0x16a8] sm:$0xff]
                %904 = vst [vmem:[%s152 + $0xbb8] sm:$0xff] %v903
                %v905 = vld [vmem:[%s151 + $0x16b0] sm:$0xff]
                %906 = vst [vmem:[%s152 + $0xbc0] sm:$0xff] %v905
                %v907 = vld [vmem:[%s151 + $0x16b8] sm:$0xff]
                %908 = vst [vmem:[%s152 + $0xbc8] sm:$0xff] %v907
                %v909 = vld [vmem:[%s151 + $0x16c0] sm:$0xff]
                %910 = vst [vmem:[%s152 + $0xbd0] sm:$0xff] %v909
                %v911 = vld [vmem:[%s151 + $0x16c8] sm:$0xff]
                %912 = vst [vmem:[%s152 + $0xbd8] sm:$0xff] %v911
                %v913 = vld [vmem:[%s151 + $0x16d0] sm:$0xff]
                %914 = vst [vmem:[%s152 + $0xbe0] sm:$0xff] %v913
                %v915 = vld [vmem:[%s151 + $0x16d8] sm:$0xff]
                %916 = vst [vmem:[%s152 + $0xbe8] sm:$0xff] %v915
                %v917 = vld [vmem:[%s151 + $0x16e0] sm:$0xff]
                %918 = vst [vmem:[%s152 + $0xbf0] sm:$0xff] %v917
                %v919 = vld [vmem:[%s151 + $0x16e8] sm:$0xff]
                %920 = vst [vmem:[%s152 + $0xbf8] sm:$0xff] %v919
                %v921 = vld [vmem:[%s151 + $0x16f0] sm:$0xff]
                %922 = vst [vmem:[%s152 + $0xc00] sm:$0xff] %v921
                %v923 = vld [vmem:[%s151 + $0x16f8] sm:$0xff]
                %924 = vst [vmem:[%s152 + $0xc08] sm:$0xff] %v923
                %v925 = vld [vmem:[%s151 + $0x1700] sm:$0xff]
                %926 = vst [vmem:[%s152 + $0xc10] sm:$0xff] %v925
                %v927 = vld [vmem:[%s151 + $0x1708] sm:$0xff]
                %928 = vst [vmem:[%s152 + $0xc18] sm:$0xff] %v927
                %v929 = vld [vmem:[%s151 + $0x1710] sm:$0xff]
                %930 = vst [vmem:[%s152 + $0xc20] sm:$0xff] %v929
                %v931 = vld [vmem:[%s151 + $0x1718] sm:$0xff]
                %932 = vst [vmem:[%s152 + $0xc28] sm:$0xff] %v931
                %v933 = vld [vmem:[%s151 + $0x1720] sm:$0xff]
                %934 = vst [vmem:[%s152 + $0xc30] sm:$0xff] %v933
                %v935 = vld [vmem:[%s151 + $0x1728] sm:$0xff]
                %936 = vst [vmem:[%s152 + $0xc38] sm:$0xff] %v935
                %v937 = vld [vmem:[%s151 + $0x1730] sm:$0xff]
                %938 = vst [vmem:[%s152 + $0xc40] sm:$0xff] %v937
                %v939 = vld [vmem:[%s151 + $0x1738] sm:$0xff]
                %940 = vst [vmem:[%s152 + $0xc48] sm:$0xff] %v939
                %v941 = vld [vmem:[%s151 + $0x1740] sm:$0xff]
                %942 = vst [vmem:[%s152 + $0xc50] sm:$0xff] %v941
                %v943 = vld [vmem:[%s151 + $0x1748] sm:$0xff]
                %944 = vst [vmem:[%s152 + $0xc58] sm:$0xff] %v943
                %v945 = vld [vmem:[%s151 + $0x1750] sm:$0xff]
                %946 = vst [vmem:[%s152 + $0xc60] sm:$0xff] %v945
                %v947 = vld [vmem:[%s151 + $0x1758] sm:$0xff]
                %948 = vst [vmem:[%s152 + $0xc68] sm:$0xff] %v947
                %v949 = vld [vmem:[%s151 + $0x1760] sm:$0xff]
                %950 = vst [vmem:[%s152 + $0xc70] sm:$0xff] %v949
                %v951 = vld [vmem:[%s151 + $0x1768] sm:$0xff]
                %952 = vst [vmem:[%s152 + $0xc78] sm:$0xff] %v951
              $region45: #{cnn3d_forward.2} parent=39 // loop_footer
                %s150 = sadd.s32 1, %s146
              $region46: #{cnn3d_forward.2} parent=39 // loop_footer_branch
                %145 = sbr.rel target = $region42
              $region47: #{cnn3d_forward.2} parent=39 // loop_exit
                _
            $region40: #{cnn3d_forward.2} parent=31 // pred_fallthru
              _
          $region32: #{cnn3d_forward.2} parent=27 // pred_fallthru
            _
          %1765 = vnop
        $region28: #{cnn3d_forward.2} parent=23 // pred_fallthru
          _
      $region24: #{cnn3d_forward.2} parent=5 // pred_fallthru
        _
      %p1766 = scmp.le.s32.totalorder 1, %s9
      %p1767 = scmp.lt.s32.totalorder %s9, 3
      %p1768 = pnand %p1766, %p1767
      %p1769 = pneg %p1768
      // Predicated region
      $region63: #{cnn3d_forward.2} parent=5 // pred_check
        _
      $region64: #{cnn3d_forward.2} parent=5 // pred_check_branch
        %1771 = sbr.rel (%p1768) target = $region66
      $region65: #{cnn3d_forward.2} parent=5 // pred_region
        %s1772 = ssub.s32 %s9, 1
        %s1773 = sand.u32 %s22, 1
        %s1774 = sand.u32 %s22, 1
        %s1775 = smul.addr %s1774, 3200
        %s1776 = scalar_lea.vmem [#allocation2], %s1775
        // Predicated region
        $region67: #{cnn3d_forward.2} parent=65 // pred_check
          %p1777 = pneg %p35
        $region68: #{cnn3d_forward.2} parent=65 // pred_check_branch
          %1779 = sbr.rel (%p1777) target = $region70
        $region69: #{cnn3d_forward.2} parent=65 // pred_region
          _
        $region70: #{cnn3d_forward.2} parent=65 // pred_fallthru
          _
        %s1780 = sand.u32 %s22, 1
        %s1781 = sand.u32 %s22, 1
        %s1782 = smul.addr %s1781, 3200
        %s1783 = scalar_lea.vmem [#allocation2], %s1782
        %p1784 = pneg %p35
        %p1785 = pneg %p32
        %p1786 = pneg %p56
        %p1787 = pneg %p53
        %p1788 = pneg %p77
        %p1789 = pneg %p74
        %p1790 = pneg %p103
        %p1791 = pneg %p100
        %s1792 = smul.u32 50, %s14
        %p1793 = scmp.lt.s32.totalorder %s1792, 99
        %s1794 = scalar_select %p1793, %s1792, 99
        %s1795 = smul.addr %s1794, 8
        %s1796 = scalar_lea.vmem %s3, %s1795
        %s1797 = smul.u32 50, %s14
        %s1798 = smul.u32 50, %s14
        %p1799 = scmp.lt.s32.totalorder %s1798, 99
        %s1800 = scalar_select %p1799, %s1798, 99
        %s1801 = smul.addr %s1800, 8
        %s1802 = scalar_lea.vmem %s3, %s1801
        %s1803 = smul.u32 50, %s14
        %v1804 = vld [vmem:[%s1] sm:$0xff]
        %v1805 = vld [vmem:[%s1 + $0x8] sm:$0xff]
        %v1806 = vld [vmem:[%s1 + $0x10] sm:$0xff]
        %v1807 = vld [vmem:[%s1 + $0x18] sm:$0xff]
        %v1808 = vld [vmem:[%s1 + $0x20] sm:$0xff]
        %v1809 = vld [vmem:[%s1 + $0x28] sm:$0xff]
        %v1810 = vld [vmem:[%s1 + $0x30] sm:$0xff]
        %v1811 = vld [vmem:[%s1 + $0x38] sm:$0xff]
        %v1812 = vld [vmem:[%s1 + $0x40] sm:$0xff]
        %v1813 = vld [vmem:[%s1 + $0x48] sm:$0xff]
        %v1814 = vld [vmem:[%s1 + $0x50] sm:$0xff]
        %v1815 = vld [vmem:[%s1 + $0x58] sm:$0xff]
        %v1816 = vld [vmem:[%s1 + $0x60] sm:$0xff]
        %v1817 = vld [vmem:[%s1 + $0x68] sm:$0xff]
        %v1818 = vld [vmem:[%s1 + $0x70] sm:$0xff]
        %v1819 = vld [vmem:[%s1 + $0x78] sm:$0xff]
        %v1820 = vld [vmem:[%s1776] sm:$0xff]
        %v1821 = vld [vmem:[%s1776 + $0x8] sm:$0xff]
        %v1822 = vld [vmem:[%s1776 + $0x10] sm:$0xff]
        %v1823 = vld [vmem:[%s1776 + $0x18] sm:$0xff]
        %v1824 = vld [vmem:[%s1776 + $0x20] sm:$0xff]
        %v1825 = vld [vmem:[%s1776 + $0x28] sm:$0xff]
        %v1826 = vld [vmem:[%s1776 + $0x30] sm:$0xff]
        %v1827 = vld [vmem:[%s1776 + $0x38] sm:$0xff]
        %v1828 = vld [vmem:[%s1776 + $0x40] sm:$0xff]
        %v1829 = vld [vmem:[%s1776 + $0x48] sm:$0xff]
        %v1830 = vld [vmem:[%s1776 + $0x50] sm:$0xff]
        %v1831 = vld [vmem:[%s1776 + $0x58] sm:$0xff]
        %v1832 = vld [vmem:[%s1776 + $0x60] sm:$0xff]
        %v1833 = vld [vmem:[%s1776 + $0x68] sm:$0xff]
        %v1834 = vld [vmem:[%s1776 + $0x70] sm:$0xff]
        %v1835 = vld [vmem:[%s1776 + $0x78] sm:$0xff]
        %v1836 = vld [vmem:[%s1776 + $0x80] sm:$0xff]
        %v1837 = vld [vmem:[%s1776 + $0x88] sm:$0xff]
        %v1838 = vld [vmem:[%s1776 + $0x90] sm:$0xff]
        %v1839 = vld [vmem:[%s1776 + $0x98] sm:$0xff]
        %v1840 = vld [vmem:[%s1776 + $0xa0] sm:$0xff]
        %v1841 = vld [vmem:[%s1776 + $0xa8] sm:$0xff]
        %v1842 = vld [vmem:[%s1776 + $0xb0] sm:$0xff]
        %v1843 = vld [vmem:[%s1776 + $0xb8] sm:$0xff]
        %v1844 = vld [vmem:[%s1776 + $0xc0] sm:$0xff]
        %v1845 = vld [vmem:[%s1776 + $0xc8] sm:$0xff]
        %v1846 = vld [vmem:[%s1776 + $0xd0] sm:$0xff]
        %v1847 = vld [vmem:[%s1776 + $0xd8] sm:$0xff]
        %v1848 = vld [vmem:[%s1776 + $0xe0] sm:$0xff]
        %v1849 = vld [vmem:[%s1776 + $0xe8] sm:$0xff]
        %v1850 = vld [vmem:[%s1776 + $0xf0] sm:$0xff]
        %v1851 = vld [vmem:[%s1776 + $0xf8] sm:$0xff]
        %v1852 = vld [vmem:[%s1776 + $0x100] sm:$0xff]
        %v1853 = vld [vmem:[%s1776 + $0x108] sm:$0xff]
        %v1854 = vld [vmem:[%s1776 + $0x110] sm:$0xff]
        %v1855 = vld [vmem:[%s1776 + $0x118] sm:$0xff]
        %v1856 = vld [vmem:[%s1776 + $0x120] sm:$0xff]
        %v1857 = vld [vmem:[%s1776 + $0x128] sm:$0xff]
        %v1858 = vld [vmem:[%s1776 + $0x130] sm:$0xff]
        %v1859 = vld [vmem:[%s1776 + $0x138] sm:$0xff]
        %v1860 = vld [vmem:[%s1776 + $0x140] sm:$0xff]
        %v1861 = vld [vmem:[%s1776 + $0x148] sm:$0xff]
        %v1862 = vld [vmem:[%s1776 + $0x150] sm:$0xff]
        %v1863 = vld [vmem:[%s1776 + $0x158] sm:$0xff]
        %v1864 = vld [vmem:[%s1776 + $0x160] sm:$0xff]
        %v1865 = vld [vmem:[%s1776 + $0x168] sm:$0xff]
        %v1866 = vld [vmem:[%s1776 + $0x170] sm:$0xff]
        %v1867 = vld [vmem:[%s1776 + $0x178] sm:$0xff]
        %v1868 = vld [vmem:[%s1776 + $0x180] sm:$0xff]
        %v1869 = vld [vmem:[%s1776 + $0x188] sm:$0xff]
        %1870 = vmatprep.subr.mxu0 0.0
        %1871 = vmatpush1.msra.mxu0 %v1804
        %1872 = vmatprep.subr.mxu0 0.0
        %1873 = vmatpush1.msra.mxu0 %v1805
        %1874 = vmatprep.subr.mxu0 0.0
        %1875 = vmatpush1.msra.mxu0 %v1806
        %1876 = vmatprep.subr.mxu0 0.0
        %1877 = vmatpush1.msra.mxu0 %v1807
        %1878 = vmatprep.subr.mxu0 0.0
        %1879 = vmatpush1.msra.mxu0 %v1808
        %1880 = vmatprep.subr.mxu0 0.0
        %1881 = vmatpush1.msra.mxu0 %v1809
        %1882 = vmatprep.subr.mxu0 0.0
        %1883 = vmatpush1.msra.mxu0 %v1810
        %1884 = vmatprep.subr.mxu0 0.0
        %1885 = vmatpush1.msra.mxu0 %v1811
        %1886 = vmatprep.subr.mxu0 0.0
        %1887 = vmatpush1.msra.mxu0 %v1812
        %1888 = vmatprep.subr.mxu0 0.0
        %1889 = vmatpush1.msra.mxu0 %v1813
        %1890 = vmatprep.subr.mxu0 0.0
        %1891 = vmatpush1.msra.mxu0 %v1814
        %1892 = vmatprep.subr.mxu0 0.0
        %1893 = vmatpush1.msra.mxu0 %v1815
        %1894 = vmatprep.subr.mxu0 0.0
        %1895 = vmatpush1.msra.mxu0 %v1816
        %1896 = vmatprep.subr.mxu0 0.0
        %1897 = vmatpush1.msra.mxu0 %v1817
        %1898 = vmatprep.subr.mxu0 0.0
        %1899 = vmatpush1.msra.mxu0 %v1818
        %1900 = vmatprep.subr.mxu0 0.0
        %1901 = vmatpush1.msra.mxu0 %v1819
        %1902 = vmatprep.subr.mxu0 0.0
        %1903 = vmatpush1.msra.mxu0 0.0
        %1904 = vmatprep.subr.mxu0 0.0
        %1905 = vmatpush1.msra.mxu0 0.0
        %1906 = vmatprep.subr.mxu0 0.0
        %1907 = vmatpush1.msra.mxu0 0.0
        %1908 = vmatprep.subr.mxu0 0.0
        %1909 = vmatpush1.msra.mxu0 0.0
        %1910 = vmatprep.subr.mxu0 0.0
        %1911 = vmatpush1.msra.mxu0 0.0
        %1912 = vmatprep.subr.mxu0 0.0
        %1913 = vmatpush1.msra.mxu0 0.0
        %1914 = vmatprep.subr.mxu0 0.0
        %1915 = vmatpush1.msra.mxu0 0.0
        %1916 = vmatprep.subr.mxu0 0.0
        %1917 = vmatpush1.msra.mxu0 0.0
        %1918 = vmatprep.subr.mxu0 0.0
        %1919 = vmatpush1.msra.mxu0 0.0
        %1920 = vmatprep.subr.mxu0 0.0
        %1921 = vmatpush1.msra.mxu0 0.0
        %1922 = vmatprep.subr.mxu0 0.0
        %1923 = vmatpush1.msra.mxu0 0.0
        %1924 = vmatprep.subr.mxu0 0.0
        %1925 = vmatpush1.msra.mxu0 0.0
        %1926 = vmatprep.subr.mxu0 0.0
        %1927 = vmatpush1.msra.mxu0 0.0
        %1928 = vmatprep.subr.mxu0 0.0
        %1929 = vmatpush1.msra.mxu0 0.0
        %1930 = vmatprep.subr.mxu0 0.0
        %1931 = vmatpush1.msra.mxu0 0.0
        %1932 = vmatprep.subr.mxu0 0.0
        %1933 = vmatpush1.msra.mxu0 0.0
        %1934 = vmatprep.mubr.f32.mxu0 0.0
        %1935 = vmatmul.mubr.f32.gmra.mrb[0].mxu0 %v1820
        %v1936 = vpop.f32.mrb[0].mxu0
        %v1937 = vadd.f32 0.0, %v1936
        %v1938 = vpop.f32.mrb[0].mxu0
        %1939 = vmatprep.mubr.f32.mxu0 0.0
        %1940 = vmatmul.mubr.f32.gmra.mrb[0].mxu0 %v1821
        %v1941 = vpop.f32.mrb[0].mxu0
        %v1942 = vadd.f32 0.0, %v1941
        %v1943 = vpop.f32.mrb[0].mxu0
        %1944 = vmatprep.mubr.f32.mxu0 0.0
        %1945 = vmatmul.mubr.f32.gmra.mrb[0].mxu0 %v1822
        %v1946 = vpop.f32.mrb[0].mxu0
        %v1947 = vadd.f32 0.0, %v1946
        %v1948 = vpop.f32.mrb[0].mxu0
        %1949 = vmatprep.mubr.f32.mxu0 0.0
        %1950 = vmatmul.mubr.f32.gmra.mrb[0].mxu0 %v1823
        %v1951 = vpop.f32.mrb[0].mxu0
        %v1952 = vadd.f32 0.0, %v1951
        %v1953 = vpop.f32.mrb[0].mxu0
        %1954 = vmatprep.mubr.f32.mxu0 0.0
        %1955 = vmatmul.mubr.f32.gmra.mrb[0].mxu0 %v1824
        %v1956 = vpop.f32.mrb[0].mxu0
        %v1957 = vadd.f32 0.0, %v1956
        %v1958 = vpop.f32.mrb[0].mxu0
        %1959 = vmatprep.mubr.f32.mxu0 0.0
        %1960 = vmatmul.mubr.f32.gmra.mrb[0].mxu0 %v1825
        %v1961 = vpop.f32.mrb[0].mxu0
        %v1962 = vadd.f32 0.0, %v1961
        %v1963 = vpop.f32.mrb[0].mxu0
        %1964 = vmatprep.mubr.f32.mxu0 0.0
        %1965 = vmatmul.mubr.f32.gmra.mrb[0].mxu0 %v1826
        %v1966 = vpop.f32.mrb[0].mxu0
        %v1967 = vadd.f32 0.0, %v1966
        %v1968 = vpop.f32.mrb[0].mxu0
        %1969 = vmatprep.mubr.f32.mxu0 0.0
        %1970 = vmatmul.mubr.f32.gmra.mrb[0].mxu0 %v1827
        %v1971 = vpop.f32.mrb[0].mxu0
        %v1972 = vadd.f32 0.0, %v1971
        %v1973 = vpop.f32.mrb[0].mxu0
        %1974 = vmatprep.mubr.f32.mxu0 0.0
        %1975 = vmatmul.mubr.f32.gmra.mrb[0].mxu0 %v1828
        %v1976 = vpop.f32.mrb[0].mxu0
        %v1977 = vadd.f32 0.0, %v1976
        %v1978 = vpop.f32.mrb[0].mxu0
        %1979 = vmatprep.mubr.f32.mxu0 0.0
        %1980 = vmatmul.mubr.f32.gmra.mrb[0].mxu0 %v1829
        %v1981 = vpop.f32.mrb[0].mxu0
        %v1982 = vadd.f32 0.0, %v1981
        %v1983 = vpop.f32.mrb[0].mxu0
        %1984 = vmatprep.mubr.f32.mxu0 0.0
        %1985 = vmatmul.mubr.f32.gmra.mrb[0].mxu0 %v1830
        %v1986 = vpop.f32.mrb[0].mxu0
        %v1987 = vadd.f32 0.0, %v1986
        %v1988 = vpop.f32.mrb[0].mxu0
        %1989 = vmatprep.mubr.f32.mxu0 0.0
        %1990 = vmatmul.mubr.f32.gmra.mrb[0].mxu0 %v1831
        %v1991 = vpop.f32.mrb[0].mxu0
        %v1992 = vadd.f32 0.0, %v1991
        %v1993 = vpop.f32.mrb[0].mxu0
        %1994 = vmatprep.mubr.f32.mxu0 0.0
        %1995 = vmatmul.mubr.f32.gmra.mrb[0].mxu0 %v1832
        %v1996 = vpop.f32.mrb[0].mxu0
        %v1997 = vadd.f32 0.0, %v1996
        %v1998 = vpop.f32.mrb[0].mxu0
        %1999 = vmatprep.mubr.f32.mxu0 0.0
        %2000 = vmatmul.mubr.f32.gmra.mrb[0].mxu0 %v1833
        %v2001 = vpop.f32.mrb[0].mxu0
        %v2002 = vadd.f32 0.0, %v2001
        %v2003 = vpop.f32.mrb[0].mxu0
        %2004 = vmatprep.mubr.f32.mxu0 0.0
        %2005 = vmatmul.mubr.f32.gmra.mrb[0].mxu0 %v1834
        %v2006 = vpop.f32.mrb[0].mxu0
        %v2007 = vadd.f32 0.0, %v2006
        %v2008 = vpop.f32.mrb[0].mxu0
        %2009 = vmatprep.mubr.f32.mxu0 0.0
        %2010 = vmatmul.mubr.f32.gmra.mrb[0].mxu0 %v1835
        %v2011 = vpop.f32.mrb[0].mxu0
        %v2012 = vadd.f32 0.0, %v2011
        %v2013 = vpop.f32.mrb[0].mxu0
        %2014 = vmatprep.mubr.f32.mxu0 0.0
        %2015 = vmatmul.mubr.f32.gmra.mrb[0].mxu0 %v1836
        %v2016 = vpop.f32.mrb[0].mxu0
        %v2017 = vadd.f32 0.0, %v2016
        %v2018 = vpop.f32.mrb[0].mxu0
        %2019 = vmatprep.mubr.f32.mxu0 0.0
        %2020 = vmatmul.mubr.f32.gmra.mrb[0].mxu0 %v1837
        %v2021 = vpop.f32.mrb[0].mxu0
        %v2022 = vadd.f32 0.0, %v2021
        %v2023 = vpop.f32.mrb[0].mxu0
        %2024 = vmatprep.mubr.f32.mxu0 0.0
        %2025 = vmatmul.mubr.f32.gmra.mrb[0].mxu0 %v1838
        %v2026 = vpop.f32.mrb[0].mxu0
        %v2027 = vadd.f32 0.0, %v2026
        %v2028 = vpop.f32.mrb[0].mxu0
        %2029 = vmatprep.mubr.f32.mxu0 0.0
        %2030 = vmatmul.mubr.f32.gmra.mrb[0].mxu0 %v1839
        %v2031 = vpop.f32.mrb[0].mxu0
        %v2032 = vadd.f32 0.0, %v2031
        %v2033 = vpop.f32.mrb[0].mxu0
        %2034 = vmatprep.mubr.f32.mxu0 0.0
        %2035 = vmatmul.mubr.f32.gmra.mrb[0].mxu0 %v1840
        %v2036 = vpop.f32.mrb[0].mxu0
        %v2037 = vadd.f32 0.0, %v2036
        %v2038 = vpop.f32.mrb[0].mxu0
        %2039 = vmatprep.mubr.f32.mxu0 0.0
        %2040 = vmatmul.mubr.f32.gmra.mrb[0].mxu0 %v1841
        %v2041 = vpop.f32.mrb[0].mxu0
        %v2042 = vadd.f32 0.0, %v2041
        %v2043 = vpop.f32.mrb[0].mxu0
        %2044 = vmatprep.mubr.f32.mxu0 0.0
        %2045 = vmatmul.mubr.f32.gmra.mrb[0].mxu0 %v1842
        %v2046 = vpop.f32.mrb[0].mxu0
        %v2047 = vadd.f32 0.0, %v2046
        %v2048 = vpop.f32.mrb[0].mxu0
        %2049 = vmatprep.mubr.f32.mxu0 0.0
        %2050 = vmatmul.mubr.f32.gmra.mrb[0].mxu0 %v1843
        %v2051 = vpop.f32.mrb[0].mxu0
        %v2052 = vadd.f32 0.0, %v2051
        %v2053 = vpop.f32.mrb[0].mxu0
        %2054 = vmatprep.mubr.f32.mxu0 0.0
        %2055 = vmatmul.mubr.f32.gmra.mrb[0].mxu0 %v1844
        %v2056 = vpop.f32.mrb[0].mxu0
        %v2057 = vadd.f32 0.0, %v2056
        %v2058 = vpop.f32.mrb[0].mxu0
        %2059 = vmatprep.mubr.f32.mxu0 0.0
        %2060 = vmatmul.mubr.f32.gmra.mrb[0].mxu0 %v1845
        %v2061 = vpop.f32.mrb[0].mxu0
        %v2062 = vadd.f32 0.0, %v2061
        %v2063 = vpop.f32.mrb[0].mxu0
        %2064 = vmatprep.mubr.f32.mxu0 0.0
        %2065 = vmatmul.mubr.f32.gmra.mrb[0].mxu0 %v1846
        %v2066 = vpop.f32.mrb[0].mxu0
        %v2067 = vadd.f32 0.0, %v2066
        %v2068 = vpop.f32.mrb[0].mxu0
        %2069 = vmatprep.mubr.f32.mxu0 0.0
        %2070 = vmatmul.mubr.f32.gmra.mrb[0].mxu0 %v1847
        %v2071 = vpop.f32.mrb[0].mxu0
        %v2072 = vadd.f32 0.0, %v2071
        %v2073 = vpop.f32.mrb[0].mxu0
        %2074 = vmatprep.mubr.f32.mxu0 0.0
        %2075 = vmatmul.mubr.f32.gmra.mrb[0].mxu0 %v1848
        %v2076 = vpop.f32.mrb[0].mxu0
        %v2077 = vadd.f32 0.0, %v2076
        %v2078 = vpop.f32.mrb[0].mxu0
        %2079 = vmatprep.mubr.f32.mxu0 0.0
        %2080 = vmatmul.mubr.f32.gmra.mrb[0].mxu0 %v1849
        %v2081 = vpop.f32.mrb[0].mxu0
        %v2082 = vadd.f32 0.0, %v2081
        %v2083 = vpop.f32.mrb[0].mxu0
        %2084 = vmatprep.mubr.f32.mxu0 0.0
        %2085 = vmatmul.mubr.f32.gmra.mrb[0].mxu0 %v1850
        %v2086 = vpop.f32.mrb[0].mxu0
        %v2087 = vadd.f32 0.0, %v2086
        %v2088 = vpop.f32.mrb[0].mxu0
        %2089 = vmatprep.mubr.f32.mxu0 0.0
        %2090 = vmatmul.mubr.f32.gmra.mrb[0].mxu0 %v1851
        %v2091 = vpop.f32.mrb[0].mxu0
        %v2092 = vadd.f32 0.0, %v2091
        %v2093 = vpop.f32.mrb[0].mxu0
        %2094 = vmatprep.mubr.f32.mxu0 0.0
        %2095 = vmatmul.mubr.f32.gmra.mrb[0].mxu0 %v1852
        %v2096 = vpop.f32.mrb[0].mxu0
        %v2097 = vadd.f32 0.0, %v2096
        %v2098 = vpop.f32.mrb[0].mxu0
        %2099 = vmatprep.mubr.f32.mxu0 0.0
        %2100 = vmatmul.mubr.f32.gmra.mrb[0].mxu0 %v1853
        %v2101 = vpop.f32.mrb[0].mxu0
        %v2102 = vadd.f32 0.0, %v2101
        %v2103 = vpop.f32.mrb[0].mxu0
        %2104 = vmatprep.mubr.f32.mxu0 0.0
        %2105 = vmatmul.mubr.f32.gmra.mrb[0].mxu0 %v1854
        %v2106 = vpop.f32.mrb[0].mxu0
        %v2107 = vadd.f32 0.0, %v2106
        %v2108 = vpop.f32.mrb[0].mxu0
        %2109 = vmatprep.mubr.f32.mxu0 0.0
        %2110 = vmatmul.mubr.f32.gmra.mrb[0].mxu0 %v1855
        %v2111 = vpop.f32.mrb[0].mxu0
        %v2112 = vadd.f32 0.0, %v2111
        %v2113 = vpop.f32.mrb[0].mxu0
        %2114 = vmatprep.mubr.f32.mxu0 0.0
        %2115 = vmatmul.mubr.f32.gmra.mrb[0].mxu0 %v1856
        %v2116 = vpop.f32.mrb[0].mxu0
        %v2117 = vadd.f32 0.0, %v2116
        %v2118 = vpop.f32.mrb[0].mxu0
        %2119 = vmatprep.mubr.f32.mxu0 0.0
        %2120 = vmatmul.mubr.f32.gmra.mrb[0].mxu0 %v1857
        %v2121 = vpop.f32.mrb[0].mxu0
        %v2122 = vadd.f32 0.0, %v2121
        %v2123 = vpop.f32.mrb[0].mxu0
        %2124 = vmatprep.mubr.f32.mxu0 0.0
        %2125 = vmatmul.mubr.f32.gmra.mrb[0].mxu0 %v1858
        %v2126 = vpop.f32.mrb[0].mxu0
        %v2127 = vadd.f32 0.0, %v2126
        %v2128 = vpop.f32.mrb[0].mxu0
        %2129 = vmatprep.mubr.f32.mxu0 0.0
        %2130 = vmatmul.mubr.f32.gmra.mrb[0].mxu0 %v1859
        %v2131 = vpop.f32.mrb[0].mxu0
        %v2132 = vadd.f32 0.0, %v2131
        %v2133 = vpop.f32.mrb[0].mxu0
        %2134 = vmatprep.mubr.f32.mxu0 0.0
        %2135 = vmatmul.mubr.f32.gmra.mrb[0].mxu0 %v1860
        %v2136 = vpop.f32.mrb[0].mxu0
        %v2137 = vadd.f32 0.0, %v2136
        %v2138 = vpop.f32.mrb[0].mxu0
        %2139 = vmatprep.mubr.f32.mxu0 0.0
        %2140 = vmatmul.mubr.f32.gmra.mrb[0].mxu0 %v1861
        %v2141 = vpop.f32.mrb[0].mxu0
        %v2142 = vadd.f32 0.0, %v2141
        %v2143 = vpop.f32.mrb[0].mxu0
        %2144 = vmatprep.mubr.f32.mxu0 0.0
        %2145 = vmatmul.mubr.f32.gmra.mrb[0].mxu0 %v1862
        %v2146 = vpop.f32.mrb[0].mxu0
        %v2147 = vadd.f32 0.0, %v2146
        %v2148 = vpop.f32.mrb[0].mxu0
        %2149 = vmatprep.mubr.f32.mxu0 0.0
        %2150 = vmatmul.mubr.f32.gmra.mrb[0].mxu0 %v1863
        %v2151 = vpop.f32.mrb[0].mxu0
        %v2152 = vadd.f32 0.0, %v2151
        %v2153 = vpop.f32.mrb[0].mxu0
        %2154 = vmatprep.mubr.f32.mxu0 0.0
        %2155 = vmatmul.mubr.f32.gmra.mrb[0].mxu0 %v1864
        %v2156 = vpop.f32.mrb[0].mxu0
        %v2157 = vadd.f32 0.0, %v2156
        %v2158 = vpop.f32.mrb[0].mxu0
        %2159 = vmatprep.mubr.f32.mxu0 0.0
        %2160 = vmatmul.mubr.f32.gmra.mrb[0].mxu0 %v1865
        %v2161 = vpop.f32.mrb[0].mxu0
        %v2162 = vadd.f32 0.0, %v2161
        %v2163 = vpop.f32.mrb[0].mxu0
        %2164 = vmatprep.mubr.f32.mxu0 0.0
        %2165 = vmatmul.mubr.f32.gmra.mrb[0].mxu0 %v1866
        %v2166 = vpop.f32.mrb[0].mxu0
        %v2167 = vadd.f32 0.0, %v2166
        %v2168 = vpop.f32.mrb[0].mxu0
        %2169 = vmatprep.mubr.f32.mxu0 0.0
        %2170 = vmatmul.mubr.f32.gmra.mrb[0].mxu0 %v1867
        %v2171 = vpop.f32.mrb[0].mxu0
        %v2172 = vadd.f32 0.0, %v2171
        %v2173 = vpop.f32.mrb[0].mxu0
        %2174 = vmatprep.mubr.f32.mxu0 0.0
        %2175 = vmatmul.mubr.f32.gmra.mrb[0].mxu0 %v1868
        %v2176 = vpop.f32.mrb[0].mxu0
        %v2177 = vadd.f32 0.0, %v2176
        %v2178 = vpop.f32.mrb[0].mxu0
        %2179 = vmatprep.mubr.f32.mxu0 0.0
        %2180 = vmatmul.mubr.f32.gmra.mrb[0].mxu0 %v1869
        %v2181 = vpop.f32.mrb[0].mxu0
        %v2182 = vadd.f32 0.0, %v2181
        %v2183 = vpop.f32.mrb[0].mxu0
        %2184 = vdwg.mxu0
        %s2185 = scalar_lea.vmem %s1776, 400 [#allocation2]
        %v2186 = vld [vmem:[%s2185] sm:$0xff]
        %v2187 = vld [vmem:[%s2185 + $0x8] sm:$0xff]
        %v2188 = vld [vmem:[%s2185 + $0x10] sm:$0xff]
        %v2189 = vld [vmem:[%s2185 + $0x18] sm:$0xff]
        %v2190 = vld [vmem:[%s2185 + $0x20] sm:$0xff]
        %v2191 = vld [vmem:[%s2185 + $0x28] sm:$0xff]
        %v2192 = vld [vmem:[%s2185 + $0x30] sm:$0xff]
        %v2193 = vld [vmem:[%s2185 + $0x38] sm:$0xff]
        %v2194 = vld [vmem:[%s2185 + $0x40] sm:$0xff]
        %v2195 = vld [vmem:[%s2185 + $0x48] sm:$0xff]
        %v2196 = vld [vmem:[%s2185 + $0x50] sm:$0xff]
        %v2197 = vld [vmem:[%s2185 + $0x58] sm:$0xff]
        %v2198 = vld [vmem:[%s2185 + $0x60] sm:$0xff]
        %v2199 = vld [vmem:[%s2185 + $0x68] sm:$0xff]
        %v2200 = vld [vmem:[%s2185 + $0x70] sm:$0xff]
        %v2201 = vld [vmem:[%s2185 + $0x78] sm:$0xff]
        %v2202 = vld [vmem:[%s2185 + $0x80] sm:$0xff]
        %v2203 = vld [vmem:[%s2185 + $0x88] sm:$0xff]
        %v2204 = vld [vmem:[%s2185 + $0x90] sm:$0xff]
        %v2205 = vld [vmem:[%s2185 + $0x98] sm:$0xff]
        %v2206 = vld [vmem:[%s2185 + $0xa0] sm:$0xff]
        %v2207 = vld [vmem:[%s2185 + $0xa8] sm:$0xff]
        %v2208 = vld [vmem:[%s2185 + $0xb0] sm:$0xff]
        %v2209 = vld [vmem:[%s2185 + $0xb8] sm:$0xff]
        %v2210 = vld [vmem:[%s2185 + $0xc0] sm:$0xff]
        %v2211 = vld [vmem:[%s2185 + $0xc8] sm:$0xff]
        %v2212 = vld [vmem:[%s2185 + $0xd0] sm:$0xff]
        %v2213 = vld [vmem:[%s2185 + $0xd8] sm:$0xff]
        %v2214 = vld [vmem:[%s2185 + $0xe0] sm:$0xff]
        %v2215 = vld [vmem:[%s2185 + $0xe8] sm:$0xff]
        %v2216 = vld [vmem:[%s2185 + $0xf0] sm:$0xff]
        %v2217 = vld [vmem:[%s2185 + $0xf8] sm:$0xff]
        %v2218 = vld [vmem:[%s2185 + $0x100] sm:$0xff]
        %v2219 = vld [vmem:[%s2185 + $0x108] sm:$0xff]
        %v2220 = vld [vmem:[%s2185 + $0x110] sm:$0xff]
        %v2221 = vld [vmem:[%s2185 + $0x118] sm:$0xff]
        %v2222 = vld [vmem:[%s2185 + $0x120] sm:$0xff]
        %v2223 = vld [vmem:[%s2185 + $0x128] sm:$0xff]
        %v2224 = vld [vmem:[%s2185 + $0x130] sm:$0xff]
        %v2225 = vld [vmem:[%s2185 + $0x138] sm:$0xff]
        %v2226 = vld [vmem:[%s2185 + $0x140] sm:$0xff]
        %v2227 = vld [vmem:[%s2185 + $0x148] sm:$0xff]
        %v2228 = vld [vmem:[%s2185 + $0x150] sm:$0xff]
        %v2229 = vld [vmem:[%s2185 + $0x158] sm:$0xff]
        %v2230 = vld [vmem:[%s2185 + $0x160] sm:$0xff]
        %v2231 = vld [vmem:[%s2185 + $0x168] sm:$0xff]
        %v2232 = vld [vmem:[%s2185 + $0x170] sm:$0xff]
        %v2233 = vld [vmem:[%s2185 + $0x178] sm:$0xff]
        %v2234 = vld [vmem:[%s2185 + $0x180] sm:$0xff]
        %v2235 = vld [vmem:[%s2185 + $0x188] sm:$0xff]
        %2236 = vmatprep.subr.mxu0 0.0
        %2237 = vmatpush1.msra.mxu0 %v1804
        %2238 = vmatprep.subr.mxu0 0.0
        %2239 = vmatpush1.msra.mxu0 %v1805
        %2240 = vmatprep.subr.mxu0 0.0
        %2241 = vmatpush1.msra.mxu0 %v1806
        %2242 = vmatprep.subr.mxu0 0.0
        %2243 = vmatpush1.msra.mxu0 %v1807
        %2244 = vmatprep.subr.mxu0 0.0
        %2245 = vmatpush1.msra.mxu0 %v1808
        %2246 = vmatprep.subr.mxu0 0.0
        %2247 = vmatpush1.msra.mxu0 %v1809
        %2248 = vmatprep.subr.mxu0 0.0
        %2249 = vmatpush1.msra.mxu0 %v1810
        %2250 = vmatprep.subr.mxu0 0.0
        %2251 = vmatpush1.msra.mxu0 %v1811
        %2252 = vmatprep.subr.mxu0 0.0
        %2253 = vmatpush1.msra.mxu0 %v1812
        %2254 = vmatprep.subr.mxu0 0.0
        %2255 = vmatpush1.msra.mxu0 %v1813
        %2256 = vmatprep.subr.mxu0 0.0
        %2257 = vmatpush1.msra.mxu0 %v1814
        %2258 = vmatprep.subr.mxu0 0.0
        %2259 = vmatpush1.msra.mxu0 %v1815
        %2260 = vmatprep.subr.mxu0 0.0
        %2261 = vmatpush1.msra.mxu0 %v1816
        %2262 = vmatprep.subr.mxu0 0.0
        %2263 = vmatpush1.msra.mxu0 %v1817
        %2264 = vmatprep.subr.mxu0 0.0
        %2265 = vmatpush1.msra.mxu0 %v1818
        %2266 = vmatprep.subr.mxu0 0.0
        %2267 = vmatpush1.msra.mxu0 %v1819
        %2268 = vmatprep.subr.mxu0 0.0
        %2269 = vmatpush1.msra.mxu0 0.0
        %2270 = vmatprep.subr.mxu0 0.0
        %2271 = vmatpush1.msra.mxu0 0.0
        %2272 = vmatprep.subr.mxu0 0.0
        %2273 = vmatpush1.msra.mxu0 0.0
        %2274 = vmatprep.subr.mxu0 0.0
        %2275 = vmatpush1.msra.mxu0 0.0
        %2276 = vmatprep.subr.mxu0 0.0
        %2277 = vmatpush1.msra.mxu0 0.0
        %2278 = vmatprep.subr.mxu0 0.0
        %2279 = vmatpush1.msra.mxu0 0.0
        %2280 = vmatprep.subr.mxu0 0.0
        %2281 = vmatpush1.msra.mxu0 0.0
        %2282 = vmatprep.subr.mxu0 0.0
        %2283 = vmatpush1.msra.mxu0 0.0
        %2284 = vmatprep.subr.mxu0 0.0
        %2285 = vmatpush1.msra.mxu0 0.0
        %2286 = vmatprep.subr.mxu0 0.0
        %2287 = vmatpush1.msra.mxu0 0.0
        %2288 = vmatprep.subr.mxu0 0.0
        %2289 = vmatpush1.msra.mxu0 0.0
        %2290 = vmatprep.subr.mxu0 0.0
        %2291 = vmatpush1.msra.mxu0 0.0
        %2292 = vmatprep.subr.mxu0 0.0
        %2293 = vmatpush1.msra.mxu0 0.0
        %2294 = vmatprep.subr.mxu0 0.0
        %2295 = vmatpush1.msra.mxu0 0.0
        %2296 = vmatprep.subr.mxu0 0.0
        %2297 = vmatpush1.msra.mxu0 0.0
        %2298 = vmatprep.subr.mxu0 0.0
        %2299 = vmatpush1.msra.mxu0 0.0
        %2300 = vmatprep.mubr.f32.mxu0 0.0
        %2301 = vmatmul.mubr.f32.gmra.mrb[0].mxu0 %v2186
        %v2302 = vpop.f32.mrb[0].mxu0
        %v2303 = vadd.f32 0.0, %v2302
        %v2304 = vpop.f32.mrb[0].mxu0
        %2305 = vmatprep.mubr.f32.mxu0 0.0
        %2306 = vmatmul.mubr.f32.gmra.mrb[0].mxu0 %v2187
        %v2307 = vpop.f32.mrb[0].mxu0
        %v2308 = vadd.f32 0.0, %v2307
        %v2309 = vpop.f32.mrb[0].mxu0
        %2310 = vmatprep.mubr.f32.mxu0 0.0
        %2311 = vmatmul.mubr.f32.gmra.mrb[0].mxu0 %v2188
        %v2312 = vpop.f32.mrb[0].mxu0
        %v2313 = vadd.f32 0.0, %v2312
        %v2314 = vpop.f32.mrb[0].mxu0
        %2315 = vmatprep.mubr.f32.mxu0 0.0
        %2316 = vmatmul.mubr.f32.gmra.mrb[0].mxu0 %v2189
        %v2317 = vpop.f32.mrb[0].mxu0
        %v2318 = vadd.f32 0.0, %v2317
        %v2319 = vpop.f32.mrb[0].mxu0
        %2320 = vmatprep.mubr.f32.mxu0 0.0
        %2321 = vmatmul.mubr.f32.gmra.mrb[0].mxu0 %v2190
        %v2322 = vpop.f32.mrb[0].mxu0
        %v2323 = vadd.f32 0.0, %v2322
        %v2324 = vpop.f32.mrb[0].mxu0
        %2325 = vmatprep.mubr.f32.mxu0 0.0
        %2326 = vmatmul.mubr.f32.gmra.mrb[0].mxu0 %v2191
        %v2327 = vpop.f32.mrb[0].mxu0
        %v2328 = vadd.f32 0.0, %v2327
        %v2329 = vpop.f32.mrb[0].mxu0
        %2330 = vmatprep.mubr.f32.mxu0 0.0
        %2331 = vmatmul.mubr.f32.gmra.mrb[0].mxu0 %v2192
        %v2332 = vpop.f32.mrb[0].mxu0
        %v2333 = vadd.f32 0.0, %v2332
        %v2334 = vpop.f32.mrb[0].mxu0
        %2335 = vmatprep.mubr.f32.mxu0 0.0
        %2336 = vmatmul.mubr.f32.gmra.mrb[0].mxu0 %v2193
        %v2337 = vpop.f32.mrb[0].mxu0
        %v2338 = vadd.f32 0.0, %v2337
        %v2339 = vpop.f32.mrb[0].mxu0
        %2340 = vmatprep.mubr.f32.mxu0 0.0
        %2341 = vmatmul.mubr.f32.gmra.mrb[0].mxu0 %v2194
        %v2342 = vpop.f32.mrb[0].mxu0
        %v2343 = vadd.f32 0.0, %v2342
        %v2344 = vpop.f32.mrb[0].mxu0
        %2345 = vmatprep.mubr.f32.mxu0 0.0
        %2346 = vmatmul.mubr.f32.gmra.mrb[0].mxu0 %v2195
        %v2347 = vpop.f32.mrb[0].mxu0
        %v2348 = vadd.f32 0.0, %v2347
        %v2349 = vpop.f32.mrb[0].mxu0
        %2350 = vmatprep.mubr.f32.mxu0 0.0
        %2351 = vmatmul.mubr.f32.gmra.mrb[0].mxu0 %v2196
        %v2352 = vpop.f32.mrb[0].mxu0
        %v2353 = vadd.f32 0.0, %v2352
        %v2354 = vpop.f32.mrb[0].mxu0
        %2355 = vmatprep.mubr.f32.mxu0 0.0
        %2356 = vmatmul.mubr.f32.gmra.mrb[0].mxu0 %v2197
        %v2357 = vpop.f32.mrb[0].mxu0
        %v2358 = vadd.f32 0.0, %v2357
        %v2359 = vpop.f32.mrb[0].mxu0
        %2360 = vmatprep.mubr.f32.mxu0 0.0
        %2361 = vmatmul.mubr.f32.gmra.mrb[0].mxu0 %v2198
        %v2362 = vpop.f32.mrb[0].mxu0
        %v2363 = vadd.f32 0.0, %v2362
        %v2364 = vpop.f32.mrb[0].mxu0
        %2365 = vmatprep.mubr.f32.mxu0 0.0
        %2366 = vmatmul.mubr.f32.gmra.mrb[0].mxu0 %v2199
        %v2367 = vpop.f32.mrb[0].mxu0
        %v2368 = vadd.f32 0.0, %v2367
        %v2369 = vpop.f32.mrb[0].mxu0
        %2370 = vmatprep.mubr.f32.mxu0 0.0
        %2371 = vmatmul.mubr.f32.gmra.mrb[0].mxu0 %v2200
        %v2372 = vpop.f32.mrb[0].mxu0
        %v2373 = vadd.f32 0.0, %v2372
        %v2374 = vpop.f32.mrb[0].mxu0
        %2375 = vmatprep.mubr.f32.mxu0 0.0
        %2376 = vmatmul.mubr.f32.gmra.mrb[0].mxu0 %v2201
        %v2377 = vpop.f32.mrb[0].mxu0
        %v2378 = vadd.f32 0.0, %v2377
        %v2379 = vpop.f32.mrb[0].mxu0
        %2380 = vmatprep.mubr.f32.mxu0 0.0
        %2381 = vmatmul.mubr.f32.gmra.mrb[0].mxu0 %v2202
        %v2382 = vpop.f32.mrb[0].mxu0
        %v2383 = vadd.f32 0.0, %v2382
        %v2384 = vpop.f32.mrb[0].mxu0
        %2385 = vmatprep.mubr.f32.mxu0 0.0
        %2386 = vmatmul.mubr.f32.gmra.mrb[0].mxu0 %v2203
        %v2387 = vpop.f32.mrb[0].mxu0
        %v2388 = vadd.f32 0.0, %v2387
        %v2389 = vpop.f32.mrb[0].mxu0
        %2390 = vmatprep.mubr.f32.mxu0 0.0
        %2391 = vmatmul.mubr.f32.gmra.mrb[0].mxu0 %v2204
        %v2392 = vpop.f32.mrb[0].mxu0
        %v2393 = vadd.f32 0.0, %v2392
        %v2394 = vpop.f32.mrb[0].mxu0
        %2395 = vmatprep.mubr.f32.mxu0 0.0
        %2396 = vmatmul.mubr.f32.gmra.mrb[0].mxu0 %v2205
        %v2397 = vpop.f32.mrb[0].mxu0
        %v2398 = vadd.f32 0.0, %v2397
        %v2399 = vpop.f32.mrb[0].mxu0
        %2400 = vmatprep.mubr.f32.mxu0 0.0
        %2401 = vmatmul.mubr.f32.gmra.mrb[0].mxu0 %v2206
        %v2402 = vpop.f32.mrb[0].mxu0
        %v2403 = vadd.f32 0.0, %v2402
        %v2404 = vpop.f32.mrb[0].mxu0
        %2405 = vmatprep.mubr.f32.mxu0 0.0
        %2406 = vmatmul.mubr.f32.gmra.mrb[0].mxu0 %v2207
        %v2407 = vpop.f32.mrb[0].mxu0
        %v2408 = vadd.f32 0.0, %v2407
        %v2409 = vpop.f32.mrb[0].mxu0
        %2410 = vmatprep.mubr.f32.mxu0 0.0
        %2411 = vmatmul.mubr.f32.gmra.mrb[0].mxu0 %v2208
        %v2412 = vpop.f32.mrb[0].mxu0
        %v2413 = vadd.f32 0.0, %v2412
        %v2414 = vpop.f32.mrb[0].mxu0
        %2415 = vmatprep.mubr.f32.mxu0 0.0
        %2416 = vmatmul.mubr.f32.gmra.mrb[0].mxu0 %v2209
        %v2417 = vpop.f32.mrb[0].mxu0
        %v2418 = vadd.f32 0.0, %v2417
        %v2419 = vpop.f32.mrb[0].mxu0
        %2420 = vmatprep.mubr.f32.mxu0 0.0
        %2421 = vmatmul.mubr.f32.gmra.mrb[0].mxu0 %v2210
        %v2422 = vpop.f32.mrb[0].mxu0
        %v2423 = vadd.f32 0.0, %v2422
        %v2424 = vpop.f32.mrb[0].mxu0
        %2425 = vmatprep.mubr.f32.mxu0 0.0
        %2426 = vmatmul.mubr.f32.gmra.mrb[0].mxu0 %v2211
        %v2427 = vpop.f32.mrb[0].mxu0
        %v2428 = vadd.f32 0.0, %v2427
        %v2429 = vpop.f32.mrb[0].mxu0
        %2430 = vmatprep.mubr.f32.mxu0 0.0
        %2431 = vmatmul.mubr.f32.gmra.mrb[0].mxu0 %v2212
        %v2432 = vpop.f32.mrb[0].mxu0
        %v2433 = vadd.f32 0.0, %v2432
        %v2434 = vpop.f32.mrb[0].mxu0
        %2435 = vmatprep.mubr.f32.mxu0 0.0
        %2436 = vmatmul.mubr.f32.gmra.mrb[0].mxu0 %v2213
        %v2437 = vpop.f32.mrb[0].mxu0
        %v2438 = vadd.f32 0.0, %v2437
        %v2439 = vpop.f32.mrb[0].mxu0
        %2440 = vmatprep.mubr.f32.mxu0 0.0
        %2441 = vmatmul.mubr.f32.gmra.mrb[0].mxu0 %v2214
        %v2442 = vpop.f32.mrb[0].mxu0
        %v2443 = vadd.f32 0.0, %v2442
        %v2444 = vpop.f32.mrb[0].mxu0
        %2445 = vmatprep.mubr.f32.mxu0 0.0
        %2446 = vmatmul.mubr.f32.gmra.mrb[0].mxu0 %v2215
        %v2447 = vpop.f32.mrb[0].mxu0
        %v2448 = vadd.f32 0.0, %v2447
        %v2449 = vpop.f32.mrb[0].mxu0
        %2450 = vmatprep.mubr.f32.mxu0 0.0
        %2451 = vmatmul.mubr.f32.gmra.mrb[0].mxu0 %v2216
        %v2452 = vpop.f32.mrb[0].mxu0
        %v2453 = vadd.f32 0.0, %v2452
        %v2454 = vpop.f32.mrb[0].mxu0
        %2455 = vmatprep.mubr.f32.mxu0 0.0
        %2456 = vmatmul.mubr.f32.gmra.mrb[0].mxu0 %v2217
        %v2457 = vpop.f32.mrb[0].mxu0
        %v2458 = vadd.f32 0.0, %v2457
        %v2459 = vpop.f32.mrb[0].mxu0
        %2460 = vmatprep.mubr.f32.mxu0 0.0
        %2461 = vmatmul.mubr.f32.gmra.mrb[0].mxu0 %v2218
        %v2462 = vpop.f32.mrb[0].mxu0
        %v2463 = vadd.f32 0.0, %v2462
        %v2464 = vpop.f32.mrb[0].mxu0
        %2465 = vmatprep.mubr.f32.mxu0 0.0
        %2466 = vmatmul.mubr.f32.gmra.mrb[0].mxu0 %v2219
        %v2467 = vpop.f32.mrb[0].mxu0
        %v2468 = vadd.f32 0.0, %v2467
        %v2469 = vpop.f32.mrb[0].mxu0
        %2470 = vmatprep.mubr.f32.mxu0 0.0
        %2471 = vmatmul.mubr.f32.gmra.mrb[0].mxu0 %v2220
        %v2472 = vpop.f32.mrb[0].mxu0
        %v2473 = vadd.f32 0.0, %v2472
        %v2474 = vpop.f32.mrb[0].mxu0
        %2475 = vmatprep.mubr.f32.mxu0 0.0
        %2476 = vmatmul.mubr.f32.gmra.mrb[0].mxu0 %v2221
        %v2477 = vpop.f32.mrb[0].mxu0
        %v2478 = vadd.f32 0.0, %v2477
        %v2479 = vpop.f32.mrb[0].mxu0
        %2480 = vmatprep.mubr.f32.mxu0 0.0
        %2481 = vmatmul.mubr.f32.gmra.mrb[0].mxu0 %v2222
        %v2482 = vpop.f32.mrb[0].mxu0
        %v2483 = vadd.f32 0.0, %v2482
        %v2484 = vpop.f32.mrb[0].mxu0
        %2485 = vmatprep.mubr.f32.mxu0 0.0
        %2486 = vmatmul.mubr.f32.gmra.mrb[0].mxu0 %v2223
        %v2487 = vpop.f32.mrb[0].mxu0
        %v2488 = vadd.f32 0.0, %v2487
        %v2489 = vpop.f32.mrb[0].mxu0
        %2490 = vmatprep.mubr.f32.mxu0 0.0
        %2491 = vmatmul.mubr.f32.gmra.mrb[0].mxu0 %v2224
        %v2492 = vpop.f32.mrb[0].mxu0
        %v2493 = vadd.f32 0.0, %v2492
        %v2494 = vpop.f32.mrb[0].mxu0
        %2495 = vmatprep.mubr.f32.mxu0 0.0
        %2496 = vmatmul.mubr.f32.gmra.mrb[0].mxu0 %v2225
        %v2497 = vpop.f32.mrb[0].mxu0
        %v2498 = vadd.f32 0.0, %v2497
        %v2499 = vpop.f32.mrb[0].mxu0
        %2500 = vmatprep.mubr.f32.mxu0 0.0
        %2501 = vmatmul.mubr.f32.gmra.mrb[0].mxu0 %v2226
        %v2502 = vpop.f32.mrb[0].mxu0
        %v2503 = vadd.f32 0.0, %v2502
        %v2504 = vpop.f32.mrb[0].mxu0
        %2505 = vmatprep.mubr.f32.mxu0 0.0
        %2506 = vmatmul.mubr.f32.gmra.mrb[0].mxu0 %v2227
        %v2507 = vpop.f32.mrb[0].mxu0
        %v2508 = vadd.f32 0.0, %v2507
        %v2509 = vpop.f32.mrb[0].mxu0
        %2510 = vmatprep.mubr.f32.mxu0 0.0
        %2511 = vmatmul.mubr.f32.gmra.mrb[0].mxu0 %v2228
        %v2512 = vpop.f32.mrb[0].mxu0
        %v2513 = vadd.f32 0.0, %v2512
        %v2514 = vpop.f32.mrb[0].mxu0
        %2515 = vmatprep.mubr.f32.mxu0 0.0
        %2516 = vmatmul.mubr.f32.gmra.mrb[0].mxu0 %v2229
        %v2517 = vpop.f32.mrb[0].mxu0
        %v2518 = vadd.f32 0.0, %v2517
        %v2519 = vpop.f32.mrb[0].mxu0
        %2520 = vmatprep.mubr.f32.mxu0 0.0
        %2521 = vmatmul.mubr.f32.gmra.mrb[0].mxu0 %v2230
        %v2522 = vpop.f32.mrb[0].mxu0
        %v2523 = vadd.f32 0.0, %v2522
        %v2524 = vpop.f32.mrb[0].mxu0
        %2525 = vmatprep.mubr.f32.mxu0 0.0
        %2526 = vmatmul.mubr.f32.gmra.mrb[0].mxu0 %v2231
        %v2527 = vpop.f32.mrb[0].mxu0
        %v2528 = vadd.f32 0.0, %v2527
        %v2529 = vpop.f32.mrb[0].mxu0
        %2530 = vmatprep.mubr.f32.mxu0 0.0
        %2531 = vmatmul.mubr.f32.gmra.mrb[0].mxu0 %v2232
        %v2532 = vpop.f32.mrb[0].mxu0
        %v2533 = vadd.f32 0.0, %v2532
        %v2534 = vpop.f32.mrb[0].mxu0
        %2535 = vmatprep.mubr.f32.mxu0 0.0
        %2536 = vmatmul.mubr.f32.gmra.mrb[0].mxu0 %v2233
        %v2537 = vpop.f32.mrb[0].mxu0
        %v2538 = vadd.f32 0.0, %v2537
        %v2539 = vpop.f32.mrb[0].mxu0
        %2540 = vmatprep.mubr.f32.mxu0 0.0
        %2541 = vmatmul.mubr.f32.gmra.mrb[0].mxu0 %v2234
        %v2542 = vpop.f32.mrb[0].mxu0
        %v2543 = vadd.f32 0.0, %v2542
        %v2544 = vpop.f32.mrb[0].mxu0
        %2545 = vmatprep.mubr.f32.mxu0 0.0
        %2546 = vmatmul.mubr.f32.gmra.mrb[0].mxu0 %v2235
        %v2547 = vpop.f32.mrb[0].mxu0
        %v2548 = vadd.f32 0.0, %v2547
        %v2549 = vpop.f32.mrb[0].mxu0
        %2550 = vdwg.mxu0
        %v2551 = vmax.f32 %v1937, %v2303
        %v2552 = vmax.f32 %v1942, %v2308
        %v2553 = vmax.f32 %v1947, %v2313
        %v2554 = vmax.f32 %v1952, %v2318
        %v2555 = vmax.f32 %v1957, %v2323
        %v2556 = vmax.f32 %v1962, %v2328
        %v2557 = vmax.f32 %v1967, %v2333
        %v2558 = vmax.f32 %v1972, %v2338
        %v2559 = vmax.f32 %v1977, %v2343
        %v2560 = vmax.f32 %v1982, %v2348
        %v2561 = vmax.f32 %v1987, %v2353
        %v2562 = vmax.f32 %v1992, %v2358
        %v2563 = vmax.f32 %v1997, %v2363
        %v2564 = vmax.f32 %v2002, %v2368
        %v2565 = vmax.f32 %v2007, %v2373
        %v2566 = vmax.f32 %v2012, %v2378
        %v2567 = vmax.f32 %v2017, %v2383
        %v2568 = vmax.f32 %v2022, %v2388
        %v2569 = vmax.f32 %v2027, %v2393
        %v2570 = vmax.f32 %v2032, %v2398
        %v2571 = vmax.f32 %v2037, %v2403
        %v2572 = vmax.f32 %v2042, %v2408
        %v2573 = vmax.f32 %v2047, %v2413
        %v2574 = vmax.f32 %v2052, %v2418
        %v2575 = vmax.f32 %v2057, %v2423
        %v2576 = vmax.f32 %v2062, %v2428
        %v2577 = vmax.f32 %v2067, %v2433
        %v2578 = vmax.f32 %v2072, %v2438
        %v2579 = vmax.f32 %v2077, %v2443
        %v2580 = vmax.f32 %v2082, %v2448
        %v2581 = vmax.f32 %v2087, %v2453
        %v2582 = vmax.f32 %v2092, %v2458
        %v2583 = vmax.f32 %v2097, %v2463
        %v2584 = vmax.f32 %v2102, %v2468
        %v2585 = vmax.f32 %v2107, %v2473
        %v2586 = vmax.f32 %v2112, %v2478
        %v2587 = vmax.f32 %v2117, %v2483
        %v2588 = vmax.f32 %v2122, %v2488
        %v2589 = vmax.f32 %v2127, %v2493
        %v2590 = vmax.f32 %v2132, %v2498
        %v2591 = vmax.f32 %v2137, %v2503
        %v2592 = vmax.f32 %v2142, %v2508
        %v2593 = vmax.f32 %v2147, %v2513
        %v2594 = vmax.f32 %v2152, %v2518
        %v2595 = vmax.f32 %v2157, %v2523
        %v2596 = vmax.f32 %v2162, %v2528
        %v2597 = vmax.f32 %v2167, %v2533
        %v2598 = vmax.f32 %v2172, %v2538
        %v2599 = vmax.f32 %v2177, %v2543
        %v2600 = vmax.f32 %v2182, %v2548
        %s2601 = scalar_lea.vmem %s1776, 800 [#allocation2]
        %v2602 = vld [vmem:[%s2601] sm:$0xff]
        %v2603 = vld [vmem:[%s2601 + $0x8] sm:$0xff]
        %v2604 = vld [vmem:[%s2601 + $0x10] sm:$0xff]
        %v2605 = vld [vmem:[%s2601 + $0x18] sm:$0xff]
        %v2606 = vld [vmem:[%s2601 + $0x20] sm:$0xff]
        %v2607 = vld [vmem:[%s2601 + $0x28] sm:$0xff]
        %v2608 = vld [vmem:[%s2601 + $0x30] sm:$0xff]
        %v2609 = vld [vmem:[%s2601 + $0x38] sm:$0xff]
        %v2610 = vld [vmem:[%s2601 + $0x40] sm:$0xff]
        %v2611 = vld [vmem:[%s2601 + $0x48] sm:$0xff]
        %v2612 = vld [vmem:[%s2601 + $0x50] sm:$0xff]
        %v2613 = vld [vmem:[%s2601 + $0x58] sm:$0xff]
        %v2614 = vld [vmem:[%s2601 + $0x60] sm:$0xff]
        %v2615 = vld [vmem:[%s2601 + $0x68] sm:$0xff]
        %v2616 = vld [vmem:[%s2601 + $0x70] sm:$0xff]
        %v2617 = vld [vmem:[%s2601 + $0x78] sm:$0xff]
        %v2618 = vld [vmem:[%s2601 + $0x80] sm:$0xff]
        %v2619 = vld [vmem:[%s2601 + $0x88] sm:$0xff]
        %v2620 = vld [vmem:[%s2601 + $0x90] sm:$0xff]
        %v2621 = vld [vmem:[%s2601 + $0x98] sm:$0xff]
        %v2622 = vld [vmem:[%s2601 + $0xa0] sm:$0xff]
        %v2623 = vld [vmem:[%s2601 + $0xa8] sm:$0xff]
        %v2624 = vld [vmem:[%s2601 + $0xb0] sm:$0xff]
        %v2625 = vld [vmem:[%s2601 + $0xb8] sm:$0xff]
        %v2626 = vld [vmem:[%s2601 + $0xc0] sm:$0xff]
        %v2627 = vld [vmem:[%s2601 + $0xc8] sm:$0xff]
        %v2628 = vld [vmem:[%s2601 + $0xd0] sm:$0xff]
        %v2629 = vld [vmem:[%s2601 + $0xd8] sm:$0xff]
        %v2630 = vld [vmem:[%s2601 + $0xe0] sm:$0xff]
        %v2631 = vld [vmem:[%s2601 + $0xe8] sm:$0xff]
        %v2632 = vld [vmem:[%s2601 + $0xf0] sm:$0xff]
        %v2633 = vld [vmem:[%s2601 + $0xf8] sm:$0xff]
        %v2634 = vld [vmem:[%s2601 + $0x100] sm:$0xff]
        %v2635 = vld [vmem:[%s2601 + $0x108] sm:$0xff]
        %v2636 = vld [vmem:[%s2601 + $0x110] sm:$0xff]
        %v2637 = vld [vmem:[%s2601 + $0x118] sm:$0xff]
        %v2638 = vld [vmem:[%s2601 + $0x120] sm:$0xff]
        %v2639 = vld [vmem:[%s2601 + $0x128] sm:$0xff]
        %v2640 = vld [vmem:[%s2601 + $0x130] sm:$0xff]
        %v2641 = vld [vmem:[%s2601 + $0x138] sm:$0xff]
        %v2642 = vld [vmem:[%s2601 + $0x140] sm:$0xff]
        %v2643 = vld [vmem:[%s2601 + $0x148] sm:$0xff]
        %v2644 = vld [vmem:[%s2601 + $0x150] sm:$0xff]
        %v2645 = vld [vmem:[%s2601 + $0x158] sm:$0xff]
        %v2646 = vld [vmem:[%s2601 + $0x160] sm:$0xff]
        %v2647 = vld [vmem:[%s2601 + $0x168] sm:$0xff]
        %v2648 = vld [vmem:[%s2601 + $0x170] sm:$0xff]
        %v2649 = vld [vmem:[%s2601 + $0x178] sm:$0xff]
        %v2650 = vld [vmem:[%s2601 + $0x180] sm:$0xff]
        %v2651 = vld [vmem:[%s2601 + $0x188] sm:$0xff]
        %2652 = vmatprep.subr.mxu0 0.0
        %2653 = vmatpush1.msra.mxu0 %v1804
        %2654 = vmatprep.subr.mxu0 0.0
        %2655 = vmatpush1.msra.mxu0 %v1805
        %2656 = vmatprep.subr.mxu0 0.0
        %2657 = vmatpush1.msra.mxu0 %v1806
        %2658 = vmatprep.subr.mxu0 0.0
        %2659 = vmatpush1.msra.mxu0 %v1807
        %2660 = vmatprep.subr.mxu0 0.0
        %2661 = vmatpush1.msra.mxu0 %v1808
        %2662 = vmatprep.subr.mxu0 0.0
        %2663 = vmatpush1.msra.mxu0 %v1809
        %2664 = vmatprep.subr.mxu0 0.0
        %2665 = vmatpush1.msra.mxu0 %v1810
        %2666 = vmatprep.subr.mxu0 0.0
        %2667 = vmatpush1.msra.mxu0 %v1811
        %2668 = vmatprep.subr.mxu0 0.0
        %2669 = vmatpush1.msra.mxu0 %v1812
        %2670 = vmatprep.subr.mxu0 0.0
        %2671 = vmatpush1.msra.mxu0 %v1813
        %2672 = vmatprep.subr.mxu0 0.0
        %2673 = vmatpush1.msra.mxu0 %v1814
        %2674 = vmatprep.subr.mxu0 0.0
        %2675 = vmatpush1.msra.mxu0 %v1815
        %2676 = vmatprep.subr.mxu0 0.0
        %2677 = vmatpush1.msra.mxu0 %v1816
        %2678 = vmatprep.subr.mxu0 0.0
        %2679 = vmatpush1.msra.mxu0 %v1817
        %2680 = vmatprep.subr.mxu0 0.0
        %2681 = vmatpush1.msra.mxu0 %v1818
        %2682 = vmatprep.subr.mxu0 0.0
        %2683 = vmatpush1.msra.mxu0 %v1819
        %2684 = vmatprep.subr.mxu0 0.0
        %2685 = vmatpush1.msra.mxu0 0.0
        %2686 = vmatprep.subr.mxu0 0.0
        %2687 = vmatpush1.msra.mxu0 0.0
        %2688 = vmatprep.subr.mxu0 0.0
        %2689 = vmatpush1.msra.mxu0 0.0
        %2690 = vmatprep.subr.mxu0 0.0
        %2691 = vmatpush1.msra.mxu0 0.0
        %2692 = vmatprep.subr.mxu0 0.0
        %2693 = vmatpush1.msra.mxu0 0.0
        %2694 = vmatprep.subr.mxu0 0.0
        %2695 = vmatpush1.msra.mxu0 0.0
        %2696 = vmatprep.subr.mxu0 0.0
        %2697 = vmatpush1.msra.mxu0 0.0
        %2698 = vmatprep.subr.mxu0 0.0
        %2699 = vmatpush1.msra.mxu0 0.0
        %2700 = vmatprep.subr.mxu0 0.0
        %2701 = vmatpush1.msra.mxu0 0.0
        %2702 = vmatprep.subr.mxu0 0.0
        %2703 = vmatpush1.msra.mxu0 0.0
        %2704 = vmatprep.subr.mxu0 0.0
        %2705 = vmatpush1.msra.mxu0 0.0
        %2706 = vmatprep.subr.mxu0 0.0
        %2707 = vmatpush1.msra.mxu0 0.0
        %2708 = vmatprep.subr.mxu0 0.0
        %2709 = vmatpush1.msra.mxu0 0.0
        %2710 = vmatprep.subr.mxu0 0.0
        %2711 = vmatpush1.msra.mxu0 0.0
        %2712 = vmatprep.subr.mxu0 0.0
        %2713 = vmatpush1.msra.mxu0 0.0
        %2714 = vmatprep.subr.mxu0 0.0
        %2715 = vmatpush1.msra.mxu0 0.0
        %2716 = vmatprep.mubr.f32.mxu0 0.0
        %2717 = vmatmul.mubr.f32.gmra.mrb[0].mxu0 %v2602
        %v2718 = vpop.f32.mrb[0].mxu0
        %v2719 = vadd.f32 0.0, %v2718
        %v2720 = vpop.f32.mrb[0].mxu0
        %2721 = vmatprep.mubr.f32.mxu0 0.0
        %2722 = vmatmul.mubr.f32.gmra.mrb[0].mxu0 %v2603
        %v2723 = vpop.f32.mrb[0].mxu0
        %v2724 = vadd.f32 0.0, %v2723
        %v2725 = vpop.f32.mrb[0].mxu0
        %2726 = vmatprep.mubr.f32.mxu0 0.0
        %2727 = vmatmul.mubr.f32.gmra.mrb[0].mxu0 %v2604
        %v2728 = vpop.f32.mrb[0].mxu0
        %v2729 = vadd.f32 0.0, %v2728
        %v2730 = vpop.f32.mrb[0].mxu0
        %2731 = vmatprep.mubr.f32.mxu0 0.0
        %2732 = vmatmul.mubr.f32.gmra.mrb[0].mxu0 %v2605
        %v2733 = vpop.f32.mrb[0].mxu0
        %v2734 = vadd.f32 0.0, %v2733
        %v2735 = vpop.f32.mrb[0].mxu0
        %2736 = vmatprep.mubr.f32.mxu0 0.0
        %2737 = vmatmul.mubr.f32.gmra.mrb[0].mxu0 %v2606
        %v2738 = vpop.f32.mrb[0].mxu0
        %v2739 = vadd.f32 0.0, %v2738
        %v2740 = vpop.f32.mrb[0].mxu0
        %2741 = vmatprep.mubr.f32.mxu0 0.0
        %2742 = vmatmul.mubr.f32.gmra.mrb[0].mxu0 %v2607
        %v2743 = vpop.f32.mrb[0].mxu0
        %v2744 = vadd.f32 0.0, %v2743
        %v2745 = vpop.f32.mrb[0].mxu0
        %2746 = vmatprep.mubr.f32.mxu0 0.0
        %2747 = vmatmul.mubr.f32.gmra.mrb[0].mxu0 %v2608
        %v2748 = vpop.f32.mrb[0].mxu0
        %v2749 = vadd.f32 0.0, %v2748
        %v2750 = vpop.f32.mrb[0].mxu0
        %2751 = vmatprep.mubr.f32.mxu0 0.0
        %2752 = vmatmul.mubr.f32.gmra.mrb[0].mxu0 %v2609
        %v2753 = vpop.f32.mrb[0].mxu0
        %v2754 = vadd.f32 0.0, %v2753
        %v2755 = vpop.f32.mrb[0].mxu0
        %2756 = vmatprep.mubr.f32.mxu0 0.0
        %2757 = vmatmul.mubr.f32.gmra.mrb[0].mxu0 %v2610
        %v2758 = vpop.f32.mrb[0].mxu0
        %v2759 = vadd.f32 0.0, %v2758
        %v2760 = vpop.f32.mrb[0].mxu0
        %2761 = vmatprep.mubr.f32.mxu0 0.0
        %2762 = vmatmul.mubr.f32.gmra.mrb[0].mxu0 %v2611
        %v2763 = vpop.f32.mrb[0].mxu0
        %v2764 = vadd.f32 0.0, %v2763
        %v2765 = vpop.f32.mrb[0].mxu0
        %2766 = vmatprep.mubr.f32.mxu0 0.0
        %2767 = vmatmul.mubr.f32.gmra.mrb[0].mxu0 %v2612
        %v2768 = vpop.f32.mrb[0].mxu0
        %v2769 = vadd.f32 0.0, %v2768
        %v2770 = vpop.f32.mrb[0].mxu0
        %2771 = vmatprep.mubr.f32.mxu0 0.0
        %2772 = vmatmul.mubr.f32.gmra.mrb[0].mxu0 %v2613
        %v2773 = vpop.f32.mrb[0].mxu0
        %v2774 = vadd.f32 0.0, %v2773
        %v2775 = vpop.f32.mrb[0].mxu0
        %2776 = vmatprep.mubr.f32.mxu0 0.0
        %2777 = vmatmul.mubr.f32.gmra.mrb[0].mxu0 %v2614
        %v2778 = vpop.f32.mrb[0].mxu0
        %v2779 = vadd.f32 0.0, %v2778
        %v2780 = vpop.f32.mrb[0].mxu0
        %2781 = vmatprep.mubr.f32.mxu0 0.0
        %2782 = vmatmul.mubr.f32.gmra.mrb[0].mxu0 %v2615
        %v2783 = vpop.f32.mrb[0].mxu0
        %v2784 = vadd.f32 0.0, %v2783
        %v2785 = vpop.f32.mrb[0].mxu0
        %2786 = vmatprep.mubr.f32.mxu0 0.0
        %2787 = vmatmul.mubr.f32.gmra.mrb[0].mxu0 %v2616
        %v2788 = vpop.f32.mrb[0].mxu0
        %v2789 = vadd.f32 0.0, %v2788
        %v2790 = vpop.f32.mrb[0].mxu0
        %2791 = vmatprep.mubr.f32.mxu0 0.0
        %2792 = vmatmul.mubr.f32.gmra.mrb[0].mxu0 %v2617
        %v2793 = vpop.f32.mrb[0].mxu0
        %v2794 = vadd.f32 0.0, %v2793
        %v2795 = vpop.f32.mrb[0].mxu0
        %2796 = vmatprep.mubr.f32.mxu0 0.0
        %2797 = vmatmul.mubr.f32.gmra.mrb[0].mxu0 %v2618
        %v2798 = vpop.f32.mrb[0].mxu0
        %v2799 = vadd.f32 0.0, %v2798
        %v2800 = vpop.f32.mrb[0].mxu0
        %2801 = vmatprep.mubr.f32.mxu0 0.0
        %2802 = vmatmul.mubr.f32.gmra.mrb[0].mxu0 %v2619
        %v2803 = vpop.f32.mrb[0].mxu0
        %v2804 = vadd.f32 0.0, %v2803
        %v2805 = vpop.f32.mrb[0].mxu0
        %2806 = vmatprep.mubr.f32.mxu0 0.0
        %2807 = vmatmul.mubr.f32.gmra.mrb[0].mxu0 %v2620
        %v2808 = vpop.f32.mrb[0].mxu0
        %v2809 = vadd.f32 0.0, %v2808
        %v2810 = vpop.f32.mrb[0].mxu0
        %2811 = vmatprep.mubr.f32.mxu0 0.0
        %2812 = vmatmul.mubr.f32.gmra.mrb[0].mxu0 %v2621
        %v2813 = vpop.f32.mrb[0].mxu0
        %v2814 = vadd.f32 0.0, %v2813
        %v2815 = vpop.f32.mrb[0].mxu0
        %2816 = vmatprep.mubr.f32.mxu0 0.0
        %2817 = vmatmul.mubr.f32.gmra.mrb[0].mxu0 %v2622
        %v2818 = vpop.f32.mrb[0].mxu0
        %v2819 = vadd.f32 0.0, %v2818
        %v2820 = vpop.f32.mrb[0].mxu0
        %2821 = vmatprep.mubr.f32.mxu0 0.0
        %2822 = vmatmul.mubr.f32.gmra.mrb[0].mxu0 %v2623
        %v2823 = vpop.f32.mrb[0].mxu0
        %v2824 = vadd.f32 0.0, %v2823
        %v2825 = vpop.f32.mrb[0].mxu0
        %2826 = vmatprep.mubr.f32.mxu0 0.0
        %2827 = vmatmul.mubr.f32.gmra.mrb[0].mxu0 %v2624
        %v2828 = vpop.f32.mrb[0].mxu0
        %v2829 = vadd.f32 0.0, %v2828
        %v2830 = vpop.f32.mrb[0].mxu0
        %2831 = vmatprep.mubr.f32.mxu0 0.0
        %2832 = vmatmul.mubr.f32.gmra.mrb[0].mxu0 %v2625
        %v2833 = vpop.f32.mrb[0].mxu0
        %v2834 = vadd.f32 0.0, %v2833
        %v2835 = vpop.f32.mrb[0].mxu0
        %2836 = vmatprep.mubr.f32.mxu0 0.0
        %2837 = vmatmul.mubr.f32.gmra.mrb[0].mxu0 %v2626
        %v2838 = vpop.f32.mrb[0].mxu0
        %v2839 = vadd.f32 0.0, %v2838
        %v2840 = vpop.f32.mrb[0].mxu0
        %2841 = vmatprep.mubr.f32.mxu0 0.0
        %2842 = vmatmul.mubr.f32.gmra.mrb[0].mxu0 %v2627
        %v2843 = vpop.f32.mrb[0].mxu0
        %v2844 = vadd.f32 0.0, %v2843
        %v2845 = vpop.f32.mrb[0].mxu0
        %2846 = vmatprep.mubr.f32.mxu0 0.0
        %2847 = vmatmul.mubr.f32.gmra.mrb[0].mxu0 %v2628
        %v2848 = vpop.f32.mrb[0].mxu0
        %v2849 = vadd.f32 0.0, %v2848
        %v2850 = vpop.f32.mrb[0].mxu0
        %2851 = vmatprep.mubr.f32.mxu0 0.0
        %2852 = vmatmul.mubr.f32.gmra.mrb[0].mxu0 %v2629
        %v2853 = vpop.f32.mrb[0].mxu0
        %v2854 = vadd.f32 0.0, %v2853
        %v2855 = vpop.f32.mrb[0].mxu0
        %2856 = vmatprep.mubr.f32.mxu0 0.0
        %2857 = vmatmul.mubr.f32.gmra.mrb[0].mxu0 %v2630
        %v2858 = vpop.f32.mrb[0].mxu0
        %v2859 = vadd.f32 0.0, %v2858
        %v2860 = vpop.f32.mrb[0].mxu0
        %2861 = vmatprep.mubr.f32.mxu0 0.0
        %2862 = vmatmul.mubr.f32.gmra.mrb[0].mxu0 %v2631
        %v2863 = vpop.f32.mrb[0].mxu0
        %v2864 = vadd.f32 0.0, %v2863
        %v2865 = vpop.f32.mrb[0].mxu0
        %2866 = vmatprep.mubr.f32.mxu0 0.0
        %2867 = vmatmul.mubr.f32.gmra.mrb[0].mxu0 %v2632
        %v2868 = vpop.f32.mrb[0].mxu0
        %v2869 = vadd.f32 0.0, %v2868
        %v2870 = vpop.f32.mrb[0].mxu0
        %2871 = vmatprep.mubr.f32.mxu0 0.0
        %2872 = vmatmul.mubr.f32.gmra.mrb[0].mxu0 %v2633
        %v2873 = vpop.f32.mrb[0].mxu0
        %v2874 = vadd.f32 0.0, %v2873
        %v2875 = vpop.f32.mrb[0].mxu0
        %2876 = vmatprep.mubr.f32.mxu0 0.0
        %2877 = vmatmul.mubr.f32.gmra.mrb[0].mxu0 %v2634
        %v2878 = vpop.f32.mrb[0].mxu0
        %v2879 = vadd.f32 0.0, %v2878
        %v2880 = vpop.f32.mrb[0].mxu0
        %2881 = vmatprep.mubr.f32.mxu0 0.0
        %2882 = vmatmul.mubr.f32.gmra.mrb[0].mxu0 %v2635
        %v2883 = vpop.f32.mrb[0].mxu0
        %v2884 = vadd.f32 0.0, %v2883
        %v2885 = vpop.f32.mrb[0].mxu0
        %2886 = vmatprep.mubr.f32.mxu0 0.0
        %2887 = vmatmul.mubr.f32.gmra.mrb[0].mxu0 %v2636
        %v2888 = vpop.f32.mrb[0].mxu0
        %v2889 = vadd.f32 0.0, %v2888
        %v2890 = vpop.f32.mrb[0].mxu0
        %2891 = vmatprep.mubr.f32.mxu0 0.0
        %2892 = vmatmul.mubr.f32.gmra.mrb[0].mxu0 %v2637
        %v2893 = vpop.f32.mrb[0].mxu0
        %v2894 = vadd.f32 0.0, %v2893
        %v2895 = vpop.f32.mrb[0].mxu0
        %2896 = vmatprep.mubr.f32.mxu0 0.0
        %2897 = vmatmul.mubr.f32.gmra.mrb[0].mxu0 %v2638
        %v2898 = vpop.f32.mrb[0].mxu0
        %v2899 = vadd.f32 0.0, %v2898
        %v2900 = vpop.f32.mrb[0].mxu0
        %2901 = vmatprep.mubr.f32.mxu0 0.0
        %2902 = vmatmul.mubr.f32.gmra.mrb[0].mxu0 %v2639
        %v2903 = vpop.f32.mrb[0].mxu0
        %v2904 = vadd.f32 0.0, %v2903
        %v2905 = vpop.f32.mrb[0].mxu0
        %2906 = vmatprep.mubr.f32.mxu0 0.0
        %2907 = vmatmul.mubr.f32.gmra.mrb[0].mxu0 %v2640
        %v2908 = vpop.f32.mrb[0].mxu0
        %v2909 = vadd.f32 0.0, %v2908
        %v2910 = vpop.f32.mrb[0].mxu0
        %2911 = vmatprep.mubr.f32.mxu0 0.0
        %2912 = vmatmul.mubr.f32.gmra.mrb[0].mxu0 %v2641
        %v2913 = vpop.f32.mrb[0].mxu0
        %v2914 = vadd.f32 0.0, %v2913
        %v2915 = vpop.f32.mrb[0].mxu0
        %2916 = vmatprep.mubr.f32.mxu0 0.0
        %2917 = vmatmul.mubr.f32.gmra.mrb[0].mxu0 %v2642
        %v2918 = vpop.f32.mrb[0].mxu0
        %v2919 = vadd.f32 0.0, %v2918
        %v2920 = vpop.f32.mrb[0].mxu0
        %2921 = vmatprep.mubr.f32.mxu0 0.0
        %2922 = vmatmul.mubr.f32.gmra.mrb[0].mxu0 %v2643
        %v2923 = vpop.f32.mrb[0].mxu0
        %v2924 = vadd.f32 0.0, %v2923
        %v2925 = vpop.f32.mrb[0].mxu0
        %2926 = vmatprep.mubr.f32.mxu0 0.0
        %2927 = vmatmul.mubr.f32.gmra.mrb[0].mxu0 %v2644
        %v2928 = vpop.f32.mrb[0].mxu0
        %v2929 = vadd.f32 0.0, %v2928
        %v2930 = vpop.f32.mrb[0].mxu0
        %2931 = vmatprep.mubr.f32.mxu0 0.0
        %2932 = vmatmul.mubr.f32.gmra.mrb[0].mxu0 %v2645
        %v2933 = vpop.f32.mrb[0].mxu0
        %v2934 = vadd.f32 0.0, %v2933
        %v2935 = vpop.f32.mrb[0].mxu0
        %2936 = vmatprep.mubr.f32.mxu0 0.0
        %2937 = vmatmul.mubr.f32.gmra.mrb[0].mxu0 %v2646
        %v2938 = vpop.f32.mrb[0].mxu0
        %v2939 = vadd.f32 0.0, %v2938
        %v2940 = vpop.f32.mrb[0].mxu0
        %2941 = vmatprep.mubr.f32.mxu0 0.0
        %2942 = vmatmul.mubr.f32.gmra.mrb[0].mxu0 %v2647
        %v2943 = vpop.f32.mrb[0].mxu0
        %v2944 = vadd.f32 0.0, %v2943
        %v2945 = vpop.f32.mrb[0].mxu0
        %2946 = vmatprep.mubr.f32.mxu0 0.0
        %2947 = vmatmul.mubr.f32.gmra.mrb[0].mxu0 %v2648
        %v2948 = vpop.f32.mrb[0].mxu0
        %v2949 = vadd.f32 0.0, %v2948
        %v2950 = vpop.f32.mrb[0].mxu0
        %2951 = vmatprep.mubr.f32.mxu0 0.0
        %2952 = vmatmul.mubr.f32.gmra.mrb[0].mxu0 %v2649
        %v2953 = vpop.f32.mrb[0].mxu0
        %v2954 = vadd.f32 0.0, %v2953
        %v2955 = vpop.f32.mrb[0].mxu0
        %2956 = vmatprep.mubr.f32.mxu0 0.0
        %2957 = vmatmul.mubr.f32.gmra.mrb[0].mxu0 %v2650
        %v2958 = vpop.f32.mrb[0].mxu0
        %v2959 = vadd.f32 0.0, %v2958
        %v2960 = vpop.f32.mrb[0].mxu0
        %2961 = vmatprep.mubr.f32.mxu0 0.0
        %2962 = vmatmul.mubr.f32.gmra.mrb[0].mxu0 %v2651
        %v2963 = vpop.f32.mrb[0].mxu0
        %v2964 = vadd.f32 0.0, %v2963
        %v2965 = vpop.f32.mrb[0].mxu0
        %2966 = vdwg.mxu0
        %v2967 = vmax.f32 %v2551, %v2719
        %v2968 = vmax.f32 %v2552, %v2724
        %v2969 = vmax.f32 %v2553, %v2729
        %v2970 = vmax.f32 %v2554, %v2734
        %v2971 = vmax.f32 %v2555, %v2739
        %v2972 = vmax.f32 %v2556, %v2744
        %v2973 = vmax.f32 %v2557, %v2749
        %v2974 = vmax.f32 %v2558, %v2754
        %v2975 = vmax.f32 %v2559, %v2759
        %v2976 = vmax.f32 %v2560, %v2764
        %v2977 = vmax.f32 %v2561, %v2769
        %v2978 = vmax.f32 %v2562, %v2774
        %v2979 = vmax.f32 %v2563, %v2779
        %v2980 = vmax.f32 %v2564, %v2784
        %v2981 = vmax.f32 %v2565, %v2789
        %v2982 = vmax.f32 %v2566, %v2794
        %v2983 = vmax.f32 %v2567, %v2799
        %v2984 = vmax.f32 %v2568, %v2804
        %v2985 = vmax.f32 %v2569, %v2809
        %v2986 = vmax.f32 %v2570, %v2814
        %v2987 = vmax.f32 %v2571, %v2819
        %v2988 = vmax.f32 %v2572, %v2824
        %v2989 = vmax.f32 %v2573, %v2829
        %v2990 = vmax.f32 %v2574, %v2834
        %v2991 = vmax.f32 %v2575, %v2839
        %v2992 = vmax.f32 %v2576, %v2844
        %v2993 = vmax.f32 %v2577, %v2849
        %v2994 = vmax.f32 %v2578, %v2854
        %v2995 = vmax.f32 %v2579, %v2859
        %v2996 = vmax.f32 %v2580, %v2864
        %v2997 = vmax.f32 %v2581, %v2869
        %v2998 = vmax.f32 %v2582, %v2874
        %v2999 = vmax.f32 %v2583, %v2879
        %v3000 = vmax.f32 %v2584, %v2884
        %v3001 = vmax.f32 %v2585, %v2889
        %v3002 = vmax.f32 %v2586, %v2894
        %v3003 = vmax.f32 %v2587, %v2899
        %v3004 = vmax.f32 %v2588, %v2904
        %v3005 = vmax.f32 %v2589, %v2909
        %v3006 = vmax.f32 %v2590, %v2914
        %v3007 = vmax.f32 %v2591, %v2919
        %v3008 = vmax.f32 %v2592, %v2924
        %v3009 = vmax.f32 %v2593, %v2929
        %v3010 = vmax.f32 %v2594, %v2934
        %v3011 = vmax.f32 %v2595, %v2939
        %v3012 = vmax.f32 %v2596, %v2944
        %v3013 = vmax.f32 %v2597, %v2949
        %v3014 = vmax.f32 %v2598, %v2954
        %v3015 = vmax.f32 %v2599, %v2959
        %v3016 = vmax.f32 %v2600, %v2964
        %s3017 = scalar_lea.vmem %s1776, 1200 [#allocation2]
        %v3018 = vld [vmem:[%s3017] sm:$0xff]
        %v3019 = vld [vmem:[%s3017 + $0x8] sm:$0xff]
        %v3020 = vld [vmem:[%s3017 + $0x10] sm:$0xff]
        %v3021 = vld [vmem:[%s3017 + $0x18] sm:$0xff]
        %v3022 = vld [vmem:[%s3017 + $0x20] sm:$0xff]
        %v3023 = vld [vmem:[%s3017 + $0x28] sm:$0xff]
        %v3024 = vld [vmem:[%s3017 + $0x30] sm:$0xff]
        %v3025 = vld [vmem:[%s3017 + $0x38] sm:$0xff]
        %v3026 = vld [vmem:[%s3017 + $0x40] sm:$0xff]
        %v3027 = vld [vmem:[%s3017 + $0x48] sm:$0xff]
        %v3028 = vld [vmem:[%s3017 + $0x50] sm:$0xff]
        %v3029 = vld [vmem:[%s3017 + $0x58] sm:$0xff]
        %v3030 = vld [vmem:[%s3017 + $0x60] sm:$0xff]
        %v3031 = vld [vmem:[%s3017 + $0x68] sm:$0xff]
        %v3032 = vld [vmem:[%s3017 + $0x70] sm:$0xff]
        %v3033 = vld [vmem:[%s3017 + $0x78] sm:$0xff]
        %v3034 = vld [vmem:[%s3017 + $0x80] sm:$0xff]
        %v3035 = vld [vmem:[%s3017 + $0x88] sm:$0xff]
        %v3036 = vld [vmem:[%s3017 + $0x90] sm:$0xff]
        %v3037 = vld [vmem:[%s3017 + $0x98] sm:$0xff]
        %v3038 = vld [vmem:[%s3017 + $0xa0] sm:$0xff]
        %v3039 = vld [vmem:[%s3017 + $0xa8] sm:$0xff]
        %v3040 = vld [vmem:[%s3017 + $0xb0] sm:$0xff]
        %v3041 = vld [vmem:[%s3017 + $0xb8] sm:$0xff]
        %v3042 = vld [vmem:[%s3017 + $0xc0] sm:$0xff]
        %v3043 = vld [vmem:[%s3017 + $0xc8] sm:$0xff]
        %v3044 = vld [vmem:[%s3017 + $0xd0] sm:$0xff]
        %v3045 = vld [vmem:[%s3017 + $0xd8] sm:$0xff]
        %v3046 = vld [vmem:[%s3017 + $0xe0] sm:$0xff]
        %v3047 = vld [vmem:[%s3017 + $0xe8] sm:$0xff]
        %v3048 = vld [vmem:[%s3017 + $0xf0] sm:$0xff]
        %v3049 = vld [vmem:[%s3017 + $0xf8] sm:$0xff]
        %v3050 = vld [vmem:[%s3017 + $0x100] sm:$0xff]
        %v3051 = vld [vmem:[%s3017 + $0x108] sm:$0xff]
        %v3052 = vld [vmem:[%s3017 + $0x110] sm:$0xff]
        %v3053 = vld [vmem:[%s3017 + $0x118] sm:$0xff]
        %v3054 = vld [vmem:[%s3017 + $0x120] sm:$0xff]
        %v3055 = vld [vmem:[%s3017 + $0x128] sm:$0xff]
        %v3056 = vld [vmem:[%s3017 + $0x130] sm:$0xff]
        %v3057 = vld [vmem:[%s3017 + $0x138] sm:$0xff]
        %v3058 = vld [vmem:[%s3017 + $0x140] sm:$0xff]
        %v3059 = vld [vmem:[%s3017 + $0x148] sm:$0xff]
        %v3060 = vld [vmem:[%s3017 + $0x150] sm:$0xff]
        %v3061 = vld [vmem:[%s3017 + $0x158] sm:$0xff]
        %v3062 = vld [vmem:[%s3017 + $0x160] sm:$0xff]
        %v3063 = vld [vmem:[%s3017 + $0x168] sm:$0xff]
        %v3064 = vld [vmem:[%s3017 + $0x170] sm:$0xff]
        %v3065 = vld [vmem:[%s3017 + $0x178] sm:$0xff]
        %v3066 = vld [vmem:[%s3017 + $0x180] sm:$0xff]
        %v3067 = vld [vmem:[%s3017 + $0x188] sm:$0xff]
        %3068 = vmatprep.subr.mxu0 0.0
        %3069 = vmatpush1.msra.mxu0 %v1804
        %3070 = vmatprep.subr.mxu0 0.0
        %3071 = vmatpush1.msra.mxu0 %v1805
        %3072 = vmatprep.subr.mxu0 0.0
        %3073 = vmatpush1.msra.mxu0 %v1806
        %3074 = vmatprep.subr.mxu0 0.0
        %3075 = vmatpush1.msra.mxu0 %v1807
        %3076 = vmatprep.subr.mxu0 0.0
        %3077 = vmatpush1.msra.mxu0 %v1808
        %3078 = vmatprep.subr.mxu0 0.0
        %3079 = vmatpush1.msra.mxu0 %v1809
        %3080 = vmatprep.subr.mxu0 0.0
        %3081 = vmatpush1.msra.mxu0 %v1810
        %3082 = vmatprep.subr.mxu0 0.0
        %3083 = vmatpush1.msra.mxu0 %v1811
        %3084 = vmatprep.subr.mxu0 0.0
        %3085 = vmatpush1.msra.mxu0 %v1812
        %3086 = vmatprep.subr.mxu0 0.0
        %3087 = vmatpush1.msra.mxu0 %v1813
        %3088 = vmatprep.subr.mxu0 0.0
        %3089 = vmatpush1.msra.mxu0 %v1814
        %3090 = vmatprep.subr.mxu0 0.0
        %3091 = vmatpush1.msra.mxu0 %v1815
        %3092 = vmatprep.subr.mxu0 0.0
        %3093 = vmatpush1.msra.mxu0 %v1816
        %3094 = vmatprep.subr.mxu0 0.0
        %3095 = vmatpush1.msra.mxu0 %v1817
        %3096 = vmatprep.subr.mxu0 0.0
        %3097 = vmatpush1.msra.mxu0 %v1818
        %3098 = vmatprep.subr.mxu0 0.0
        %3099 = vmatpush1.msra.mxu0 %v1819
        %3100 = vmatprep.subr.mxu0 0.0
        %3101 = vmatpush1.msra.mxu0 0.0
        %3102 = vmatprep.subr.mxu0 0.0
        %3103 = vmatpush1.msra.mxu0 0.0
        %3104 = vmatprep.subr.mxu0 0.0
        %3105 = vmatpush1.msra.mxu0 0.0
        %3106 = vmatprep.subr.mxu0 0.0
        %3107 = vmatpush1.msra.mxu0 0.0
        %3108 = vmatprep.subr.mxu0 0.0
        %3109 = vmatpush1.msra.mxu0 0.0
        %3110 = vmatprep.subr.mxu0 0.0
        %3111 = vmatpush1.msra.mxu0 0.0
        %3112 = vmatprep.subr.mxu0 0.0
        %3113 = vmatpush1.msra.mxu0 0.0
        %3114 = vmatprep.subr.mxu0 0.0
        %3115 = vmatpush1.msra.mxu0 0.0
        %3116 = vmatprep.subr.mxu0 0.0
        %3117 = vmatpush1.msra.mxu0 0.0
        %3118 = vmatprep.subr.mxu0 0.0
        %3119 = vmatpush1.msra.mxu0 0.0
        %3120 = vmatprep.subr.mxu0 0.0
        %3121 = vmatpush1.msra.mxu0 0.0
        %3122 = vmatprep.subr.mxu0 0.0
        %3123 = vmatpush1.msra.mxu0 0.0
        %3124 = vmatprep.subr.mxu0 0.0
        %3125 = vmatpush1.msra.mxu0 0.0
        %3126 = vmatprep.subr.mxu0 0.0
        %3127 = vmatpush1.msra.mxu0 0.0
        %3128 = vmatprep.subr.mxu0 0.0
        %3129 = vmatpush1.msra.mxu0 0.0
        %3130 = vmatprep.subr.mxu0 0.0
        %3131 = vmatpush1.msra.mxu0 0.0
        %3132 = vmatprep.mubr.f32.mxu0 0.0
        %3133 = vmatmul.mubr.f32.gmra.mrb[0].mxu0 %v3018
        %v3134 = vpop.f32.mrb[0].mxu0
        %v3135 = vadd.f32 0.0, %v3134
        %v3136 = vpop.f32.mrb[0].mxu0
        %3137 = vmatprep.mubr.f32.mxu0 0.0
        %3138 = vmatmul.mubr.f32.gmra.mrb[0].mxu0 %v3019
        %v3139 = vpop.f32.mrb[0].mxu0
        %v3140 = vadd.f32 0.0, %v3139
        %v3141 = vpop.f32.mrb[0].mxu0
        %3142 = vmatprep.mubr.f32.mxu0 0.0
        %3143 = vmatmul.mubr.f32.gmra.mrb[0].mxu0 %v3020
        %v3144 = vpop.f32.mrb[0].mxu0
        %v3145 = vadd.f32 0.0, %v3144
        %v3146 = vpop.f32.mrb[0].mxu0
        %3147 = vmatprep.mubr.f32.mxu0 0.0
        %3148 = vmatmul.mubr.f32.gmra.mrb[0].mxu0 %v3021
        %v3149 = vpop.f32.mrb[0].mxu0
        %v3150 = vadd.f32 0.0, %v3149
        %v3151 = vpop.f32.mrb[0].mxu0
        %3152 = vmatprep.mubr.f32.mxu0 0.0
        %3153 = vmatmul.mubr.f32.gmra.mrb[0].mxu0 %v3022
        %v3154 = vpop.f32.mrb[0].mxu0
        %v3155 = vadd.f32 0.0, %v3154
        %v3156 = vpop.f32.mrb[0].mxu0
        %3157 = vmatprep.mubr.f32.mxu0 0.0
        %3158 = vmatmul.mubr.f32.gmra.mrb[0].mxu0 %v3023
        %v3159 = vpop.f32.mrb[0].mxu0
        %v3160 = vadd.f32 0.0, %v3159
        %v3161 = vpop.f32.mrb[0].mxu0
        %3162 = vmatprep.mubr.f32.mxu0 0.0
        %3163 = vmatmul.mubr.f32.gmra.mrb[0].mxu0 %v3024
        %v3164 = vpop.f32.mrb[0].mxu0
        %v3165 = vadd.f32 0.0, %v3164
        %v3166 = vpop.f32.mrb[0].mxu0
        %3167 = vmatprep.mubr.f32.mxu0 0.0
        %3168 = vmatmul.mubr.f32.gmra.mrb[0].mxu0 %v3025
        %v3169 = vpop.f32.mrb[0].mxu0
        %v3170 = vadd.f32 0.0, %v3169
        %v3171 = vpop.f32.mrb[0].mxu0
        %3172 = vmatprep.mubr.f32.mxu0 0.0
        %3173 = vmatmul.mubr.f32.gmra.mrb[0].mxu0 %v3026
        %v3174 = vpop.f32.mrb[0].mxu0
        %v3175 = vadd.f32 0.0, %v3174
        %v3176 = vpop.f32.mrb[0].mxu0
        %3177 = vmatprep.mubr.f32.mxu0 0.0
        %3178 = vmatmul.mubr.f32.gmra.mrb[0].mxu0 %v3027
        %v3179 = vpop.f32.mrb[0].mxu0
        %v3180 = vadd.f32 0.0, %v3179
        %v3181 = vpop.f32.mrb[0].mxu0
        %3182 = vmatprep.mubr.f32.mxu0 0.0
        %3183 = vmatmul.mubr.f32.gmra.mrb[0].mxu0 %v3028
        %v3184 = vpop.f32.mrb[0].mxu0
        %v3185 = vadd.f32 0.0, %v3184
        %v3186 = vpop.f32.mrb[0].mxu0
        %3187 = vmatprep.mubr.f32.mxu0 0.0
        %3188 = vmatmul.mubr.f32.gmra.mrb[0].mxu0 %v3029
        %v3189 = vpop.f32.mrb[0].mxu0
        %v3190 = vadd.f32 0.0, %v3189
        %v3191 = vpop.f32.mrb[0].mxu0
        %3192 = vmatprep.mubr.f32.mxu0 0.0
        %3193 = vmatmul.mubr.f32.gmra.mrb[0].mxu0 %v3030
        %v3194 = vpop.f32.mrb[0].mxu0
        %v3195 = vadd.f32 0.0, %v3194
        %v3196 = vpop.f32.mrb[0].mxu0
        %3197 = vmatprep.mubr.f32.mxu0 0.0
        %3198 = vmatmul.mubr.f32.gmra.mrb[0].mxu0 %v3031
        %v3199 = vpop.f32.mrb[0].mxu0
        %v3200 = vadd.f32 0.0, %v3199
        %v3201 = vpop.f32.mrb[0].mxu0
        %3202 = vmatprep.mubr.f32.mxu0 0.0
        %3203 = vmatmul.mubr.f32.gmra.mrb[0].mxu0 %v3032
        %v3204 = vpop.f32.mrb[0].mxu0
        %v3205 = vadd.f32 0.0, %v3204
        %v3206 = vpop.f32.mrb[0].mxu0
        %3207 = vmatprep.mubr.f32.mxu0 0.0
        %3208 = vmatmul.mubr.f32.gmra.mrb[0].mxu0 %v3033
        %v3209 = vpop.f32.mrb[0].mxu0
        %v3210 = vadd.f32 0.0, %v3209
        %v3211 = vpop.f32.mrb[0].mxu0
        %3212 = vmatprep.mubr.f32.mxu0 0.0
        %3213 = vmatmul.mubr.f32.gmra.mrb[0].mxu0 %v3034
        %v3214 = vpop.f32.mrb[0].mxu0
        %v3215 = vadd.f32 0.0, %v3214
        %v3216 = vpop.f32.mrb[0].mxu0
        %3217 = vmatprep.mubr.f32.mxu0 0.0
        %3218 = vmatmul.mubr.f32.gmra.mrb[0].mxu0 %v3035
        %v3219 = vpop.f32.mrb[0].mxu0
        %v3220 = vadd.f32 0.0, %v3219
        %v3221 = vpop.f32.mrb[0].mxu0
        %3222 = vmatprep.mubr.f32.mxu0 0.0
        %3223 = vmatmul.mubr.f32.gmra.mrb[0].mxu0 %v3036
        %v3224 = vpop.f32.mrb[0].mxu0
        %v3225 = vadd.f32 0.0, %v3224
        %v3226 = vpop.f32.mrb[0].mxu0
        %3227 = vmatprep.mubr.f32.mxu0 0.0
        %3228 = vmatmul.mubr.f32.gmra.mrb[0].mxu0 %v3037
        %v3229 = vpop.f32.mrb[0].mxu0
        %v3230 = vadd.f32 0.0, %v3229
        %v3231 = vpop.f32.mrb[0].mxu0
        %3232 = vmatprep.mubr.f32.mxu0 0.0
        %3233 = vmatmul.mubr.f32.gmra.mrb[0].mxu0 %v3038
        %v3234 = vpop.f32.mrb[0].mxu0
        %v3235 = vadd.f32 0.0, %v3234
        %v3236 = vpop.f32.mrb[0].mxu0
        %3237 = vmatprep.mubr.f32.mxu0 0.0
        %3238 = vmatmul.mubr.f32.gmra.mrb[0].mxu0 %v3039
        %v3239 = vpop.f32.mrb[0].mxu0
        %v3240 = vadd.f32 0.0, %v3239
        %v3241 = vpop.f32.mrb[0].mxu0
        %3242 = vmatprep.mubr.f32.mxu0 0.0
        %3243 = vmatmul.mubr.f32.gmra.mrb[0].mxu0 %v3040
        %v3244 = vpop.f32.mrb[0].mxu0
        %v3245 = vadd.f32 0.0, %v3244
        %v3246 = vpop.f32.mrb[0].mxu0
        %3247 = vmatprep.mubr.f32.mxu0 0.0
        %3248 = vmatmul.mubr.f32.gmra.mrb[0].mxu0 %v3041
        %v3249 = vpop.f32.mrb[0].mxu0
        %v3250 = vadd.f32 0.0, %v3249
        %v3251 = vpop.f32.mrb[0].mxu0
        %3252 = vmatprep.mubr.f32.mxu0 0.0
        %3253 = vmatmul.mubr.f32.gmra.mrb[0].mxu0 %v3042
        %v3254 = vpop.f32.mrb[0].mxu0
        %v3255 = vadd.f32 0.0, %v3254
        %v3256 = vpop.f32.mrb[0].mxu0
        %3257 = vmatprep.mubr.f32.mxu0 0.0
        %3258 = vmatmul.mubr.f32.gmra.mrb[0].mxu0 %v3043
        %v3259 = vpop.f32.mrb[0].mxu0
        %v3260 = vadd.f32 0.0, %v3259
        %v3261 = vpop.f32.mrb[0].mxu0
        %3262 = vmatprep.mubr.f32.mxu0 0.0
        %3263 = vmatmul.mubr.f32.gmra.mrb[0].mxu0 %v3044
        %v3264 = vpop.f32.mrb[0].mxu0
        %v3265 = vadd.f32 0.0, %v3264
        %v3266 = vpop.f32.mrb[0].mxu0
        %3267 = vmatprep.mubr.f32.mxu0 0.0
        %3268 = vmatmul.mubr.f32.gmra.mrb[0].mxu0 %v3045
        %v3269 = vpop.f32.mrb[0].mxu0
        %v3270 = vadd.f32 0.0, %v3269
        %v3271 = vpop.f32.mrb[0].mxu0
        %3272 = vmatprep.mubr.f32.mxu0 0.0
        %3273 = vmatmul.mubr.f32.gmra.mrb[0].mxu0 %v3046
        %v3274 = vpop.f32.mrb[0].mxu0
        %v3275 = vadd.f32 0.0, %v3274
        %v3276 = vpop.f32.mrb[0].mxu0
        %3277 = vmatprep.mubr.f32.mxu0 0.0
        %3278 = vmatmul.mubr.f32.gmra.mrb[0].mxu0 %v3047
        %v3279 = vpop.f32.mrb[0].mxu0
        %v3280 = vadd.f32 0.0, %v3279
        %v3281 = vpop.f32.mrb[0].mxu0
        %3282 = vmatprep.mubr.f32.mxu0 0.0
        %3283 = vmatmul.mubr.f32.gmra.mrb[0].mxu0 %v3048
        %v3284 = vpop.f32.mrb[0].mxu0
        %v3285 = vadd.f32 0.0, %v3284
        %v3286 = vpop.f32.mrb[0].mxu0
        %3287 = vmatprep.mubr.f32.mxu0 0.0
        %3288 = vmatmul.mubr.f32.gmra.mrb[0].mxu0 %v3049
        %v3289 = vpop.f32.mrb[0].mxu0
        %v3290 = vadd.f32 0.0, %v3289
        %v3291 = vpop.f32.mrb[0].mxu0
        %3292 = vmatprep.mubr.f32.mxu0 0.0
        %3293 = vmatmul.mubr.f32.gmra.mrb[0].mxu0 %v3050
        %v3294 = vpop.f32.mrb[0].mxu0
        %v3295 = vadd.f32 0.0, %v3294
        %v3296 = vpop.f32.mrb[0].mxu0
        %3297 = vmatprep.mubr.f32.mxu0 0.0
        %3298 = vmatmul.mubr.f32.gmra.mrb[0].mxu0 %v3051
        %v3299 = vpop.f32.mrb[0].mxu0
        %v3300 = vadd.f32 0.0, %v3299
        %v3301 = vpop.f32.mrb[0].mxu0
        %3302 = vmatprep.mubr.f32.mxu0 0.0
        %3303 = vmatmul.mubr.f32.gmra.mrb[0].mxu0 %v3052
        %v3304 = vpop.f32.mrb[0].mxu0
        %v3305 = vadd.f32 0.0, %v3304
        %v3306 = vpop.f32.mrb[0].mxu0
        %3307 = vmatprep.mubr.f32.mxu0 0.0
        %3308 = vmatmul.mubr.f32.gmra.mrb[0].mxu0 %v3053
        %v3309 = vpop.f32.mrb[0].mxu0
        %v3310 = vadd.f32 0.0, %v3309
        %v3311 = vpop.f32.mrb[0].mxu0
        %3312 = vmatprep.mubr.f32.mxu0 0.0
        %3313 = vmatmul.mubr.f32.gmra.mrb[0].mxu0 %v3054
        %v3314 = vpop.f32.mrb[0].mxu0
        %v3315 = vadd.f32 0.0, %v3314
        %v3316 = vpop.f32.mrb[0].mxu0
        %3317 = vmatprep.mubr.f32.mxu0 0.0
        %3318 = vmatmul.mubr.f32.gmra.mrb[0].mxu0 %v3055
        %v3319 = vpop.f32.mrb[0].mxu0
        %v3320 = vadd.f32 0.0, %v3319
        %v3321 = vpop.f32.mrb[0].mxu0
        %3322 = vmatprep.mubr.f32.mxu0 0.0
        %3323 = vmatmul.mubr.f32.gmra.mrb[0].mxu0 %v3056
        %v3324 = vpop.f32.mrb[0].mxu0
        %v3325 = vadd.f32 0.0, %v3324
        %v3326 = vpop.f32.mrb[0].mxu0
        %3327 = vmatprep.mubr.f32.mxu0 0.0
        %3328 = vmatmul.mubr.f32.gmra.mrb[0].mxu0 %v3057
        %v3329 = vpop.f32.mrb[0].mxu0
        %v3330 = vadd.f32 0.0, %v3329
        %v3331 = vpop.f32.mrb[0].mxu0
        %3332 = vmatprep.mubr.f32.mxu0 0.0
        %3333 = vmatmul.mubr.f32.gmra.mrb[0].mxu0 %v3058
        %v3334 = vpop.f32.mrb[0].mxu0
        %v3335 = vadd.f32 0.0, %v3334
        %v3336 = vpop.f32.mrb[0].mxu0
        %3337 = vmatprep.mubr.f32.mxu0 0.0
        %3338 = vmatmul.mubr.f32.gmra.mrb[0].mxu0 %v3059
        %v3339 = vpop.f32.mrb[0].mxu0
        %v3340 = vadd.f32 0.0, %v3339
        %v3341 = vpop.f32.mrb[0].mxu0
        %3342 = vmatprep.mubr.f32.mxu0 0.0
        %3343 = vmatmul.mubr.f32.gmra.mrb[0].mxu0 %v3060
        %v3344 = vpop.f32.mrb[0].mxu0
        %v3345 = vadd.f32 0.0, %v3344
        %v3346 = vpop.f32.mrb[0].mxu0
        %3347 = vmatprep.mubr.f32.mxu0 0.0
        %3348 = vmatmul.mubr.f32.gmra.mrb[0].mxu0 %v3061
        %v3349 = vpop.f32.mrb[0].mxu0
        %v3350 = vadd.f32 0.0, %v3349
        %v3351 = vpop.f32.mrb[0].mxu0
        %3352 = vmatprep.mubr.f32.mxu0 0.0
        %3353 = vmatmul.mubr.f32.gmra.mrb[0].mxu0 %v3062
        %v3354 = vpop.f32.mrb[0].mxu0
        %v3355 = vadd.f32 0.0, %v3354
        %v3356 = vpop.f32.mrb[0].mxu0
        %3357 = vmatprep.mubr.f32.mxu0 0.0
        %3358 = vmatmul.mubr.f32.gmra.mrb[0].mxu0 %v3063
        %v3359 = vpop.f32.mrb[0].mxu0
        %v3360 = vadd.f32 0.0, %v3359
        %v3361 = vpop.f32.mrb[0].mxu0
        %3362 = vmatprep.mubr.f32.mxu0 0.0
        %3363 = vmatmul.mubr.f32.gmra.mrb[0].mxu0 %v3064
        %v3364 = vpop.f32.mrb[0].mxu0
        %v3365 = vadd.f32 0.0, %v3364
        %v3366 = vpop.f32.mrb[0].mxu0
        %3367 = vmatprep.mubr.f32.mxu0 0.0
        %3368 = vmatmul.mubr.f32.gmra.mrb[0].mxu0 %v3065
        %v3369 = vpop.f32.mrb[0].mxu0
        %v3370 = vadd.f32 0.0, %v3369
        %v3371 = vpop.f32.mrb[0].mxu0
        %3372 = vmatprep.mubr.f32.mxu0 0.0
        %3373 = vmatmul.mubr.f32.gmra.mrb[0].mxu0 %v3066
        %v3374 = vpop.f32.mrb[0].mxu0
        %v3375 = vadd.f32 0.0, %v3374
        %v3376 = vpop.f32.mrb[0].mxu0
        %3377 = vmatprep.mubr.f32.mxu0 0.0
        %3378 = vmatmul.mubr.f32.gmra.mrb[0].mxu0 %v3067
        %v3379 = vpop.f32.mrb[0].mxu0
        %v3380 = vadd.f32 0.0, %v3379
        %v3381 = vpop.f32.mrb[0].mxu0
        %3382 = vdwg.mxu0
        %v3383 = vmax.f32 %v2967, %v3135
        %v3384 = vmax.f32 %v2968, %v3140
        %v3385 = vmax.f32 %v2969, %v3145
        %v3386 = vmax.f32 %v2970, %v3150
        %v3387 = vmax.f32 %v2971, %v3155
        %v3388 = vmax.f32 %v2972, %v3160
        %v3389 = vmax.f32 %v2973, %v3165
        %v3390 = vmax.f32 %v2974, %v3170
        %v3391 = vmax.f32 %v2975, %v3175
        %v3392 = vmax.f32 %v2976, %v3180
        %v3393 = vmax.f32 %v2977, %v3185
        %v3394 = vmax.f32 %v2978, %v3190
        %v3395 = vmax.f32 %v2979, %v3195
        %v3396 = vmax.f32 %v2980, %v3200
        %v3397 = vmax.f32 %v2981, %v3205
        %v3398 = vmax.f32 %v2982, %v3210
        %v3399 = vmax.f32 %v2983, %v3215
        %v3400 = vmax.f32 %v2984, %v3220
        %v3401 = vmax.f32 %v2985, %v3225
        %v3402 = vmax.f32 %v2986, %v3230
        %v3403 = vmax.f32 %v2987, %v3235
        %v3404 = vmax.f32 %v2988, %v3240
        %v3405 = vmax.f32 %v2989, %v3245
        %v3406 = vmax.f32 %v2990, %v3250
        %v3407 = vmax.f32 %v2991, %v3255
        %v3408 = vmax.f32 %v2992, %v3260
        %v3409 = vmax.f32 %v2993, %v3265
        %v3410 = vmax.f32 %v2994, %v3270
        %v3411 = vmax.f32 %v2995, %v3275
        %v3412 = vmax.f32 %v2996, %v3280
        %v3413 = vmax.f32 %v2997, %v3285
        %v3414 = vmax.f32 %v2998, %v3290
        %v3415 = vmax.f32 %v2999, %v3295
        %v3416 = vmax.f32 %v3000, %v3300
        %v3417 = vmax.f32 %v3001, %v3305
        %v3418 = vmax.f32 %v3002, %v3310
        %v3419 = vmax.f32 %v3003, %v3315
        %v3420 = vmax.f32 %v3004, %v3320
        %v3421 = vmax.f32 %v3005, %v3325
        %v3422 = vmax.f32 %v3006, %v3330
        %v3423 = vmax.f32 %v3007, %v3335
        %v3424 = vmax.f32 %v3008, %v3340
        %v3425 = vmax.f32 %v3009, %v3345
        %v3426 = vmax.f32 %v3010, %v3350
        %v3427 = vmax.f32 %v3011, %v3355
        %v3428 = vmax.f32 %v3012, %v3360
        %v3429 = vmax.f32 %v3013, %v3365
        %v3430 = vmax.f32 %v3014, %v3370
        %v3431 = vmax.f32 %v3015, %v3375
        %v3432 = vmax.f32 %v3016, %v3380
        %s3433 = scalar_lea.vmem %s1776, 1600 [#allocation2]
        %v3434 = vld [vmem:[%s3433] sm:$0xff]
        %v3435 = vld [vmem:[%s3433 + $0x8] sm:$0xff]
        %v3436 = vld [vmem:[%s3433 + $0x10] sm:$0xff]
        %v3437 = vld [vmem:[%s3433 + $0x18] sm:$0xff]
        %v3438 = vld [vmem:[%s3433 + $0x20] sm:$0xff]
        %v3439 = vld [vmem:[%s3433 + $0x28] sm:$0xff]
        %v3440 = vld [vmem:[%s3433 + $0x30] sm:$0xff]
        %v3441 = vld [vmem:[%s3433 + $0x38] sm:$0xff]
        %v3442 = vld [vmem:[%s3433 + $0x40] sm:$0xff]
        %v3443 = vld [vmem:[%s3433 + $0x48] sm:$0xff]
        %v3444 = vld [vmem:[%s3433 + $0x50] sm:$0xff]
        %v3445 = vld [vmem:[%s3433 + $0x58] sm:$0xff]
        %v3446 = vld [vmem:[%s3433 + $0x60] sm:$0xff]
        %v3447 = vld [vmem:[%s3433 + $0x68] sm:$0xff]
        %v3448 = vld [vmem:[%s3433 + $0x70] sm:$0xff]
        %v3449 = vld [vmem:[%s3433 + $0x78] sm:$0xff]
        %v3450 = vld [vmem:[%s3433 + $0x80] sm:$0xff]
        %v3451 = vld [vmem:[%s3433 + $0x88] sm:$0xff]
        %v3452 = vld [vmem:[%s3433 + $0x90] sm:$0xff]
        %v3453 = vld [vmem:[%s3433 + $0x98] sm:$0xff]
        %v3454 = vld [vmem:[%s3433 + $0xa0] sm:$0xff]
        %v3455 = vld [vmem:[%s3433 + $0xa8] sm:$0xff]
        %v3456 = vld [vmem:[%s3433 + $0xb0] sm:$0xff]
        %v3457 = vld [vmem:[%s3433 + $0xb8] sm:$0xff]
        %v3458 = vld [vmem:[%s3433 + $0xc0] sm:$0xff]
        %v3459 = vld [vmem:[%s3433 + $0xc8] sm:$0xff]
        %v3460 = vld [vmem:[%s3433 + $0xd0] sm:$0xff]
        %v3461 = vld [vmem:[%s3433 + $0xd8] sm:$0xff]
        %v3462 = vld [vmem:[%s3433 + $0xe0] sm:$0xff]
        %v3463 = vld [vmem:[%s3433 + $0xe8] sm:$0xff]
        %v3464 = vld [vmem:[%s3433 + $0xf0] sm:$0xff]
        %v3465 = vld [vmem:[%s3433 + $0xf8] sm:$0xff]
        %v3466 = vld [vmem:[%s3433 + $0x100] sm:$0xff]
        %v3467 = vld [vmem:[%s3433 + $0x108] sm:$0xff]
        %v3468 = vld [vmem:[%s3433 + $0x110] sm:$0xff]
        %v3469 = vld [vmem:[%s3433 + $0x118] sm:$0xff]
        %v3470 = vld [vmem:[%s3433 + $0x120] sm:$0xff]
        %v3471 = vld [vmem:[%s3433 + $0x128] sm:$0xff]
        %v3472 = vld [vmem:[%s3433 + $0x130] sm:$0xff]
        %v3473 = vld [vmem:[%s3433 + $0x138] sm:$0xff]
        %v3474 = vld [vmem:[%s3433 + $0x140] sm:$0xff]
        %v3475 = vld [vmem:[%s3433 + $0x148] sm:$0xff]
        %v3476 = vld [vmem:[%s3433 + $0x150] sm:$0xff]
        %v3477 = vld [vmem:[%s3433 + $0x158] sm:$0xff]
        %v3478 = vld [vmem:[%s3433 + $0x160] sm:$0xff]
        %v3479 = vld [vmem:[%s3433 + $0x168] sm:$0xff]
        %v3480 = vld [vmem:[%s3433 + $0x170] sm:$0xff]
        %v3481 = vld [vmem:[%s3433 + $0x178] sm:$0xff]
        %v3482 = vld [vmem:[%s3433 + $0x180] sm:$0xff]
        %v3483 = vld [vmem:[%s3433 + $0x188] sm:$0xff]
        %3484 = vmatprep.subr.mxu0 0.0
        %3485 = vmatpush1.msra.mxu0 %v1804
        %3486 = vmatprep.subr.mxu0 0.0
        %3487 = vmatpush1.msra.mxu0 %v1805
        %3488 = vmatprep.subr.mxu0 0.0
        %3489 = vmatpush1.msra.mxu0 %v1806
        %3490 = vmatprep.subr.mxu0 0.0
        %3491 = vmatpush1.msra.mxu0 %v1807
        %3492 = vmatprep.subr.mxu0 0.0
        %3493 = vmatpush1.msra.mxu0 %v1808
        %3494 = vmatprep.subr.mxu0 0.0
        %3495 = vmatpush1.msra.mxu0 %v1809
        %3496 = vmatprep.subr.mxu0 0.0
        %3497 = vmatpush1.msra.mxu0 %v1810
        %3498 = vmatprep.subr.mxu0 0.0
        %3499 = vmatpush1.msra.mxu0 %v1811
        %3500 = vmatprep.subr.mxu0 0.0
        %3501 = vmatpush1.msra.mxu0 %v1812
        %3502 = vmatprep.subr.mxu0 0.0
        %3503 = vmatpush1.msra.mxu0 %v1813
        %3504 = vmatprep.subr.mxu0 0.0
        %3505 = vmatpush1.msra.mxu0 %v1814
        %3506 = vmatprep.subr.mxu0 0.0
        %3507 = vmatpush1.msra.mxu0 %v1815
        %3508 = vmatprep.subr.mxu0 0.0
        %3509 = vmatpush1.msra.mxu0 %v1816
        %3510 = vmatprep.subr.mxu0 0.0
        %3511 = vmatpush1.msra.mxu0 %v1817
        %3512 = vmatprep.subr.mxu0 0.0
        %3513 = vmatpush1.msra.mxu0 %v1818
        %3514 = vmatprep.subr.mxu0 0.0
        %3515 = vmatpush1.msra.mxu0 %v1819
        %3516 = vmatprep.subr.mxu0 0.0
        %3517 = vmatpush1.msra.mxu0 0.0
        %3518 = vmatprep.subr.mxu0 0.0
        %3519 = vmatpush1.msra.mxu0 0.0
        %3520 = vmatprep.subr.mxu0 0.0
        %3521 = vmatpush1.msra.mxu0 0.0
        %3522 = vmatprep.subr.mxu0 0.0
        %3523 = vmatpush1.msra.mxu0 0.0
        %3524 = vmatprep.subr.mxu0 0.0
        %3525 = vmatpush1.msra.mxu0 0.0
        %3526 = vmatprep.subr.mxu0 0.0
        %3527 = vmatpush1.msra.mxu0 0.0
        %3528 = vmatprep.subr.mxu0 0.0
        %3529 = vmatpush1.msra.mxu0 0.0
        %3530 = vmatprep.subr.mxu0 0.0
        %3531 = vmatpush1.msra.mxu0 0.0
        %3532 = vmatprep.subr.mxu0 0.0
        %3533 = vmatpush1.msra.mxu0 0.0
        %3534 = vmatprep.subr.mxu0 0.0
        %3535 = vmatpush1.msra.mxu0 0.0
        %3536 = vmatprep.subr.mxu0 0.0
        %3537 = vmatpush1.msra.mxu0 0.0
        %3538 = vmatprep.subr.mxu0 0.0
        %3539 = vmatpush1.msra.mxu0 0.0
        %3540 = vmatprep.subr.mxu0 0.0
        %3541 = vmatpush1.msra.mxu0 0.0
        %3542 = vmatprep.subr.mxu0 0.0
        %3543 = vmatpush1.msra.mxu0 0.0
        %3544 = vmatprep.subr.mxu0 0.0
        %3545 = vmatpush1.msra.mxu0 0.0
        %3546 = vmatprep.subr.mxu0 0.0
        %3547 = vmatpush1.msra.mxu0 0.0
        %3548 = vmatprep.mubr.f32.mxu0 0.0
        %3549 = vmatmul.mubr.f32.gmra.mrb[0].mxu0 %v3434
        %v3550 = vpop.f32.mrb[0].mxu0
        %v3551 = vadd.f32 0.0, %v3550
        %v3552 = vpop.f32.mrb[0].mxu0
        %3553 = vmatprep.mubr.f32.mxu0 0.0
        %3554 = vmatmul.mubr.f32.gmra.mrb[0].mxu0 %v3435
        %v3555 = vpop.f32.mrb[0].mxu0
        %v3556 = vadd.f32 0.0, %v3555
        %v3557 = vpop.f32.mrb[0].mxu0
        %3558 = vmatprep.mubr.f32.mxu0 0.0
        %3559 = vmatmul.mubr.f32.gmra.mrb[0].mxu0 %v3436
        %v3560 = vpop.f32.mrb[0].mxu0
        %v3561 = vadd.f32 0.0, %v3560
        %v3562 = vpop.f32.mrb[0].mxu0
        %3563 = vmatprep.mubr.f32.mxu0 0.0
        %3564 = vmatmul.mubr.f32.gmra.mrb[0].mxu0 %v3437
        %v3565 = vpop.f32.mrb[0].mxu0
        %v3566 = vadd.f32 0.0, %v3565
        %v3567 = vpop.f32.mrb[0].mxu0
        %3568 = vmatprep.mubr.f32.mxu0 0.0
        %3569 = vmatmul.mubr.f32.gmra.mrb[0].mxu0 %v3438
        %v3570 = vpop.f32.mrb[0].mxu0
        %v3571 = vadd.f32 0.0, %v3570
        %v3572 = vpop.f32.mrb[0].mxu0
        %3573 = vmatprep.mubr.f32.mxu0 0.0
        %3574 = vmatmul.mubr.f32.gmra.mrb[0].mxu0 %v3439
        %v3575 = vpop.f32.mrb[0].mxu0
        %v3576 = vadd.f32 0.0, %v3575
        %v3577 = vpop.f32.mrb[0].mxu0
        %3578 = vmatprep.mubr.f32.mxu0 0.0
        %3579 = vmatmul.mubr.f32.gmra.mrb[0].mxu0 %v3440
        %v3580 = vpop.f32.mrb[0].mxu0
        %v3581 = vadd.f32 0.0, %v3580
        %v3582 = vpop.f32.mrb[0].mxu0
        %3583 = vmatprep.mubr.f32.mxu0 0.0
        %3584 = vmatmul.mubr.f32.gmra.mrb[0].mxu0 %v3441
        %v3585 = vpop.f32.mrb[0].mxu0
        %v3586 = vadd.f32 0.0, %v3585
        %v3587 = vpop.f32.mrb[0].mxu0
        %3588 = vmatprep.mubr.f32.mxu0 0.0
        %3589 = vmatmul.mubr.f32.gmra.mrb[0].mxu0 %v3442
        %v3590 = vpop.f32.mrb[0].mxu0
        %v3591 = vadd.f32 0.0, %v3590
        %v3592 = vpop.f32.mrb[0].mxu0
        %3593 = vmatprep.mubr.f32.mxu0 0.0
        %3594 = vmatmul.mubr.f32.gmra.mrb[0].mxu0 %v3443
        %v3595 = vpop.f32.mrb[0].mxu0
        %v3596 = vadd.f32 0.0, %v3595
        %v3597 = vpop.f32.mrb[0].mxu0
        %3598 = vmatprep.mubr.f32.mxu0 0.0
        %3599 = vmatmul.mubr.f32.gmra.mrb[0].mxu0 %v3444
        %v3600 = vpop.f32.mrb[0].mxu0
        %v3601 = vadd.f32 0.0, %v3600
        %v3602 = vpop.f32.mrb[0].mxu0
        %3603 = vmatprep.mubr.f32.mxu0 0.0
        %3604 = vmatmul.mubr.f32.gmra.mrb[0].mxu0 %v3445
        %v3605 = vpop.f32.mrb[0].mxu0
        %v3606 = vadd.f32 0.0, %v3605
        %v3607 = vpop.f32.mrb[0].mxu0
        %3608 = vmatprep.mubr.f32.mxu0 0.0
        %3609 = vmatmul.mubr.f32.gmra.mrb[0].mxu0 %v3446
        %v3610 = vpop.f32.mrb[0].mxu0
        %v3611 = vadd.f32 0.0, %v3610
        %v3612 = vpop.f32.mrb[0].mxu0
        %3613 = vmatprep.mubr.f32.mxu0 0.0
        %3614 = vmatmul.mubr.f32.gmra.mrb[0].mxu0 %v3447
        %v3615 = vpop.f32.mrb[0].mxu0
        %v3616 = vadd.f32 0.0, %v3615
        %v3617 = vpop.f32.mrb[0].mxu0
        %3618 = vmatprep.mubr.f32.mxu0 0.0
        %3619 = vmatmul.mubr.f32.gmra.mrb[0].mxu0 %v3448
        %v3620 = vpop.f32.mrb[0].mxu0
        %v3621 = vadd.f32 0.0, %v3620
        %v3622 = vpop.f32.mrb[0].mxu0
        %3623 = vmatprep.mubr.f32.mxu0 0.0
        %3624 = vmatmul.mubr.f32.gmra.mrb[0].mxu0 %v3449
        %v3625 = vpop.f32.mrb[0].mxu0
        %v3626 = vadd.f32 0.0, %v3625
        %v3627 = vpop.f32.mrb[0].mxu0
        %3628 = vmatprep.mubr.f32.mxu0 0.0
        %3629 = vmatmul.mubr.f32.gmra.mrb[0].mxu0 %v3450
        %v3630 = vpop.f32.mrb[0].mxu0
        %v3631 = vadd.f32 0.0, %v3630
        %v3632 = vpop.f32.mrb[0].mxu0
        %3633 = vmatprep.mubr.f32.mxu0 0.0
        %3634 = vmatmul.mubr.f32.gmra.mrb[0].mxu0 %v3451
        %v3635 = vpop.f32.mrb[0].mxu0
        %v3636 = vadd.f32 0.0, %v3635
        %v3637 = vpop.f32.mrb[0].mxu0
        %3638 = vmatprep.mubr.f32.mxu0 0.0
        %3639 = vmatmul.mubr.f32.gmra.mrb[0].mxu0 %v3452
        %v3640 = vpop.f32.mrb[0].mxu0
        %v3641 = vadd.f32 0.0, %v3640
        %v3642 = vpop.f32.mrb[0].mxu0
        %3643 = vmatprep.mubr.f32.mxu0 0.0
        %3644 = vmatmul.mubr.f32.gmra.mrb[0].mxu0 %v3453
        %v3645 = vpop.f32.mrb[0].mxu0
        %v3646 = vadd.f32 0.0, %v3645
        %v3647 = vpop.f32.mrb[0].mxu0
        %3648 = vmatprep.mubr.f32.mxu0 0.0
        %3649 = vmatmul.mubr.f32.gmra.mrb[0].mxu0 %v3454
        %v3650 = vpop.f32.mrb[0].mxu0
        %v3651 = vadd.f32 0.0, %v3650
        %v3652 = vpop.f32.mrb[0].mxu0
        %3653 = vmatprep.mubr.f32.mxu0 0.0
        %3654 = vmatmul.mubr.f32.gmra.mrb[0].mxu0 %v3455
        %v3655 = vpop.f32.mrb[0].mxu0
        %v3656 = vadd.f32 0.0, %v3655
        %v3657 = vpop.f32.mrb[0].mxu0
        %3658 = vmatprep.mubr.f32.mxu0 0.0
        %3659 = vmatmul.mubr.f32.gmra.mrb[0].mxu0 %v3456
        %v3660 = vpop.f32.mrb[0].mxu0
        %v3661 = vadd.f32 0.0, %v3660
        %v3662 = vpop.f32.mrb[0].mxu0
        %3663 = vmatprep.mubr.f32.mxu0 0.0
        %3664 = vmatmul.mubr.f32.gmra.mrb[0].mxu0 %v3457
        %v3665 = vpop.f32.mrb[0].mxu0
        %v3666 = vadd.f32 0.0, %v3665
        %v3667 = vpop.f32.mrb[0].mxu0
        %3668 = vmatprep.mubr.f32.mxu0 0.0
        %3669 = vmatmul.mubr.f32.gmra.mrb[0].mxu0 %v3458
        %v3670 = vpop.f32.mrb[0].mxu0
        %v3671 = vadd.f32 0.0, %v3670
        %v3672 = vpop.f32.mrb[0].mxu0
        %3673 = vmatprep.mubr.f32.mxu0 0.0
        %3674 = vmatmul.mubr.f32.gmra.mrb[0].mxu0 %v3459
        %v3675 = vpop.f32.mrb[0].mxu0
        %v3676 = vadd.f32 0.0, %v3675
        %v3677 = vpop.f32.mrb[0].mxu0
        %3678 = vmatprep.mubr.f32.mxu0 0.0
        %3679 = vmatmul.mubr.f32.gmra.mrb[0].mxu0 %v3460
        %v3680 = vpop.f32.mrb[0].mxu0
        %v3681 = vadd.f32 0.0, %v3680
        %v3682 = vpop.f32.mrb[0].mxu0
        %3683 = vmatprep.mubr.f32.mxu0 0.0
        %3684 = vmatmul.mubr.f32.gmra.mrb[0].mxu0 %v3461
        %v3685 = vpop.f32.mrb[0].mxu0
        %v3686 = vadd.f32 0.0, %v3685
        %v3687 = vpop.f32.mrb[0].mxu0
        %3688 = vmatprep.mubr.f32.mxu0 0.0
        %3689 = vmatmul.mubr.f32.gmra.mrb[0].mxu0 %v3462
        %v3690 = vpop.f32.mrb[0].mxu0
        %v3691 = vadd.f32 0.0, %v3690
        %v3692 = vpop.f32.mrb[0].mxu0
        %3693 = vmatprep.mubr.f32.mxu0 0.0
        %3694 = vmatmul.mubr.f32.gmra.mrb[0].mxu0 %v3463
        %v3695 = vpop.f32.mrb[0].mxu0
        %v3696 = vadd.f32 0.0, %v3695
        %v3697 = vpop.f32.mrb[0].mxu0
        %3698 = vmatprep.mubr.f32.mxu0 0.0
        %3699 = vmatmul.mubr.f32.gmra.mrb[0].mxu0 %v3464
        %v3700 = vpop.f32.mrb[0].mxu0
        %v3701 = vadd.f32 0.0, %v3700
        %v3702 = vpop.f32.mrb[0].mxu0
        %3703 = vmatprep.mubr.f32.mxu0 0.0
        %3704 = vmatmul.mubr.f32.gmra.mrb[0].mxu0 %v3465
        %v3705 = vpop.f32.mrb[0].mxu0
        %v3706 = vadd.f32 0.0, %v3705
        %v3707 = vpop.f32.mrb[0].mxu0
        %3708 = vmatprep.mubr.f32.mxu0 0.0
        %3709 = vmatmul.mubr.f32.gmra.mrb[0].mxu0 %v3466
        %v3710 = vpop.f32.mrb[0].mxu0
        %v3711 = vadd.f32 0.0, %v3710
        %v3712 = vpop.f32.mrb[0].mxu0
        %3713 = vmatprep.mubr.f32.mxu0 0.0
        %3714 = vmatmul.mubr.f32.gmra.mrb[0].mxu0 %v3467
        %v3715 = vpop.f32.mrb[0].mxu0
        %v3716 = vadd.f32 0.0, %v3715
        %v3717 = vpop.f32.mrb[0].mxu0
        %3718 = vmatprep.mubr.f32.mxu0 0.0
        %3719 = vmatmul.mubr.f32.gmra.mrb[0].mxu0 %v3468
        %v3720 = vpop.f32.mrb[0].mxu0
        %v3721 = vadd.f32 0.0, %v3720
        %v3722 = vpop.f32.mrb[0].mxu0
        %3723 = vmatprep.mubr.f32.mxu0 0.0
        %3724 = vmatmul.mubr.f32.gmra.mrb[0].mxu0 %v3469
        %v3725 = vpop.f32.mrb[0].mxu0
        %v3726 = vadd.f32 0.0, %v3725
        %v3727 = vpop.f32.mrb[0].mxu0
        %3728 = vmatprep.mubr.f32.mxu0 0.0
        %3729 = vmatmul.mubr.f32.gmra.mrb[0].mxu0 %v3470
        %v3730 = vpop.f32.mrb[0].mxu0
        %v3731 = vadd.f32 0.0, %v3730
        %v3732 = vpop.f32.mrb[0].mxu0
        %3733 = vmatprep.mubr.f32.mxu0 0.0
        %3734 = vmatmul.mubr.f32.gmra.mrb[0].mxu0 %v3471
        %v3735 = vpop.f32.mrb[0].mxu0
        %v3736 = vadd.f32 0.0, %v3735
        %v3737 = vpop.f32.mrb[0].mxu0
        %3738 = vmatprep.mubr.f32.mxu0 0.0
        %3739 = vmatmul.mubr.f32.gmra.mrb[0].mxu0 %v3472
        %v3740 = vpop.f32.mrb[0].mxu0
        %v3741 = vadd.f32 0.0, %v3740
        %v3742 = vpop.f32.mrb[0].mxu0
        %3743 = vmatprep.mubr.f32.mxu0 0.0
        %3744 = vmatmul.mubr.f32.gmra.mrb[0].mxu0 %v3473
        %v3745 = vpop.f32.mrb[0].mxu0
        %v3746 = vadd.f32 0.0, %v3745
        %v3747 = vpop.f32.mrb[0].mxu0
        %3748 = vmatprep.mubr.f32.mxu0 0.0
        %3749 = vmatmul.mubr.f32.gmra.mrb[0].mxu0 %v3474
        %v3750 = vpop.f32.mrb[0].mxu0
        %v3751 = vadd.f32 0.0, %v3750
        %v3752 = vpop.f32.mrb[0].mxu0
        %3753 = vmatprep.mubr.f32.mxu0 0.0
        %3754 = vmatmul.mubr.f32.gmra.mrb[0].mxu0 %v3475
        %v3755 = vpop.f32.mrb[0].mxu0
        %v3756 = vadd.f32 0.0, %v3755
        %v3757 = vpop.f32.mrb[0].mxu0
        %3758 = vmatprep.mubr.f32.mxu0 0.0
        %3759 = vmatmul.mubr.f32.gmra.mrb[0].mxu0 %v3476
        %v3760 = vpop.f32.mrb[0].mxu0
        %v3761 = vadd.f32 0.0, %v3760
        %v3762 = vpop.f32.mrb[0].mxu0
        %3763 = vmatprep.mubr.f32.mxu0 0.0
        %3764 = vmatmul.mubr.f32.gmra.mrb[0].mxu0 %v3477
        %v3765 = vpop.f32.mrb[0].mxu0
        %v3766 = vadd.f32 0.0, %v3765
        %v3767 = vpop.f32.mrb[0].mxu0
        %3768 = vmatprep.mubr.f32.mxu0 0.0
        %3769 = vmatmul.mubr.f32.gmra.mrb[0].mxu0 %v3478
        %v3770 = vpop.f32.mrb[0].mxu0
        %v3771 = vadd.f32 0.0, %v3770
        %v3772 = vpop.f32.mrb[0].mxu0
        %3773 = vmatprep.mubr.f32.mxu0 0.0
        %3774 = vmatmul.mubr.f32.gmra.mrb[0].mxu0 %v3479
        %v3775 = vpop.f32.mrb[0].mxu0
        %v3776 = vadd.f32 0.0, %v3775
        %v3777 = vpop.f32.mrb[0].mxu0
        %3778 = vmatprep.mubr.f32.mxu0 0.0
        %3779 = vmatmul.mubr.f32.gmra.mrb[0].mxu0 %v3480
        %v3780 = vpop.f32.mrb[0].mxu0
        %v3781 = vadd.f32 0.0, %v3780
        %v3782 = vpop.f32.mrb[0].mxu0
        %3783 = vmatprep.mubr.f32.mxu0 0.0
        %3784 = vmatmul.mubr.f32.gmra.mrb[0].mxu0 %v3481
        %v3785 = vpop.f32.mrb[0].mxu0
        %v3786 = vadd.f32 0.0, %v3785
        %v3787 = vpop.f32.mrb[0].mxu0
        %3788 = vmatprep.mubr.f32.mxu0 0.0
        %3789 = vmatmul.mubr.f32.gmra.mrb[0].mxu0 %v3482
        %v3790 = vpop.f32.mrb[0].mxu0
        %v3791 = vadd.f32 0.0, %v3790
        %v3792 = vpop.f32.mrb[0].mxu0
        %3793 = vmatprep.mubr.f32.mxu0 0.0
        %3794 = vmatmul.mubr.f32.gmra.mrb[0].mxu0 %v3483
        %v3795 = vpop.f32.mrb[0].mxu0
        %v3796 = vadd.f32 0.0, %v3795
        %v3797 = vpop.f32.mrb[0].mxu0
        %3798 = vdwg.mxu0
        %v3799 = vmax.f32 %v3383, %v3551
        %v3800 = vmax.f32 %v3384, %v3556
        %v3801 = vmax.f32 %v3385, %v3561
        %v3802 = vmax.f32 %v3386, %v3566
        %v3803 = vmax.f32 %v3387, %v3571
        %v3804 = vmax.f32 %v3388, %v3576
        %v3805 = vmax.f32 %v3389, %v3581
        %v3806 = vmax.f32 %v3390, %v3586
        %v3807 = vmax.f32 %v3391, %v3591
        %v3808 = vmax.f32 %v3392, %v3596
        %v3809 = vmax.f32 %v3393, %v3601
        %v3810 = vmax.f32 %v3394, %v3606
        %v3811 = vmax.f32 %v3395, %v3611
        %v3812 = vmax.f32 %v3396, %v3616
        %v3813 = vmax.f32 %v3397, %v3621
        %v3814 = vmax.f32 %v3398, %v3626
        %v3815 = vmax.f32 %v3399, %v3631
        %v3816 = vmax.f32 %v3400, %v3636
        %v3817 = vmax.f32 %v3401, %v3641
        %v3818 = vmax.f32 %v3402, %v3646
        %v3819 = vmax.f32 %v3403, %v3651
        %v3820 = vmax.f32 %v3404, %v3656
        %v3821 = vmax.f32 %v3405, %v3661
        %v3822 = vmax.f32 %v3406, %v3666
        %v3823 = vmax.f32 %v3407, %v3671
        %v3824 = vmax.f32 %v3408, %v3676
        %v3825 = vmax.f32 %v3409, %v3681
        %v3826 = vmax.f32 %v3410, %v3686
        %v3827 = vmax.f32 %v3411, %v3691
        %v3828 = vmax.f32 %v3412, %v3696
        %v3829 = vmax.f32 %v3413, %v3701
        %v3830 = vmax.f32 %v3414, %v3706
        %v3831 = vmax.f32 %v3415, %v3711
        %v3832 = vmax.f32 %v3416, %v3716
        %v3833 = vmax.f32 %v3417, %v3721
        %v3834 = vmax.f32 %v3418, %v3726
        %v3835 = vmax.f32 %v3419, %v3731
        %v3836 = vmax.f32 %v3420, %v3736
        %v3837 = vmax.f32 %v3421, %v3741
        %v3838 = vmax.f32 %v3422, %v3746
        %v3839 = vmax.f32 %v3423, %v3751
        %v3840 = vmax.f32 %v3424, %v3756
        %v3841 = vmax.f32 %v3425, %v3761
        %v3842 = vmax.f32 %v3426, %v3766
        %v3843 = vmax.f32 %v3427, %v3771
        %v3844 = vmax.f32 %v3428, %v3776
        %v3845 = vmax.f32 %v3429, %v3781
        %v3846 = vmax.f32 %v3430, %v3786
        %v3847 = vmax.f32 %v3431, %v3791
        %v3848 = vmax.f32 %v3432, %v3796
        %s3849 = scalar_lea.vmem %s1776, 2000 [#allocation2]
        %v3850 = vld [vmem:[%s3849] sm:$0xff]
        %v3851 = vld [vmem:[%s3849 + $0x8] sm:$0xff]
        %v3852 = vld [vmem:[%s3849 + $0x10] sm:$0xff]
        %v3853 = vld [vmem:[%s3849 + $0x18] sm:$0xff]
        %v3854 = vld [vmem:[%s3849 + $0x20] sm:$0xff]
        %v3855 = vld [vmem:[%s3849 + $0x28] sm:$0xff]
        %v3856 = vld [vmem:[%s3849 + $0x30] sm:$0xff]
        %v3857 = vld [vmem:[%s3849 + $0x38] sm:$0xff]
        %v3858 = vld [vmem:[%s3849 + $0x40] sm:$0xff]
        %v3859 = vld [vmem:[%s3849 + $0x48] sm:$0xff]
        %v3860 = vld [vmem:[%s3849 + $0x50] sm:$0xff]
        %v3861 = vld [vmem:[%s3849 + $0x58] sm:$0xff]
        %v3862 = vld [vmem:[%s3849 + $0x60] sm:$0xff]
        %v3863 = vld [vmem:[%s3849 + $0x68] sm:$0xff]
        %v3864 = vld [vmem:[%s3849 + $0x70] sm:$0xff]
        %v3865 = vld [vmem:[%s3849 + $0x78] sm:$0xff]
        %v3866 = vld [vmem:[%s3849 + $0x80] sm:$0xff]
        %v3867 = vld [vmem:[%s3849 + $0x88] sm:$0xff]
        %v3868 = vld [vmem:[%s3849 + $0x90] sm:$0xff]
        %v3869 = vld [vmem:[%s3849 + $0x98] sm:$0xff]
        %v3870 = vld [vmem:[%s3849 + $0xa0] sm:$0xff]
        %v3871 = vld [vmem:[%s3849 + $0xa8] sm:$0xff]
        %v3872 = vld [vmem:[%s3849 + $0xb0] sm:$0xff]
        %v3873 = vld [vmem:[%s3849 + $0xb8] sm:$0xff]
        %v3874 = vld [vmem:[%s3849 + $0xc0] sm:$0xff]
        %v3875 = vld [vmem:[%s3849 + $0xc8] sm:$0xff]
        %v3876 = vld [vmem:[%s3849 + $0xd0] sm:$0xff]
        %v3877 = vld [vmem:[%s3849 + $0xd8] sm:$0xff]
        %v3878 = vld [vmem:[%s3849 + $0xe0] sm:$0xff]
        %v3879 = vld [vmem:[%s3849 + $0xe8] sm:$0xff]
        %v3880 = vld [vmem:[%s3849 + $0xf0] sm:$0xff]
        %v3881 = vld [vmem:[%s3849 + $0xf8] sm:$0xff]
        %v3882 = vld [vmem:[%s3849 + $0x100] sm:$0xff]
        %v3883 = vld [vmem:[%s3849 + $0x108] sm:$0xff]
        %v3884 = vld [vmem:[%s3849 + $0x110] sm:$0xff]
        %v3885 = vld [vmem:[%s3849 + $0x118] sm:$0xff]
        %v3886 = vld [vmem:[%s3849 + $0x120] sm:$0xff]
        %v3887 = vld [vmem:[%s3849 + $0x128] sm:$0xff]
        %v3888 = vld [vmem:[%s3849 + $0x130] sm:$0xff]
        %v3889 = vld [vmem:[%s3849 + $0x138] sm:$0xff]
        %v3890 = vld [vmem:[%s3849 + $0x140] sm:$0xff]
        %v3891 = vld [vmem:[%s3849 + $0x148] sm:$0xff]
        %v3892 = vld [vmem:[%s3849 + $0x150] sm:$0xff]
        %v3893 = vld [vmem:[%s3849 + $0x158] sm:$0xff]
        %v3894 = vld [vmem:[%s3849 + $0x160] sm:$0xff]
        %v3895 = vld [vmem:[%s3849 + $0x168] sm:$0xff]
        %v3896 = vld [vmem:[%s3849 + $0x170] sm:$0xff]
        %v3897 = vld [vmem:[%s3849 + $0x178] sm:$0xff]
        %v3898 = vld [vmem:[%s3849 + $0x180] sm:$0xff]
        %v3899 = vld [vmem:[%s3849 + $0x188] sm:$0xff]
        %3900 = vmatprep.subr.mxu0 0.0
        %3901 = vmatpush1.msra.mxu0 %v1804
        %3902 = vmatprep.subr.mxu0 0.0
        %3903 = vmatpush1.msra.mxu0 %v1805
        %3904 = vmatprep.subr.mxu0 0.0
        %3905 = vmatpush1.msra.mxu0 %v1806
        %3906 = vmatprep.subr.mxu0 0.0
        %3907 = vmatpush1.msra.mxu0 %v1807
        %3908 = vmatprep.subr.mxu0 0.0
        %3909 = vmatpush1.msra.mxu0 %v1808
        %3910 = vmatprep.subr.mxu0 0.0
        %3911 = vmatpush1.msra.mxu0 %v1809
        %3912 = vmatprep.subr.mxu0 0.0
        %3913 = vmatpush1.msra.mxu0 %v1810
        %3914 = vmatprep.subr.mxu0 0.0
        %3915 = vmatpush1.msra.mxu0 %v1811
        %3916 = vmatprep.subr.mxu0 0.0
        %3917 = vmatpush1.msra.mxu0 %v1812
        %3918 = vmatprep.subr.mxu0 0.0
        %3919 = vmatpush1.msra.mxu0 %v1813
        %3920 = vmatprep.subr.mxu0 0.0
        %3921 = vmatpush1.msra.mxu0 %v1814
        %3922 = vmatprep.subr.mxu0 0.0
        %3923 = vmatpush1.msra.mxu0 %v1815
        %3924 = vmatprep.subr.mxu0 0.0
        %3925 = vmatpush1.msra.mxu0 %v1816
        %3926 = vmatprep.subr.mxu0 0.0
        %3927 = vmatpush1.msra.mxu0 %v1817
        %3928 = vmatprep.subr.mxu0 0.0
        %3929 = vmatpush1.msra.mxu0 %v1818
        %3930 = vmatprep.subr.mxu0 0.0
        %3931 = vmatpush1.msra.mxu0 %v1819
        %3932 = vmatprep.subr.mxu0 0.0
        %3933 = vmatpush1.msra.mxu0 0.0
        %3934 = vmatprep.subr.mxu0 0.0
        %3935 = vmatpush1.msra.mxu0 0.0
        %3936 = vmatprep.subr.mxu0 0.0
        %3937 = vmatpush1.msra.mxu0 0.0
        %3938 = vmatprep.subr.mxu0 0.0
        %3939 = vmatpush1.msra.mxu0 0.0
        %3940 = vmatprep.subr.mxu0 0.0
        %3941 = vmatpush1.msra.mxu0 0.0
        %3942 = vmatprep.subr.mxu0 0.0
        %3943 = vmatpush1.msra.mxu0 0.0
        %3944 = vmatprep.subr.mxu0 0.0
        %3945 = vmatpush1.msra.mxu0 0.0
        %3946 = vmatprep.subr.mxu0 0.0
        %3947 = vmatpush1.msra.mxu0 0.0
        %3948 = vmatprep.subr.mxu0 0.0
        %3949 = vmatpush1.msra.mxu0 0.0
        %3950 = vmatprep.subr.mxu0 0.0
        %3951 = vmatpush1.msra.mxu0 0.0
        %3952 = vmatprep.subr.mxu0 0.0
        %3953 = vmatpush1.msra.mxu0 0.0
        %3954 = vmatprep.subr.mxu0 0.0
        %3955 = vmatpush1.msra.mxu0 0.0
        %3956 = vmatprep.subr.mxu0 0.0
        %3957 = vmatpush1.msra.mxu0 0.0
        %3958 = vmatprep.subr.mxu0 0.0
        %3959 = vmatpush1.msra.mxu0 0.0
        %3960 = vmatprep.subr.mxu0 0.0
        %3961 = vmatpush1.msra.mxu0 0.0
        %3962 = vmatprep.subr.mxu0 0.0
        %3963 = vmatpush1.msra.mxu0 0.0
        %3964 = vmatprep.mubr.f32.mxu0 0.0
        %3965 = vmatmul.mubr.f32.gmra.mrb[0].mxu0 %v3850
        %v3966 = vpop.f32.mrb[0].mxu0
        %v3967 = vadd.f32 0.0, %v3966
        %v3968 = vpop.f32.mrb[0].mxu0
        %3969 = vmatprep.mubr.f32.mxu0 0.0
        %3970 = vmatmul.mubr.f32.gmra.mrb[0].mxu0 %v3851
        %v3971 = vpop.f32.mrb[0].mxu0
        %v3972 = vadd.f32 0.0, %v3971
        %v3973 = vpop.f32.mrb[0].mxu0
        %3974 = vmatprep.mubr.f32.mxu0 0.0
        %3975 = vmatmul.mubr.f32.gmra.mrb[0].mxu0 %v3852
        %v3976 = vpop.f32.mrb[0].mxu0
        %v3977 = vadd.f32 0.0, %v3976
        %v3978 = vpop.f32.mrb[0].mxu0
        %3979 = vmatprep.mubr.f32.mxu0 0.0
        %3980 = vmatmul.mubr.f32.gmra.mrb[0].mxu0 %v3853
        %v3981 = vpop.f32.mrb[0].mxu0
        %v3982 = vadd.f32 0.0, %v3981
        %v3983 = vpop.f32.mrb[0].mxu0
        %3984 = vmatprep.mubr.f32.mxu0 0.0
        %3985 = vmatmul.mubr.f32.gmra.mrb[0].mxu0 %v3854
        %v3986 = vpop.f32.mrb[0].mxu0
        %v3987 = vadd.f32 0.0, %v3986
        %v3988 = vpop.f32.mrb[0].mxu0
        %3989 = vmatprep.mubr.f32.mxu0 0.0
        %3990 = vmatmul.mubr.f32.gmra.mrb[0].mxu0 %v3855
        %v3991 = vpop.f32.mrb[0].mxu0
        %v3992 = vadd.f32 0.0, %v3991
        %v3993 = vpop.f32.mrb[0].mxu0
        %3994 = vmatprep.mubr.f32.mxu0 0.0
        %3995 = vmatmul.mubr.f32.gmra.mrb[0].mxu0 %v3856
        %v3996 = vpop.f32.mrb[0].mxu0
        %v3997 = vadd.f32 0.0, %v3996
        %v3998 = vpop.f32.mrb[0].mxu0
        %3999 = vmatprep.mubr.f32.mxu0 0.0
        %4000 = vmatmul.mubr.f32.gmra.mrb[0].mxu0 %v3857
        %v4001 = vpop.f32.mrb[0].mxu0
        %v4002 = vadd.f32 0.0, %v4001
        %v4003 = vpop.f32.mrb[0].mxu0
        %4004 = vmatprep.mubr.f32.mxu0 0.0
        %4005 = vmatmul.mubr.f32.gmra.mrb[0].mxu0 %v3858
        %v4006 = vpop.f32.mrb[0].mxu0
        %v4007 = vadd.f32 0.0, %v4006
        %v4008 = vpop.f32.mrb[0].mxu0
        %4009 = vmatprep.mubr.f32.mxu0 0.0
        %4010 = vmatmul.mubr.f32.gmra.mrb[0].mxu0 %v3859
        %v4011 = vpop.f32.mrb[0].mxu0
        %v4012 = vadd.f32 0.0, %v4011
        %v4013 = vpop.f32.mrb[0].mxu0
        %4014 = vmatprep.mubr.f32.mxu0 0.0
        %4015 = vmatmul.mubr.f32.gmra.mrb[0].mxu0 %v3860
        %v4016 = vpop.f32.mrb[0].mxu0
        %v4017 = vadd.f32 0.0, %v4016
        %v4018 = vpop.f32.mrb[0].mxu0
        %4019 = vmatprep.mubr.f32.mxu0 0.0
        %4020 = vmatmul.mubr.f32.gmra.mrb[0].mxu0 %v3861
        %v4021 = vpop.f32.mrb[0].mxu0
        %v4022 = vadd.f32 0.0, %v4021
        %v4023 = vpop.f32.mrb[0].mxu0
        %4024 = vmatprep.mubr.f32.mxu0 0.0
        %4025 = vmatmul.mubr.f32.gmra.mrb[0].mxu0 %v3862
        %v4026 = vpop.f32.mrb[0].mxu0
        %v4027 = vadd.f32 0.0, %v4026
        %v4028 = vpop.f32.mrb[0].mxu0
        %4029 = vmatprep.mubr.f32.mxu0 0.0
        %4030 = vmatmul.mubr.f32.gmra.mrb[0].mxu0 %v3863
        %v4031 = vpop.f32.mrb[0].mxu0
        %v4032 = vadd.f32 0.0, %v4031
        %v4033 = vpop.f32.mrb[0].mxu0
        %4034 = vmatprep.mubr.f32.mxu0 0.0
        %4035 = vmatmul.mubr.f32.gmra.mrb[0].mxu0 %v3864
        %v4036 = vpop.f32.mrb[0].mxu0
        %v4037 = vadd.f32 0.0, %v4036
        %v4038 = vpop.f32.mrb[0].mxu0
        %4039 = vmatprep.mubr.f32.mxu0 0.0
        %4040 = vmatmul.mubr.f32.gmra.mrb[0].mxu0 %v3865
        %v4041 = vpop.f32.mrb[0].mxu0
        %v4042 = vadd.f32 0.0, %v4041
        %v4043 = vpop.f32.mrb[0].mxu0
        %4044 = vmatprep.mubr.f32.mxu0 0.0
        %4045 = vmatmul.mubr.f32.gmra.mrb[0].mxu0 %v3866
        %v4046 = vpop.f32.mrb[0].mxu0
        %v4047 = vadd.f32 0.0, %v4046
        %v4048 = vpop.f32.mrb[0].mxu0
        %4049 = vmatprep.mubr.f32.mxu0 0.0
        %4050 = vmatmul.mubr.f32.gmra.mrb[0].mxu0 %v3867
        %v4051 = vpop.f32.mrb[0].mxu0
        %v4052 = vadd.f32 0.0, %v4051
        %v4053 = vpop.f32.mrb[0].mxu0
        %4054 = vmatprep.mubr.f32.mxu0 0.0
        %4055 = vmatmul.mubr.f32.gmra.mrb[0].mxu0 %v3868
        %v4056 = vpop.f32.mrb[0].mxu0
        %v4057 = vadd.f32 0.0, %v4056
        %v4058 = vpop.f32.mrb[0].mxu0
        %4059 = vmatprep.mubr.f32.mxu0 0.0
        %4060 = vmatmul.mubr.f32.gmra.mrb[0].mxu0 %v3869
        %v4061 = vpop.f32.mrb[0].mxu0
        %v4062 = vadd.f32 0.0, %v4061
        %v4063 = vpop.f32.mrb[0].mxu0
        %4064 = vmatprep.mubr.f32.mxu0 0.0
        %4065 = vmatmul.mubr.f32.gmra.mrb[0].mxu0 %v3870
        %v4066 = vpop.f32.mrb[0].mxu0
        %v4067 = vadd.f32 0.0, %v4066
        %v4068 = vpop.f32.mrb[0].mxu0
        %4069 = vmatprep.mubr.f32.mxu0 0.0
        %4070 = vmatmul.mubr.f32.gmra.mrb[0].mxu0 %v3871
        %v4071 = vpop.f32.mrb[0].mxu0
        %v4072 = vadd.f32 0.0, %v4071
        %v4073 = vpop.f32.mrb[0].mxu0
        %4074 = vmatprep.mubr.f32.mxu0 0.0
        %4075 = vmatmul.mubr.f32.gmra.mrb[0].mxu0 %v3872
        %v4076 = vpop.f32.mrb[0].mxu0
        %v4077 = vadd.f32 0.0, %v4076
        %v4078 = vpop.f32.mrb[0].mxu0
        %4079 = vmatprep.mubr.f32.mxu0 0.0
        %4080 = vmatmul.mubr.f32.gmra.mrb[0].mxu0 %v3873
        %v4081 = vpop.f32.mrb[0].mxu0
        %v4082 = vadd.f32 0.0, %v4081
        %v4083 = vpop.f32.mrb[0].mxu0
        %4084 = vmatprep.mubr.f32.mxu0 0.0
        %4085 = vmatmul.mubr.f32.gmra.mrb[0].mxu0 %v3874
        %v4086 = vpop.f32.mrb[0].mxu0
        %v4087 = vadd.f32 0.0, %v4086
        %v4088 = vpop.f32.mrb[0].mxu0
        %4089 = vmatprep.mubr.f32.mxu0 0.0
        %4090 = vmatmul.mubr.f32.gmra.mrb[0].mxu0 %v3875
        %v4091 = vpop.f32.mrb[0].mxu0
        %v4092 = vadd.f32 0.0, %v4091
        %v4093 = vpop.f32.mrb[0].mxu0
        %4094 = vmatprep.mubr.f32.mxu0 0.0
        %4095 = vmatmul.mubr.f32.gmra.mrb[0].mxu0 %v3876
        %v4096 = vpop.f32.mrb[0].mxu0
        %v4097 = vadd.f32 0.0, %v4096
        %v4098 = vpop.f32.mrb[0].mxu0
        %4099 = vmatprep.mubr.f32.mxu0 0.0
        %4100 = vmatmul.mubr.f32.gmra.mrb[0].mxu0 %v3877
        %v4101 = vpop.f32.mrb[0].mxu0
        %v4102 = vadd.f32 0.0, %v4101
        %v4103 = vpop.f32.mrb[0].mxu0
        %4104 = vmatprep.mubr.f32.mxu0 0.0
        %4105 = vmatmul.mubr.f32.gmra.mrb[0].mxu0 %v3878
        %v4106 = vpop.f32.mrb[0].mxu0
        %v4107 = vadd.f32 0.0, %v4106
        %v4108 = vpop.f32.mrb[0].mxu0
        %4109 = vmatprep.mubr.f32.mxu0 0.0
        %4110 = vmatmul.mubr.f32.gmra.mrb[0].mxu0 %v3879
        %v4111 = vpop.f32.mrb[0].mxu0
        %v4112 = vadd.f32 0.0, %v4111
        %v4113 = vpop.f32.mrb[0].mxu0
        %4114 = vmatprep.mubr.f32.mxu0 0.0
        %4115 = vmatmul.mubr.f32.gmra.mrb[0].mxu0 %v3880
        %v4116 = vpop.f32.mrb[0].mxu0
        %v4117 = vadd.f32 0.0, %v4116
        %v4118 = vpop.f32.mrb[0].mxu0
        %4119 = vmatprep.mubr.f32.mxu0 0.0
        %4120 = vmatmul.mubr.f32.gmra.mrb[0].mxu0 %v3881
        %v4121 = vpop.f32.mrb[0].mxu0
        %v4122 = vadd.f32 0.0, %v4121
        %v4123 = vpop.f32.mrb[0].mxu0
        %4124 = vmatprep.mubr.f32.mxu0 0.0
        %4125 = vmatmul.mubr.f32.gmra.mrb[0].mxu0 %v3882
        %v4126 = vpop.f32.mrb[0].mxu0
        %v4127 = vadd.f32 0.0, %v4126
        %v4128 = vpop.f32.mrb[0].mxu0
        %4129 = vmatprep.mubr.f32.mxu0 0.0
        %4130 = vmatmul.mubr.f32.gmra.mrb[0].mxu0 %v3883
        %v4131 = vpop.f32.mrb[0].mxu0
        %v4132 = vadd.f32 0.0, %v4131
        %v4133 = vpop.f32.mrb[0].mxu0
        %4134 = vmatprep.mubr.f32.mxu0 0.0
        %4135 = vmatmul.mubr.f32.gmra.mrb[0].mxu0 %v3884
        %v4136 = vpop.f32.mrb[0].mxu0
        %v4137 = vadd.f32 0.0, %v4136
        %v4138 = vpop.f32.mrb[0].mxu0
        %4139 = vmatprep.mubr.f32.mxu0 0.0
        %4140 = vmatmul.mubr.f32.gmra.mrb[0].mxu0 %v3885
        %v4141 = vpop.f32.mrb[0].mxu0
        %v4142 = vadd.f32 0.0, %v4141
        %v4143 = vpop.f32.mrb[0].mxu0
        %4144 = vmatprep.mubr.f32.mxu0 0.0
        %4145 = vmatmul.mubr.f32.gmra.mrb[0].mxu0 %v3886
        %v4146 = vpop.f32.mrb[0].mxu0
        %v4147 = vadd.f32 0.0, %v4146
        %v4148 = vpop.f32.mrb[0].mxu0
        %4149 = vmatprep.mubr.f32.mxu0 0.0
        %4150 = vmatmul.mubr.f32.gmra.mrb[0].mxu0 %v3887
        %v4151 = vpop.f32.mrb[0].mxu0
        %v4152 = vadd.f32 0.0, %v4151
        %v4153 = vpop.f32.mrb[0].mxu0
        %4154 = vmatprep.mubr.f32.mxu0 0.0
        %4155 = vmatmul.mubr.f32.gmra.mrb[0].mxu0 %v3888
        %v4156 = vpop.f32.mrb[0].mxu0
        %v4157 = vadd.f32 0.0, %v4156
        %v4158 = vpop.f32.mrb[0].mxu0
        %4159 = vmatprep.mubr.f32.mxu0 0.0
        %4160 = vmatmul.mubr.f32.gmra.mrb[0].mxu0 %v3889
        %v4161 = vpop.f32.mrb[0].mxu0
        %v4162 = vadd.f32 0.0, %v4161
        %v4163 = vpop.f32.mrb[0].mxu0
        %4164 = vmatprep.mubr.f32.mxu0 0.0
        %4165 = vmatmul.mubr.f32.gmra.mrb[0].mxu0 %v3890
        %v4166 = vpop.f32.mrb[0].mxu0
        %v4167 = vadd.f32 0.0, %v4166
        %v4168 = vpop.f32.mrb[0].mxu0
        %4169 = vmatprep.mubr.f32.mxu0 0.0
        %4170 = vmatmul.mubr.f32.gmra.mrb[0].mxu0 %v3891
        %v4171 = vpop.f32.mrb[0].mxu0
        %v4172 = vadd.f32 0.0, %v4171
        %v4173 = vpop.f32.mrb[0].mxu0
        %4174 = vmatprep.mubr.f32.mxu0 0.0
        %4175 = vmatmul.mubr.f32.gmra.mrb[0].mxu0 %v3892
        %v4176 = vpop.f32.mrb[0].mxu0
        %v4177 = vadd.f32 0.0, %v4176
        %v4178 = vpop.f32.mrb[0].mxu0
        %4179 = vmatprep.mubr.f32.mxu0 0.0
        %4180 = vmatmul.mubr.f32.gmra.mrb[0].mxu0 %v3893
        %v4181 = vpop.f32.mrb[0].mxu0
        %v4182 = vadd.f32 0.0, %v4181
        %v4183 = vpop.f32.mrb[0].mxu0
        %4184 = vmatprep.mubr.f32.mxu0 0.0
        %4185 = vmatmul.mubr.f32.gmra.mrb[0].mxu0 %v3894
        %v4186 = vpop.f32.mrb[0].mxu0
        %v4187 = vadd.f32 0.0, %v4186
        %v4188 = vpop.f32.mrb[0].mxu0
        %4189 = vmatprep.mubr.f32.mxu0 0.0
        %4190 = vmatmul.mubr.f32.gmra.mrb[0].mxu0 %v3895
        %v4191 = vpop.f32.mrb[0].mxu0
        %v4192 = vadd.f32 0.0, %v4191
        %v4193 = vpop.f32.mrb[0].mxu0
        %4194 = vmatprep.mubr.f32.mxu0 0.0
        %4195 = vmatmul.mubr.f32.gmra.mrb[0].mxu0 %v3896
        %v4196 = vpop.f32.mrb[0].mxu0
        %v4197 = vadd.f32 0.0, %v4196
        %v4198 = vpop.f32.mrb[0].mxu0
        %4199 = vmatprep.mubr.f32.mxu0 0.0
        %4200 = vmatmul.mubr.f32.gmra.mrb[0].mxu0 %v3897
        %v4201 = vpop.f32.mrb[0].mxu0
        %v4202 = vadd.f32 0.0, %v4201
        %v4203 = vpop.f32.mrb[0].mxu0
        %4204 = vmatprep.mubr.f32.mxu0 0.0
        %4205 = vmatmul.mubr.f32.gmra.mrb[0].mxu0 %v3898
        %v4206 = vpop.f32.mrb[0].mxu0
        %v4207 = vadd.f32 0.0, %v4206
        %v4208 = vpop.f32.mrb[0].mxu0
        %4209 = vmatprep.mubr.f32.mxu0 0.0
        %4210 = vmatmul.mubr.f32.gmra.mrb[0].mxu0 %v3899
        %v4211 = vpop.f32.mrb[0].mxu0
        %v4212 = vadd.f32 0.0, %v4211
        %v4213 = vpop.f32.mrb[0].mxu0
        %4214 = vdwg.mxu0
        %v4215 = vmax.f32 %v3799, %v3967
        %v4216 = vmax.f32 %v3800, %v3972
        %v4217 = vmax.f32 %v3801, %v3977
        %v4218 = vmax.f32 %v3802, %v3982
        %v4219 = vmax.f32 %v3803, %v3987
        %v4220 = vmax.f32 %v3804, %v3992
        %v4221 = vmax.f32 %v3805, %v3997
        %v4222 = vmax.f32 %v3806, %v4002
        %v4223 = vmax.f32 %v3807, %v4007
        %v4224 = vmax.f32 %v3808, %v4012
        %v4225 = vmax.f32 %v3809, %v4017
        %v4226 = vmax.f32 %v3810, %v4022
        %v4227 = vmax.f32 %v3811, %v4027
        %v4228 = vmax.f32 %v3812, %v4032
        %v4229 = vmax.f32 %v3813, %v4037
        %v4230 = vmax.f32 %v3814, %v4042
        %v4231 = vmax.f32 %v3815, %v4047
        %v4232 = vmax.f32 %v3816, %v4052
        %v4233 = vmax.f32 %v3817, %v4057
        %v4234 = vmax.f32 %v3818, %v4062
        %v4235 = vmax.f32 %v3819, %v4067
        %v4236 = vmax.f32 %v3820, %v4072
        %v4237 = vmax.f32 %v3821, %v4077
        %v4238 = vmax.f32 %v3822, %v4082
        %v4239 = vmax.f32 %v3823, %v4087
        %v4240 = vmax.f32 %v3824, %v4092
        %v4241 = vmax.f32 %v3825, %v4097
        %v4242 = vmax.f32 %v3826, %v4102
        %v4243 = vmax.f32 %v3827, %v4107
        %v4244 = vmax.f32 %v3828, %v4112
        %v4245 = vmax.f32 %v3829, %v4117
        %v4246 = vmax.f32 %v3830, %v4122
        %v4247 = vmax.f32 %v3831, %v4127
        %v4248 = vmax.f32 %v3832, %v4132
        %v4249 = vmax.f32 %v3833, %v4137
        %v4250 = vmax.f32 %v3834, %v4142
        %v4251 = vmax.f32 %v3835, %v4147
        %v4252 = vmax.f32 %v3836, %v4152
        %v4253 = vmax.f32 %v3837, %v4157
        %v4254 = vmax.f32 %v3838, %v4162
        %v4255 = vmax.f32 %v3839, %v4167
        %v4256 = vmax.f32 %v3840, %v4172
        %v4257 = vmax.f32 %v3841, %v4177
        %v4258 = vmax.f32 %v3842, %v4182
        %v4259 = vmax.f32 %v3843, %v4187
        %v4260 = vmax.f32 %v3844, %v4192
        %v4261 = vmax.f32 %v3845, %v4197
        %v4262 = vmax.f32 %v3846, %v4202
        %v4263 = vmax.f32 %v3847, %v4207
        %v4264 = vmax.f32 %v3848, %v4212
        %s4265 = scalar_lea.vmem %s1776, 2400 [#allocation2]
        %v4266 = vld [vmem:[%s4265] sm:$0xff]
        %v4267 = vld [vmem:[%s4265 + $0x8] sm:$0xff]
        %v4268 = vld [vmem:[%s4265 + $0x10] sm:$0xff]
        %v4269 = vld [vmem:[%s4265 + $0x18] sm:$0xff]
        %v4270 = vld [vmem:[%s4265 + $0x20] sm:$0xff]
        %v4271 = vld [vmem:[%s4265 + $0x28] sm:$0xff]
        %v4272 = vld [vmem:[%s4265 + $0x30] sm:$0xff]
        %v4273 = vld [vmem:[%s4265 + $0x38] sm:$0xff]
        %v4274 = vld [vmem:[%s4265 + $0x40] sm:$0xff]
        %v4275 = vld [vmem:[%s4265 + $0x48] sm:$0xff]
        %v4276 = vld [vmem:[%s4265 + $0x50] sm:$0xff]
        %v4277 = vld [vmem:[%s4265 + $0x58] sm:$0xff]
        %v4278 = vld [vmem:[%s4265 + $0x60] sm:$0xff]
        %v4279 = vld [vmem:[%s4265 + $0x68] sm:$0xff]
        %v4280 = vld [vmem:[%s4265 + $0x70] sm:$0xff]
        %v4281 = vld [vmem:[%s4265 + $0x78] sm:$0xff]
        %v4282 = vld [vmem:[%s4265 + $0x80] sm:$0xff]
        %v4283 = vld [vmem:[%s4265 + $0x88] sm:$0xff]
        %v4284 = vld [vmem:[%s4265 + $0x90] sm:$0xff]
        %v4285 = vld [vmem:[%s4265 + $0x98] sm:$0xff]
        %v4286 = vld [vmem:[%s4265 + $0xa0] sm:$0xff]
        %v4287 = vld [vmem:[%s4265 + $0xa8] sm:$0xff]
        %v4288 = vld [vmem:[%s4265 + $0xb0] sm:$0xff]
        %v4289 = vld [vmem:[%s4265 + $0xb8] sm:$0xff]
        %v4290 = vld [vmem:[%s4265 + $0xc0] sm:$0xff]
        %v4291 = vld [vmem:[%s4265 + $0xc8] sm:$0xff]
        %v4292 = vld [vmem:[%s4265 + $0xd0] sm:$0xff]
        %v4293 = vld [vmem:[%s4265 + $0xd8] sm:$0xff]
        %v4294 = vld [vmem:[%s4265 + $0xe0] sm:$0xff]
        %v4295 = vld [vmem:[%s4265 + $0xe8] sm:$0xff]
        %v4296 = vld [vmem:[%s4265 + $0xf0] sm:$0xff]
        %v4297 = vld [vmem:[%s4265 + $0xf8] sm:$0xff]
        %v4298 = vld [vmem:[%s4265 + $0x100] sm:$0xff]
        %v4299 = vld [vmem:[%s4265 + $0x108] sm:$0xff]
        %v4300 = vld [vmem:[%s4265 + $0x110] sm:$0xff]
        %v4301 = vld [vmem:[%s4265 + $0x118] sm:$0xff]
        %v4302 = vld [vmem:[%s4265 + $0x120] sm:$0xff]
        %v4303 = vld [vmem:[%s4265 + $0x128] sm:$0xff]
        %v4304 = vld [vmem:[%s4265 + $0x130] sm:$0xff]
        %v4305 = vld [vmem:[%s4265 + $0x138] sm:$0xff]
        %v4306 = vld [vmem:[%s4265 + $0x140] sm:$0xff]
        %v4307 = vld [vmem:[%s4265 + $0x148] sm:$0xff]
        %v4308 = vld [vmem:[%s4265 + $0x150] sm:$0xff]
        %v4309 = vld [vmem:[%s4265 + $0x158] sm:$0xff]
        %v4310 = vld [vmem:[%s4265 + $0x160] sm:$0xff]
        %v4311 = vld [vmem:[%s4265 + $0x168] sm:$0xff]
        %v4312 = vld [vmem:[%s4265 + $0x170] sm:$0xff]
        %v4313 = vld [vmem:[%s4265 + $0x178] sm:$0xff]
        %v4314 = vld [vmem:[%s4265 + $0x180] sm:$0xff]
        %v4315 = vld [vmem:[%s4265 + $0x188] sm:$0xff]
        %4316 = vmatprep.subr.mxu0 0.0
        %4317 = vmatpush1.msra.mxu0 %v1804
        %4318 = vmatprep.subr.mxu0 0.0
        %4319 = vmatpush1.msra.mxu0 %v1805
        %4320 = vmatprep.subr.mxu0 0.0
        %4321 = vmatpush1.msra.mxu0 %v1806
        %4322 = vmatprep.subr.mxu0 0.0
        %4323 = vmatpush1.msra.mxu0 %v1807
        %4324 = vmatprep.subr.mxu0 0.0
        %4325 = vmatpush1.msra.mxu0 %v1808
        %4326 = vmatprep.subr.mxu0 0.0
        %4327 = vmatpush1.msra.mxu0 %v1809
        %4328 = vmatprep.subr.mxu0 0.0
        %4329 = vmatpush1.msra.mxu0 %v1810
        %4330 = vmatprep.subr.mxu0 0.0
        %4331 = vmatpush1.msra.mxu0 %v1811
        %4332 = vmatprep.subr.mxu0 0.0
        %4333 = vmatpush1.msra.mxu0 %v1812
        %4334 = vmatprep.subr.mxu0 0.0
        %4335 = vmatpush1.msra.mxu0 %v1813
        %4336 = vmatprep.subr.mxu0 0.0
        %4337 = vmatpush1.msra.mxu0 %v1814
        %4338 = vmatprep.subr.mxu0 0.0
        %4339 = vmatpush1.msra.mxu0 %v1815
        %4340 = vmatprep.subr.mxu0 0.0
        %4341 = vmatpush1.msra.mxu0 %v1816
        %4342 = vmatprep.subr.mxu0 0.0
        %4343 = vmatpush1.msra.mxu0 %v1817
        %4344 = vmatprep.subr.mxu0 0.0
        %4345 = vmatpush1.msra.mxu0 %v1818
        %4346 = vmatprep.subr.mxu0 0.0
        %4347 = vmatpush1.msra.mxu0 %v1819
        %4348 = vmatprep.subr.mxu0 0.0
        %4349 = vmatpush1.msra.mxu0 0.0
        %4350 = vmatprep.subr.mxu0 0.0
        %4351 = vmatpush1.msra.mxu0 0.0
        %4352 = vmatprep.subr.mxu0 0.0
        %4353 = vmatpush1.msra.mxu0 0.0
        %4354 = vmatprep.subr.mxu0 0.0
        %4355 = vmatpush1.msra.mxu0 0.0
        %4356 = vmatprep.subr.mxu0 0.0
        %4357 = vmatpush1.msra.mxu0 0.0
        %4358 = vmatprep.subr.mxu0 0.0
        %4359 = vmatpush1.msra.mxu0 0.0
        %4360 = vmatprep.subr.mxu0 0.0
        %4361 = vmatpush1.msra.mxu0 0.0
        %4362 = vmatprep.subr.mxu0 0.0
        %4363 = vmatpush1.msra.mxu0 0.0
        %4364 = vmatprep.subr.mxu0 0.0
        %4365 = vmatpush1.msra.mxu0 0.0
        %4366 = vmatprep.subr.mxu0 0.0
        %4367 = vmatpush1.msra.mxu0 0.0
        %4368 = vmatprep.subr.mxu0 0.0
        %4369 = vmatpush1.msra.mxu0 0.0
        %4370 = vmatprep.subr.mxu0 0.0
        %4371 = vmatpush1.msra.mxu0 0.0
        %4372 = vmatprep.subr.mxu0 0.0
        %4373 = vmatpush1.msra.mxu0 0.0
        %4374 = vmatprep.subr.mxu0 0.0
        %4375 = vmatpush1.msra.mxu0 0.0
        %4376 = vmatprep.subr.mxu0 0.0
        %4377 = vmatpush1.msra.mxu0 0.0
        %4378 = vmatprep.subr.mxu0 0.0
        %4379 = vmatpush1.msra.mxu0 0.0
        %4380 = vmatprep.mubr.f32.mxu0 0.0
        %4381 = vmatmul.mubr.f32.gmra.mrb[0].mxu0 %v4266
        %v4382 = vpop.f32.mrb[0].mxu0
        %v4383 = vadd.f32 0.0, %v4382
        %v4384 = vpop.f32.mrb[0].mxu0
        %4385 = vmatprep.mubr.f32.mxu0 0.0
        %4386 = vmatmul.mubr.f32.gmra.mrb[0].mxu0 %v4267
        %v4387 = vpop.f32.mrb[0].mxu0
        %v4388 = vadd.f32 0.0, %v4387
        %v4389 = vpop.f32.mrb[0].mxu0
        %4390 = vmatprep.mubr.f32.mxu0 0.0
        %4391 = vmatmul.mubr.f32.gmra.mrb[0].mxu0 %v4268
        %v4392 = vpop.f32.mrb[0].mxu0
        %v4393 = vadd.f32 0.0, %v4392
        %v4394 = vpop.f32.mrb[0].mxu0
        %4395 = vmatprep.mubr.f32.mxu0 0.0
        %4396 = vmatmul.mubr.f32.gmra.mrb[0].mxu0 %v4269
        %v4397 = vpop.f32.mrb[0].mxu0
        %v4398 = vadd.f32 0.0, %v4397
        %v4399 = vpop.f32.mrb[0].mxu0
        %4400 = vmatprep.mubr.f32.mxu0 0.0
        %4401 = vmatmul.mubr.f32.gmra.mrb[0].mxu0 %v4270
        %v4402 = vpop.f32.mrb[0].mxu0
        %v4403 = vadd.f32 0.0, %v4402
        %v4404 = vpop.f32.mrb[0].mxu0
        %4405 = vmatprep.mubr.f32.mxu0 0.0
        %4406 = vmatmul.mubr.f32.gmra.mrb[0].mxu0 %v4271
        %v4407 = vpop.f32.mrb[0].mxu0
        %v4408 = vadd.f32 0.0, %v4407
        %v4409 = vpop.f32.mrb[0].mxu0
        %4410 = vmatprep.mubr.f32.mxu0 0.0
        %4411 = vmatmul.mubr.f32.gmra.mrb[0].mxu0 %v4272
        %v4412 = vpop.f32.mrb[0].mxu0
        %v4413 = vadd.f32 0.0, %v4412
        %v4414 = vpop.f32.mrb[0].mxu0
        %4415 = vmatprep.mubr.f32.mxu0 0.0
        %4416 = vmatmul.mubr.f32.gmra.mrb[0].mxu0 %v4273
        %v4417 = vpop.f32.mrb[0].mxu0
        %v4418 = vadd.f32 0.0, %v4417
        %v4419 = vpop.f32.mrb[0].mxu0
        %4420 = vmatprep.mubr.f32.mxu0 0.0
        %4421 = vmatmul.mubr.f32.gmra.mrb[0].mxu0 %v4274
        %v4422 = vpop.f32.mrb[0].mxu0
        %v4423 = vadd.f32 0.0, %v4422
        %v4424 = vpop.f32.mrb[0].mxu0
        %4425 = vmatprep.mubr.f32.mxu0 0.0
        %4426 = vmatmul.mubr.f32.gmra.mrb[0].mxu0 %v4275
        %v4427 = vpop.f32.mrb[0].mxu0
        %v4428 = vadd.f32 0.0, %v4427
        %v4429 = vpop.f32.mrb[0].mxu0
        %4430 = vmatprep.mubr.f32.mxu0 0.0
        %4431 = vmatmul.mubr.f32.gmra.mrb[0].mxu0 %v4276
        %v4432 = vpop.f32.mrb[0].mxu0
        %v4433 = vadd.f32 0.0, %v4432
        %v4434 = vpop.f32.mrb[0].mxu0
        %4435 = vmatprep.mubr.f32.mxu0 0.0
        %4436 = vmatmul.mubr.f32.gmra.mrb[0].mxu0 %v4277
        %v4437 = vpop.f32.mrb[0].mxu0
        %v4438 = vadd.f32 0.0, %v4437
        %v4439 = vpop.f32.mrb[0].mxu0
        %4440 = vmatprep.mubr.f32.mxu0 0.0
        %4441 = vmatmul.mubr.f32.gmra.mrb[0].mxu0 %v4278
        %v4442 = vpop.f32.mrb[0].mxu0
        %v4443 = vadd.f32 0.0, %v4442
        %v4444 = vpop.f32.mrb[0].mxu0
        %4445 = vmatprep.mubr.f32.mxu0 0.0
        %4446 = vmatmul.mubr.f32.gmra.mrb[0].mxu0 %v4279
        %v4447 = vpop.f32.mrb[0].mxu0
        %v4448 = vadd.f32 0.0, %v4447
        %v4449 = vpop.f32.mrb[0].mxu0
        %4450 = vmatprep.mubr.f32.mxu0 0.0
        %4451 = vmatmul.mubr.f32.gmra.mrb[0].mxu0 %v4280
        %v4452 = vpop.f32.mrb[0].mxu0
        %v4453 = vadd.f32 0.0, %v4452
        %v4454 = vpop.f32.mrb[0].mxu0
        %4455 = vmatprep.mubr.f32.mxu0 0.0
        %4456 = vmatmul.mubr.f32.gmra.mrb[0].mxu0 %v4281
        %v4457 = vpop.f32.mrb[0].mxu0
        %v4458 = vadd.f32 0.0, %v4457
        %v4459 = vpop.f32.mrb[0].mxu0
        %4460 = vmatprep.mubr.f32.mxu0 0.0
        %4461 = vmatmul.mubr.f32.gmra.mrb[0].mxu0 %v4282
        %v4462 = vpop.f32.mrb[0].mxu0
        %v4463 = vadd.f32 0.0, %v4462
        %v4464 = vpop.f32.mrb[0].mxu0
        %4465 = vmatprep.mubr.f32.mxu0 0.0
        %4466 = vmatmul.mubr.f32.gmra.mrb[0].mxu0 %v4283
        %v4467 = vpop.f32.mrb[0].mxu0
        %v4468 = vadd.f32 0.0, %v4467
        %v4469 = vpop.f32.mrb[0].mxu0
        %4470 = vmatprep.mubr.f32.mxu0 0.0
        %4471 = vmatmul.mubr.f32.gmra.mrb[0].mxu0 %v4284
        %v4472 = vpop.f32.mrb[0].mxu0
        %v4473 = vadd.f32 0.0, %v4472
        %v4474 = vpop.f32.mrb[0].mxu0
        %4475 = vmatprep.mubr.f32.mxu0 0.0
        %4476 = vmatmul.mubr.f32.gmra.mrb[0].mxu0 %v4285
        %v4477 = vpop.f32.mrb[0].mxu0
        %v4478 = vadd.f32 0.0, %v4477
        %v4479 = vpop.f32.mrb[0].mxu0
        %4480 = vmatprep.mubr.f32.mxu0 0.0
        %4481 = vmatmul.mubr.f32.gmra.mrb[0].mxu0 %v4286
        %v4482 = vpop.f32.mrb[0].mxu0
        %v4483 = vadd.f32 0.0, %v4482
        %v4484 = vpop.f32.mrb[0].mxu0
        %4485 = vmatprep.mubr.f32.mxu0 0.0
        %4486 = vmatmul.mubr.f32.gmra.mrb[0].mxu0 %v4287
        %v4487 = vpop.f32.mrb[0].mxu0
        %v4488 = vadd.f32 0.0, %v4487
        %v4489 = vpop.f32.mrb[0].mxu0
        %4490 = vmatprep.mubr.f32.mxu0 0.0
        %4491 = vmatmul.mubr.f32.gmra.mrb[0].mxu0 %v4288
        %v4492 = vpop.f32.mrb[0].mxu0
        %v4493 = vadd.f32 0.0, %v4492
        %v4494 = vpop.f32.mrb[0].mxu0
        %4495 = vmatprep.mubr.f32.mxu0 0.0
        %4496 = vmatmul.mubr.f32.gmra.mrb[0].mxu0 %v4289
        %v4497 = vpop.f32.mrb[0].mxu0
        %v4498 = vadd.f32 0.0, %v4497
        %v4499 = vpop.f32.mrb[0].mxu0
        %4500 = vmatprep.mubr.f32.mxu0 0.0
        %4501 = vmatmul.mubr.f32.gmra.mrb[0].mxu0 %v4290
        %v4502 = vpop.f32.mrb[0].mxu0
        %v4503 = vadd.f32 0.0, %v4502
        %v4504 = vpop.f32.mrb[0].mxu0
        %4505 = vmatprep.mubr.f32.mxu0 0.0
        %4506 = vmatmul.mubr.f32.gmra.mrb[0].mxu0 %v4291
        %v4507 = vpop.f32.mrb[0].mxu0
        %v4508 = vadd.f32 0.0, %v4507
        %v4509 = vpop.f32.mrb[0].mxu0
        %4510 = vmatprep.mubr.f32.mxu0 0.0
        %4511 = vmatmul.mubr.f32.gmra.mrb[0].mxu0 %v4292
        %v4512 = vpop.f32.mrb[0].mxu0
        %v4513 = vadd.f32 0.0, %v4512
        %v4514 = vpop.f32.mrb[0].mxu0
        %4515 = vmatprep.mubr.f32.mxu0 0.0
        %4516 = vmatmul.mubr.f32.gmra.mrb[0].mxu0 %v4293
        %v4517 = vpop.f32.mrb[0].mxu0
        %v4518 = vadd.f32 0.0, %v4517
        %v4519 = vpop.f32.mrb[0].mxu0
        %4520 = vmatprep.mubr.f32.mxu0 0.0
        %4521 = vmatmul.mubr.f32.gmra.mrb[0].mxu0 %v4294
        %v4522 = vpop.f32.mrb[0].mxu0
        %v4523 = vadd.f32 0.0, %v4522
        %v4524 = vpop.f32.mrb[0].mxu0
        %4525 = vmatprep.mubr.f32.mxu0 0.0
        %4526 = vmatmul.mubr.f32.gmra.mrb[0].mxu0 %v4295
        %v4527 = vpop.f32.mrb[0].mxu0
        %v4528 = vadd.f32 0.0, %v4527
        %v4529 = vpop.f32.mrb[0].mxu0
        %4530 = vmatprep.mubr.f32.mxu0 0.0
        %4531 = vmatmul.mubr.f32.gmra.mrb[0].mxu0 %v4296
        %v4532 = vpop.f32.mrb[0].mxu0
        %v4533 = vadd.f32 0.0, %v4532
        %v4534 = vpop.f32.mrb[0].mxu0
        %4535 = vmatprep.mubr.f32.mxu0 0.0
        %4536 = vmatmul.mubr.f32.gmra.mrb[0].mxu0 %v4297
        %v4537 = vpop.f32.mrb[0].mxu0
        %v4538 = vadd.f32 0.0, %v4537
        %v4539 = vpop.f32.mrb[0].mxu0
        %4540 = vmatprep.mubr.f32.mxu0 0.0
        %4541 = vmatmul.mubr.f32.gmra.mrb[0].mxu0 %v4298
        %v4542 = vpop.f32.mrb[0].mxu0
        %v4543 = vadd.f32 0.0, %v4542
        %v4544 = vpop.f32.mrb[0].mxu0
        %4545 = vmatprep.mubr.f32.mxu0 0.0
        %4546 = vmatmul.mubr.f32.gmra.mrb[0].mxu0 %v4299
        %v4547 = vpop.f32.mrb[0].mxu0
        %v4548 = vadd.f32 0.0, %v4547
        %v4549 = vpop.f32.mrb[0].mxu0
        %4550 = vmatprep.mubr.f32.mxu0 0.0
        %4551 = vmatmul.mubr.f32.gmra.mrb[0].mxu0 %v4300
        %v4552 = vpop.f32.mrb[0].mxu0
        %v4553 = vadd.f32 0.0, %v4552
        %v4554 = vpop.f32.mrb[0].mxu0
        %4555 = vmatprep.mubr.f32.mxu0 0.0
        %4556 = vmatmul.mubr.f32.gmra.mrb[0].mxu0 %v4301
        %v4557 = vpop.f32.mrb[0].mxu0
        %v4558 = vadd.f32 0.0, %v4557
        %v4559 = vpop.f32.mrb[0].mxu0
        %4560 = vmatprep.mubr.f32.mxu0 0.0
        %4561 = vmatmul.mubr.f32.gmra.mrb[0].mxu0 %v4302
        %v4562 = vpop.f32.mrb[0].mxu0
        %v4563 = vadd.f32 0.0, %v4562
        %v4564 = vpop.f32.mrb[0].mxu0
        %4565 = vmatprep.mubr.f32.mxu0 0.0
        %4566 = vmatmul.mubr.f32.gmra.mrb[0].mxu0 %v4303
        %v4567 = vpop.f32.mrb[0].mxu0
        %v4568 = vadd.f32 0.0, %v4567
        %v4569 = vpop.f32.mrb[0].mxu0
        %4570 = vmatprep.mubr.f32.mxu0 0.0
        %4571 = vmatmul.mubr.f32.gmra.mrb[0].mxu0 %v4304
        %v4572 = vpop.f32.mrb[0].mxu0
        %v4573 = vadd.f32 0.0, %v4572
        %v4574 = vpop.f32.mrb[0].mxu0
        %4575 = vmatprep.mubr.f32.mxu0 0.0
        %4576 = vmatmul.mubr.f32.gmra.mrb[0].mxu0 %v4305
        %v4577 = vpop.f32.mrb[0].mxu0
        %v4578 = vadd.f32 0.0, %v4577
        %v4579 = vpop.f32.mrb[0].mxu0
        %4580 = vmatprep.mubr.f32.mxu0 0.0
        %4581 = vmatmul.mubr.f32.gmra.mrb[0].mxu0 %v4306
        %v4582 = vpop.f32.mrb[0].mxu0
        %v4583 = vadd.f32 0.0, %v4582
        %v4584 = vpop.f32.mrb[0].mxu0
        %4585 = vmatprep.mubr.f32.mxu0 0.0
        %4586 = vmatmul.mubr.f32.gmra.mrb[0].mxu0 %v4307
        %v4587 = vpop.f32.mrb[0].mxu0
        %v4588 = vadd.f32 0.0, %v4587
        %v4589 = vpop.f32.mrb[0].mxu0
        %4590 = vmatprep.mubr.f32.mxu0 0.0
        %4591 = vmatmul.mubr.f32.gmra.mrb[0].mxu0 %v4308
        %v4592 = vpop.f32.mrb[0].mxu0
        %v4593 = vadd.f32 0.0, %v4592
        %v4594 = vpop.f32.mrb[0].mxu0
        %4595 = vmatprep.mubr.f32.mxu0 0.0
        %4596 = vmatmul.mubr.f32.gmra.mrb[0].mxu0 %v4309
        %v4597 = vpop.f32.mrb[0].mxu0
        %v4598 = vadd.f32 0.0, %v4597
        %v4599 = vpop.f32.mrb[0].mxu0
        %4600 = vmatprep.mubr.f32.mxu0 0.0
        %4601 = vmatmul.mubr.f32.gmra.mrb[0].mxu0 %v4310
        %v4602 = vpop.f32.mrb[0].mxu0
        %v4603 = vadd.f32 0.0, %v4602
        %v4604 = vpop.f32.mrb[0].mxu0
        %4605 = vmatprep.mubr.f32.mxu0 0.0
        %4606 = vmatmul.mubr.f32.gmra.mrb[0].mxu0 %v4311
        %v4607 = vpop.f32.mrb[0].mxu0
        %v4608 = vadd.f32 0.0, %v4607
        %v4609 = vpop.f32.mrb[0].mxu0
        %4610 = vmatprep.mubr.f32.mxu0 0.0
        %4611 = vmatmul.mubr.f32.gmra.mrb[0].mxu0 %v4312
        %v4612 = vpop.f32.mrb[0].mxu0
        %v4613 = vadd.f32 0.0, %v4612
        %v4614 = vpop.f32.mrb[0].mxu0
        %4615 = vmatprep.mubr.f32.mxu0 0.0
        %4616 = vmatmul.mubr.f32.gmra.mrb[0].mxu0 %v4313
        %v4617 = vpop.f32.mrb[0].mxu0
        %v4618 = vadd.f32 0.0, %v4617
        %v4619 = vpop.f32.mrb[0].mxu0
        %4620 = vmatprep.mubr.f32.mxu0 0.0
        %4621 = vmatmul.mubr.f32.gmra.mrb[0].mxu0 %v4314
        %v4622 = vpop.f32.mrb[0].mxu0
        %v4623 = vadd.f32 0.0, %v4622
        %v4624 = vpop.f32.mrb[0].mxu0
        %4625 = vmatprep.mubr.f32.mxu0 0.0
        %4626 = vmatmul.mubr.f32.gmra.mrb[0].mxu0 %v4315
        %v4627 = vpop.f32.mrb[0].mxu0
        %v4628 = vadd.f32 0.0, %v4627
        %v4629 = vpop.f32.mrb[0].mxu0
        %4630 = vdwg.mxu0
        %v4631 = vmax.f32 %v4215, %v4383
        %v4632 = vmax.f32 %v4216, %v4388
        %v4633 = vmax.f32 %v4217, %v4393
        %v4634 = vmax.f32 %v4218, %v4398
        %v4635 = vmax.f32 %v4219, %v4403
        %v4636 = vmax.f32 %v4220, %v4408
        %v4637 = vmax.f32 %v4221, %v4413
        %v4638 = vmax.f32 %v4222, %v4418
        %v4639 = vmax.f32 %v4223, %v4423
        %v4640 = vmax.f32 %v4224, %v4428
        %v4641 = vmax.f32 %v4225, %v4433
        %v4642 = vmax.f32 %v4226, %v4438
        %v4643 = vmax.f32 %v4227, %v4443
        %v4644 = vmax.f32 %v4228, %v4448
        %v4645 = vmax.f32 %v4229, %v4453
        %v4646 = vmax.f32 %v4230, %v4458
        %v4647 = vmax.f32 %v4231, %v4463
        %v4648 = vmax.f32 %v4232, %v4468
        %v4649 = vmax.f32 %v4233, %v4473
        %v4650 = vmax.f32 %v4234, %v4478
        %v4651 = vmax.f32 %v4235, %v4483
        %v4652 = vmax.f32 %v4236, %v4488
        %v4653 = vmax.f32 %v4237, %v4493
        %v4654 = vmax.f32 %v4238, %v4498
        %v4655 = vmax.f32 %v4239, %v4503
        %v4656 = vmax.f32 %v4240, %v4508
        %v4657 = vmax.f32 %v4241, %v4513
        %v4658 = vmax.f32 %v4242, %v4518
        %v4659 = vmax.f32 %v4243, %v4523
        %v4660 = vmax.f32 %v4244, %v4528
        %v4661 = vmax.f32 %v4245, %v4533
        %v4662 = vmax.f32 %v4246, %v4538
        %v4663 = vmax.f32 %v4247, %v4543
        %v4664 = vmax.f32 %v4248, %v4548
        %v4665 = vmax.f32 %v4249, %v4553
        %v4666 = vmax.f32 %v4250, %v4558
        %v4667 = vmax.f32 %v4251, %v4563
        %v4668 = vmax.f32 %v4252, %v4568
        %v4669 = vmax.f32 %v4253, %v4573
        %v4670 = vmax.f32 %v4254, %v4578
        %v4671 = vmax.f32 %v4255, %v4583
        %v4672 = vmax.f32 %v4256, %v4588
        %v4673 = vmax.f32 %v4257, %v4593
        %v4674 = vmax.f32 %v4258, %v4598
        %v4675 = vmax.f32 %v4259, %v4603
        %v4676 = vmax.f32 %v4260, %v4608
        %v4677 = vmax.f32 %v4261, %v4613
        %v4678 = vmax.f32 %v4262, %v4618
        %v4679 = vmax.f32 %v4263, %v4623
        %v4680 = vmax.f32 %v4264, %v4628
        %s4681 = scalar_lea.vmem %s1776, 2800 [#allocation2]
        %v4682 = vld [vmem:[%s4681] sm:$0xff]
        %v4683 = vld [vmem:[%s4681 + $0x8] sm:$0xff]
        %v4684 = vld [vmem:[%s4681 + $0x10] sm:$0xff]
        %v4685 = vld [vmem:[%s4681 + $0x18] sm:$0xff]
        %v4686 = vld [vmem:[%s4681 + $0x20] sm:$0xff]
        %v4687 = vld [vmem:[%s4681 + $0x28] sm:$0xff]
        %v4688 = vld [vmem:[%s4681 + $0x30] sm:$0xff]
        %v4689 = vld [vmem:[%s4681 + $0x38] sm:$0xff]
        %v4690 = vld [vmem:[%s4681 + $0x40] sm:$0xff]
        %v4691 = vld [vmem:[%s4681 + $0x48] sm:$0xff]
        %v4692 = vld [vmem:[%s4681 + $0x50] sm:$0xff]
        %v4693 = vld [vmem:[%s4681 + $0x58] sm:$0xff]
        %v4694 = vld [vmem:[%s4681 + $0x60] sm:$0xff]
        %v4695 = vld [vmem:[%s4681 + $0x68] sm:$0xff]
        %v4696 = vld [vmem:[%s4681 + $0x70] sm:$0xff]
        %v4697 = vld [vmem:[%s4681 + $0x78] sm:$0xff]
        %v4698 = vld [vmem:[%s4681 + $0x80] sm:$0xff]
        %v4699 = vld [vmem:[%s4681 + $0x88] sm:$0xff]
        %v4700 = vld [vmem:[%s4681 + $0x90] sm:$0xff]
        %v4701 = vld [vmem:[%s4681 + $0x98] sm:$0xff]
        %v4702 = vld [vmem:[%s4681 + $0xa0] sm:$0xff]
        %v4703 = vld [vmem:[%s4681 + $0xa8] sm:$0xff]
        %v4704 = vld [vmem:[%s4681 + $0xb0] sm:$0xff]
        %v4705 = vld [vmem:[%s4681 + $0xb8] sm:$0xff]
        %v4706 = vld [vmem:[%s4681 + $0xc0] sm:$0xff]
        %v4707 = vld [vmem:[%s4681 + $0xc8] sm:$0xff]
        %v4708 = vld [vmem:[%s4681 + $0xd0] sm:$0xff]
        %v4709 = vld [vmem:[%s4681 + $0xd8] sm:$0xff]
        %v4710 = vld [vmem:[%s4681 + $0xe0] sm:$0xff]
        %v4711 = vld [vmem:[%s4681 + $0xe8] sm:$0xff]
        %v4712 = vld [vmem:[%s4681 + $0xf0] sm:$0xff]
        %v4713 = vld [vmem:[%s4681 + $0xf8] sm:$0xff]
        %v4714 = vld [vmem:[%s4681 + $0x100] sm:$0xff]
        %v4715 = vld [vmem:[%s4681 + $0x108] sm:$0xff]
        %v4716 = vld [vmem:[%s4681 + $0x110] sm:$0xff]
        %v4717 = vld [vmem:[%s4681 + $0x118] sm:$0xff]
        %v4718 = vld [vmem:[%s4681 + $0x120] sm:$0xff]
        %v4719 = vld [vmem:[%s4681 + $0x128] sm:$0xff]
        %v4720 = vld [vmem:[%s4681 + $0x130] sm:$0xff]
        %v4721 = vld [vmem:[%s4681 + $0x138] sm:$0xff]
        %v4722 = vld [vmem:[%s4681 + $0x140] sm:$0xff]
        %v4723 = vld [vmem:[%s4681 + $0x148] sm:$0xff]
        %v4724 = vld [vmem:[%s4681 + $0x150] sm:$0xff]
        %v4725 = vld [vmem:[%s4681 + $0x158] sm:$0xff]
        %v4726 = vld [vmem:[%s4681 + $0x160] sm:$0xff]
        %v4727 = vld [vmem:[%s4681 + $0x168] sm:$0xff]
        %v4728 = vld [vmem:[%s4681 + $0x170] sm:$0xff]
        %v4729 = vld [vmem:[%s4681 + $0x178] sm:$0xff]
        %v4730 = vld [vmem:[%s4681 + $0x180] sm:$0xff]
        %v4731 = vld [vmem:[%s4681 + $0x188] sm:$0xff]
        %4732 = vmatprep.subr.mxu0 0.0
        %4733 = vmatpush1.msra.mxu0 %v1804
        %4734 = vmatprep.subr.mxu0 0.0
        %4735 = vmatpush1.msra.mxu0 %v1805
        %4736 = vmatprep.subr.mxu0 0.0
        %4737 = vmatpush1.msra.mxu0 %v1806
        %4738 = vmatprep.subr.mxu0 0.0
        %4739 = vmatpush1.msra.mxu0 %v1807
        %4740 = vmatprep.subr.mxu0 0.0
        %4741 = vmatpush1.msra.mxu0 %v1808
        %4742 = vmatprep.subr.mxu0 0.0
        %4743 = vmatpush1.msra.mxu0 %v1809
        %4744 = vmatprep.subr.mxu0 0.0
        %4745 = vmatpush1.msra.mxu0 %v1810
        %4746 = vmatprep.subr.mxu0 0.0
        %4747 = vmatpush1.msra.mxu0 %v1811
        %4748 = vmatprep.subr.mxu0 0.0
        %4749 = vmatpush1.msra.mxu0 %v1812
        %4750 = vmatprep.subr.mxu0 0.0
        %4751 = vmatpush1.msra.mxu0 %v1813
        %4752 = vmatprep.subr.mxu0 0.0
        %4753 = vmatpush1.msra.mxu0 %v1814
        %4754 = vmatprep.subr.mxu0 0.0
        %4755 = vmatpush1.msra.mxu0 %v1815
        %4756 = vmatprep.subr.mxu0 0.0
        %4757 = vmatpush1.msra.mxu0 %v1816
        %4758 = vmatprep.subr.mxu0 0.0
        %4759 = vmatpush1.msra.mxu0 %v1817
        %4760 = vmatprep.subr.mxu0 0.0
        %4761 = vmatpush1.msra.mxu0 %v1818
        %4762 = vmatprep.subr.mxu0 0.0
        %4763 = vmatpush1.msra.mxu0 %v1819
        %4764 = vmatprep.subr.mxu0 0.0
        %4765 = vmatpush1.msra.mxu0 0.0
        %4766 = vmatprep.subr.mxu0 0.0
        %4767 = vmatpush1.msra.mxu0 0.0
        %4768 = vmatprep.subr.mxu0 0.0
        %4769 = vmatpush1.msra.mxu0 0.0
        %4770 = vmatprep.subr.mxu0 0.0
        %4771 = vmatpush1.msra.mxu0 0.0
        %4772 = vmatprep.subr.mxu0 0.0
        %4773 = vmatpush1.msra.mxu0 0.0
        %4774 = vmatprep.subr.mxu0 0.0
        %4775 = vmatpush1.msra.mxu0 0.0
        %4776 = vmatprep.subr.mxu0 0.0
        %4777 = vmatpush1.msra.mxu0 0.0
        %4778 = vmatprep.subr.mxu0 0.0
        %4779 = vmatpush1.msra.mxu0 0.0
        %4780 = vmatprep.subr.mxu0 0.0
        %4781 = vmatpush1.msra.mxu0 0.0
        %4782 = vmatprep.subr.mxu0 0.0
        %4783 = vmatpush1.msra.mxu0 0.0
        %4784 = vmatprep.subr.mxu0 0.0
        %4785 = vmatpush1.msra.mxu0 0.0
        %4786 = vmatprep.subr.mxu0 0.0
        %4787 = vmatpush1.msra.mxu0 0.0
        %4788 = vmatprep.subr.mxu0 0.0
        %4789 = vmatpush1.msra.mxu0 0.0
        %4790 = vmatprep.subr.mxu0 0.0
        %4791 = vmatpush1.msra.mxu0 0.0
        %4792 = vmatprep.subr.mxu0 0.0
        %4793 = vmatpush1.msra.mxu0 0.0
        %4794 = vmatprep.subr.mxu0 0.0
        %4795 = vmatpush1.msra.mxu0 0.0
        %4796 = vmatprep.mubr.f32.mxu0 0.0
        %4797 = vmatmul.mubr.f32.gmra.mrb[0].mxu0 %v4682
        %v4798 = vpop.f32.mrb[0].mxu0
        %v4799 = vadd.f32 0.0, %v4798
        %v4800 = vpop.f32.mrb[0].mxu0
        %4801 = vmatprep.mubr.f32.mxu0 0.0
        %4802 = vmatmul.mubr.f32.gmra.mrb[0].mxu0 %v4683
        %v4803 = vpop.f32.mrb[0].mxu0
        %v4804 = vadd.f32 0.0, %v4803
        %v4805 = vpop.f32.mrb[0].mxu0
        %4806 = vmatprep.mubr.f32.mxu0 0.0
        %4807 = vmatmul.mubr.f32.gmra.mrb[0].mxu0 %v4684
        %v4808 = vpop.f32.mrb[0].mxu0
        %v4809 = vadd.f32 0.0, %v4808
        %v4810 = vpop.f32.mrb[0].mxu0
        %4811 = vmatprep.mubr.f32.mxu0 0.0
        %4812 = vmatmul.mubr.f32.gmra.mrb[0].mxu0 %v4685
        %v4813 = vpop.f32.mrb[0].mxu0
        %v4814 = vadd.f32 0.0, %v4813
        %v4815 = vpop.f32.mrb[0].mxu0
        %4816 = vmatprep.mubr.f32.mxu0 0.0
        %4817 = vmatmul.mubr.f32.gmra.mrb[0].mxu0 %v4686
        %v4818 = vpop.f32.mrb[0].mxu0
        %v4819 = vadd.f32 0.0, %v4818
        %v4820 = vpop.f32.mrb[0].mxu0
        %4821 = vmatprep.mubr.f32.mxu0 0.0
        %4822 = vmatmul.mubr.f32.gmra.mrb[0].mxu0 %v4687
        %v4823 = vpop.f32.mrb[0].mxu0
        %v4824 = vadd.f32 0.0, %v4823
        %v4825 = vpop.f32.mrb[0].mxu0
        %4826 = vmatprep.mubr.f32.mxu0 0.0
        %4827 = vmatmul.mubr.f32.gmra.mrb[0].mxu0 %v4688
        %v4828 = vpop.f32.mrb[0].mxu0
        %v4829 = vadd.f32 0.0, %v4828
        %v4830 = vpop.f32.mrb[0].mxu0
        %4831 = vmatprep.mubr.f32.mxu0 0.0
        %4832 = vmatmul.mubr.f32.gmra.mrb[0].mxu0 %v4689
        %v4833 = vpop.f32.mrb[0].mxu0
        %v4834 = vadd.f32 0.0, %v4833
        %v4835 = vpop.f32.mrb[0].mxu0
        %4836 = vmatprep.mubr.f32.mxu0 0.0
        %4837 = vmatmul.mubr.f32.gmra.mrb[0].mxu0 %v4690
        %v4838 = vpop.f32.mrb[0].mxu0
        %v4839 = vadd.f32 0.0, %v4838
        %v4840 = vpop.f32.mrb[0].mxu0
        %4841 = vmatprep.mubr.f32.mxu0 0.0
        %4842 = vmatmul.mubr.f32.gmra.mrb[0].mxu0 %v4691
        %v4843 = vpop.f32.mrb[0].mxu0
        %v4844 = vadd.f32 0.0, %v4843
        %v4845 = vpop.f32.mrb[0].mxu0
        %4846 = vmatprep.mubr.f32.mxu0 0.0
        %4847 = vmatmul.mubr.f32.gmra.mrb[0].mxu0 %v4692
        %v4848 = vpop.f32.mrb[0].mxu0
        %v4849 = vadd.f32 0.0, %v4848
        %v4850 = vpop.f32.mrb[0].mxu0
        %4851 = vmatprep.mubr.f32.mxu0 0.0
        %4852 = vmatmul.mubr.f32.gmra.mrb[0].mxu0 %v4693
        %v4853 = vpop.f32.mrb[0].mxu0
        %v4854 = vadd.f32 0.0, %v4853
        %v4855 = vpop.f32.mrb[0].mxu0
        %4856 = vmatprep.mubr.f32.mxu0 0.0
        %4857 = vmatmul.mubr.f32.gmra.mrb[0].mxu0 %v4694
        %v4858 = vpop.f32.mrb[0].mxu0
        %v4859 = vadd.f32 0.0, %v4858
        %v4860 = vpop.f32.mrb[0].mxu0
        %4861 = vmatprep.mubr.f32.mxu0 0.0
        %4862 = vmatmul.mubr.f32.gmra.mrb[0].mxu0 %v4695
        %v4863 = vpop.f32.mrb[0].mxu0
        %v4864 = vadd.f32 0.0, %v4863
        %v4865 = vpop.f32.mrb[0].mxu0
        %4866 = vmatprep.mubr.f32.mxu0 0.0
        %4867 = vmatmul.mubr.f32.gmra.mrb[0].mxu0 %v4696
        %v4868 = vpop.f32.mrb[0].mxu0
        %v4869 = vadd.f32 0.0, %v4868
        %v4870 = vpop.f32.mrb[0].mxu0
        %4871 = vmatprep.mubr.f32.mxu0 0.0
        %4872 = vmatmul.mubr.f32.gmra.mrb[0].mxu0 %v4697
        %v4873 = vpop.f32.mrb[0].mxu0
        %v4874 = vadd.f32 0.0, %v4873
        %v4875 = vpop.f32.mrb[0].mxu0
        %4876 = vmatprep.mubr.f32.mxu0 0.0
        %4877 = vmatmul.mubr.f32.gmra.mrb[0].mxu0 %v4698
        %v4878 = vpop.f32.mrb[0].mxu0
        %v4879 = vadd.f32 0.0, %v4878
        %v4880 = vpop.f32.mrb[0].mxu0
        %4881 = vmatprep.mubr.f32.mxu0 0.0
        %4882 = vmatmul.mubr.f32.gmra.mrb[0].mxu0 %v4699
        %v4883 = vpop.f32.mrb[0].mxu0
        %v4884 = vadd.f32 0.0, %v4883
        %v4885 = vpop.f32.mrb[0].mxu0
        %4886 = vmatprep.mubr.f32.mxu0 0.0
        %4887 = vmatmul.mubr.f32.gmra.mrb[0].mxu0 %v4700
        %v4888 = vpop.f32.mrb[0].mxu0
        %v4889 = vadd.f32 0.0, %v4888
        %v4890 = vpop.f32.mrb[0].mxu0
        %4891 = vmatprep.mubr.f32.mxu0 0.0
        %4892 = vmatmul.mubr.f32.gmra.mrb[0].mxu0 %v4701
        %v4893 = vpop.f32.mrb[0].mxu0
        %v4894 = vadd.f32 0.0, %v4893
        %v4895 = vpop.f32.mrb[0].mxu0
        %4896 = vmatprep.mubr.f32.mxu0 0.0
        %4897 = vmatmul.mubr.f32.gmra.mrb[0].mxu0 %v4702
        %v4898 = vpop.f32.mrb[0].mxu0
        %v4899 = vadd.f32 0.0, %v4898
        %v4900 = vpop.f32.mrb[0].mxu0
        %4901 = vmatprep.mubr.f32.mxu0 0.0
        %4902 = vmatmul.mubr.f32.gmra.mrb[0].mxu0 %v4703
        %v4903 = vpop.f32.mrb[0].mxu0
        %v4904 = vadd.f32 0.0, %v4903
        %v4905 = vpop.f32.mrb[0].mxu0
        %4906 = vmatprep.mubr.f32.mxu0 0.0
        %4907 = vmatmul.mubr.f32.gmra.mrb[0].mxu0 %v4704
        %v4908 = vpop.f32.mrb[0].mxu0
        %v4909 = vadd.f32 0.0, %v4908
        %v4910 = vpop.f32.mrb[0].mxu0
        %4911 = vmatprep.mubr.f32.mxu0 0.0
        %4912 = vmatmul.mubr.f32.gmra.mrb[0].mxu0 %v4705
        %v4913 = vpop.f32.mrb[0].mxu0
        %v4914 = vadd.f32 0.0, %v4913
        %v4915 = vpop.f32.mrb[0].mxu0
        %4916 = vmatprep.mubr.f32.mxu0 0.0
        %4917 = vmatmul.mubr.f32.gmra.mrb[0].mxu0 %v4706
        %v4918 = vpop.f32.mrb[0].mxu0
        %v4919 = vadd.f32 0.0, %v4918
        %v4920 = vpop.f32.mrb[0].mxu0
        %4921 = vmatprep.mubr.f32.mxu0 0.0
        %4922 = vmatmul.mubr.f32.gmra.mrb[0].mxu0 %v4707
        %v4923 = vpop.f32.mrb[0].mxu0
        %v4924 = vadd.f32 0.0, %v4923
        %v4925 = vpop.f32.mrb[0].mxu0
        %4926 = vmatprep.mubr.f32.mxu0 0.0
        %4927 = vmatmul.mubr.f32.gmra.mrb[0].mxu0 %v4708
        %v4928 = vpop.f32.mrb[0].mxu0
        %v4929 = vadd.f32 0.0, %v4928
        %v4930 = vpop.f32.mrb[0].mxu0
        %4931 = vmatprep.mubr.f32.mxu0 0.0
        %4932 = vmatmul.mubr.f32.gmra.mrb[0].mxu0 %v4709
        %v4933 = vpop.f32.mrb[0].mxu0
        %v4934 = vadd.f32 0.0, %v4933
        %v4935 = vpop.f32.mrb[0].mxu0
        %4936 = vmatprep.mubr.f32.mxu0 0.0
        %4937 = vmatmul.mubr.f32.gmra.mrb[0].mxu0 %v4710
        %v4938 = vpop.f32.mrb[0].mxu0
        %v4939 = vadd.f32 0.0, %v4938
        %v4940 = vpop.f32.mrb[0].mxu0
        %4941 = vmatprep.mubr.f32.mxu0 0.0
        %4942 = vmatmul.mubr.f32.gmra.mrb[0].mxu0 %v4711
        %v4943 = vpop.f32.mrb[0].mxu0
        %v4944 = vadd.f32 0.0, %v4943
        %v4945 = vpop.f32.mrb[0].mxu0
        %4946 = vmatprep.mubr.f32.mxu0 0.0
        %4947 = vmatmul.mubr.f32.gmra.mrb[0].mxu0 %v4712
        %v4948 = vpop.f32.mrb[0].mxu0
        %v4949 = vadd.f32 0.0, %v4948
        %v4950 = vpop.f32.mrb[0].mxu0
        %4951 = vmatprep.mubr.f32.mxu0 0.0
        %4952 = vmatmul.mubr.f32.gmra.mrb[0].mxu0 %v4713
        %v4953 = vpop.f32.mrb[0].mxu0
        %v4954 = vadd.f32 0.0, %v4953
        %v4955 = vpop.f32.mrb[0].mxu0
        %4956 = vmatprep.mubr.f32.mxu0 0.0
        %4957 = vmatmul.mubr.f32.gmra.mrb[0].mxu0 %v4714
        %v4958 = vpop.f32.mrb[0].mxu0
        %v4959 = vadd.f32 0.0, %v4958
        %v4960 = vpop.f32.mrb[0].mxu0
        %4961 = vmatprep.mubr.f32.mxu0 0.0
        %4962 = vmatmul.mubr.f32.gmra.mrb[0].mxu0 %v4715
        %v4963 = vpop.f32.mrb[0].mxu0
        %v4964 = vadd.f32 0.0, %v4963
        %v4965 = vpop.f32.mrb[0].mxu0
        %4966 = vmatprep.mubr.f32.mxu0 0.0
        %4967 = vmatmul.mubr.f32.gmra.mrb[0].mxu0 %v4716
        %v4968 = vpop.f32.mrb[0].mxu0
        %v4969 = vadd.f32 0.0, %v4968
        %v4970 = vpop.f32.mrb[0].mxu0
        %4971 = vmatprep.mubr.f32.mxu0 0.0
        %4972 = vmatmul.mubr.f32.gmra.mrb[0].mxu0 %v4717
        %v4973 = vpop.f32.mrb[0].mxu0
        %v4974 = vadd.f32 0.0, %v4973
        %v4975 = vpop.f32.mrb[0].mxu0
        %4976 = vmatprep.mubr.f32.mxu0 0.0
        %4977 = vmatmul.mubr.f32.gmra.mrb[0].mxu0 %v4718
        %v4978 = vpop.f32.mrb[0].mxu0
        %v4979 = vadd.f32 0.0, %v4978
        %v4980 = vpop.f32.mrb[0].mxu0
        %4981 = vmatprep.mubr.f32.mxu0 0.0
        %4982 = vmatmul.mubr.f32.gmra.mrb[0].mxu0 %v4719
        %v4983 = vpop.f32.mrb[0].mxu0
        %v4984 = vadd.f32 0.0, %v4983
        %v4985 = vpop.f32.mrb[0].mxu0
        %4986 = vmatprep.mubr.f32.mxu0 0.0
        %4987 = vmatmul.mubr.f32.gmra.mrb[0].mxu0 %v4720
        %v4988 = vpop.f32.mrb[0].mxu0
        %v4989 = vadd.f32 0.0, %v4988
        %v4990 = vpop.f32.mrb[0].mxu0
        %4991 = vmatprep.mubr.f32.mxu0 0.0
        %4992 = vmatmul.mubr.f32.gmra.mrb[0].mxu0 %v4721
        %v4993 = vpop.f32.mrb[0].mxu0
        %v4994 = vadd.f32 0.0, %v4993
        %v4995 = vpop.f32.mrb[0].mxu0
        %4996 = vmatprep.mubr.f32.mxu0 0.0
        %4997 = vmatmul.mubr.f32.gmra.mrb[0].mxu0 %v4722
        %v4998 = vpop.f32.mrb[0].mxu0
        %v4999 = vadd.f32 0.0, %v4998
        %v5000 = vpop.f32.mrb[0].mxu0
        %5001 = vmatprep.mubr.f32.mxu0 0.0
        %5002 = vmatmul.mubr.f32.gmra.mrb[0].mxu0 %v4723
        %v5003 = vpop.f32.mrb[0].mxu0
        %v5004 = vadd.f32 0.0, %v5003
        %v5005 = vpop.f32.mrb[0].mxu0
        %5006 = vmatprep.mubr.f32.mxu0 0.0
        %5007 = vmatmul.mubr.f32.gmra.mrb[0].mxu0 %v4724
        %v5008 = vpop.f32.mrb[0].mxu0
        %v5009 = vadd.f32 0.0, %v5008
        %v5010 = vpop.f32.mrb[0].mxu0
        %5011 = vmatprep.mubr.f32.mxu0 0.0
        %5012 = vmatmul.mubr.f32.gmra.mrb[0].mxu0 %v4725
        %v5013 = vpop.f32.mrb[0].mxu0
        %v5014 = vadd.f32 0.0, %v5013
        %v5015 = vpop.f32.mrb[0].mxu0
        %5016 = vmatprep.mubr.f32.mxu0 0.0
        %5017 = vmatmul.mubr.f32.gmra.mrb[0].mxu0 %v4726
        %v5018 = vpop.f32.mrb[0].mxu0
        %v5019 = vadd.f32 0.0, %v5018
        %v5020 = vpop.f32.mrb[0].mxu0
        %5021 = vmatprep.mubr.f32.mxu0 0.0
        %5022 = vmatmul.mubr.f32.gmra.mrb[0].mxu0 %v4727
        %v5023 = vpop.f32.mrb[0].mxu0
        %v5024 = vadd.f32 0.0, %v5023
        %v5025 = vpop.f32.mrb[0].mxu0
        %5026 = vmatprep.mubr.f32.mxu0 0.0
        %5027 = vmatmul.mubr.f32.gmra.mrb[0].mxu0 %v4728
        %v5028 = vpop.f32.mrb[0].mxu0
        %v5029 = vadd.f32 0.0, %v5028
        %v5030 = vpop.f32.mrb[0].mxu0
        %5031 = vmatprep.mubr.f32.mxu0 0.0
        %5032 = vmatmul.mubr.f32.gmra.mrb[0].mxu0 %v4729
        %v5033 = vpop.f32.mrb[0].mxu0
        %v5034 = vadd.f32 0.0, %v5033
        %v5035 = vpop.f32.mrb[0].mxu0
        %5036 = vmatprep.mubr.f32.mxu0 0.0
        %5037 = vmatmul.mubr.f32.gmra.mrb[0].mxu0 %v4730
        %v5038 = vpop.f32.mrb[0].mxu0
        %v5039 = vadd.f32 0.0, %v5038
        %v5040 = vpop.f32.mrb[0].mxu0
        %5041 = vmatprep.mubr.f32.mxu0 0.0
        %5042 = vmatmul.mubr.f32.gmra.mrb[0].mxu0 %v4731
        %v5043 = vpop.f32.mrb[0].mxu0
        %v5044 = vadd.f32 0.0, %v5043
        %v5045 = vpop.f32.mrb[0].mxu0
        %5046 = vdwg.mxu0
        %v5047 = vmax.f32 %v4631, %v4799
        %v5048 = vmax.f32 %v4632, %v4804
        %v5049 = vmax.f32 %v4633, %v4809
        %v5050 = vmax.f32 %v4634, %v4814
        %v5051 = vmax.f32 %v4635, %v4819
        %v5052 = vmax.f32 %v4636, %v4824
        %v5053 = vmax.f32 %v4637, %v4829
        %v5054 = vmax.f32 %v4638, %v4834
        %v5055 = vmax.f32 %v4639, %v4839
        %v5056 = vmax.f32 %v4640, %v4844
        %v5057 = vmax.f32 %v4641, %v4849
        %v5058 = vmax.f32 %v4642, %v4854
        %v5059 = vmax.f32 %v4643, %v4859
        %v5060 = vmax.f32 %v4644, %v4864
        %v5061 = vmax.f32 %v4645, %v4869
        %v5062 = vmax.f32 %v4646, %v4874
        %v5063 = vmax.f32 %v4647, %v4879
        %v5064 = vmax.f32 %v4648, %v4884
        %v5065 = vmax.f32 %v4649, %v4889
        %v5066 = vmax.f32 %v4650, %v4894
        %v5067 = vmax.f32 %v4651, %v4899
        %v5068 = vmax.f32 %v4652, %v4904
        %v5069 = vmax.f32 %v4653, %v4909
        %v5070 = vmax.f32 %v4654, %v4914
        %v5071 = vmax.f32 %v4655, %v4919
        %v5072 = vmax.f32 %v4656, %v4924
        %v5073 = vmax.f32 %v4657, %v4929
        %v5074 = vmax.f32 %v4658, %v4934
        %v5075 = vmax.f32 %v4659, %v4939
        %v5076 = vmax.f32 %v4660, %v4944
        %v5077 = vmax.f32 %v4661, %v4949
        %v5078 = vmax.f32 %v4662, %v4954
        %v5079 = vmax.f32 %v4663, %v4959
        %v5080 = vmax.f32 %v4664, %v4964
        %v5081 = vmax.f32 %v4665, %v4969
        %v5082 = vmax.f32 %v4666, %v4974
        %v5083 = vmax.f32 %v4667, %v4979
        %v5084 = vmax.f32 %v4668, %v4984
        %v5085 = vmax.f32 %v4669, %v4989
        %v5086 = vmax.f32 %v4670, %v4994
        %v5087 = vmax.f32 %v4671, %v4999
        %v5088 = vmax.f32 %v4672, %v5004
        %v5089 = vmax.f32 %v4673, %v5009
        %v5090 = vmax.f32 %v4674, %v5014
        %v5091 = vmax.f32 %v4675, %v5019
        %v5092 = vmax.f32 %v4676, %v5024
        %v5093 = vmax.f32 %v4677, %v5029
        %v5094 = vmax.f32 %v4678, %v5034
        %v5095 = vmax.f32 %v4679, %v5039
        %v5096 = vmax.f32 %v4680, %v5044
        %v5097 = vld [vmem:[%s2] sm:$0x1]
        %v5099 = vlaneseq
        %v5100 = vshrl.u32 %v5099, 7
        %v5101 = vsub.s32 0, %v5100
        %v5102 = vrot.slane %v5097, %v5101
        %v5104 = vadd.f32 %v5047, %v5102
        %v5105 = vadd.f32 %v5048, %v5102
        %v5106 = vadd.f32 %v5049, %v5102
        %v5107 = vadd.f32 %v5050, %v5102
        %v5108 = vadd.f32 %v5051, %v5102
        %v5109 = vadd.f32 %v5052, %v5102
        %v5110 = vadd.f32 %v5053, %v5102
        %v5111 = vadd.f32 %v5054, %v5102
        %v5112 = vadd.f32 %v5055, %v5102
        %v5113 = vadd.f32 %v5056, %v5102
        %v5114 = vadd.f32 %v5057, %v5102
        %v5115 = vadd.f32 %v5058, %v5102
        %v5116 = vadd.f32 %v5059, %v5102
        %v5117 = vadd.f32 %v5060, %v5102
        %v5118 = vadd.f32 %v5061, %v5102
        %v5119 = vadd.f32 %v5062, %v5102
        %v5120 = vadd.f32 %v5063, %v5102
        %v5121 = vadd.f32 %v5064, %v5102
        %v5122 = vadd.f32 %v5065, %v5102
        %v5123 = vadd.f32 %v5066, %v5102
        %v5124 = vadd.f32 %v5067, %v5102
        %v5125 = vadd.f32 %v5068, %v5102
        %v5126 = vadd.f32 %v5069, %v5102
        %v5127 = vadd.f32 %v5070, %v5102
        %v5128 = vadd.f32 %v5071, %v5102
        %v5129 = vadd.f32 %v5072, %v5102
        %v5130 = vadd.f32 %v5073, %v5102
        %v5131 = vadd.f32 %v5074, %v5102
        %v5132 = vadd.f32 %v5075, %v5102
        %v5133 = vadd.f32 %v5076, %v5102
        %v5134 = vadd.f32 %v5077, %v5102
        %v5135 = vadd.f32 %v5078, %v5102
        %v5136 = vadd.f32 %v5079, %v5102
        %v5137 = vadd.f32 %v5080, %v5102
        %v5138 = vadd.f32 %v5081, %v5102
        %v5139 = vadd.f32 %v5082, %v5102
        %v5140 = vadd.f32 %v5083, %v5102
        %v5141 = vadd.f32 %v5084, %v5102
        %v5142 = vadd.f32 %v5085, %v5102
        %v5143 = vadd.f32 %v5086, %v5102
        %v5144 = vadd.f32 %v5087, %v5102
        %v5145 = vadd.f32 %v5088, %v5102
        %v5146 = vadd.f32 %v5089, %v5102
        %v5147 = vadd.f32 %v5090, %v5102
        %v5148 = vadd.f32 %v5091, %v5102
        %v5149 = vadd.f32 %v5092, %v5102
        %v5150 = vadd.f32 %v5093, %v5102
        %v5151 = vadd.f32 %v5094, %v5102
        %v5152 = vadd.f32 %v5095, %v5102
        %v5153 = vadd.f32 %v5096, %v5102
        %vm5154 = vcmp.ge.f32.partialorder %v5104, 0.0
        %vm5155 = vcmp.ge.f32.partialorder %v5105, 0.0
        %vm5156 = vcmp.ge.f32.partialorder %v5106, 0.0
        %vm5157 = vcmp.ge.f32.partialorder %v5107, 0.0
        %vm5158 = vcmp.ge.f32.partialorder %v5108, 0.0
        %vm5159 = vcmp.ge.f32.partialorder %v5109, 0.0
        %vm5160 = vcmp.ge.f32.partialorder %v5110, 0.0
        %vm5161 = vcmp.ge.f32.partialorder %v5111, 0.0
        %vm5162 = vcmp.ge.f32.partialorder %v5112, 0.0
        %vm5163 = vcmp.ge.f32.partialorder %v5113, 0.0
        %vm5164 = vcmp.ge.f32.partialorder %v5114, 0.0
        %vm5165 = vcmp.ge.f32.partialorder %v5115, 0.0
        %vm5166 = vcmp.ge.f32.partialorder %v5116, 0.0
        %vm5167 = vcmp.ge.f32.partialorder %v5117, 0.0
        %vm5168 = vcmp.ge.f32.partialorder %v5118, 0.0
        %vm5169 = vcmp.ge.f32.partialorder %v5119, 0.0
        %vm5170 = vcmp.ge.f32.partialorder %v5120, 0.0
        %vm5171 = vcmp.ge.f32.partialorder %v5121, 0.0
        %vm5172 = vcmp.ge.f32.partialorder %v5122, 0.0
        %vm5173 = vcmp.ge.f32.partialorder %v5123, 0.0
        %vm5174 = vcmp.ge.f32.partialorder %v5124, 0.0
        %vm5175 = vcmp.ge.f32.partialorder %v5125, 0.0
        %vm5176 = vcmp.ge.f32.partialorder %v5126, 0.0
        %vm5177 = vcmp.ge.f32.partialorder %v5127, 0.0
        %vm5178 = vcmp.ge.f32.partialorder %v5128, 0.0
        %vm5179 = vcmp.ge.f32.partialorder %v5129, 0.0
        %vm5180 = vcmp.ge.f32.partialorder %v5130, 0.0
        %vm5181 = vcmp.ge.f32.partialorder %v5131, 0.0
        %vm5182 = vcmp.ge.f32.partialorder %v5132, 0.0
        %vm5183 = vcmp.ge.f32.partialorder %v5133, 0.0
        %vm5184 = vcmp.ge.f32.partialorder %v5134, 0.0
        %vm5185 = vcmp.ge.f32.partialorder %v5135, 0.0
        %vm5186 = vcmp.ge.f32.partialorder %v5136, 0.0
        %vm5187 = vcmp.ge.f32.partialorder %v5137, 0.0
        %vm5188 = vcmp.ge.f32.partialorder %v5138, 0.0
        %vm5189 = vcmp.ge.f32.partialorder %v5139, 0.0
        %vm5190 = vcmp.ge.f32.partialorder %v5140, 0.0
        %vm5191 = vcmp.ge.f32.partialorder %v5141, 0.0
        %vm5192 = vcmp.ge.f32.partialorder %v5142, 0.0
        %vm5193 = vcmp.ge.f32.partialorder %v5143, 0.0
        %vm5194 = vcmp.ge.f32.partialorder %v5144, 0.0
        %vm5195 = vcmp.ge.f32.partialorder %v5145, 0.0
        %vm5196 = vcmp.ge.f32.partialorder %v5146, 0.0
        %vm5197 = vcmp.ge.f32.partialorder %v5147, 0.0
        %vm5198 = vcmp.ge.f32.partialorder %v5148, 0.0
        %vm5199 = vcmp.ge.f32.partialorder %v5149, 0.0
        %vm5200 = vcmp.ge.f32.partialorder %v5150, 0.0
        %vm5201 = vcmp.ge.f32.partialorder %v5151, 0.0
        %vm5202 = vcmp.ge.f32.partialorder %v5152, 0.0
        %vm5203 = vcmp.ge.f32.partialorder %v5153, 0.0
        %v5204 = vmul.f32 %v5104, 0.01
        %v5205 = vmul.f32 %v5105, 0.01
        %v5206 = vmul.f32 %v5106, 0.01
        %v5207 = vmul.f32 %v5107, 0.01
        %v5208 = vmul.f32 %v5108, 0.01
        %v5209 = vmul.f32 %v5109, 0.01
        %v5210 = vmul.f32 %v5110, 0.01
        %v5211 = vmul.f32 %v5111, 0.01
        %v5212 = vmul.f32 %v5112, 0.01
        %v5213 = vmul.f32 %v5113, 0.01
        %v5214 = vmul.f32 %v5114, 0.01
        %v5215 = vmul.f32 %v5115, 0.01
        %v5216 = vmul.f32 %v5116, 0.01
        %v5217 = vmul.f32 %v5117, 0.01
        %v5218 = vmul.f32 %v5118, 0.01
        %v5219 = vmul.f32 %v5119, 0.01
        %v5220 = vmul.f32 %v5120, 0.01
        %v5221 = vmul.f32 %v5121, 0.01
        %v5222 = vmul.f32 %v5122, 0.01
        %v5223 = vmul.f32 %v5123, 0.01
        %v5224 = vmul.f32 %v5124, 0.01
        %v5225 = vmul.f32 %v5125, 0.01
        %v5226 = vmul.f32 %v5126, 0.01
        %v5227 = vmul.f32 %v5127, 0.01
        %v5228 = vmul.f32 %v5128, 0.01
        %v5229 = vmul.f32 %v5129, 0.01
        %v5230 = vmul.f32 %v5130, 0.01
        %v5231 = vmul.f32 %v5131, 0.01
        %v5232 = vmul.f32 %v5132, 0.01
        %v5233 = vmul.f32 %v5133, 0.01
        %v5234 = vmul.f32 %v5134, 0.01
        %v5235 = vmul.f32 %v5135, 0.01
        %v5236 = vmul.f32 %v5136, 0.01
        %v5237 = vmul.f32 %v5137, 0.01
        %v5238 = vmul.f32 %v5138, 0.01
        %v5239 = vmul.f32 %v5139, 0.01
        %v5240 = vmul.f32 %v5140, 0.01
        %v5241 = vmul.f32 %v5141, 0.01
        %v5242 = vmul.f32 %v5142, 0.01
        %v5243 = vmul.f32 %v5143, 0.01
        %v5244 = vmul.f32 %v5144, 0.01
        %v5245 = vmul.f32 %v5145, 0.01
        %v5246 = vmul.f32 %v5146, 0.01
        %v5247 = vmul.f32 %v5147, 0.01
        %v5248 = vmul.f32 %v5148, 0.01
        %v5249 = vmul.f32 %v5149, 0.01
        %v5250 = vmul.f32 %v5150, 0.01
        %v5251 = vmul.f32 %v5151, 0.01
        %v5252 = vmul.f32 %v5152, 0.01
        %v5253 = vmul.f32 %v5153, 0.01
        %v5254 = vsel %vm5154, %v5104, %v5204
        %v5255 = vsel %vm5155, %v5105, %v5205
        %v5256 = vsel %vm5156, %v5106, %v5206
        %v5257 = vsel %vm5157, %v5107, %v5207
        %v5258 = vsel %vm5158, %v5108, %v5208
        %v5259 = vsel %vm5159, %v5109, %v5209
        %v5260 = vsel %vm5160, %v5110, %v5210
        %v5261 = vsel %vm5161, %v5111, %v5211
        %v5262 = vsel %vm5162, %v5112, %v5212
        %v5263 = vsel %vm5163, %v5113, %v5213
        %v5264 = vsel %vm5164, %v5114, %v5214
        %v5265 = vsel %vm5165, %v5115, %v5215
        %v5266 = vsel %vm5166, %v5116, %v5216
        %v5267 = vsel %vm5167, %v5117, %v5217
        %v5268 = vsel %vm5168, %v5118, %v5218
        %v5269 = vsel %vm5169, %v5119, %v5219
        %v5270 = vsel %vm5170, %v5120, %v5220
        %v5271 = vsel %vm5171, %v5121, %v5221
        %v5272 = vsel %vm5172, %v5122, %v5222
        %v5273 = vsel %vm5173, %v5123, %v5223
        %v5274 = vsel %vm5174, %v5124, %v5224
        %v5275 = vsel %vm5175, %v5125, %v5225
        %v5276 = vsel %vm5176, %v5126, %v5226
        %v5277 = vsel %vm5177, %v5127, %v5227
        %v5278 = vsel %vm5178, %v5128, %v5228
        %v5279 = vsel %vm5179, %v5129, %v5229
        %v5280 = vsel %vm5180, %v5130, %v5230
        %v5281 = vsel %vm5181, %v5131, %v5231
        %v5282 = vsel %vm5182, %v5132, %v5232
        %v5283 = vsel %vm5183, %v5133, %v5233
        %v5284 = vsel %vm5184, %v5134, %v5234
        %v5285 = vsel %vm5185, %v5135, %v5235
        %v5286 = vsel %vm5186, %v5136, %v5236
        %v5287 = vsel %vm5187, %v5137, %v5237
        %v5288 = vsel %vm5188, %v5138, %v5238
        %v5289 = vsel %vm5189, %v5139, %v5239
        %v5290 = vsel %vm5190, %v5140, %v5240
        %v5291 = vsel %vm5191, %v5141, %v5241
        %v5292 = vsel %vm5192, %v5142, %v5242
        %v5293 = vsel %vm5193, %v5143, %v5243
        %v5294 = vsel %vm5194, %v5144, %v5244
        %v5295 = vsel %vm5195, %v5145, %v5245
        %v5296 = vsel %vm5196, %v5146, %v5246
        %v5297 = vsel %vm5197, %v5147, %v5247
        %v5298 = vsel %vm5198, %v5148, %v5248
        %v5299 = vsel %vm5199, %v5149, %v5249
        %v5300 = vsel %vm5200, %v5150, %v5250
        %v5301 = vsel %vm5201, %v5151, %v5251
        %v5302 = vsel %vm5202, %v5152, %v5252
        %v5303 = vsel %vm5203, %v5153, %v5253
        %vm5304 = vcmask 130048
        %5305 = vst.msk [vmem:[%s1802] sm:$0xff] %vm5304, %v5254
        %5306 = vst.msk [vmem:[%s1802 + $0x8] sm:$0xff] %vm5304, %v5255
        %5307 = vst.msk [vmem:[%s1802 + $0x10] sm:$0xff] %vm5304, %v5256
        %5308 = vst.msk [vmem:[%s1802 + $0x18] sm:$0xff] %vm5304, %v5257
        %5309 = vst.msk [vmem:[%s1802 + $0x20] sm:$0xff] %vm5304, %v5258
        %5310 = vst.msk [vmem:[%s1802 + $0x28] sm:$0xff] %vm5304, %v5259
        %5311 = vst.msk [vmem:[%s1802 + $0x30] sm:$0xff] %vm5304, %v5260
        %5312 = vst.msk [vmem:[%s1802 + $0x38] sm:$0xff] %vm5304, %v5261
        %5313 = vst.msk [vmem:[%s1802 + $0x40] sm:$0xff] %vm5304, %v5262
        %5314 = vst.msk [vmem:[%s1802 + $0x48] sm:$0xff] %vm5304, %v5263
        %5315 = vst.msk [vmem:[%s1802 + $0x50] sm:$0xff] %vm5304, %v5264
        %5316 = vst.msk [vmem:[%s1802 + $0x58] sm:$0xff] %vm5304, %v5265
        %5317 = vst.msk [vmem:[%s1802 + $0x60] sm:$0xff] %vm5304, %v5266
        %5318 = vst.msk [vmem:[%s1802 + $0x68] sm:$0xff] %vm5304, %v5267
        %5319 = vst.msk [vmem:[%s1802 + $0x70] sm:$0xff] %vm5304, %v5268
        %5320 = vst.msk [vmem:[%s1802 + $0x78] sm:$0xff] %vm5304, %v5269
        %5321 = vst.msk [vmem:[%s1802 + $0x80] sm:$0xff] %vm5304, %v5270
        %5322 = vst.msk [vmem:[%s1802 + $0x88] sm:$0xff] %vm5304, %v5271
        %5323 = vst.msk [vmem:[%s1802 + $0x90] sm:$0xff] %vm5304, %v5272
        %5324 = vst.msk [vmem:[%s1802 + $0x98] sm:$0xff] %vm5304, %v5273
        %5325 = vst.msk [vmem:[%s1802 + $0xa0] sm:$0xff] %vm5304, %v5274
        %5326 = vst.msk [vmem:[%s1802 + $0xa8] sm:$0xff] %vm5304, %v5275
        %5327 = vst.msk [vmem:[%s1802 + $0xb0] sm:$0xff] %vm5304, %v5276
        %5328 = vst.msk [vmem:[%s1802 + $0xb8] sm:$0xff] %vm5304, %v5277
        %5329 = vst.msk [vmem:[%s1802 + $0xc0] sm:$0xff] %vm5304, %v5278
        %5330 = vst.msk [vmem:[%s1802 + $0xc8] sm:$0xff] %vm5304, %v5279
        %5331 = vst.msk [vmem:[%s1802 + $0xd0] sm:$0xff] %vm5304, %v5280
        %5332 = vst.msk [vmem:[%s1802 + $0xd8] sm:$0xff] %vm5304, %v5281
        %5333 = vst.msk [vmem:[%s1802 + $0xe0] sm:$0xff] %vm5304, %v5282
        %5334 = vst.msk [vmem:[%s1802 + $0xe8] sm:$0xff] %vm5304, %v5283
        %5335 = vst.msk [vmem:[%s1802 + $0xf0] sm:$0xff] %vm5304, %v5284
        %5336 = vst.msk [vmem:[%s1802 + $0xf8] sm:$0xff] %vm5304, %v5285
        %5337 = vst.msk [vmem:[%s1802 + $0x100] sm:$0xff] %vm5304, %v5286
        %5338 = vst.msk [vmem:[%s1802 + $0x108] sm:$0xff] %vm5304, %v5287
        %5339 = vst.msk [vmem:[%s1802 + $0x110] sm:$0xff] %vm5304, %v5288
        %5340 = vst.msk [vmem:[%s1802 + $0x118] sm:$0xff] %vm5304, %v5289
        %5341 = vst.msk [vmem:[%s1802 + $0x120] sm:$0xff] %vm5304, %v5290
        %5342 = vst.msk [vmem:[%s1802 + $0x128] sm:$0xff] %vm5304, %v5291
        %5343 = vst.msk [vmem:[%s1802 + $0x130] sm:$0xff] %vm5304, %v5292
        %5344 = vst.msk [vmem:[%s1802 + $0x138] sm:$0xff] %vm5304, %v5293
        %5345 = vst.msk [vmem:[%s1802 + $0x140] sm:$0xff] %vm5304, %v5294
        %5346 = vst.msk [vmem:[%s1802 + $0x148] sm:$0xff] %vm5304, %v5295
        %5347 = vst.msk [vmem:[%s1802 + $0x150] sm:$0xff] %vm5304, %v5296
        %5348 = vst.msk [vmem:[%s1802 + $0x158] sm:$0xff] %vm5304, %v5297
        %5349 = vst.msk [vmem:[%s1802 + $0x160] sm:$0xff] %vm5304, %v5298
        %5350 = vst.msk [vmem:[%s1802 + $0x168] sm:$0xff] %vm5304, %v5299
        %5351 = vst.msk [vmem:[%s1802 + $0x170] sm:$0xff] %vm5304, %v5300
        %5352 = vst.msk [vmem:[%s1802 + $0x178] sm:$0xff] %vm5304, %v5301
        %5353 = vst.msk [vmem:[%s1802 + $0x180] sm:$0xff] %vm5304, %v5302
        %5354 = vst.msk [vmem:[%s1802 + $0x188] sm:$0xff] %vm5304, %v5303
        %s5355 = smul.u32 50, %s14
        %p5356 = scmp.lt.s32.totalorder %s5355, 99
        %s5357 = scalar_select %p5356, %s5355, 99
        %s5358 = smul.addr %s5357, 8
        %s5359 = scalar_lea.vmem %s3, %s5358
        // Predicated region
        $region71: #{cnn3d_forward.2} parent=65 // pred_check
          %p5360 = pneg %p100
        $region72: #{cnn3d_forward.2} parent=65 // pred_check_branch
          %5362 = sbr.rel (%p5360) target = $region74
        $region73: #{cnn3d_forward.2} parent=65 // pred_region
          %s5363 = smul.u32 50, %s14
        $region74: #{cnn3d_forward.2} parent=65 // pred_fallthru
          _
      $region66: #{cnn3d_forward.2} parent=5 // pred_fallthru
        _
      %p5364 = scmp.le.s32.totalorder 2, %s9
      // Predicated region
      $region75: #{cnn3d_forward.2} parent=5 // pred_check
        %p5365 = pneg %p5364
      $region76: #{cnn3d_forward.2} parent=5 // pred_check_branch
        %5367 = sbr.rel (%p5365) target = $region78
      $region77: #{cnn3d_forward.2} parent=5 // pred_region
        %s5368 = ssub.s32 %s9, 2
        // Predicated region
        $region79: #{cnn3d_forward.2} parent=77 // pred_check
          %p5369 = pneg %p106
        $region80: #{cnn3d_forward.2} parent=77 // pred_check_branch
          %5371 = sbr.rel (%p5369) target = $region82
        $region81: #{cnn3d_forward.2} parent=77 // pred_region
          %s5372 = smul.u32 50, %s15
          %p5373 = scmp.lt.s32.totalorder %s5372, 99
          %s5374 = scalar_select %p5373, %s5372, 99
          %s5375 = smul.addr %s5374, 8
          %s5376 = scalar_lea.vmem %s3, %s5375
        $region82: #{cnn3d_forward.2} parent=77 // pred_fallthru
          _
      $region78: #{cnn3d_forward.2} parent=5 // pred_fallthru
        _
    $region6: #{cnn3d_forward.2} parent=1 // loop_footer
      %s13 = sadd.s32 1, %s9
    $region7: #{cnn3d_forward.2} parent=1 // loop_footer_branch
      %8 = sbr.rel target = $region3
    $region8: #{cnn3d_forward.2} parent=1 // loop_exit
      _

// kernel: cnn3d_forward.3
$region0: #{cnn3d_forward.3}
  #allocation0 [shape = 'u32[]', space=smem, size = 0x4, offset = 0x4, fixed_abs, tag = 'smem constant byte address 0x4 - core index']
  #allocation1 [shape = 'u32[144,128]{1,0:T(1,128)}', space=vmem, size = 0x12000, scoped, tag = 'internal scratch']
  %s0 = inlined_call_operand.vmem [shape: f32[2,6400], index: 0, kind: input, shape index: {}]
  %s1 = inlined_call_operand.vmem [shape: f32[6400,64], index: 1, kind: input, shape index: {}]
  %s2 = inlined_call_operand.vmem [shape: f32[1,64], index: 2, kind: input, shape index: {}]
  %s3 = inlined_call_operand.vmem [shape: f32[64,5], index: 3, kind: input, shape index: {}]
  %s4 = inlined_call_operand.vmem [shape: f32[1,5], index: 4, kind: input, shape index: {}]
  %s5 = inlined_call_operand.hbm [shape: f32[2,5], index: 5, kind: output, shape index: {}]
  %s6 = sld [smem:[#allocation0]]
  $region30: #{cnn3d_forward.3} parent=0
    _
  %s8 = ssub.s32 1, %s6
  %s9 = scalar_select 0, %s8, %s6
  $region1: #{cnn3d_forward.3} parent=0
    #allocation2 [shape = 'u8[1024]{0}', space=vmem, size = 0x400, scoped, tag = 'output window, operand 0, single buffered']
    #allocation3 [shape = 's32[1]{0}', space=sflag, size = 0x4, scoped, tag = 'scoped memory for cnn3d_forward.3']
    %10 = vsyncpa [#allocation3], 0
    // Predicated region
    $region2: #{cnn3d_forward.3} parent=1 // pred_check
      _
    $region3: #{cnn3d_forward.3} parent=1 // pred_check_branch
      %12 = sbr.rel (0) target = $region5
    $region4: #{cnn3d_forward.3} parent=1 // pred_region
      _
    $region5: #{cnn3d_forward.3} parent=1 // pred_fallthru
      _
    // Predicated region
    $region6: #{cnn3d_forward.3} parent=1 // pred_check
      _
    $region7: #{cnn3d_forward.3} parent=1 // pred_check_branch
      %14 = sbr.rel (0) target = $region9
    $region8: #{cnn3d_forward.3} parent=1 // pred_region
      _
    $region9: #{cnn3d_forward.3} parent=1 // pred_fallthru
      _
    // Predicated region
    $region10: #{cnn3d_forward.3} parent=1 // pred_check
      _
    $region11: #{cnn3d_forward.3} parent=1 // pred_check_branch
      %16 = sbr.rel (0) target = $region13
    $region12: #{cnn3d_forward.3} parent=1 // pred_region
      _
    $region13: #{cnn3d_forward.3} parent=1 // pred_fallthru
      _
    // Predicated region
    $region14: #{cnn3d_forward.3} parent=1 // pred_check
      _
    $region15: #{cnn3d_forward.3} parent=1 // pred_check_branch
      %18 = sbr.rel (0) target = $region17
    $region16: #{cnn3d_forward.3} parent=1 // pred_region
      _
    $region17: #{cnn3d_forward.3} parent=1 // pred_fallthru
      _
    // Predicated region
    $region18: #{cnn3d_forward.3} parent=1 // pred_check
      _
    $region19: #{cnn3d_forward.3} parent=1 // pred_check_branch
      %20 = sbr.rel (0) target = $region21
    $region20: #{cnn3d_forward.3} parent=1 // pred_region
      _
    $region21: #{cnn3d_forward.3} parent=1 // pred_fallthru
      _
    %v21 = vld [vmem:[%s0] sm:$0xff]
    %v22 = vld [vmem:[%s0 + $0x8] sm:$0xff]
    %v23 = vld [vmem:[%s0 + $0x10] sm:$0xff]
    %v24 = vld [vmem:[%s0 + $0x18] sm:$0xff]
    %v25 = vld [vmem:[%s0 + $0x20] sm:$0xff]
    %v26 = vld [vmem:[%s0 + $0x28] sm:$0xff]
    %v27 = vld [vmem:[%s0 + $0x30] sm:$0xff]
    %v28 = vld [vmem:[%s0 + $0x38] sm:$0xff]
    %v29 = vld [vmem:[%s0 + $0x40] sm:$0xff]
    %v30 = vld [vmem:[%s0 + $0x48] sm:$0xff]
    %v31 = vld [vmem:[%s0 + $0x50] sm:$0xff]
    %v32 = vld [vmem:[%s0 + $0x58] sm:$0xff]
    %v33 = vld [vmem:[%s0 + $0x60] sm:$0xf]
    %v34 = vld [vmem:[%s1] sm:$0xff]
    %v35 = vld [vmem:[%s1 + $0x8] sm:$0xff]
    %v36 = vld [vmem:[%s1 + $0x10] sm:$0xff]
    %v37 = vld [vmem:[%s1 + $0x18] sm:$0xff]
    %v38 = vld [vmem:[%s1 + $0x20] sm:$0xff]
    %v39 = vld [vmem:[%s1 + $0x28] sm:$0xff]
    %v40 = vld [vmem:[%s1 + $0x30] sm:$0xff]
    %v41 = vld [vmem:[%s1 + $0x38] sm:$0xff]
    %v42 = vld [vmem:[%s1 + $0x40] sm:$0xff]
    %v43 = vld [vmem:[%s1 + $0x48] sm:$0xff]
    %v44 = vld [vmem:[%s1 + $0x50] sm:$0xff]
    %v45 = vld [vmem:[%s1 + $0x58] sm:$0xff]
    %v46 = vld [vmem:[%s1 + $0x60] sm:$0xff]
    %v47 = vld [vmem:[%s1 + $0x68] sm:$0xff]
    %v48 = vld [vmem:[%s1 + $0x70] sm:$0xff]
    %v49 = vld [vmem:[%s1 + $0x78] sm:$0xff]
    %v50 = vld [vmem:[%s1 + $0x80] sm:$0xff]
    %v51 = vld [vmem:[%s1 + $0x88] sm:$0xff]
    %v52 = vld [vmem:[%s1 + $0x90] sm:$0xff]
    %v53 = vld [vmem:[%s1 + $0x98] sm:$0xff]
    %v54 = vld [vmem:[%s1 + $0xa0] sm:$0xff]
    %v55 = vld [vmem:[%s1 + $0xa8] sm:$0xff]
    %v56 = vld [vmem:[%s1 + $0xb0] sm:$0xff]
    %v57 = vld [vmem:[%s1 + $0xb8] sm:$0xff]
    %v58 = vld [vmem:[%s1 + $0xc0] sm:$0xff]
    %v59 = vld [vmem:[%s1 + $0xc8] sm:$0xff]
    %v60 = vld [vmem:[%s1 + $0xd0] sm:$0xff]
    %v61 = vld [vmem:[%s1 + $0xd8] sm:$0xff]
    %v62 = vld [vmem:[%s1 + $0xe0] sm:$0xff]
    %v63 = vld [vmem:[%s1 + $0xe8] sm:$0xff]
    %v64 = vld [vmem:[%s1 + $0xf0] sm:$0xff]
    %v65 = vld [vmem:[%s1 + $0xf8] sm:$0xff]
    %v66 = vld [vmem:[%s1 + $0x100] sm:$0xff]
    %v67 = vld [vmem:[%s1 + $0x108] sm:$0xff]
    %v68 = vld [vmem:[%s1 + $0x110] sm:$0xff]
    %v69 = vld [vmem:[%s1 + $0x118] sm:$0xff]
    %v70 = vld [vmem:[%s1 + $0x120] sm:$0xff]
    %v71 = vld [vmem:[%s1 + $0x128] sm:$0xff]
    %v72 = vld [vmem:[%s1 + $0x130] sm:$0xff]
    %v73 = vld [vmem:[%s1 + $0x138] sm:$0xff]
    %v74 = vld [vmem:[%s1 + $0x140] sm:$0xff]
    %v75 = vld [vmem:[%s1 + $0x148] sm:$0xff]
    %v76 = vld [vmem:[%s1 + $0x150] sm:$0xff]
    %v77 = vld [vmem:[%s1 + $0x158] sm:$0xff]
    %v78 = vld [vmem:[%s1 + $0x160] sm:$0xff]
    %v79 = vld [vmem:[%s1 + $0x168] sm:$0xff]
    %v80 = vld [vmem:[%s1 + $0x170] sm:$0xff]
    %v81 = vld [vmem:[%s1 + $0x178] sm:$0xff]
    %v82 = vld [vmem:[%s1 + $0x180] sm:$0xff]
    %v83 = vld [vmem:[%s1 + $0x188] sm:$0xff]
    %v84 = vld [vmem:[%s1 + $0x190] sm:$0xff]
    %v85 = vld [vmem:[%s1 + $0x198] sm:$0xff]
    %v86 = vld [vmem:[%s1 + $0x1a0] sm:$0xff]
    %v87 = vld [vmem:[%s1 + $0x1a8] sm:$0xff]
    %v88 = vld [vmem:[%s1 + $0x1b0] sm:$0xff]
    %v89 = vld [vmem:[%s1 + $0x1b8] sm:$0xff]
    %v90 = vld [vmem:[%s1 + $0x1c0] sm:$0xff]
    %v91 = vld [vmem:[%s1 + $0x1c8] sm:$0xff]
    %v92 = vld [vmem:[%s1 + $0x1d0] sm:$0xff]
    %v93 = vld [vmem:[%s1 + $0x1d8] sm:$0xff]
    %v94 = vld [vmem:[%s1 + $0x1e0] sm:$0xff]
    %v95 = vld [vmem:[%s1 + $0x1e8] sm:$0xff]
    %v96 = vld [vmem:[%s1 + $0x1f0] sm:$0xff]
    %v97 = vld [vmem:[%s1 + $0x1f8] sm:$0xff]
    %v98 = vld [vmem:[%s1 + $0x200] sm:$0xff]
    %v99 = vld [vmem:[%s1 + $0x208] sm:$0xff]
    %v100 = vld [vmem:[%s1 + $0x210] sm:$0xff]
    %v101 = vld [vmem:[%s1 + $0x218] sm:$0xff]
    %v102 = vld [vmem:[%s1 + $0x220] sm:$0xff]
    %v103 = vld [vmem:[%s1 + $0x228] sm:$0xff]
    %v104 = vld [vmem:[%s1 + $0x230] sm:$0xff]
    %v105 = vld [vmem:[%s1 + $0x238] sm:$0xff]
    %v106 = vld [vmem:[%s1 + $0x240] sm:$0xff]
    %v107 = vld [vmem:[%s1 + $0x248] sm:$0xff]
    %v108 = vld [vmem:[%s1 + $0x250] sm:$0xff]
    %v109 = vld [vmem:[%s1 + $0x258] sm:$0xff]
    %v110 = vld [vmem:[%s1 + $0x260] sm:$0xff]
    %v111 = vld [vmem:[%s1 + $0x268] sm:$0xff]
    %v112 = vld [vmem:[%s1 + $0x270] sm:$0xff]
    %v113 = vld [vmem:[%s1 + $0x278] sm:$0xff]
    %v114 = vld [vmem:[%s1 + $0x280] sm:$0xff]
    %v115 = vld [vmem:[%s1 + $0x288] sm:$0xff]
    %v116 = vld [vmem:[%s1 + $0x290] sm:$0xff]
    %v117 = vld [vmem:[%s1 + $0x298] sm:$0xff]
    %v118 = vld [vmem:[%s1 + $0x2a0] sm:$0xff]
    %v119 = vld [vmem:[%s1 + $0x2a8] sm:$0xff]
    %v120 = vld [vmem:[%s1 + $0x2b0] sm:$0xff]
    %v121 = vld [vmem:[%s1 + $0x2b8] sm:$0xff]
    %v122 = vld [vmem:[%s1 + $0x2c0] sm:$0xff]
    %v123 = vld [vmem:[%s1 + $0x2c8] sm:$0xff]
    %v124 = vld [vmem:[%s1 + $0x2d0] sm:$0xff]
    %v125 = vld [vmem:[%s1 + $0x2d8] sm:$0xff]
    %v126 = vld [vmem:[%s1 + $0x2e0] sm:$0xff]
    %v127 = vld [vmem:[%s1 + $0x2e8] sm:$0xff]
    %v128 = vld [vmem:[%s1 + $0x2f0] sm:$0xff]
    %v129 = vld [vmem:[%s1 + $0x2f8] sm:$0xff]
    %v130 = vld [vmem:[%s1 + $0x300] sm:$0xff]
    %v131 = vld [vmem:[%s1 + $0x308] sm:$0xff]
    %v132 = vld [vmem:[%s1 + $0x310] sm:$0xff]
    %v133 = vld [vmem:[%s1 + $0x318] sm:$0xff]
    %v134 = vld [vmem:[%s1 + $0x320] sm:$0xff]
    %v135 = vld [vmem:[%s1 + $0x328] sm:$0xff]
    %v136 = vld [vmem:[%s1 + $0x330] sm:$0xff]
    %v137 = vld [vmem:[%s1 + $0x338] sm:$0xff]
    %v138 = vld [vmem:[%s1 + $0x340] sm:$0xff]
    %v139 = vld [vmem:[%s1 + $0x348] sm:$0xff]
    %v140 = vld [vmem:[%s1 + $0x350] sm:$0xff]
    %v141 = vld [vmem:[%s1 + $0x358] sm:$0xff]
    %v142 = vld [vmem:[%s1 + $0x360] sm:$0xff]
    %v143 = vld [vmem:[%s1 + $0x368] sm:$0xff]
    %v144 = vld [vmem:[%s1 + $0x370] sm:$0xff]
    %v145 = vld [vmem:[%s1 + $0x378] sm:$0xff]
    %v146 = vld [vmem:[%s1 + $0x380] sm:$0xff]
    %v147 = vld [vmem:[%s1 + $0x388] sm:$0xff]
    %v148 = vld [vmem:[%s1 + $0x390] sm:$0xff]
    %v149 = vld [vmem:[%s1 + $0x398] sm:$0xff]
    %v150 = vld [vmem:[%s1 + $0x3a0] sm:$0xff]
    %v151 = vld [vmem:[%s1 + $0x3a8] sm:$0xff]
    %v152 = vld [vmem:[%s1 + $0x3b0] sm:$0xff]
    %v153 = vld [vmem:[%s1 + $0x3b8] sm:$0xff]
    %v154 = vld [vmem:[%s1 + $0x3c0] sm:$0xff]
    %v155 = vld [vmem:[%s1 + $0x3c8] sm:$0xff]
    %v156 = vld [vmem:[%s1 + $0x3d0] sm:$0xff]
    %v157 = vld [vmem:[%s1 + $0x3d8] sm:$0xff]
    %v158 = vld [vmem:[%s1 + $0x3e0] sm:$0xff]
    %v159 = vld [vmem:[%s1 + $0x3e8] sm:$0xff]
    %v160 = vld [vmem:[%s1 + $0x3f0] sm:$0xff]
    %v161 = vld [vmem:[%s1 + $0x3f8] sm:$0xff]
    %v162 = vld [vmem:[%s1 + $0x400] sm:$0xff]
    %v163 = vld [vmem:[%s1 + $0x408] sm:$0xff]
    %v164 = vld [vmem:[%s1 + $0x410] sm:$0xff]
    %v165 = vld [vmem:[%s1 + $0x418] sm:$0xff]
    %v166 = vld [vmem:[%s1 + $0x420] sm:$0xff]
    %v167 = vld [vmem:[%s1 + $0x428] sm:$0xff]
    %v168 = vld [vmem:[%s1 + $0x430] sm:$0xff]
    %v169 = vld [vmem:[%s1 + $0x438] sm:$0xff]
    %v170 = vld [vmem:[%s1 + $0x440] sm:$0xff]
    %v171 = vld [vmem:[%s1 + $0x448] sm:$0xff]
    %v172 = vld [vmem:[%s1 + $0x450] sm:$0xff]
    %v173 = vld [vmem:[%s1 + $0x458] sm:$0xff]
    %v174 = vld [vmem:[%s1 + $0x460] sm:$0xff]
    %v175 = vld [vmem:[%s1 + $0x468] sm:$0xff]
    %v176 = vld [vmem:[%s1 + $0x470] sm:$0xff]
    %v177 = vld [vmem:[%s1 + $0x478] sm:$0xff]
    %v178 = vld [vmem:[%s1 + $0x480] sm:$0xff]
    %v179 = vld [vmem:[%s1 + $0x488] sm:$0xff]
    %v180 = vld [vmem:[%s1 + $0x490] sm:$0xff]
    %v181 = vld [vmem:[%s1 + $0x498] sm:$0xff]
    %v182 = vld [vmem:[%s1 + $0x4a0] sm:$0xff]
    %v183 = vld [vmem:[%s1 + $0x4a8] sm:$0xff]
    %v184 = vld [vmem:[%s1 + $0x4b0] sm:$0xff]
    %v185 = vld [vmem:[%s1 + $0x4b8] sm:$0xff]
    %v186 = vld [vmem:[%s1 + $0x4c0] sm:$0xff]
    %v187 = vld [vmem:[%s1 + $0x4c8] sm:$0xff]
    %v188 = vld [vmem:[%s1 + $0x4d0] sm:$0xff]
    %v189 = vld [vmem:[%s1 + $0x4d8] sm:$0xff]
    %v190 = vld [vmem:[%s1 + $0x4e0] sm:$0xff]
    %v191 = vld [vmem:[%s1 + $0x4e8] sm:$0xff]
    %v192 = vld [vmem:[%s1 + $0x4f0] sm:$0xff]
    %v193 = vld [vmem:[%s1 + $0x4f8] sm:$0xff]
    %v194 = vld [vmem:[%s1 + $0x500] sm:$0xff]
    %v195 = vld [vmem:[%s1 + $0x508] sm:$0xff]
    %v196 = vld [vmem:[%s1 + $0x510] sm:$0xff]
    %v197 = vld [vmem:[%s1 + $0x518] sm:$0xff]
    %v198 = vld [vmem:[%s1 + $0x520] sm:$0xff]
    %v199 = vld [vmem:[%s1 + $0x528] sm:$0xff]
    %v200 = vld [vmem:[%s1 + $0x530] sm:$0xff]
    %v201 = vld [vmem:[%s1 + $0x538] sm:$0xff]
    %v202 = vld [vmem:[%s1 + $0x540] sm:$0xff]
    %v203 = vld [vmem:[%s1 + $0x548] sm:$0xff]
    %v204 = vld [vmem:[%s1 + $0x550] sm:$0xff]
    %v205 = vld [vmem:[%s1 + $0x558] sm:$0xff]
    %v206 = vld [vmem:[%s1 + $0x560] sm:$0xff]
    %v207 = vld [vmem:[%s1 + $0x568] sm:$0xff]
    %v208 = vld [vmem:[%s1 + $0x570] sm:$0xff]
    %v209 = vld [vmem:[%s1 + $0x578] sm:$0xff]
    %v210 = vld [vmem:[%s1 + $0x580] sm:$0xff]
    %v211 = vld [vmem:[%s1 + $0x588] sm:$0xff]
    %v212 = vld [vmem:[%s1 + $0x590] sm:$0xff]
    %v213 = vld [vmem:[%s1 + $0x598] sm:$0xff]
    %v214 = vld [vmem:[%s1 + $0x5a0] sm:$0xff]
    %v215 = vld [vmem:[%s1 + $0x5a8] sm:$0xff]
    %v216 = vld [vmem:[%s1 + $0x5b0] sm:$0xff]
    %v217 = vld [vmem:[%s1 + $0x5b8] sm:$0xff]
    %v218 = vld [vmem:[%s1 + $0x5c0] sm:$0xff]
    %v219 = vld [vmem:[%s1 + $0x5c8] sm:$0xff]
    %v220 = vld [vmem:[%s1 + $0x5d0] sm:$0xff]
    %v221 = vld [vmem:[%s1 + $0x5d8] sm:$0xff]
    %v222 = vld [vmem:[%s1 + $0x5e0] sm:$0xff]
    %v223 = vld [vmem:[%s1 + $0x5e8] sm:$0xff]
    %v224 = vld [vmem:[%s1 + $0x5f0] sm:$0xff]
    %v225 = vld [vmem:[%s1 + $0x5f8] sm:$0xff]
    %v226 = vld [vmem:[%s1 + $0x600] sm:$0xff]
    %v227 = vld [vmem:[%s1 + $0x608] sm:$0xff]
    %v228 = vld [vmem:[%s1 + $0x610] sm:$0xff]
    %v229 = vld [vmem:[%s1 + $0x618] sm:$0xff]
    %v230 = vld [vmem:[%s1 + $0x620] sm:$0xff]
    %v231 = vld [vmem:[%s1 + $0x628] sm:$0xff]
    %v232 = vld [vmem:[%s1 + $0x630] sm:$0xff]
    %v233 = vld [vmem:[%s1 + $0x638] sm:$0xff]
    %v234 = vld [vmem:[%s1 + $0x640] sm:$0xff]
    %v235 = vld [vmem:[%s1 + $0x648] sm:$0xff]
    %v236 = vld [vmem:[%s1 + $0x650] sm:$0xff]
    %v237 = vld [vmem:[%s1 + $0x658] sm:$0xff]
    %v238 = vld [vmem:[%s1 + $0x660] sm:$0xff]
    %v239 = vld [vmem:[%s1 + $0x668] sm:$0xff]
    %v240 = vld [vmem:[%s1 + $0x670] sm:$0xff]
    %v241 = vld [vmem:[%s1 + $0x678] sm:$0xff]
    %v242 = vld [vmem:[%s1 + $0x680] sm:$0xff]
    %v243 = vld [vmem:[%s1 + $0x688] sm:$0xff]
    %v244 = vld [vmem:[%s1 + $0x690] sm:$0xff]
    %v245 = vld [vmem:[%s1 + $0x698] sm:$0xff]
    %v246 = vld [vmem:[%s1 + $0x6a0] sm:$0xff]
    %v247 = vld [vmem:[%s1 + $0x6a8] sm:$0xff]
    %v248 = vld [vmem:[%s1 + $0x6b0] sm:$0xff]
    %v249 = vld [vmem:[%s1 + $0x6b8] sm:$0xff]
    %v250 = vld [vmem:[%s1 + $0x6c0] sm:$0xff]
    %v251 = vld [vmem:[%s1 + $0x6c8] sm:$0xff]
    %v252 = vld [vmem:[%s1 + $0x6d0] sm:$0xff]
    %v253 = vld [vmem:[%s1 + $0x6d8] sm:$0xff]
    %v254 = vld [vmem:[%s1 + $0x6e0] sm:$0xff]
    %v255 = vld [vmem:[%s1 + $0x6e8] sm:$0xff]
    %v256 = vld [vmem:[%s1 + $0x6f0] sm:$0xff]
    %v257 = vld [vmem:[%s1 + $0x6f8] sm:$0xff]
    %v258 = vld [vmem:[%s1 + $0x700] sm:$0xff]
    %v259 = vld [vmem:[%s1 + $0x708] sm:$0xff]
    %v260 = vld [vmem:[%s1 + $0x710] sm:$0xff]
    %v261 = vld [vmem:[%s1 + $0x718] sm:$0xff]
    %v262 = vld [vmem:[%s1 + $0x720] sm:$0xff]
    %v263 = vld [vmem:[%s1 + $0x728] sm:$0xff]
    %v264 = vld [vmem:[%s1 + $0x730] sm:$0xff]
    %v265 = vld [vmem:[%s1 + $0x738] sm:$0xff]
    %v266 = vld [vmem:[%s1 + $0x740] sm:$0xff]
    %v267 = vld [vmem:[%s1 + $0x748] sm:$0xff]
    %v268 = vld [vmem:[%s1 + $0x750] sm:$0xff]
    %v269 = vld [vmem:[%s1 + $0x758] sm:$0xff]
    %v270 = vld [vmem:[%s1 + $0x760] sm:$0xff]
    %v271 = vld [vmem:[%s1 + $0x768] sm:$0xff]
    %v272 = vld [vmem:[%s1 + $0x770] sm:$0xff]
    %v273 = vld [vmem:[%s1 + $0x778] sm:$0xff]
    %v274 = vld [vmem:[%s1 + $0x780] sm:$0xff]
    %v275 = vld [vmem:[%s1 + $0x788] sm:$0xff]
    %v276 = vld [vmem:[%s1 + $0x790] sm:$0xff]
    %v277 = vld [vmem:[%s1 + $0x798] sm:$0xff]
    %v278 = vld [vmem:[%s1 + $0x7a0] sm:$0xff]
    %v279 = vld [vmem:[%s1 + $0x7a8] sm:$0xff]
    %v280 = vld [vmem:[%s1 + $0x7b0] sm:$0xff]
    %v281 = vld [vmem:[%s1 + $0x7b8] sm:$0xff]
    %v282 = vld [vmem:[%s1 + $0x7c0] sm:$0xff]
    %v283 = vld [vmem:[%s1 + $0x7c8] sm:$0xff]
    %v284 = vld [vmem:[%s1 + $0x7d0] sm:$0xff]
    %v285 = vld [vmem:[%s1 + $0x7d8] sm:$0xff]
    %v286 = vld [vmem:[%s1 + $0x7e0] sm:$0xff]
    %v287 = vld [vmem:[%s1 + $0x7e8] sm:$0xff]
    %v288 = vld [vmem:[%s1 + $0x7f0] sm:$0xff]
    %v289 = vld [vmem:[%s1 + $0x7f8] sm:$0xff]
    %v290 = vld [vmem:[%s1 + $0x800] sm:$0xff]
    %v291 = vld [vmem:[%s1 + $0x808] sm:$0xff]
    %v292 = vld [vmem:[%s1 + $0x810] sm:$0xff]
    %v293 = vld [vmem:[%s1 + $0x818] sm:$0xff]
    %v294 = vld [vmem:[%s1 + $0x820] sm:$0xff]
    %v295 = vld [vmem:[%s1 + $0x828] sm:$0xff]
    %v296 = vld [vmem:[%s1 + $0x830] sm:$0xff]
    %v297 = vld [vmem:[%s1 + $0x838] sm:$0xff]
    %v298 = vld [vmem:[%s1 + $0x840] sm:$0xff]
    %v299 = vld [vmem:[%s1 + $0x848] sm:$0xff]
    %v300 = vld [vmem:[%s1 + $0x850] sm:$0xff]
    %v301 = vld [vmem:[%s1 + $0x858] sm:$0xff]
    %v302 = vld [vmem:[%s1 + $0x860] sm:$0xff]
    %v303 = vld [vmem:[%s1 + $0x868] sm:$0xff]
    %v304 = vld [vmem:[%s1 + $0x870] sm:$0xff]
    %v305 = vld [vmem:[%s1 + $0x878] sm:$0xff]
    %v306 = vld [vmem:[%s1 + $0x880] sm:$0xff]
    %v307 = vld [vmem:[%s1 + $0x888] sm:$0xff]
    %v308 = vld [vmem:[%s1 + $0x890] sm:$0xff]
    %v309 = vld [vmem:[%s1 + $0x898] sm:$0xff]
    %v310 = vld [vmem:[%s1 + $0x8a0] sm:$0xff]
    %v311 = vld [vmem:[%s1 + $0x8a8] sm:$0xff]
    %v312 = vld [vmem:[%s1 + $0x8b0] sm:$0xff]
    %v313 = vld [vmem:[%s1 + $0x8b8] sm:$0xff]
    %v314 = vld [vmem:[%s1 + $0x8c0] sm:$0xff]
    %v315 = vld [vmem:[%s1 + $0x8c8] sm:$0xff]
    %v316 = vld [vmem:[%s1 + $0x8d0] sm:$0xff]
    %v317 = vld [vmem:[%s1 + $0x8d8] sm:$0xff]
    %v318 = vld [vmem:[%s1 + $0x8e0] sm:$0xff]
    %v319 = vld [vmem:[%s1 + $0x8e8] sm:$0xff]
    %v320 = vld [vmem:[%s1 + $0x8f0] sm:$0xff]
    %v321 = vld [vmem:[%s1 + $0x8f8] sm:$0xff]
    %v322 = vld [vmem:[%s1 + $0x900] sm:$0xff]
    %v323 = vld [vmem:[%s1 + $0x908] sm:$0xff]
    %v324 = vld [vmem:[%s1 + $0x910] sm:$0xff]
    %v325 = vld [vmem:[%s1 + $0x918] sm:$0xff]
    %v326 = vld [vmem:[%s1 + $0x920] sm:$0xff]
    %v327 = vld [vmem:[%s1 + $0x928] sm:$0xff]
    %v328 = vld [vmem:[%s1 + $0x930] sm:$0xff]
    %v329 = vld [vmem:[%s1 + $0x938] sm:$0xff]
    %v330 = vld [vmem:[%s1 + $0x940] sm:$0xff]
    %v331 = vld [vmem:[%s1 + $0x948] sm:$0xff]
    %v332 = vld [vmem:[%s1 + $0x950] sm:$0xff]
    %v333 = vld [vmem:[%s1 + $0x958] sm:$0xff]
    %v334 = vld [vmem:[%s1 + $0x960] sm:$0xff]
    %v335 = vld [vmem:[%s1 + $0x968] sm:$0xff]
    %v336 = vld [vmem:[%s1 + $0x970] sm:$0xff]
    %v337 = vld [vmem:[%s1 + $0x978] sm:$0xff]
    %v338 = vld [vmem:[%s1 + $0x980] sm:$0xff]
    %v339 = vld [vmem:[%s1 + $0x988] sm:$0xff]
    %v340 = vld [vmem:[%s1 + $0x990] sm:$0xff]
    %v341 = vld [vmem:[%s1 + $0x998] sm:$0xff]
    %v342 = vld [vmem:[%s1 + $0x9a0] sm:$0xff]
    %v343 = vld [vmem:[%s1 + $0x9a8] sm:$0xff]
    %v344 = vld [vmem:[%s1 + $0x9b0] sm:$0xff]
    %v345 = vld [vmem:[%s1 + $0x9b8] sm:$0xff]
    %v346 = vld [vmem:[%s1 + $0x9c0] sm:$0xff]
    %v347 = vld [vmem:[%s1 + $0x9c8] sm:$0xff]
    %v348 = vld [vmem:[%s1 + $0x9d0] sm:$0xff]
    %v349 = vld [vmem:[%s1 + $0x9d8] sm:$0xff]
    %v350 = vld [vmem:[%s1 + $0x9e0] sm:$0xff]
    %v351 = vld [vmem:[%s1 + $0x9e8] sm:$0xff]
    %v352 = vld [vmem:[%s1 + $0x9f0] sm:$0xff]
    %v353 = vld [vmem:[%s1 + $0x9f8] sm:$0xff]
    %v354 = vld [vmem:[%s1 + $0xa00] sm:$0xff]
    %v355 = vld [vmem:[%s1 + $0xa08] sm:$0xff]
    %v356 = vld [vmem:[%s1 + $0xa10] sm:$0xff]
    %v357 = vld [vmem:[%s1 + $0xa18] sm:$0xff]
    %v358 = vld [vmem:[%s1 + $0xa20] sm:$0xff]
    %v359 = vld [vmem:[%s1 + $0xa28] sm:$0xff]
    %v360 = vld [vmem:[%s1 + $0xa30] sm:$0xff]
    %v361 = vld [vmem:[%s1 + $0xa38] sm:$0xff]
    %v362 = vld [vmem:[%s1 + $0xa40] sm:$0xff]
    %v363 = vld [vmem:[%s1 + $0xa48] sm:$0xff]
    %v364 = vld [vmem:[%s1 + $0xa50] sm:$0xff]
    %v365 = vld [vmem:[%s1 + $0xa58] sm:$0xff]
    %v366 = vld [vmem:[%s1 + $0xa60] sm:$0xff]
    %v367 = vld [vmem:[%s1 + $0xa68] sm:$0xff]
    %v368 = vld [vmem:[%s1 + $0xa70] sm:$0xff]
    %v369 = vld [vmem:[%s1 + $0xa78] sm:$0xff]
    %v370 = vld [vmem:[%s1 + $0xa80] sm:$0xff]
    %v371 = vld [vmem:[%s1 + $0xa88] sm:$0xff]
    %v372 = vld [vmem:[%s1 + $0xa90] sm:$0xff]
    %v373 = vld [vmem:[%s1 + $0xa98] sm:$0xff]
    %v374 = vld [vmem:[%s1 + $0xaa0] sm:$0xff]
    %v375 = vld [vmem:[%s1 + $0xaa8] sm:$0xff]
    %v376 = vld [vmem:[%s1 + $0xab0] sm:$0xff]
    %v377 = vld [vmem:[%s1 + $0xab8] sm:$0xff]
    %v378 = vld [vmem:[%s1 + $0xac0] sm:$0xff]
    %v379 = vld [vmem:[%s1 + $0xac8] sm:$0xff]
    %v380 = vld [vmem:[%s1 + $0xad0] sm:$0xff]
    %v381 = vld [vmem:[%s1 + $0xad8] sm:$0xff]
    %v382 = vld [vmem:[%s1 + $0xae0] sm:$0xff]
    %v383 = vld [vmem:[%s1 + $0xae8] sm:$0xff]
    %v384 = vld [vmem:[%s1 + $0xaf0] sm:$0xff]
    %v385 = vld [vmem:[%s1 + $0xaf8] sm:$0xff]
    %v386 = vld [vmem:[%s1 + $0xb00] sm:$0xff]
    %v387 = vld [vmem:[%s1 + $0xb08] sm:$0xff]
    %v388 = vld [vmem:[%s1 + $0xb10] sm:$0xff]
    %v389 = vld [vmem:[%s1 + $0xb18] sm:$0xff]
    %v390 = vld [vmem:[%s1 + $0xb20] sm:$0xff]
    %v391 = vld [vmem:[%s1 + $0xb28] sm:$0xff]
    %v392 = vld [vmem:[%s1 + $0xb30] sm:$0xff]
    %v393 = vld [vmem:[%s1 + $0xb38] sm:$0xff]
    %v394 = vld [vmem:[%s1 + $0xb40] sm:$0xff]
    %v395 = vld [vmem:[%s1 + $0xb48] sm:$0xff]
    %v396 = vld [vmem:[%s1 + $0xb50] sm:$0xff]
    %v397 = vld [vmem:[%s1 + $0xb58] sm:$0xff]
    %v398 = vld [vmem:[%s1 + $0xb60] sm:$0xff]
    %v399 = vld [vmem:[%s1 + $0xb68] sm:$0xff]
    %v400 = vld [vmem:[%s1 + $0xb70] sm:$0xff]
    %v401 = vld [vmem:[%s1 + $0xb78] sm:$0xff]
    %v402 = vld [vmem:[%s1 + $0xb80] sm:$0xff]
    %v403 = vld [vmem:[%s1 + $0xb88] sm:$0xff]
    %v404 = vld [vmem:[%s1 + $0xb90] sm:$0xff]
    %v405 = vld [vmem:[%s1 + $0xb98] sm:$0xff]
    %v406 = vld [vmem:[%s1 + $0xba0] sm:$0xff]
    %v407 = vld [vmem:[%s1 + $0xba8] sm:$0xff]
    %v408 = vld [vmem:[%s1 + $0xbb0] sm:$0xff]
    %v409 = vld [vmem:[%s1 + $0xbb8] sm:$0xff]
    %v410 = vld [vmem:[%s1 + $0xbc0] sm:$0xff]
    %v411 = vld [vmem:[%s1 + $0xbc8] sm:$0xff]
    %v412 = vld [vmem:[%s1 + $0xbd0] sm:$0xff]
    %v413 = vld [vmem:[%s1 + $0xbd8] sm:$0xff]
    %v414 = vld [vmem:[%s1 + $0xbe0] sm:$0xff]
    %v415 = vld [vmem:[%s1 + $0xbe8] sm:$0xff]
    %v416 = vld [vmem:[%s1 + $0xbf0] sm:$0xff]
    %v417 = vld [vmem:[%s1 + $0xbf8] sm:$0xff]
    %v418 = vld [vmem:[%s1 + $0xc00] sm:$0xff]
    %v419 = vld [vmem:[%s1 + $0xc08] sm:$0xff]
    %v420 = vld [vmem:[%s1 + $0xc10] sm:$0xff]
    %v421 = vld [vmem:[%s1 + $0xc18] sm:$0xff]
    %v422 = vld [vmem:[%s1 + $0xc20] sm:$0xff]
    %v423 = vld [vmem:[%s1 + $0xc28] sm:$0xff]
    %v424 = vld [vmem:[%s1 + $0xc30] sm:$0xff]
    %v425 = vld [vmem:[%s1 + $0xc38] sm:$0xff]
    %v426 = vld [vmem:[%s1 + $0xc40] sm:$0xff]
    %v427 = vld [vmem:[%s1 + $0xc48] sm:$0xff]
    %v428 = vld [vmem:[%s1 + $0xc50] sm:$0xff]
    %v429 = vld [vmem:[%s1 + $0xc58] sm:$0xff]
    %v430 = vld [vmem:[%s1 + $0xc60] sm:$0xff]
    %v431 = vld [vmem:[%s1 + $0xc68] sm:$0xff]
    %v432 = vld [vmem:[%s1 + $0xc70] sm:$0xff]
    %v433 = vld [vmem:[%s1 + $0xc78] sm:$0xff]
    %v434 = vld [vmem:[%s1 + $0xc80] sm:$0xff]
    %v435 = vld [vmem:[%s1 + $0xc88] sm:$0xff]
    %v436 = vld [vmem:[%s1 + $0xc90] sm:$0xff]
    %v437 = vld [vmem:[%s1 + $0xc98] sm:$0xff]
    %v438 = vld [vmem:[%s1 + $0xca0] sm:$0xff]
    %v439 = vld [vmem:[%s1 + $0xca8] sm:$0xff]
    %v440 = vld [vmem:[%s1 + $0xcb0] sm:$0xff]
    %v441 = vld [vmem:[%s1 + $0xcb8] sm:$0xff]
    %v442 = vld [vmem:[%s1 + $0xcc0] sm:$0xff]
    %v443 = vld [vmem:[%s1 + $0xcc8] sm:$0xff]
    %v444 = vld [vmem:[%s1 + $0xcd0] sm:$0xff]
    %v445 = vld [vmem:[%s1 + $0xcd8] sm:$0xff]
    %v446 = vld [vmem:[%s1 + $0xce0] sm:$0xff]
    %v447 = vld [vmem:[%s1 + $0xce8] sm:$0xff]
    %v448 = vld [vmem:[%s1 + $0xcf0] sm:$0xff]
    %v449 = vld [vmem:[%s1 + $0xcf8] sm:$0xff]
    %v450 = vld [vmem:[%s1 + $0xd00] sm:$0xff]
    %v451 = vld [vmem:[%s1 + $0xd08] sm:$0xff]
    %v452 = vld [vmem:[%s1 + $0xd10] sm:$0xff]
    %v453 = vld [vmem:[%s1 + $0xd18] sm:$0xff]
    %v454 = vld [vmem:[%s1 + $0xd20] sm:$0xff]
    %v455 = vld [vmem:[%s1 + $0xd28] sm:$0xff]
    %v456 = vld [vmem:[%s1 + $0xd30] sm:$0xff]
    %v457 = vld [vmem:[%s1 + $0xd38] sm:$0xff]
    %v458 = vld [vmem:[%s1 + $0xd40] sm:$0xff]
    %v459 = vld [vmem:[%s1 + $0xd48] sm:$0xff]
    %v460 = vld [vmem:[%s1 + $0xd50] sm:$0xff]
    %v461 = vld [vmem:[%s1 + $0xd58] sm:$0xff]
    %v462 = vld [vmem:[%s1 + $0xd60] sm:$0xff]
    %v463 = vld [vmem:[%s1 + $0xd68] sm:$0xff]
    %v464 = vld [vmem:[%s1 + $0xd70] sm:$0xff]
    %v465 = vld [vmem:[%s1 + $0xd78] sm:$0xff]
    %v466 = vld [vmem:[%s1 + $0xd80] sm:$0xff]
    %v467 = vld [vmem:[%s1 + $0xd88] sm:$0xff]
    %v468 = vld [vmem:[%s1 + $0xd90] sm:$0xff]
    %v469 = vld [vmem:[%s1 + $0xd98] sm:$0xff]
    %v470 = vld [vmem:[%s1 + $0xda0] sm:$0xff]
    %v471 = vld [vmem:[%s1 + $0xda8] sm:$0xff]
    %v472 = vld [vmem:[%s1 + $0xdb0] sm:$0xff]
    %v473 = vld [vmem:[%s1 + $0xdb8] sm:$0xff]
    %v474 = vld [vmem:[%s1 + $0xdc0] sm:$0xff]
    %v475 = vld [vmem:[%s1 + $0xdc8] sm:$0xff]
    %v476 = vld [vmem:[%s1 + $0xdd0] sm:$0xff]
    %v477 = vld [vmem:[%s1 + $0xdd8] sm:$0xff]
    %v478 = vld [vmem:[%s1 + $0xde0] sm:$0xff]
    %v479 = vld [vmem:[%s1 + $0xde8] sm:$0xff]
    %v480 = vld [vmem:[%s1 + $0xdf0] sm:$0xff]
    %v481 = vld [vmem:[%s1 + $0xdf8] sm:$0xff]
    %v482 = vld [vmem:[%s1 + $0xe00] sm:$0xff]
    %v483 = vld [vmem:[%s1 + $0xe08] sm:$0xff]
    %v484 = vld [vmem:[%s1 + $0xe10] sm:$0xff]
    %v485 = vld [vmem:[%s1 + $0xe18] sm:$0xff]
    %v486 = vld [vmem:[%s1 + $0xe20] sm:$0xff]
    %v487 = vld [vmem:[%s1 + $0xe28] sm:$0xff]
    %v488 = vld [vmem:[%s1 + $0xe30] sm:$0xff]
    %v489 = vld [vmem:[%s1 + $0xe38] sm:$0xff]
    %v490 = vld [vmem:[%s1 + $0xe40] sm:$0xff]
    %v491 = vld [vmem:[%s1 + $0xe48] sm:$0xff]
    %v492 = vld [vmem:[%s1 + $0xe50] sm:$0xff]
    %v493 = vld [vmem:[%s1 + $0xe58] sm:$0xff]
    %v494 = vld [vmem:[%s1 + $0xe60] sm:$0xff]
    %v495 = vld [vmem:[%s1 + $0xe68] sm:$0xff]
    %v496 = vld [vmem:[%s1 + $0xe70] sm:$0xff]
    %v497 = vld [vmem:[%s1 + $0xe78] sm:$0xff]
    %v498 = vld [vmem:[%s1 + $0xe80] sm:$0xff]
    %v499 = vld [vmem:[%s1 + $0xe88] sm:$0xff]
    %v500 = vld [vmem:[%s1 + $0xe90] sm:$0xff]
    %v501 = vld [vmem:[%s1 + $0xe98] sm:$0xff]
    %v502 = vld [vmem:[%s1 + $0xea0] sm:$0xff]
    %v503 = vld [vmem:[%s1 + $0xea8] sm:$0xff]
    %v504 = vld [vmem:[%s1 + $0xeb0] sm:$0xff]
    %v505 = vld [vmem:[%s1 + $0xeb8] sm:$0xff]
    %v506 = vld [vmem:[%s1 + $0xec0] sm:$0xff]
    %v507 = vld [vmem:[%s1 + $0xec8] sm:$0xff]
    %v508 = vld [vmem:[%s1 + $0xed0] sm:$0xff]
    %v509 = vld [vmem:[%s1 + $0xed8] sm:$0xff]
    %v510 = vld [vmem:[%s1 + $0xee0] sm:$0xff]
    %v511 = vld [vmem:[%s1 + $0xee8] sm:$0xff]
    %v512 = vld [vmem:[%s1 + $0xef0] sm:$0xff]
    %v513 = vld [vmem:[%s1 + $0xef8] sm:$0xff]
    %v514 = vld [vmem:[%s1 + $0xf00] sm:$0xff]
    %v515 = vld [vmem:[%s1 + $0xf08] sm:$0xff]
    %v516 = vld [vmem:[%s1 + $0xf10] sm:$0xff]
    %v517 = vld [vmem:[%s1 + $0xf18] sm:$0xff]
    %v518 = vld [vmem:[%s1 + $0xf20] sm:$0xff]
    %v519 = vld [vmem:[%s1 + $0xf28] sm:$0xff]
    %v520 = vld [vmem:[%s1 + $0xf30] sm:$0xff]
    %v521 = vld [vmem:[%s1 + $0xf38] sm:$0xff]
    %v522 = vld [vmem:[%s1 + $0xf40] sm:$0xff]
    %v523 = vld [vmem:[%s1 + $0xf48] sm:$0xff]
    %v524 = vld [vmem:[%s1 + $0xf50] sm:$0xff]
    %v525 = vld [vmem:[%s1 + $0xf58] sm:$0xff]
    %v526 = vld [vmem:[%s1 + $0xf60] sm:$0xff]
    %v527 = vld [vmem:[%s1 + $0xf68] sm:$0xff]
    %v528 = vld [vmem:[%s1 + $0xf70] sm:$0xff]
    %v529 = vld [vmem:[%s1 + $0xf78] sm:$0xff]
    %v530 = vld [vmem:[%s1 + $0xf80] sm:$0xff]
    %v531 = vld [vmem:[%s1 + $0xf88] sm:$0xff]
    %v532 = vld [vmem:[%s1 + $0xf90] sm:$0xff]
    %v533 = vld [vmem:[%s1 + $0xf98] sm:$0xff]
    %v534 = vld [vmem:[%s1 + $0xfa0] sm:$0xff]
    %v535 = vld [vmem:[%s1 + $0xfa8] sm:$0xff]
    %v536 = vld [vmem:[%s1 + $0xfb0] sm:$0xff]
    %v537 = vld [vmem:[%s1 + $0xfb8] sm:$0xff]
    %v538 = vld [vmem:[%s1 + $0xfc0] sm:$0xff]
    %v539 = vld [vmem:[%s1 + $0xfc8] sm:$0xff]
    %v540 = vld [vmem:[%s1 + $0xfd0] sm:$0xff]
    %v541 = vld [vmem:[%s1 + $0xfd8] sm:$0xff]
    %v542 = vld [vmem:[%s1 + $0xfe0] sm:$0xff]
    %v543 = vld [vmem:[%s1 + $0xfe8] sm:$0xff]
    %v544 = vld [vmem:[%s1 + $0xff0] sm:$0xff]
    %v545 = vld [vmem:[%s1 + $0xff8] sm:$0xff]
    %v546 = vld [vmem:[%s1 + $0x1000] sm:$0xff]
    %v547 = vld [vmem:[%s1 + $0x1008] sm:$0xff]
    %v548 = vld [vmem:[%s1 + $0x1010] sm:$0xff]
    %v549 = vld [vmem:[%s1 + $0x1018] sm:$0xff]
    %v550 = vld [vmem:[%s1 + $0x1020] sm:$0xff]
    %v551 = vld [vmem:[%s1 + $0x1028] sm:$0xff]
    %v552 = vld [vmem:[%s1 + $0x1030] sm:$0xff]
    %v553 = vld [vmem:[%s1 + $0x1038] sm:$0xff]
    %v554 = vld [vmem:[%s1 + $0x1040] sm:$0xff]
    %v555 = vld [vmem:[%s1 + $0x1048] sm:$0xff]
    %v556 = vld [vmem:[%s1 + $0x1050] sm:$0xff]
    %v557 = vld [vmem:[%s1 + $0x1058] sm:$0xff]
    %v558 = vld [vmem:[%s1 + $0x1060] sm:$0xff]
    %v559 = vld [vmem:[%s1 + $0x1068] sm:$0xff]
    %v560 = vld [vmem:[%s1 + $0x1070] sm:$0xff]
    %v561 = vld [vmem:[%s1 + $0x1078] sm:$0xff]
    %v562 = vld [vmem:[%s1 + $0x1080] sm:$0xff]
    %v563 = vld [vmem:[%s1 + $0x1088] sm:$0xff]
    %v564 = vld [vmem:[%s1 + $0x1090] sm:$0xff]
    %v565 = vld [vmem:[%s1 + $0x1098] sm:$0xff]
    %v566 = vld [vmem:[%s1 + $0x10a0] sm:$0xff]
    %v567 = vld [vmem:[%s1 + $0x10a8] sm:$0xff]
    %v568 = vld [vmem:[%s1 + $0x10b0] sm:$0xff]
    %v569 = vld [vmem:[%s1 + $0x10b8] sm:$0xff]
    %v570 = vld [vmem:[%s1 + $0x10c0] sm:$0xff]
    %v571 = vld [vmem:[%s1 + $0x10c8] sm:$0xff]
    %v572 = vld [vmem:[%s1 + $0x10d0] sm:$0xff]
    %v573 = vld [vmem:[%s1 + $0x10d8] sm:$0xff]
    %v574 = vld [vmem:[%s1 + $0x10e0] sm:$0xff]
    %v575 = vld [vmem:[%s1 + $0x10e8] sm:$0xff]
    %v576 = vld [vmem:[%s1 + $0x10f0] sm:$0xff]
    %v577 = vld [vmem:[%s1 + $0x10f8] sm:$0xff]
    %v578 = vld [vmem:[%s1 + $0x1100] sm:$0xff]
    %v579 = vld [vmem:[%s1 + $0x1108] sm:$0xff]
    %v580 = vld [vmem:[%s1 + $0x1110] sm:$0xff]
    %v581 = vld [vmem:[%s1 + $0x1118] sm:$0xff]
    %v582 = vld [vmem:[%s1 + $0x1120] sm:$0xff]
    %v583 = vld [vmem:[%s1 + $0x1128] sm:$0xff]
    %v584 = vld [vmem:[%s1 + $0x1130] sm:$0xff]
    %v585 = vld [vmem:[%s1 + $0x1138] sm:$0xff]
    %v586 = vld [vmem:[%s1 + $0x1140] sm:$0xff]
    %v587 = vld [vmem:[%s1 + $0x1148] sm:$0xff]
    %v588 = vld [vmem:[%s1 + $0x1150] sm:$0xff]
    %v589 = vld [vmem:[%s1 + $0x1158] sm:$0xff]
    %v590 = vld [vmem:[%s1 + $0x1160] sm:$0xff]
    %v591 = vld [vmem:[%s1 + $0x1168] sm:$0xff]
    %v592 = vld [vmem:[%s1 + $0x1170] sm:$0xff]
    %v593 = vld [vmem:[%s1 + $0x1178] sm:$0xff]
    %v594 = vld [vmem:[%s1 + $0x1180] sm:$0xff]
    %v595 = vld [vmem:[%s1 + $0x1188] sm:$0xff]
    %v596 = vld [vmem:[%s1 + $0x1190] sm:$0xff]
    %v597 = vld [vmem:[%s1 + $0x1198] sm:$0xff]
    %v598 = vld [vmem:[%s1 + $0x11a0] sm:$0xff]
    %v599 = vld [vmem:[%s1 + $0x11a8] sm:$0xff]
    %v600 = vld [vmem:[%s1 + $0x11b0] sm:$0xff]
    %v601 = vld [vmem:[%s1 + $0x11b8] sm:$0xff]
    %v602 = vld [vmem:[%s1 + $0x11c0] sm:$0xff]
    %v603 = vld [vmem:[%s1 + $0x11c8] sm:$0xff]
    %v604 = vld [vmem:[%s1 + $0x11d0] sm:$0xff]
    %v605 = vld [vmem:[%s1 + $0x11d8] sm:$0xff]
    %v606 = vld [vmem:[%s1 + $0x11e0] sm:$0xff]
    %v607 = vld [vmem:[%s1 + $0x11e8] sm:$0xff]
    %v608 = vld [vmem:[%s1 + $0x11f0] sm:$0xff]
    %v609 = vld [vmem:[%s1 + $0x11f8] sm:$0xff]
    %v610 = vld [vmem:[%s1 + $0x1200] sm:$0xff]
    %v611 = vld [vmem:[%s1 + $0x1208] sm:$0xff]
    %v612 = vld [vmem:[%s1 + $0x1210] sm:$0xff]
    %v613 = vld [vmem:[%s1 + $0x1218] sm:$0xff]
    %v614 = vld [vmem:[%s1 + $0x1220] sm:$0xff]
    %v615 = vld [vmem:[%s1 + $0x1228] sm:$0xff]
    %v616 = vld [vmem:[%s1 + $0x1230] sm:$0xff]
    %v617 = vld [vmem:[%s1 + $0x1238] sm:$0xff]
    %v618 = vld [vmem:[%s1 + $0x1240] sm:$0xff]
    %v619 = vld [vmem:[%s1 + $0x1248] sm:$0xff]
    %v620 = vld [vmem:[%s1 + $0x1250] sm:$0xff]
    %v621 = vld [vmem:[%s1 + $0x1258] sm:$0xff]
    %v622 = vld [vmem:[%s1 + $0x1260] sm:$0xff]
    %v623 = vld [vmem:[%s1 + $0x1268] sm:$0xff]
    %v624 = vld [vmem:[%s1 + $0x1270] sm:$0xff]
    %v625 = vld [vmem:[%s1 + $0x1278] sm:$0xff]
    %v626 = vld [vmem:[%s1 + $0x1280] sm:$0xff]
    %v627 = vld [vmem:[%s1 + $0x1288] sm:$0xff]
    %v628 = vld [vmem:[%s1 + $0x1290] sm:$0xff]
    %v629 = vld [vmem:[%s1 + $0x1298] sm:$0xff]
    %v630 = vld [vmem:[%s1 + $0x12a0] sm:$0xff]
    %v631 = vld [vmem:[%s1 + $0x12a8] sm:$0xff]
    %v632 = vld [vmem:[%s1 + $0x12b0] sm:$0xff]
    %v633 = vld [vmem:[%s1 + $0x12b8] sm:$0xff]
    %v634 = vld [vmem:[%s1 + $0x12c0] sm:$0xff]
    %v635 = vld [vmem:[%s1 + $0x12c8] sm:$0xff]
    %v636 = vld [vmem:[%s1 + $0x12d0] sm:$0xff]
    %v637 = vld [vmem:[%s1 + $0x12d8] sm:$0xff]
    %v638 = vld [vmem:[%s1 + $0x12e0] sm:$0xff]
    %v639 = vld [vmem:[%s1 + $0x12e8] sm:$0xff]
    %v640 = vld [vmem:[%s1 + $0x12f0] sm:$0xff]
    %v641 = vld [vmem:[%s1 + $0x12f8] sm:$0xff]
    %v642 = vld [vmem:[%s1 + $0x1300] sm:$0xff]
    %v643 = vld [vmem:[%s1 + $0x1308] sm:$0xff]
    %v644 = vld [vmem:[%s1 + $0x1310] sm:$0xff]
    %v645 = vld [vmem:[%s1 + $0x1318] sm:$0xff]
    %v646 = vld [vmem:[%s1 + $0x1320] sm:$0xff]
    %v647 = vld [vmem:[%s1 + $0x1328] sm:$0xff]
    %v648 = vld [vmem:[%s1 + $0x1330] sm:$0xff]
    %v649 = vld [vmem:[%s1 + $0x1338] sm:$0xff]
    %v650 = vld [vmem:[%s1 + $0x1340] sm:$0xff]
    %v651 = vld [vmem:[%s1 + $0x1348] sm:$0xff]
    %v652 = vld [vmem:[%s1 + $0x1350] sm:$0xff]
    %v653 = vld [vmem:[%s1 + $0x1358] sm:$0xff]
    %v654 = vld [vmem:[%s1 + $0x1360] sm:$0xff]
    %v655 = vld [vmem:[%s1 + $0x1368] sm:$0xff]
    %v656 = vld [vmem:[%s1 + $0x1370] sm:$0xff]
    %v657 = vld [vmem:[%s1 + $0x1378] sm:$0xff]
    %v658 = vld [vmem:[%s1 + $0x1380] sm:$0xff]
    %v659 = vld [vmem:[%s1 + $0x1388] sm:$0xff]
    %v660 = vld [vmem:[%s1 + $0x1390] sm:$0xff]
    %v661 = vld [vmem:[%s1 + $0x1398] sm:$0xff]
    %v662 = vld [vmem:[%s1 + $0x13a0] sm:$0xff]
    %v663 = vld [vmem:[%s1 + $0x13a8] sm:$0xff]
    %v664 = vld [vmem:[%s1 + $0x13b0] sm:$0xff]
    %v665 = vld [vmem:[%s1 + $0x13b8] sm:$0xff]
    %v666 = vld [vmem:[%s1 + $0x13c0] sm:$0xff]
    %v667 = vld [vmem:[%s1 + $0x13c8] sm:$0xff]
    %v668 = vld [vmem:[%s1 + $0x13d0] sm:$0xff]
    %v669 = vld [vmem:[%s1 + $0x13d8] sm:$0xff]
    %v670 = vld [vmem:[%s1 + $0x13e0] sm:$0xff]
    %v671 = vld [vmem:[%s1 + $0x13e8] sm:$0xff]
    %v672 = vld [vmem:[%s1 + $0x13f0] sm:$0xff]
    %v673 = vld [vmem:[%s1 + $0x13f8] sm:$0xff]
    %v674 = vld [vmem:[%s1 + $0x1400] sm:$0xff]
    %v675 = vld [vmem:[%s1 + $0x1408] sm:$0xff]
    %v676 = vld [vmem:[%s1 + $0x1410] sm:$0xff]
    %v677 = vld [vmem:[%s1 + $0x1418] sm:$0xff]
    %v678 = vld [vmem:[%s1 + $0x1420] sm:$0xff]
    %v679 = vld [vmem:[%s1 + $0x1428] sm:$0xff]
    %v680 = vld [vmem:[%s1 + $0x1430] sm:$0xff]
    %v681 = vld [vmem:[%s1 + $0x1438] sm:$0xff]
    %v682 = vld [vmem:[%s1 + $0x1440] sm:$0xff]
    %v683 = vld [vmem:[%s1 + $0x1448] sm:$0xff]
    %v684 = vld [vmem:[%s1 + $0x1450] sm:$0xff]
    %v685 = vld [vmem:[%s1 + $0x1458] sm:$0xff]
    %v686 = vld [vmem:[%s1 + $0x1460] sm:$0xff]
    %v687 = vld [vmem:[%s1 + $0x1468] sm:$0xff]
    %v688 = vld [vmem:[%s1 + $0x1470] sm:$0xff]
    %v689 = vld [vmem:[%s1 + $0x1478] sm:$0xff]
    %v690 = vld [vmem:[%s1 + $0x1480] sm:$0xff]
    %v691 = vld [vmem:[%s1 + $0x1488] sm:$0xff]
    %v692 = vld [vmem:[%s1 + $0x1490] sm:$0xff]
    %v693 = vld [vmem:[%s1 + $0x1498] sm:$0xff]
    %v694 = vld [vmem:[%s1 + $0x14a0] sm:$0xff]
    %v695 = vld [vmem:[%s1 + $0x14a8] sm:$0xff]
    %v696 = vld [vmem:[%s1 + $0x14b0] sm:$0xff]
    %v697 = vld [vmem:[%s1 + $0x14b8] sm:$0xff]
    %v698 = vld [vmem:[%s1 + $0x14c0] sm:$0xff]
    %v699 = vld [vmem:[%s1 + $0x14c8] sm:$0xff]
    %v700 = vld [vmem:[%s1 + $0x14d0] sm:$0xff]
    %v701 = vld [vmem:[%s1 + $0x14d8] sm:$0xff]
    %v702 = vld [vmem:[%s1 + $0x14e0] sm:$0xff]
    %v703 = vld [vmem:[%s1 + $0x14e8] sm:$0xff]
    %v704 = vld [vmem:[%s1 + $0x14f0] sm:$0xff]
    %v705 = vld [vmem:[%s1 + $0x14f8] sm:$0xff]
    %v706 = vld [vmem:[%s1 + $0x1500] sm:$0xff]
    %v707 = vld [vmem:[%s1 + $0x1508] sm:$0xff]
    %v708 = vld [vmem:[%s1 + $0x1510] sm:$0xff]
    %v709 = vld [vmem:[%s1 + $0x1518] sm:$0xff]
    %v710 = vld [vmem:[%s1 + $0x1520] sm:$0xff]
    %v711 = vld [vmem:[%s1 + $0x1528] sm:$0xff]
    %v712 = vld [vmem:[%s1 + $0x1530] sm:$0xff]
    %v713 = vld [vmem:[%s1 + $0x1538] sm:$0xff]
    %v714 = vld [vmem:[%s1 + $0x1540] sm:$0xff]
    %v715 = vld [vmem:[%s1 + $0x1548] sm:$0xff]
    %v716 = vld [vmem:[%s1 + $0x1550] sm:$0xff]
    %v717 = vld [vmem:[%s1 + $0x1558] sm:$0xff]
    %v718 = vld [vmem:[%s1 + $0x1560] sm:$0xff]
    %v719 = vld [vmem:[%s1 + $0x1568] sm:$0xff]
    %v720 = vld [vmem:[%s1 + $0x1570] sm:$0xff]
    %v721 = vld [vmem:[%s1 + $0x1578] sm:$0xff]
    %v722 = vld [vmem:[%s1 + $0x1580] sm:$0xff]
    %v723 = vld [vmem:[%s1 + $0x1588] sm:$0xff]
    %v724 = vld [vmem:[%s1 + $0x1590] sm:$0xff]
    %v725 = vld [vmem:[%s1 + $0x1598] sm:$0xff]
    %v726 = vld [vmem:[%s1 + $0x15a0] sm:$0xff]
    %v727 = vld [vmem:[%s1 + $0x15a8] sm:$0xff]
    %v728 = vld [vmem:[%s1 + $0x15b0] sm:$0xff]
    %v729 = vld [vmem:[%s1 + $0x15b8] sm:$0xff]
    %v730 = vld [vmem:[%s1 + $0x15c0] sm:$0xff]
    %v731 = vld [vmem:[%s1 + $0x15c8] sm:$0xff]
    %v732 = vld [vmem:[%s1 + $0x15d0] sm:$0xff]
    %v733 = vld [vmem:[%s1 + $0x15d8] sm:$0xff]
    %v734 = vld [vmem:[%s1 + $0x15e0] sm:$0xff]
    %v735 = vld [vmem:[%s1 + $0x15e8] sm:$0xff]
    %v736 = vld [vmem:[%s1 + $0x15f0] sm:$0xff]
    %v737 = vld [vmem:[%s1 + $0x15f8] sm:$0xff]
    %v738 = vld [vmem:[%s1 + $0x1600] sm:$0xff]
    %v739 = vld [vmem:[%s1 + $0x1608] sm:$0xff]
    %v740 = vld [vmem:[%s1 + $0x1610] sm:$0xff]
    %v741 = vld [vmem:[%s1 + $0x1618] sm:$0xff]
    %v742 = vld [vmem:[%s1 + $0x1620] sm:$0xff]
    %v743 = vld [vmem:[%s1 + $0x1628] sm:$0xff]
    %v744 = vld [vmem:[%s1 + $0x1630] sm:$0xff]
    %v745 = vld [vmem:[%s1 + $0x1638] sm:$0xff]
    %v746 = vld [vmem:[%s1 + $0x1640] sm:$0xff]
    %v747 = vld [vmem:[%s1 + $0x1648] sm:$0xff]
    %v748 = vld [vmem:[%s1 + $0x1650] sm:$0xff]
    %v749 = vld [vmem:[%s1 + $0x1658] sm:$0xff]
    %v750 = vld [vmem:[%s1 + $0x1660] sm:$0xff]
    %v751 = vld [vmem:[%s1 + $0x1668] sm:$0xff]
    %v752 = vld [vmem:[%s1 + $0x1670] sm:$0xff]
    %v753 = vld [vmem:[%s1 + $0x1678] sm:$0xff]
    %v754 = vld [vmem:[%s1 + $0x1680] sm:$0xff]
    %v755 = vld [vmem:[%s1 + $0x1688] sm:$0xff]
    %v756 = vld [vmem:[%s1 + $0x1690] sm:$0xff]
    %v757 = vld [vmem:[%s1 + $0x1698] sm:$0xff]
    %v758 = vld [vmem:[%s1 + $0x16a0] sm:$0xff]
    %v759 = vld [vmem:[%s1 + $0x16a8] sm:$0xff]
    %v760 = vld [vmem:[%s1 + $0x16b0] sm:$0xff]
    %v761 = vld [vmem:[%s1 + $0x16b8] sm:$0xff]
    %v762 = vld [vmem:[%s1 + $0x16c0] sm:$0xff]
    %v763 = vld [vmem:[%s1 + $0x16c8] sm:$0xff]
    %v764 = vld [vmem:[%s1 + $0x16d0] sm:$0xff]
    %v765 = vld [vmem:[%s1 + $0x16d8] sm:$0xff]
    %v766 = vld [vmem:[%s1 + $0x16e0] sm:$0xff]
    %v767 = vld [vmem:[%s1 + $0x16e8] sm:$0xff]
    %v768 = vld [vmem:[%s1 + $0x16f0] sm:$0xff]
    %v769 = vld [vmem:[%s1 + $0x16f8] sm:$0xff]
    %v770 = vld [vmem:[%s1 + $0x1700] sm:$0xff]
    %v771 = vld [vmem:[%s1 + $0x1708] sm:$0xff]
    %v772 = vld [vmem:[%s1 + $0x1710] sm:$0xff]
    %v773 = vld [vmem:[%s1 + $0x1718] sm:$0xff]
    %v774 = vld [vmem:[%s1 + $0x1720] sm:$0xff]
    %v775 = vld [vmem:[%s1 + $0x1728] sm:$0xff]
    %v776 = vld [vmem:[%s1 + $0x1730] sm:$0xff]
    %v777 = vld [vmem:[%s1 + $0x1738] sm:$0xff]
    %v778 = vld [vmem:[%s1 + $0x1740] sm:$0xff]
    %v779 = vld [vmem:[%s1 + $0x1748] sm:$0xff]
    %v780 = vld [vmem:[%s1 + $0x1750] sm:$0xff]
    %v781 = vld [vmem:[%s1 + $0x1758] sm:$0xff]
    %v782 = vld [vmem:[%s1 + $0x1760] sm:$0xff]
    %v783 = vld [vmem:[%s1 + $0x1768] sm:$0xff]
    %v784 = vld [vmem:[%s1 + $0x1770] sm:$0xff]
    %v785 = vld [vmem:[%s1 + $0x1778] sm:$0xff]
    %v786 = vld [vmem:[%s1 + $0x1780] sm:$0xff]
    %v787 = vld [vmem:[%s1 + $0x1788] sm:$0xff]
    %v788 = vld [vmem:[%s1 + $0x1790] sm:$0xff]
    %v789 = vld [vmem:[%s1 + $0x1798] sm:$0xff]
    %v790 = vld [vmem:[%s1 + $0x17a0] sm:$0xff]
    %v791 = vld [vmem:[%s1 + $0x17a8] sm:$0xff]
    %v792 = vld [vmem:[%s1 + $0x17b0] sm:$0xff]
    %v793 = vld [vmem:[%s1 + $0x17b8] sm:$0xff]
    %v794 = vld [vmem:[%s1 + $0x17c0] sm:$0xff]
    %v795 = vld [vmem:[%s1 + $0x17c8] sm:$0xff]
    %v796 = vld [vmem:[%s1 + $0x17d0] sm:$0xff]
    %v797 = vld [vmem:[%s1 + $0x17d8] sm:$0xff]
    %v798 = vld [vmem:[%s1 + $0x17e0] sm:$0xff]
    %v799 = vld [vmem:[%s1 + $0x17e8] sm:$0xff]
    %v800 = vld [vmem:[%s1 + $0x17f0] sm:$0xff]
    %v801 = vld [vmem:[%s1 + $0x17f8] sm:$0xff]
    %v802 = vld [vmem:[%s1 + $0x1800] sm:$0xff]
    %v803 = vld [vmem:[%s1 + $0x1808] sm:$0xff]
    %v804 = vld [vmem:[%s1 + $0x1810] sm:$0xff]
    %v805 = vld [vmem:[%s1 + $0x1818] sm:$0xff]
    %v806 = vld [vmem:[%s1 + $0x1820] sm:$0xff]
    %v807 = vld [vmem:[%s1 + $0x1828] sm:$0xff]
    %v808 = vld [vmem:[%s1 + $0x1830] sm:$0xff]
    %v809 = vld [vmem:[%s1 + $0x1838] sm:$0xff]
    %v810 = vld [vmem:[%s1 + $0x1840] sm:$0xff]
    %v811 = vld [vmem:[%s1 + $0x1848] sm:$0xff]
    %v812 = vld [vmem:[%s1 + $0x1850] sm:$0xff]
    %v813 = vld [vmem:[%s1 + $0x1858] sm:$0xff]
    %v814 = vld [vmem:[%s1 + $0x1860] sm:$0xff]
    %v815 = vld [vmem:[%s1 + $0x1868] sm:$0xff]
    %v816 = vld [vmem:[%s1 + $0x1870] sm:$0xff]
    %v817 = vld [vmem:[%s1 + $0x1878] sm:$0xff]
    %v818 = vld [vmem:[%s1 + $0x1880] sm:$0xff]
    %v819 = vld [vmem:[%s1 + $0x1888] sm:$0xff]
    %v820 = vld [vmem:[%s1 + $0x1890] sm:$0xff]
    %v821 = vld [vmem:[%s1 + $0x1898] sm:$0xff]
    %v822 = vld [vmem:[%s1 + $0x18a0] sm:$0xff]
    %v823 = vld [vmem:[%s1 + $0x18a8] sm:$0xff]
    %v824 = vld [vmem:[%s1 + $0x18b0] sm:$0xff]
    %v825 = vld [vmem:[%s1 + $0x18b8] sm:$0xff]
    %v826 = vld [vmem:[%s1 + $0x18c0] sm:$0xff]
    %v827 = vld [vmem:[%s1 + $0x18c8] sm:$0xff]
    %v828 = vld [vmem:[%s1 + $0x18d0] sm:$0xff]
    %v829 = vld [vmem:[%s1 + $0x18d8] sm:$0xff]
    %v830 = vld [vmem:[%s1 + $0x18e0] sm:$0xff]
    %v831 = vld [vmem:[%s1 + $0x18e8] sm:$0xff]
    %v832 = vld [vmem:[%s1 + $0x18f0] sm:$0xff]
    %v833 = vld [vmem:[%s1 + $0x18f8] sm:$0xff]
    %v834 = vld [vmem:[%s2] sm:$0x1]
    %v836 = vlaneseq
    %v837 = vshrl.u32 %v836, 7
    %v838 = vsub.s32 0, %v837
    %v839 = vrot.slane %v834, %v838
    %v854 = vcombine.high %v21, %v21
    %v856 = vunpack.c.l.s4 1983009808
    %v857 = vunpack.c.0.s8 %v856
    %v858 = vlaneseq
    %v859 = vshrl.u32 %v858, 7
    %v860 = vsub.s32 %v857, %v859
    %v861 = vrot.slane %v21, %v860
    %v863 = vunpack.c.l.s4 1983009808
    %v864 = vunpack.c.0.s8 %v863
    %v865 = vlaneseq
    %v866 = vshrl.u32 %v865, 7
    %v867 = vsub.s32 %v864, %v866
    %v868 = vrot.slane %v854, %v867
    %v869 = vcombine.high %v861, %v861
    %v870 = vcombine.high %v868, %v868
    %v871 = vcombine.high %v22, %v22
    %v873 = vunpack.c.l.s4 1983009808
    %v874 = vunpack.c.0.s8 %v873
    %v875 = vlaneseq
    %v876 = vshrl.u32 %v875, 7
    %v877 = vsub.s32 %v874, %v876
    %v878 = vrot.slane %v22, %v877
    %v880 = vunpack.c.l.s4 1983009808
    %v881 = vunpack.c.0.s8 %v880
    %v882 = vlaneseq
    %v883 = vshrl.u32 %v882, 7
    %v884 = vsub.s32 %v881, %v883
    %v885 = vrot.slane %v871, %v884
    %v886 = vcombine.high %v878, %v878
    %v887 = vcombine.high %v885, %v885
    %v888 = vcombine.high %v23, %v23
    %v890 = vunpack.c.l.s4 1983009808
    %v891 = vunpack.c.0.s8 %v890
    %v892 = vlaneseq
    %v893 = vshrl.u32 %v892, 7
    %v894 = vsub.s32 %v891, %v893
    %v895 = vrot.slane %v23, %v894
    %v897 = vunpack.c.l.s4 1983009808
    %v898 = vunpack.c.0.s8 %v897
    %v899 = vlaneseq
    %v900 = vshrl.u32 %v899, 7
    %v901 = vsub.s32 %v898, %v900
    %v902 = vrot.slane %v888, %v901
    %v903 = vcombine.high %v895, %v895
    %v904 = vcombine.high %v902, %v902
    %v905 = vcombine.high %v24, %v24
    %v907 = vunpack.c.l.s4 1983009808
    %v908 = vunpack.c.0.s8 %v907
    %v909 = vlaneseq
    %v910 = vshrl.u32 %v909, 7
    %v911 = vsub.s32 %v908, %v910
    %v912 = vrot.slane %v24, %v911
    %v914 = vunpack.c.l.s4 1983009808
    %v915 = vunpack.c.0.s8 %v914
    %v916 = vlaneseq
    %v917 = vshrl.u32 %v916, 7
    %v918 = vsub.s32 %v915, %v917
    %v919 = vrot.slane %v905, %v918
    %v920 = vcombine.high %v912, %v912
    %v921 = vcombine.high %v919, %v919
    %v922 = vcombine.high %v25, %v25
    %v924 = vunpack.c.l.s4 1983009808
    %v925 = vunpack.c.0.s8 %v924
    %v926 = vlaneseq
    %v927 = vshrl.u32 %v926, 7
    %v928 = vsub.s32 %v925, %v927
    %v929 = vrot.slane %v25, %v928
    %v931 = vunpack.c.l.s4 1983009808
    %v932 = vunpack.c.0.s8 %v931
    %v933 = vlaneseq
    %v934 = vshrl.u32 %v933, 7
    %v935 = vsub.s32 %v932, %v934
    %v936 = vrot.slane %v922, %v935
    %v937 = vcombine.high %v929, %v929
    %v938 = vcombine.high %v936, %v936
    %v939 = vcombine.high %v26, %v26
    %v941 = vunpack.c.l.s4 1983009808
    %v942 = vunpack.c.0.s8 %v941
    %v943 = vlaneseq
    %v944 = vshrl.u32 %v943, 7
    %v945 = vsub.s32 %v942, %v944
    %v946 = vrot.slane %v26, %v945
    %v948 = vunpack.c.l.s4 1983009808
    %v949 = vunpack.c.0.s8 %v948
    %v950 = vlaneseq
    %v951 = vshrl.u32 %v950, 7
    %v952 = vsub.s32 %v949, %v951
    %v953 = vrot.slane %v939, %v952
    %v954 = vcombine.high %v946, %v946
    %v955 = vcombine.high %v953, %v953
    %v956 = vcombine.high %v27, %v27
    %v958 = vunpack.c.l.s4 1983009808
    %v959 = vunpack.c.0.s8 %v958
    %v960 = vlaneseq
    %v961 = vshrl.u32 %v960, 7
    %v962 = vsub.s32 %v959, %v961
    %v963 = vrot.slane %v27, %v962
    %v965 = vunpack.c.l.s4 1983009808
    %v966 = vunpack.c.0.s8 %v965
    %v967 = vlaneseq
    %v968 = vshrl.u32 %v967, 7
    %v969 = vsub.s32 %v966, %v968
    %v970 = vrot.slane %v956, %v969
    %v971 = vcombine.high %v963, %v963
    %v972 = vcombine.high %v970, %v970
    %v973 = vcombine.high %v28, %v28
    %v975 = vunpack.c.l.s4 1983009808
    %v976 = vunpack.c.0.s8 %v975
    %v977 = vlaneseq
    %v978 = vshrl.u32 %v977, 7
    %v979 = vsub.s32 %v976, %v978
    %v980 = vrot.slane %v28, %v979
    %v982 = vunpack.c.l.s4 1983009808
    %v983 = vunpack.c.0.s8 %v982
    %v984 = vlaneseq
    %v985 = vshrl.u32 %v984, 7
    %v986 = vsub.s32 %v983, %v985
    %v987 = vrot.slane %v973, %v986
    %v988 = vcombine.high %v980, %v980
    %v989 = vcombine.high %v987, %v987
    %v990 = vcombine.high %v29, %v29
    %v992 = vunpack.c.l.s4 1983009808
    %v993 = vunpack.c.0.s8 %v992
    %v994 = vlaneseq
    %v995 = vshrl.u32 %v994, 7
    %v996 = vsub.s32 %v993, %v995
    %v997 = vrot.slane %v29, %v996
    %v999 = vunpack.c.l.s4 1983009808
    %v1000 = vunpack.c.0.s8 %v999
    %v1001 = vlaneseq
    %v1002 = vshrl.u32 %v1001, 7
    %v1003 = vsub.s32 %v1000, %v1002
    %v1004 = vrot.slane %v990, %v1003
    %v1005 = vcombine.high %v997, %v997
    %v1006 = vcombine.high %v1004, %v1004
    %v1007 = vcombine.high %v30, %v30
    %v1009 = vunpack.c.l.s4 1983009808
    %v1010 = vunpack.c.0.s8 %v1009
    %v1011 = vlaneseq
    %v1012 = vshrl.u32 %v1011, 7
    %v1013 = vsub.s32 %v1010, %v1012
    %v1014 = vrot.slane %v30, %v1013
    %v1016 = vunpack.c.l.s4 1983009808
    %v1017 = vunpack.c.0.s8 %v1016
    %v1018 = vlaneseq
    %v1019 = vshrl.u32 %v1018, 7
    %v1020 = vsub.s32 %v1017, %v1019
    %v1021 = vrot.slane %v1007, %v1020
    %v1022 = vcombine.high %v1014, %v1014
    %v1023 = vcombine.high %v1021, %v1021
    %v1024 = vcombine.high %v31, %v31
    %v1026 = vunpack.c.l.s4 1983009808
    %v1027 = vunpack.c.0.s8 %v1026
    %v1028 = vlaneseq
    %v1029 = vshrl.u32 %v1028, 7
    %v1030 = vsub.s32 %v1027, %v1029
    %v1031 = vrot.slane %v31, %v1030
    %v1033 = vunpack.c.l.s4 1983009808
    %v1034 = vunpack.c.0.s8 %v1033
    %v1035 = vlaneseq
    %v1036 = vshrl.u32 %v1035, 7
    %v1037 = vsub.s32 %v1034, %v1036
    %v1038 = vrot.slane %v1024, %v1037
    %v1039 = vcombine.high %v1031, %v1031
    %v1040 = vcombine.high %v1038, %v1038
    %v1041 = vcombine.high %v32, %v32
    %v1043 = vunpack.c.l.s4 1983009808
    %v1044 = vunpack.c.0.s8 %v1043
    %v1045 = vlaneseq
    %v1046 = vshrl.u32 %v1045, 7
    %v1047 = vsub.s32 %v1044, %v1046
    %v1048 = vrot.slane %v32, %v1047
    %v1050 = vunpack.c.l.s4 1983009808
    %v1051 = vunpack.c.0.s8 %v1050
    %v1052 = vlaneseq
    %v1053 = vshrl.u32 %v1052, 7
    %v1054 = vsub.s32 %v1051, %v1053
    %v1055 = vrot.slane %v1041, %v1054
    %v1056 = vcombine.high %v1048, %v1048
    %v1057 = vcombine.high %v1055, %v1055
    %v1059 = vunpack.c.l.s4 1983009808
    %v1060 = vunpack.c.0.s8 %v1059
    %v1061 = vlaneseq
    %v1062 = vshrl.u32 %v1061, 7
    %v1063 = vsub.s32 %v1060, %v1062
    %v1064 = vrot.slane %v33, %v1063
    %v1065 = vcombine.high %v1064, %v1064
    %1116 = vmatprep.subr.mxu0 0.0
    %1117 = vmatpush1.msra.mxu0 %v34
    %1118 = vmatprep.subr.mxu0 0.0
    %1119 = vmatpush1.msra.mxu0 %v35
    %1120 = vmatprep.subr.mxu0 0.0
    %1121 = vmatpush1.msra.mxu0 %v36
    %1122 = vmatprep.subr.mxu0 0.0
    %1123 = vmatpush1.msra.mxu0 %v37
    %1124 = vmatprep.subr.mxu0 0.0
    %1125 = vmatpush1.msra.mxu0 %v38
    %1126 = vmatprep.subr.mxu0 0.0
    %1127 = vmatpush1.msra.mxu0 %v39
    %1128 = vmatprep.subr.mxu0 0.0
    %1129 = vmatpush1.msra.mxu0 %v40
    %1130 = vmatprep.subr.mxu0 0.0
    %1131 = vmatpush1.msra.mxu0 %v41
    %1132 = vmatprep.subr.mxu0 0.0
    %1133 = vmatpush1.msra.mxu0 %v42
    %1134 = vmatprep.subr.mxu0 0.0
    %1135 = vmatpush1.msra.mxu0 %v43
    %1136 = vmatprep.subr.mxu0 0.0
    %1137 = vmatpush1.msra.mxu0 %v44
    %1138 = vmatprep.subr.mxu0 0.0
    %1139 = vmatpush1.msra.mxu0 %v45
    %1140 = vmatprep.subr.mxu0 0.0
    %1141 = vmatpush1.msra.mxu0 %v46
    %1142 = vmatprep.subr.mxu0 0.0
    %1143 = vmatpush1.msra.mxu0 %v47
    %1144 = vmatprep.subr.mxu0 0.0
    %1145 = vmatpush1.msra.mxu0 %v48
    %1146 = vmatprep.subr.mxu0 0.0
    %1147 = vmatpush1.msra.mxu0 %v49
    %1148 = vmatprep.subr.mxu0 0.0
    %1149 = vmatpush1.msra.mxu0 %v50
    %1150 = vmatprep.subr.mxu0 0.0
    %1151 = vmatpush1.msra.mxu0 %v51
    %1152 = vmatprep.subr.mxu0 0.0
    %1153 = vmatpush1.msra.mxu0 %v52
    %1154 = vmatprep.subr.mxu0 0.0
    %1155 = vmatpush1.msra.mxu0 %v53
    %1156 = vmatprep.subr.mxu0 0.0
    %1157 = vmatpush1.msra.mxu0 %v54
    %1158 = vmatprep.subr.mxu0 0.0
    %1159 = vmatpush1.msra.mxu0 %v55
    %1160 = vmatprep.subr.mxu0 0.0
    %1161 = vmatpush1.msra.mxu0 %v56
    %1162 = vmatprep.subr.mxu0 0.0
    %1163 = vmatpush1.msra.mxu0 %v57
    %1164 = vmatprep.subr.mxu0 0.0
    %1165 = vmatpush1.msra.mxu0 %v58
    %1166 = vmatprep.subr.mxu0 0.0
    %1167 = vmatpush1.msra.mxu0 %v59
    %1168 = vmatprep.subr.mxu0 0.0
    %1169 = vmatpush1.msra.mxu0 %v60
    %1170 = vmatprep.subr.mxu0 0.0
    %1171 = vmatpush1.msra.mxu0 %v61
    %1172 = vmatprep.subr.mxu0 0.0
    %1173 = vmatpush1.msra.mxu0 %v62
    %1174 = vmatprep.subr.mxu0 0.0
    %1175 = vmatpush1.msra.mxu0 %v63
    %1176 = vmatprep.subr.mxu0 0.0
    %1177 = vmatpush1.msra.mxu0 %v64
    %1178 = vmatprep.subr.mxu0 0.0
    %1179 = vmatpush1.msra.mxu0 %v65
    %1180 = vmatprep.mubr.f32.mxu0 %v869
    %1181 = vmatmul.mubr.f32.gmra.mrb[0].mxu0 %v861
    %v1182 = vpop.f32.mrb[0].mxu0
    %v1183 = vadd.f32 %v839, %v1182
    %v1184 = vpop.f32.mrb[0].mxu0
    %1185 = vdwg.mxu0
    %1186 = vmatprep.subr.mxu0 0.0
    %1187 = vmatpush1.msra.mxu0 %v66
    %1188 = vmatprep.subr.mxu0 0.0
    %1189 = vmatpush1.msra.mxu0 %v67
    %1190 = vmatprep.subr.mxu0 0.0
    %1191 = vmatpush1.msra.mxu0 %v68
    %1192 = vmatprep.subr.mxu0 0.0
    %1193 = vmatpush1.msra.mxu0 %v69
    %1194 = vmatprep.subr.mxu0 0.0
    %1195 = vmatpush1.msra.mxu0 %v70
    %1196 = vmatprep.subr.mxu0 0.0
    %1197 = vmatpush1.msra.mxu0 %v71
    %1198 = vmatprep.subr.mxu0 0.0
    %1199 = vmatpush1.msra.mxu0 %v72
    %1200 = vmatprep.subr.mxu0 0.0
    %1201 = vmatpush1.msra.mxu0 %v73
    %1202 = vmatprep.subr.mxu0 0.0
    %1203 = vmatpush1.msra.mxu0 %v74
    %1204 = vmatprep.subr.mxu0 0.0
    %1205 = vmatpush1.msra.mxu0 %v75
    %1206 = vmatprep.subr.mxu0 0.0
    %1207 = vmatpush1.msra.mxu0 %v76
    %1208 = vmatprep.subr.mxu0 0.0
    %1209 = vmatpush1.msra.mxu0 %v77
    %1210 = vmatprep.subr.mxu0 0.0
    %1211 = vmatpush1.msra.mxu0 %v78
    %1212 = vmatprep.subr.mxu0 0.0
    %1213 = vmatpush1.msra.mxu0 %v79
    %1214 = vmatprep.subr.mxu0 0.0
    %1215 = vmatpush1.msra.mxu0 %v80
    %1216 = vmatprep.subr.mxu0 0.0
    %1217 = vmatpush1.msra.mxu0 %v81
    %1218 = vmatprep.subr.mxu0 0.0
    %1219 = vmatpush1.msra.mxu0 %v82
    %1220 = vmatprep.subr.mxu0 0.0
    %1221 = vmatpush1.msra.mxu0 %v83
    %1222 = vmatprep.subr.mxu0 0.0
    %1223 = vmatpush1.msra.mxu0 %v84
    %1224 = vmatprep.subr.mxu0 0.0
    %1225 = vmatpush1.msra.mxu0 %v85
    %1226 = vmatprep.subr.mxu0 0.0
    %1227 = vmatpush1.msra.mxu0 %v86
    %1228 = vmatprep.subr.mxu0 0.0
    %1229 = vmatpush1.msra.mxu0 %v87
    %1230 = vmatprep.subr.mxu0 0.0
    %1231 = vmatpush1.msra.mxu0 %v88
    %1232 = vmatprep.subr.mxu0 0.0
    %1233 = vmatpush1.msra.mxu0 %v89
    %1234 = vmatprep.subr.mxu0 0.0
    %1235 = vmatpush1.msra.mxu0 %v90
    %1236 = vmatprep.subr.mxu0 0.0
    %1237 = vmatpush1.msra.mxu0 %v91
    %1238 = vmatprep.subr.mxu0 0.0
    %1239 = vmatpush1.msra.mxu0 %v92
    %1240 = vmatprep.subr.mxu0 0.0
    %1241 = vmatpush1.msra.mxu0 %v93
    %1242 = vmatprep.subr.mxu0 0.0
    %1243 = vmatpush1.msra.mxu0 %v94
    %1244 = vmatprep.subr.mxu0 0.0
    %1245 = vmatpush1.msra.mxu0 %v95
    %1246 = vmatprep.subr.mxu0 0.0
    %1247 = vmatpush1.msra.mxu0 %v96
    %1248 = vmatprep.subr.mxu0 0.0
    %1249 = vmatpush1.msra.mxu0 %v97
    %1250 = vmatprep.mubr.f32.mxu0 %v870
    %1251 = vmatmul.mubr.f32.gmra.mrb[0].mxu0 %v868
    %v1252 = vpop.f32.mrb[0].mxu0
    %v1253 = vadd.f32 %v1183, %v1252
    %v1254 = vpop.f32.mrb[0].mxu0
    %1255 = vdwg.mxu0
    %1256 = vmatprep.subr.mxu0 0.0
    %1257 = vmatpush1.msra.mxu0 %v98
    %1258 = vmatprep.subr.mxu0 0.0
    %1259 = vmatpush1.msra.mxu0 %v99
    %1260 = vmatprep.subr.mxu0 0.0
    %1261 = vmatpush1.msra.mxu0 %v100
    %1262 = vmatprep.subr.mxu0 0.0
    %1263 = vmatpush1.msra.mxu0 %v101
    %1264 = vmatprep.subr.mxu0 0.0
    %1265 = vmatpush1.msra.mxu0 %v102
    %1266 = vmatprep.subr.mxu0 0.0
    %1267 = vmatpush1.msra.mxu0 %v103
    %1268 = vmatprep.subr.mxu0 0.0
    %1269 = vmatpush1.msra.mxu0 %v104
    %1270 = vmatprep.subr.mxu0 0.0
    %1271 = vmatpush1.msra.mxu0 %v105
    %1272 = vmatprep.subr.mxu0 0.0
    %1273 = vmatpush1.msra.mxu0 %v106
    %1274 = vmatprep.subr.mxu0 0.0
    %1275 = vmatpush1.msra.mxu0 %v107
    %1276 = vmatprep.subr.mxu0 0.0
    %1277 = vmatpush1.msra.mxu0 %v108
    %1278 = vmatprep.subr.mxu0 0.0
    %1279 = vmatpush1.msra.mxu0 %v109
    %1280 = vmatprep.subr.mxu0 0.0
    %1281 = vmatpush1.msra.mxu0 %v110
    %1282 = vmatprep.subr.mxu0 0.0
    %1283 = vmatpush1.msra.mxu0 %v111
    %1284 = vmatprep.subr.mxu0 0.0
    %1285 = vmatpush1.msra.mxu0 %v112
    %1286 = vmatprep.subr.mxu0 0.0
    %1287 = vmatpush1.msra.mxu0 %v113
    %1288 = vmatprep.subr.mxu0 0.0
    %1289 = vmatpush1.msra.mxu0 %v114
    %1290 = vmatprep.subr.mxu0 0.0
    %1291 = vmatpush1.msra.mxu0 %v115
    %1292 = vmatprep.subr.mxu0 0.0
    %1293 = vmatpush1.msra.mxu0 %v116
    %1294 = vmatprep.subr.mxu0 0.0
    %1295 = vmatpush1.msra.mxu0 %v117
    %1296 = vmatprep.subr.mxu0 0.0
    %1297 = vmatpush1.msra.mxu0 %v118
    %1298 = vmatprep.subr.mxu0 0.0
    %1299 = vmatpush1.msra.mxu0 %v119
    %1300 = vmatprep.subr.mxu0 0.0
    %1301 = vmatpush1.msra.mxu0 %v120
    %1302 = vmatprep.subr.mxu0 0.0
    %1303 = vmatpush1.msra.mxu0 %v121
    %1304 = vmatprep.subr.mxu0 0.0
    %1305 = vmatpush1.msra.mxu0 %v122
    %1306 = vmatprep.subr.mxu0 0.0
    %1307 = vmatpush1.msra.mxu0 %v123
    %1308 = vmatprep.subr.mxu0 0.0
    %1309 = vmatpush1.msra.mxu0 %v124
    %1310 = vmatprep.subr.mxu0 0.0
    %1311 = vmatpush1.msra.mxu0 %v125
    %1312 = vmatprep.subr.mxu0 0.0
    %1313 = vmatpush1.msra.mxu0 %v126
    %1314 = vmatprep.subr.mxu0 0.0
    %1315 = vmatpush1.msra.mxu0 %v127
    %1316 = vmatprep.subr.mxu0 0.0
    %1317 = vmatpush1.msra.mxu0 %v128
    %1318 = vmatprep.subr.mxu0 0.0
    %1319 = vmatpush1.msra.mxu0 %v129
    %1320 = vmatprep.mubr.f32.mxu0 %v886
    %1321 = vmatmul.mubr.f32.gmra.mrb[0].mxu0 %v878
    %v1322 = vpop.f32.mrb[0].mxu0
    %v1323 = vadd.f32 %v1253, %v1322
    %v1324 = vpop.f32.mrb[0].mxu0
    %1325 = vdwg.mxu0
    %1326 = vmatprep.subr.mxu0 0.0
    %1327 = vmatpush1.msra.mxu0 %v130
    %1328 = vmatprep.subr.mxu0 0.0
    %1329 = vmatpush1.msra.mxu0 %v131
    %1330 = vmatprep.subr.mxu0 0.0
    %1331 = vmatpush1.msra.mxu0 %v132
    %1332 = vmatprep.subr.mxu0 0.0
    %1333 = vmatpush1.msra.mxu0 %v133
    %1334 = vmatprep.subr.mxu0 0.0
    %1335 = vmatpush1.msra.mxu0 %v134
    %1336 = vmatprep.subr.mxu0 0.0
    %1337 = vmatpush1.msra.mxu0 %v135
    %1338 = vmatprep.subr.mxu0 0.0
    %1339 = vmatpush1.msra.mxu0 %v136
    %1340 = vmatprep.subr.mxu0 0.0
    %1341 = vmatpush1.msra.mxu0 %v137
    %1342 = vmatprep.subr.mxu0 0.0
    %1343 = vmatpush1.msra.mxu0 %v138
    %1344 = vmatprep.subr.mxu0 0.0
    %1345 = vmatpush1.msra.mxu0 %v139
    %1346 = vmatprep.subr.mxu0 0.0
    %1347 = vmatpush1.msra.mxu0 %v140
    %1348 = vmatprep.subr.mxu0 0.0
    %1349 = vmatpush1.msra.mxu0 %v141
    %1350 = vmatprep.subr.mxu0 0.0
    %1351 = vmatpush1.msra.mxu0 %v142
    %1352 = vmatprep.subr.mxu0 0.0
    %1353 = vmatpush1.msra.mxu0 %v143
    %1354 = vmatprep.subr.mxu0 0.0
    %1355 = vmatpush1.msra.mxu0 %v144
    %1356 = vmatprep.subr.mxu0 0.0
    %1357 = vmatpush1.msra.mxu0 %v145
    %1358 = vmatprep.subr.mxu0 0.0
    %1359 = vmatpush1.msra.mxu0 %v146
    %1360 = vmatprep.subr.mxu0 0.0
    %1361 = vmatpush1.msra.mxu0 %v147
    %1362 = vmatprep.subr.mxu0 0.0
    %1363 = vmatpush1.msra.mxu0 %v148
    %1364 = vmatprep.subr.mxu0 0.0
    %1365 = vmatpush1.msra.mxu0 %v149
    %1366 = vmatprep.subr.mxu0 0.0
    %1367 = vmatpush1.msra.mxu0 %v150
    %1368 = vmatprep.subr.mxu0 0.0
    %1369 = vmatpush1.msra.mxu0 %v151
    %1370 = vmatprep.subr.mxu0 0.0
    %1371 = vmatpush1.msra.mxu0 %v152
    %1372 = vmatprep.subr.mxu0 0.0
    %1373 = vmatpush1.msra.mxu0 %v153
    %1374 = vmatprep.subr.mxu0 0.0
    %1375 = vmatpush1.msra.mxu0 %v154
    %1376 = vmatprep.subr.mxu0 0.0
    %1377 = vmatpush1.msra.mxu0 %v155
    %1378 = vmatprep.subr.mxu0 0.0
    %1379 = vmatpush1.msra.mxu0 %v156
    %1380 = vmatprep.subr.mxu0 0.0
    %1381 = vmatpush1.msra.mxu0 %v157
    %1382 = vmatprep.subr.mxu0 0.0
    %1383 = vmatpush1.msra.mxu0 %v158
    %1384 = vmatprep.subr.mxu0 0.0
    %1385 = vmatpush1.msra.mxu0 %v159
    %1386 = vmatprep.subr.mxu0 0.0
    %1387 = vmatpush1.msra.mxu0 %v160
    %1388 = vmatprep.subr.mxu0 0.0
    %1389 = vmatpush1.msra.mxu0 %v161
    %1390 = vmatprep.mubr.f32.mxu0 %v887
    %1391 = vmatmul.mubr.f32.gmra.mrb[0].mxu0 %v885
    %v1392 = vpop.f32.mrb[0].mxu0
    %v1393 = vadd.f32 %v1323, %v1392
    %v1394 = vpop.f32.mrb[0].mxu0
    %1395 = vdwg.mxu0
    %1396 = vmatprep.subr.mxu0 0.0
    %1397 = vmatpush1.msra.mxu0 %v162
    %1398 = vmatprep.subr.mxu0 0.0
    %1399 = vmatpush1.msra.mxu0 %v163
    %1400 = vmatprep.subr.mxu0 0.0
    %1401 = vmatpush1.msra.mxu0 %v164
    %1402 = vmatprep.subr.mxu0 0.0
    %1403 = vmatpush1.msra.mxu0 %v165
    %1404 = vmatprep.subr.mxu0 0.0
    %1405 = vmatpush1.msra.mxu0 %v166
    %1406 = vmatprep.subr.mxu0 0.0
    %1407 = vmatpush1.msra.mxu0 %v167
    %1408 = vmatprep.subr.mxu0 0.0
    %1409 = vmatpush1.msra.mxu0 %v168
    %1410 = vmatprep.subr.mxu0 0.0
    %1411 = vmatpush1.msra.mxu0 %v169
    %1412 = vmatprep.subr.mxu0 0.0
    %1413 = vmatpush1.msra.mxu0 %v170
    %1414 = vmatprep.subr.mxu0 0.0
    %1415 = vmatpush1.msra.mxu0 %v171
    %1416 = vmatprep.subr.mxu0 0.0
    %1417 = vmatpush1.msra.mxu0 %v172
    %1418 = vmatprep.subr.mxu0 0.0
    %1419 = vmatpush1.msra.mxu0 %v173
    %1420 = vmatprep.subr.mxu0 0.0
    %1421 = vmatpush1.msra.mxu0 %v174
    %1422 = vmatprep.subr.mxu0 0.0
    %1423 = vmatpush1.msra.mxu0 %v175
    %1424 = vmatprep.subr.mxu0 0.0
    %1425 = vmatpush1.msra.mxu0 %v176
    %1426 = vmatprep.subr.mxu0 0.0
    %1427 = vmatpush1.msra.mxu0 %v177
    %1428 = vmatprep.subr.mxu0 0.0
    %1429 = vmatpush1.msra.mxu0 %v178
    %1430 = vmatprep.subr.mxu0 0.0
    %1431 = vmatpush1.msra.mxu0 %v179
    %1432 = vmatprep.subr.mxu0 0.0
    %1433 = vmatpush1.msra.mxu0 %v180
    %1434 = vmatprep.subr.mxu0 0.0
    %1435 = vmatpush1.msra.mxu0 %v181
    %1436 = vmatprep.subr.mxu0 0.0
    %1437 = vmatpush1.msra.mxu0 %v182
    %1438 = vmatprep.subr.mxu0 0.0
    %1439 = vmatpush1.msra.mxu0 %v183
    %1440 = vmatprep.subr.mxu0 0.0
    %1441 = vmatpush1.msra.mxu0 %v184
    %1442 = vmatprep.subr.mxu0 0.0
    %1443 = vmatpush1.msra.mxu0 %v185
    %1444 = vmatprep.subr.mxu0 0.0
    %1445 = vmatpush1.msra.mxu0 %v186
    %1446 = vmatprep.subr.mxu0 0.0
    %1447 = vmatpush1.msra.mxu0 %v187
    %1448 = vmatprep.subr.mxu0 0.0
    %1449 = vmatpush1.msra.mxu0 %v188
    %1450 = vmatprep.subr.mxu0 0.0
    %1451 = vmatpush1.msra.mxu0 %v189
    %1452 = vmatprep.subr.mxu0 0.0
    %1453 = vmatpush1.msra.mxu0 %v190
    %1454 = vmatprep.subr.mxu0 0.0
    %1455 = vmatpush1.msra.mxu0 %v191
    %1456 = vmatprep.subr.mxu0 0.0
    %1457 = vmatpush1.msra.mxu0 %v192
    %1458 = vmatprep.subr.mxu0 0.0
    %1459 = vmatpush1.msra.mxu0 %v193
    %1460 = vmatprep.mubr.f32.mxu0 %v903
    %1461 = vmatmul.mubr.f32.gmra.mrb[0].mxu0 %v895
    %v1462 = vpop.f32.mrb[0].mxu0
    %v1463 = vadd.f32 %v1393, %v1462
    %v1464 = vpop.f32.mrb[0].mxu0
    %1465 = vdwg.mxu0
    %1466 = vmatprep.subr.mxu0 0.0
    %1467 = vmatpush1.msra.mxu0 %v194
    %1468 = vmatprep.subr.mxu0 0.0
    %1469 = vmatpush1.msra.mxu0 %v195
    %1470 = vmatprep.subr.mxu0 0.0
    %1471 = vmatpush1.msra.mxu0 %v196
    %1472 = vmatprep.subr.mxu0 0.0
    %1473 = vmatpush1.msra.mxu0 %v197
    %1474 = vmatprep.subr.mxu0 0.0
    %1475 = vmatpush1.msra.mxu0 %v198
    %1476 = vmatprep.subr.mxu0 0.0
    %1477 = vmatpush1.msra.mxu0 %v199
    %1478 = vmatprep.subr.mxu0 0.0
    %1479 = vmatpush1.msra.mxu0 %v200
    %1480 = vmatprep.subr.mxu0 0.0
    %1481 = vmatpush1.msra.mxu0 %v201
    %1482 = vmatprep.subr.mxu0 0.0
    %1483 = vmatpush1.msra.mxu0 %v202
    %1484 = vmatprep.subr.mxu0 0.0
    %1485 = vmatpush1.msra.mxu0 %v203
    %1486 = vmatprep.subr.mxu0 0.0
    %1487 = vmatpush1.msra.mxu0 %v204
    %1488 = vmatprep.subr.mxu0 0.0
    %1489 = vmatpush1.msra.mxu0 %v205
    %1490 = vmatprep.subr.mxu0 0.0
    %1491 = vmatpush1.msra.mxu0 %v206
    %1492 = vmatprep.subr.mxu0 0.0
    %1493 = vmatpush1.msra.mxu0 %v207
    %1494 = vmatprep.subr.mxu0 0.0
    %1495 = vmatpush1.msra.mxu0 %v208
    %1496 = vmatprep.subr.mxu0 0.0
    %1497 = vmatpush1.msra.mxu0 %v209
    %1498 = vmatprep.subr.mxu0 0.0
    %1499 = vmatpush1.msra.mxu0 %v210
    %1500 = vmatprep.subr.mxu0 0.0
    %1501 = vmatpush1.msra.mxu0 %v211
    %1502 = vmatprep.subr.mxu0 0.0
    %1503 = vmatpush1.msra.mxu0 %v212
    %1504 = vmatprep.subr.mxu0 0.0
    %1505 = vmatpush1.msra.mxu0 %v213
    %1506 = vmatprep.subr.mxu0 0.0
    %1507 = vmatpush1.msra.mxu0 %v214
    %1508 = vmatprep.subr.mxu0 0.0
    %1509 = vmatpush1.msra.mxu0 %v215
    %1510 = vmatprep.subr.mxu0 0.0
    %1511 = vmatpush1.msra.mxu0 %v216
    %1512 = vmatprep.subr.mxu0 0.0
    %1513 = vmatpush1.msra.mxu0 %v217
    %1514 = vmatprep.subr.mxu0 0.0
    %1515 = vmatpush1.msra.mxu0 %v218
    %1516 = vmatprep.subr.mxu0 0.0
    %1517 = vmatpush1.msra.mxu0 %v219
    %1518 = vmatprep.subr.mxu0 0.0
    %1519 = vmatpush1.msra.mxu0 %v220
    %1520 = vmatprep.subr.mxu0 0.0
    %1521 = vmatpush1.msra.mxu0 %v221
    %1522 = vmatprep.subr.mxu0 0.0
    %1523 = vmatpush1.msra.mxu0 %v222
    %1524 = vmatprep.subr.mxu0 0.0
    %1525 = vmatpush1.msra.mxu0 %v223
    %1526 = vmatprep.subr.mxu0 0.0
    %1527 = vmatpush1.msra.mxu0 %v224
    %1528 = vmatprep.subr.mxu0 0.0
    %1529 = vmatpush1.msra.mxu0 %v225
    %1530 = vmatprep.mubr.f32.mxu0 %v904
    %1531 = vmatmul.mubr.f32.gmra.mrb[0].mxu0 %v902
    %v1532 = vpop.f32.mrb[0].mxu0
    %v1533 = vadd.f32 %v1463, %v1532
    %v1534 = vpop.f32.mrb[0].mxu0
    %1535 = vdwg.mxu0
    %1536 = vmatprep.subr.mxu0 0.0
    %1537 = vmatpush1.msra.mxu0 %v226
    %1538 = vmatprep.subr.mxu0 0.0
    %1539 = vmatpush1.msra.mxu0 %v227
    %1540 = vmatprep.subr.mxu0 0.0
    %1541 = vmatpush1.msra.mxu0 %v228
    %1542 = vmatprep.subr.mxu0 0.0
    %1543 = vmatpush1.msra.mxu0 %v229
    %1544 = vmatprep.subr.mxu0 0.0
    %1545 = vmatpush1.msra.mxu0 %v230
    %1546 = vmatprep.subr.mxu0 0.0
    %1547 = vmatpush1.msra.mxu0 %v231
    %1548 = vmatprep.subr.mxu0 0.0
    %1549 = vmatpush1.msra.mxu0 %v232
    %1550 = vmatprep.subr.mxu0 0.0
    %1551 = vmatpush1.msra.mxu0 %v233
    %1552 = vmatprep.subr.mxu0 0.0
    %1553 = vmatpush1.msra.mxu0 %v234
    %1554 = vmatprep.subr.mxu0 0.0
    %1555 = vmatpush1.msra.mxu0 %v235
    %1556 = vmatprep.subr.mxu0 0.0
    %1557 = vmatpush1.msra.mxu0 %v236
    %1558 = vmatprep.subr.mxu0 0.0
    %1559 = vmatpush1.msra.mxu0 %v237
    %1560 = vmatprep.subr.mxu0 0.0
    %1561 = vmatpush1.msra.mxu0 %v238
    %1562 = vmatprep.subr.mxu0 0.0
    %1563 = vmatpush1.msra.mxu0 %v239
    %1564 = vmatprep.subr.mxu0 0.0
    %1565 = vmatpush1.msra.mxu0 %v240
    %1566 = vmatprep.subr.mxu0 0.0
    %1567 = vmatpush1.msra.mxu0 %v241
    %1568 = vmatprep.subr.mxu0 0.0
    %1569 = vmatpush1.msra.mxu0 %v242
    %1570 = vmatprep.subr.mxu0 0.0
    %1571 = vmatpush1.msra.mxu0 %v243
    %1572 = vmatprep.subr.mxu0 0.0
    %1573 = vmatpush1.msra.mxu0 %v244
    %1574 = vmatprep.subr.mxu0 0.0
    %1575 = vmatpush1.msra.mxu0 %v245
    %1576 = vmatprep.subr.mxu0 0.0
    %1577 = vmatpush1.msra.mxu0 %v246
    %1578 = vmatprep.subr.mxu0 0.0
    %1579 = vmatpush1.msra.mxu0 %v247
    %1580 = vmatprep.subr.mxu0 0.0
    %1581 = vmatpush1.msra.mxu0 %v248
    %1582 = vmatprep.subr.mxu0 0.0
    %1583 = vmatpush1.msra.mxu0 %v249
    %1584 = vmatprep.subr.mxu0 0.0
    %1585 = vmatpush1.msra.mxu0 %v250
    %1586 = vmatprep.subr.mxu0 0.0
    %1587 = vmatpush1.msra.mxu0 %v251
    %1588 = vmatprep.subr.mxu0 0.0
    %1589 = vmatpush1.msra.mxu0 %v252
    %1590 = vmatprep.subr.mxu0 0.0
    %1591 = vmatpush1.msra.mxu0 %v253
    %1592 = vmatprep.subr.mxu0 0.0
    %1593 = vmatpush1.msra.mxu0 %v254
    %1594 = vmatprep.subr.mxu0 0.0
    %1595 = vmatpush1.msra.mxu0 %v255
    %1596 = vmatprep.subr.mxu0 0.0
    %1597 = vmatpush1.msra.mxu0 %v256
    %1598 = vmatprep.subr.mxu0 0.0
    %1599 = vmatpush1.msra.mxu0 %v257
    %1600 = vmatprep.mubr.f32.mxu0 %v920
    %1601 = vmatmul.mubr.f32.gmra.mrb[0].mxu0 %v912
    %v1602 = vpop.f32.mrb[0].mxu0
    %v1603 = vadd.f32 %v1533, %v1602
    %v1604 = vpop.f32.mrb[0].mxu0
    %1605 = vdwg.mxu0
    %1606 = vmatprep.subr.mxu0 0.0
    %1607 = vmatpush1.msra.mxu0 %v258
    %1608 = vmatprep.subr.mxu0 0.0
    %1609 = vmatpush1.msra.mxu0 %v259
    %1610 = vmatprep.subr.mxu0 0.0
    %1611 = vmatpush1.msra.mxu0 %v260
    %1612 = vmatprep.subr.mxu0 0.0
    %1613 = vmatpush1.msra.mxu0 %v261
    %1614 = vmatprep.subr.mxu0 0.0
    %1615 = vmatpush1.msra.mxu0 %v262
    %1616 = vmatprep.subr.mxu0 0.0
    %1617 = vmatpush1.msra.mxu0 %v263
    %1618 = vmatprep.subr.mxu0 0.0
    %1619 = vmatpush1.msra.mxu0 %v264
    %1620 = vmatprep.subr.mxu0 0.0
    %1621 = vmatpush1.msra.mxu0 %v265
    %1622 = vmatprep.subr.mxu0 0.0
    %1623 = vmatpush1.msra.mxu0 %v266
    %1624 = vmatprep.subr.mxu0 0.0
    %1625 = vmatpush1.msra.mxu0 %v267
    %1626 = vmatprep.subr.mxu0 0.0
    %1627 = vmatpush1.msra.mxu0 %v268
    %1628 = vmatprep.subr.mxu0 0.0
    %1629 = vmatpush1.msra.mxu0 %v269
    %1630 = vmatprep.subr.mxu0 0.0
    %1631 = vmatpush1.msra.mxu0 %v270
    %1632 = vmatprep.subr.mxu0 0.0
    %1633 = vmatpush1.msra.mxu0 %v271
    %1634 = vmatprep.subr.mxu0 0.0
    %1635 = vmatpush1.msra.mxu0 %v272
    %1636 = vmatprep.subr.mxu0 0.0
    %1637 = vmatpush1.msra.mxu0 %v273
    %1638 = vmatprep.subr.mxu0 0.0
    %1639 = vmatpush1.msra.mxu0 %v274
    %1640 = vmatprep.subr.mxu0 0.0
    %1641 = vmatpush1.msra.mxu0 %v275
    %1642 = vmatprep.subr.mxu0 0.0
    %1643 = vmatpush1.msra.mxu0 %v276
    %1644 = vmatprep.subr.mxu0 0.0
    %1645 = vmatpush1.msra.mxu0 %v277
    %1646 = vmatprep.subr.mxu0 0.0
    %1647 = vmatpush1.msra.mxu0 %v278
    %1648 = vmatprep.subr.mxu0 0.0
    %1649 = vmatpush1.msra.mxu0 %v279
    %1650 = vmatprep.subr.mxu0 0.0
    %1651 = vmatpush1.msra.mxu0 %v280
    %1652 = vmatprep.subr.mxu0 0.0
    %1653 = vmatpush1.msra.mxu0 %v281
    %1654 = vmatprep.subr.mxu0 0.0
    %1655 = vmatpush1.msra.mxu0 %v282
    %1656 = vmatprep.subr.mxu0 0.0
    %1657 = vmatpush1.msra.mxu0 %v283
    %1658 = vmatprep.subr.mxu0 0.0
    %1659 = vmatpush1.msra.mxu0 %v284
    %1660 = vmatprep.subr.mxu0 0.0
    %1661 = vmatpush1.msra.mxu0 %v285
    %1662 = vmatprep.subr.mxu0 0.0
    %1663 = vmatpush1.msra.mxu0 %v286
    %1664 = vmatprep.subr.mxu0 0.0
    %1665 = vmatpush1.msra.mxu0 %v287
    %1666 = vmatprep.subr.mxu0 0.0
    %1667 = vmatpush1.msra.mxu0 %v288
    %1668 = vmatprep.subr.mxu0 0.0
    %1669 = vmatpush1.msra.mxu0 %v289
    %1670 = vmatprep.mubr.f32.mxu0 %v921
    %1671 = vmatmul.mubr.f32.gmra.mrb[0].mxu0 %v919
    %v1672 = vpop.f32.mrb[0].mxu0
    %v1673 = vadd.f32 %v1603, %v1672
    %v1674 = vpop.f32.mrb[0].mxu0
    %1675 = vdwg.mxu0
    %1676 = vmatprep.subr.mxu0 0.0
    %1677 = vmatpush1.msra.mxu0 %v290
    %1678 = vmatprep.subr.mxu0 0.0
    %1679 = vmatpush1.msra.mxu0 %v291
    %1680 = vmatprep.subr.mxu0 0.0
    %1681 = vmatpush1.msra.mxu0 %v292
    %1682 = vmatprep.subr.mxu0 0.0
    %1683 = vmatpush1.msra.mxu0 %v293
    %1684 = vmatprep.subr.mxu0 0.0
    %1685 = vmatpush1.msra.mxu0 %v294
    %1686 = vmatprep.subr.mxu0 0.0
    %1687 = vmatpush1.msra.mxu0 %v295
    %1688 = vmatprep.subr.mxu0 0.0
    %1689 = vmatpush1.msra.mxu0 %v296
    %1690 = vmatprep.subr.mxu0 0.0
    %1691 = vmatpush1.msra.mxu0 %v297
    %1692 = vmatprep.subr.mxu0 0.0
    %1693 = vmatpush1.msra.mxu0 %v298
    %1694 = vmatprep.subr.mxu0 0.0
    %1695 = vmatpush1.msra.mxu0 %v299
    %1696 = vmatprep.subr.mxu0 0.0
    %1697 = vmatpush1.msra.mxu0 %v300
    %1698 = vmatprep.subr.mxu0 0.0
    %1699 = vmatpush1.msra.mxu0 %v301
    %1700 = vmatprep.subr.mxu0 0.0
    %1701 = vmatpush1.msra.mxu0 %v302
    %1702 = vmatprep.subr.mxu0 0.0
    %1703 = vmatpush1.msra.mxu0 %v303
    %1704 = vmatprep.subr.mxu0 0.0
    %1705 = vmatpush1.msra.mxu0 %v304
    %1706 = vmatprep.subr.mxu0 0.0
    %1707 = vmatpush1.msra.mxu0 %v305
    %1708 = vmatprep.subr.mxu0 0.0
    %1709 = vmatpush1.msra.mxu0 %v306
    %1710 = vmatprep.subr.mxu0 0.0
    %1711 = vmatpush1.msra.mxu0 %v307
    %1712 = vmatprep.subr.mxu0 0.0
    %1713 = vmatpush1.msra.mxu0 %v308
    %1714 = vmatprep.subr.mxu0 0.0
    %1715 = vmatpush1.msra.mxu0 %v309
    %1716 = vmatprep.subr.mxu0 0.0
    %1717 = vmatpush1.msra.mxu0 %v310
    %1718 = vmatprep.subr.mxu0 0.0
    %1719 = vmatpush1.msra.mxu0 %v311
    %1720 = vmatprep.subr.mxu0 0.0
    %1721 = vmatpush1.msra.mxu0 %v312
    %1722 = vmatprep.subr.mxu0 0.0
    %1723 = vmatpush1.msra.mxu0 %v313
    %1724 = vmatprep.subr.mxu0 0.0
    %1725 = vmatpush1.msra.mxu0 %v314
    %1726 = vmatprep.subr.mxu0 0.0
    %1727 = vmatpush1.msra.mxu0 %v315
    %1728 = vmatprep.subr.mxu0 0.0
    %1729 = vmatpush1.msra.mxu0 %v316
    %1730 = vmatprep.subr.mxu0 0.0
    %1731 = vmatpush1.msra.mxu0 %v317
    %1732 = vmatprep.subr.mxu0 0.0
    %1733 = vmatpush1.msra.mxu0 %v318
    %1734 = vmatprep.subr.mxu0 0.0
    %1735 = vmatpush1.msra.mxu0 %v319
    %1736 = vmatprep.subr.mxu0 0.0
    %1737 = vmatpush1.msra.mxu0 %v320
    %1738 = vmatprep.subr.mxu0 0.0
    %1739 = vmatpush1.msra.mxu0 %v321
    %1740 = vmatprep.mubr.f32.mxu0 %v937
    %1741 = vmatmul.mubr.f32.gmra.mrb[0].mxu0 %v929
    %v1742 = vpop.f32.mrb[0].mxu0
    %v1743 = vadd.f32 %v1673, %v1742
    %v1744 = vpop.f32.mrb[0].mxu0
    %1745 = vdwg.mxu0
    %1746 = vmatprep.subr.mxu0 0.0
    %1747 = vmatpush1.msra.mxu0 %v322
    %1748 = vmatprep.subr.mxu0 0.0
    %1749 = vmatpush1.msra.mxu0 %v323
    %1750 = vmatprep.subr.mxu0 0.0
    %1751 = vmatpush1.msra.mxu0 %v324
    %1752 = vmatprep.subr.mxu0 0.0
    %1753 = vmatpush1.msra.mxu0 %v325
    %1754 = vmatprep.subr.mxu0 0.0
    %1755 = vmatpush1.msra.mxu0 %v326
    %1756 = vmatprep.subr.mxu0 0.0
    %1757 = vmatpush1.msra.mxu0 %v327
    %1758 = vmatprep.subr.mxu0 0.0
    %1759 = vmatpush1.msra.mxu0 %v328
    %1760 = vmatprep.subr.mxu0 0.0
    %1761 = vmatpush1.msra.mxu0 %v329
    %1762 = vmatprep.subr.mxu0 0.0
    %1763 = vmatpush1.msra.mxu0 %v330
    %1764 = vmatprep.subr.mxu0 0.0
    %1765 = vmatpush1.msra.mxu0 %v331
    %1766 = vmatprep.subr.mxu0 0.0
    %1767 = vmatpush1.msra.mxu0 %v332
    %1768 = vmatprep.subr.mxu0 0.0
    %1769 = vmatpush1.msra.mxu0 %v333
    %1770 = vmatprep.subr.mxu0 0.0
    %1771 = vmatpush1.msra.mxu0 %v334
    %1772 = vmatprep.subr.mxu0 0.0
    %1773 = vmatpush1.msra.mxu0 %v335
    %1774 = vmatprep.subr.mxu0 0.0
    %1775 = vmatpush1.msra.mxu0 %v336
    %1776 = vmatprep.subr.mxu0 0.0
    %1777 = vmatpush1.msra.mxu0 %v337
    %1778 = vmatprep.subr.mxu0 0.0
    %1779 = vmatpush1.msra.mxu0 %v338
    %1780 = vmatprep.subr.mxu0 0.0
    %1781 = vmatpush1.msra.mxu0 %v339
    %1782 = vmatprep.subr.mxu0 0.0
    %1783 = vmatpush1.msra.mxu0 %v340
    %1784 = vmatprep.subr.mxu0 0.0
    %1785 = vmatpush1.msra.mxu0 %v341
    %1786 = vmatprep.subr.mxu0 0.0
    %1787 = vmatpush1.msra.mxu0 %v342
    %1788 = vmatprep.subr.mxu0 0.0
    %1789 = vmatpush1.msra.mxu0 %v343
    %1790 = vmatprep.subr.mxu0 0.0
    %1791 = vmatpush1.msra.mxu0 %v344
    %1792 = vmatprep.subr.mxu0 0.0
    %1793 = vmatpush1.msra.mxu0 %v345
    %1794 = vmatprep.subr.mxu0 0.0
    %1795 = vmatpush1.msra.mxu0 %v346
    %1796 = vmatprep.subr.mxu0 0.0
    %1797 = vmatpush1.msra.mxu0 %v347
    %1798 = vmatprep.subr.mxu0 0.0
    %1799 = vmatpush1.msra.mxu0 %v348
    %1800 = vmatprep.subr.mxu0 0.0
    %1801 = vmatpush1.msra.mxu0 %v349
    %1802 = vmatprep.subr.mxu0 0.0
    %1803 = vmatpush1.msra.mxu0 %v350
    %1804 = vmatprep.subr.mxu0 0.0
    %1805 = vmatpush1.msra.mxu0 %v351
    %1806 = vmatprep.subr.mxu0 0.0
    %1807 = vmatpush1.msra.mxu0 %v352
    %1808 = vmatprep.subr.mxu0 0.0
    %1809 = vmatpush1.msra.mxu0 %v353
    %1810 = vmatprep.mubr.f32.mxu0 %v938
    %1811 = vmatmul.mubr.f32.gmra.mrb[0].mxu0 %v936
    %v1812 = vpop.f32.mrb[0].mxu0
    %v1813 = vadd.f32 %v1743, %v1812
    %v1814 = vpop.f32.mrb[0].mxu0
    %1815 = vdwg.mxu0
    %1816 = vmatprep.subr.mxu0 0.0
    %1817 = vmatpush1.msra.mxu0 %v354
    %1818 = vmatprep.subr.mxu0 0.0
    %1819 = vmatpush1.msra.mxu0 %v355
    %1820 = vmatprep.subr.mxu0 0.0
    %1821 = vmatpush1.msra.mxu0 %v356
    %1822 = vmatprep.subr.mxu0 0.0
    %1823 = vmatpush1.msra.mxu0 %v357
    %1824 = vmatprep.subr.mxu0 0.0
    %1825 = vmatpush1.msra.mxu0 %v358
    %1826 = vmatprep.subr.mxu0 0.0
    %1827 = vmatpush1.msra.mxu0 %v359
    %1828 = vmatprep.subr.mxu0 0.0
    %1829 = vmatpush1.msra.mxu0 %v360
    %1830 = vmatprep.subr.mxu0 0.0
    %1831 = vmatpush1.msra.mxu0 %v361
    %1832 = vmatprep.subr.mxu0 0.0
    %1833 = vmatpush1.msra.mxu0 %v362
    %1834 = vmatprep.subr.mxu0 0.0
    %1835 = vmatpush1.msra.mxu0 %v363
    %1836 = vmatprep.subr.mxu0 0.0
    %1837 = vmatpush1.msra.mxu0 %v364
    %1838 = vmatprep.subr.mxu0 0.0
    %1839 = vmatpush1.msra.mxu0 %v365
    %1840 = vmatprep.subr.mxu0 0.0
    %1841 = vmatpush1.msra.mxu0 %v366
    %1842 = vmatprep.subr.mxu0 0.0
    %1843 = vmatpush1.msra.mxu0 %v367
    %1844 = vmatprep.subr.mxu0 0.0
    %1845 = vmatpush1.msra.mxu0 %v368
    %1846 = vmatprep.subr.mxu0 0.0
    %1847 = vmatpush1.msra.mxu0 %v369
    %1848 = vmatprep.subr.mxu0 0.0
    %1849 = vmatpush1.msra.mxu0 %v370
    %1850 = vmatprep.subr.mxu0 0.0
    %1851 = vmatpush1.msra.mxu0 %v371
    %1852 = vmatprep.subr.mxu0 0.0
    %1853 = vmatpush1.msra.mxu0 %v372
    %1854 = vmatprep.subr.mxu0 0.0
    %1855 = vmatpush1.msra.mxu0 %v373
    %1856 = vmatprep.subr.mxu0 0.0
    %1857 = vmatpush1.msra.mxu0 %v374
    %1858 = vmatprep.subr.mxu0 0.0
    %1859 = vmatpush1.msra.mxu0 %v375
    %1860 = vmatprep.subr.mxu0 0.0
    %1861 = vmatpush1.msra.mxu0 %v376
    %1862 = vmatprep.subr.mxu0 0.0
    %1863 = vmatpush1.msra.mxu0 %v377
    %1864 = vmatprep.subr.mxu0 0.0
    %1865 = vmatpush1.msra.mxu0 %v378
    %1866 = vmatprep.subr.mxu0 0.0
    %1867 = vmatpush1.msra.mxu0 %v379
    %1868 = vmatprep.subr.mxu0 0.0
    %1869 = vmatpush1.msra.mxu0 %v380
    %1870 = vmatprep.subr.mxu0 0.0
    %1871 = vmatpush1.msra.mxu0 %v381
    %1872 = vmatprep.subr.mxu0 0.0
    %1873 = vmatpush1.msra.mxu0 %v382
    %1874 = vmatprep.subr.mxu0 0.0
    %1875 = vmatpush1.msra.mxu0 %v383
    %1876 = vmatprep.subr.mxu0 0.0
    %1877 = vmatpush1.msra.mxu0 %v384
    %1878 = vmatprep.subr.mxu0 0.0
    %1879 = vmatpush1.msra.mxu0 %v385
    %1880 = vmatprep.mubr.f32.mxu0 %v954
    %1881 = vmatmul.mubr.f32.gmra.mrb[0].mxu0 %v946
    %v1882 = vpop.f32.mrb[0].mxu0
    %v1883 = vadd.f32 %v1813, %v1882
    %v1884 = vpop.f32.mrb[0].mxu0
    %1885 = vdwg.mxu0
    %1886 = vmatprep.subr.mxu0 0.0
    %1887 = vmatpush1.msra.mxu0 %v386
    %1888 = vmatprep.subr.mxu0 0.0
    %1889 = vmatpush1.msra.mxu0 %v387
    %1890 = vmatprep.subr.mxu0 0.0
    %1891 = vmatpush1.msra.mxu0 %v388
    %1892 = vmatprep.subr.mxu0 0.0
    %1893 = vmatpush1.msra.mxu0 %v389
    %1894 = vmatprep.subr.mxu0 0.0
    %1895 = vmatpush1.msra.mxu0 %v390
    %1896 = vmatprep.subr.mxu0 0.0
    %1897 = vmatpush1.msra.mxu0 %v391
    %1898 = vmatprep.subr.mxu0 0.0
    %1899 = vmatpush1.msra.mxu0 %v392
    %1900 = vmatprep.subr.mxu0 0.0
    %1901 = vmatpush1.msra.mxu0 %v393
    %1902 = vmatprep.subr.mxu0 0.0
    %1903 = vmatpush1.msra.mxu0 %v394
    %1904 = vmatprep.subr.mxu0 0.0
    %1905 = vmatpush1.msra.mxu0 %v395
    %1906 = vmatprep.subr.mxu0 0.0
    %1907 = vmatpush1.msra.mxu0 %v396
    %1908 = vmatprep.subr.mxu0 0.0
    %1909 = vmatpush1.msra.mxu0 %v397
    %1910 = vmatprep.subr.mxu0 0.0
    %1911 = vmatpush1.msra.mxu0 %v398
    %1912 = vmatprep.subr.mxu0 0.0
    %1913 = vmatpush1.msra.mxu0 %v399
    %1914 = vmatprep.subr.mxu0 0.0
    %1915 = vmatpush1.msra.mxu0 %v400
    %1916 = vmatprep.subr.mxu0 0.0
    %1917 = vmatpush1.msra.mxu0 %v401
    %1918 = vmatprep.subr.mxu0 0.0
    %1919 = vmatpush1.msra.mxu0 %v402
    %1920 = vmatprep.subr.mxu0 0.0
    %1921 = vmatpush1.msra.mxu0 %v403
    %1922 = vmatprep.subr.mxu0 0.0
    %1923 = vmatpush1.msra.mxu0 %v404
    %1924 = vmatprep.subr.mxu0 0.0
    %1925 = vmatpush1.msra.mxu0 %v405
    %1926 = vmatprep.subr.mxu0 0.0
    %1927 = vmatpush1.msra.mxu0 %v406
    %1928 = vmatprep.subr.mxu0 0.0
    %1929 = vmatpush1.msra.mxu0 %v407
    %1930 = vmatprep.subr.mxu0 0.0
    %1931 = vmatpush1.msra.mxu0 %v408
    %1932 = vmatprep.subr.mxu0 0.0
    %1933 = vmatpush1.msra.mxu0 %v409
    %1934 = vmatprep.subr.mxu0 0.0
    %1935 = vmatpush1.msra.mxu0 %v410
    %1936 = vmatprep.subr.mxu0 0.0
    %1937 = vmatpush1.msra.mxu0 %v411
    %1938 = vmatprep.subr.mxu0 0.0
    %1939 = vmatpush1.msra.mxu0 %v412
    %1940 = vmatprep.subr.mxu0 0.0
    %1941 = vmatpush1.msra.mxu0 %v413
    %1942 = vmatprep.subr.mxu0 0.0
    %1943 = vmatpush1.msra.mxu0 %v414
    %1944 = vmatprep.subr.mxu0 0.0
    %1945 = vmatpush1.msra.mxu0 %v415
    %1946 = vmatprep.subr.mxu0 0.0
    %1947 = vmatpush1.msra.mxu0 %v416
    %1948 = vmatprep.subr.mxu0 0.0
    %1949 = vmatpush1.msra.mxu0 %v417
    %1950 = vmatprep.mubr.f32.mxu0 %v955
    %1951 = vmatmul.mubr.f32.gmra.mrb[0].mxu0 %v953
    %v1952 = vpop.f32.mrb[0].mxu0
    %v1953 = vadd.f32 %v1883, %v1952
    %v1954 = vpop.f32.mrb[0].mxu0
    %1955 = vdwg.mxu0
    %1956 = vmatprep.subr.mxu0 0.0
    %1957 = vmatpush1.msra.mxu0 %v418
    %1958 = vmatprep.subr.mxu0 0.0
    %1959 = vmatpush1.msra.mxu0 %v419
    %1960 = vmatprep.subr.mxu0 0.0
    %1961 = vmatpush1.msra.mxu0 %v420
    %1962 = vmatprep.subr.mxu0 0.0
    %1963 = vmatpush1.msra.mxu0 %v421
    %1964 = vmatprep.subr.mxu0 0.0
    %1965 = vmatpush1.msra.mxu0 %v422
    %1966 = vmatprep.subr.mxu0 0.0
    %1967 = vmatpush1.msra.mxu0 %v423
    %1968 = vmatprep.subr.mxu0 0.0
    %1969 = vmatpush1.msra.mxu0 %v424
    %1970 = vmatprep.subr.mxu0 0.0
    %1971 = vmatpush1.msra.mxu0 %v425
    %1972 = vmatprep.subr.mxu0 0.0
    %1973 = vmatpush1.msra.mxu0 %v426
    %1974 = vmatprep.subr.mxu0 0.0
    %1975 = vmatpush1.msra.mxu0 %v427
    %1976 = vmatprep.subr.mxu0 0.0
    %1977 = vmatpush1.msra.mxu0 %v428
    %1978 = vmatprep.subr.mxu0 0.0
    %1979 = vmatpush1.msra.mxu0 %v429
    %1980 = vmatprep.subr.mxu0 0.0
    %1981 = vmatpush1.msra.mxu0 %v430
    %1982 = vmatprep.subr.mxu0 0.0
    %1983 = vmatpush1.msra.mxu0 %v431
    %1984 = vmatprep.subr.mxu0 0.0
    %1985 = vmatpush1.msra.mxu0 %v432
    %1986 = vmatprep.subr.mxu0 0.0
    %1987 = vmatpush1.msra.mxu0 %v433
    %1988 = vmatprep.subr.mxu0 0.0
    %1989 = vmatpush1.msra.mxu0 %v434
    %1990 = vmatprep.subr.mxu0 0.0
    %1991 = vmatpush1.msra.mxu0 %v435
    %1992 = vmatprep.subr.mxu0 0.0
    %1993 = vmatpush1.msra.mxu0 %v436
    %1994 = vmatprep.subr.mxu0 0.0
    %1995 = vmatpush1.msra.mxu0 %v437
    %1996 = vmatprep.subr.mxu0 0.0
    %1997 = vmatpush1.msra.mxu0 %v438
    %1998 = vmatprep.subr.mxu0 0.0
    %1999 = vmatpush1.msra.mxu0 %v439
    %2000 = vmatprep.subr.mxu0 0.0
    %2001 = vmatpush1.msra.mxu0 %v440
    %2002 = vmatprep.subr.mxu0 0.0
    %2003 = vmatpush1.msra.mxu0 %v441
    %2004 = vmatprep.subr.mxu0 0.0
    %2005 = vmatpush1.msra.mxu0 %v442
    %2006 = vmatprep.subr.mxu0 0.0
    %2007 = vmatpush1.msra.mxu0 %v443
    %2008 = vmatprep.subr.mxu0 0.0
    %2009 = vmatpush1.msra.mxu0 %v444
    %2010 = vmatprep.subr.mxu0 0.0
    %2011 = vmatpush1.msra.mxu0 %v445
    %2012 = vmatprep.subr.mxu0 0.0
    %2013 = vmatpush1.msra.mxu0 %v446
    %2014 = vmatprep.subr.mxu0 0.0
    %2015 = vmatpush1.msra.mxu0 %v447
    %2016 = vmatprep.subr.mxu0 0.0
    %2017 = vmatpush1.msra.mxu0 %v448
    %2018 = vmatprep.subr.mxu0 0.0
    %2019 = vmatpush1.msra.mxu0 %v449
    %2020 = vmatprep.mubr.f32.mxu0 %v971
    %2021 = vmatmul.mubr.f32.gmra.mrb[0].mxu0 %v963
    %v2022 = vpop.f32.mrb[0].mxu0
    %v2023 = vadd.f32 %v1953, %v2022
    %v2024 = vpop.f32.mrb[0].mxu0
    %2025 = vdwg.mxu0
    %2026 = vmatprep.subr.mxu0 0.0
    %2027 = vmatpush1.msra.mxu0 %v450
    %2028 = vmatprep.subr.mxu0 0.0
    %2029 = vmatpush1.msra.mxu0 %v451
    %2030 = vmatprep.subr.mxu0 0.0
    %2031 = vmatpush1.msra.mxu0 %v452
    %2032 = vmatprep.subr.mxu0 0.0
    %2033 = vmatpush1.msra.mxu0 %v453
    %2034 = vmatprep.subr.mxu0 0.0
    %2035 = vmatpush1.msra.mxu0 %v454
    %2036 = vmatprep.subr.mxu0 0.0
    %2037 = vmatpush1.msra.mxu0 %v455
    %2038 = vmatprep.subr.mxu0 0.0
    %2039 = vmatpush1.msra.mxu0 %v456
    %2040 = vmatprep.subr.mxu0 0.0
    %2041 = vmatpush1.msra.mxu0 %v457
    %2042 = vmatprep.subr.mxu0 0.0
    %2043 = vmatpush1.msra.mxu0 %v458
    %2044 = vmatprep.subr.mxu0 0.0
    %2045 = vmatpush1.msra.mxu0 %v459
    %2046 = vmatprep.subr.mxu0 0.0
    %2047 = vmatpush1.msra.mxu0 %v460
    %2048 = vmatprep.subr.mxu0 0.0
    %2049 = vmatpush1.msra.mxu0 %v461
    %2050 = vmatprep.subr.mxu0 0.0
    %2051 = vmatpush1.msra.mxu0 %v462
    %2052 = vmatprep.subr.mxu0 0.0
    %2053 = vmatpush1.msra.mxu0 %v463
    %2054 = vmatprep.subr.mxu0 0.0
    %2055 = vmatpush1.msra.mxu0 %v464
    %2056 = vmatprep.subr.mxu0 0.0
    %2057 = vmatpush1.msra.mxu0 %v465
    %2058 = vmatprep.subr.mxu0 0.0
    %2059 = vmatpush1.msra.mxu0 %v466
    %2060 = vmatprep.subr.mxu0 0.0
    %2061 = vmatpush1.msra.mxu0 %v467
    %2062 = vmatprep.subr.mxu0 0.0
    %2063 = vmatpush1.msra.mxu0 %v468
    %2064 = vmatprep.subr.mxu0 0.0
    %2065 = vmatpush1.msra.mxu0 %v469
    %2066 = vmatprep.subr.mxu0 0.0
    %2067 = vmatpush1.msra.mxu0 %v470
    %2068 = vmatprep.subr.mxu0 0.0
    %2069 = vmatpush1.msra.mxu0 %v471
    %2070 = vmatprep.subr.mxu0 0.0
    %2071 = vmatpush1.msra.mxu0 %v472
    %2072 = vmatprep.subr.mxu0 0.0
    %2073 = vmatpush1.msra.mxu0 %v473
    %2074 = vmatprep.subr.mxu0 0.0
    %2075 = vmatpush1.msra.mxu0 %v474
    %2076 = vmatprep.subr.mxu0 0.0
    %2077 = vmatpush1.msra.mxu0 %v475
    %2078 = vmatprep.subr.mxu0 0.0
    %2079 = vmatpush1.msra.mxu0 %v476
    %2080 = vmatprep.subr.mxu0 0.0
    %2081 = vmatpush1.msra.mxu0 %v477
    %2082 = vmatprep.subr.mxu0 0.0
    %2083 = vmatpush1.msra.mxu0 %v478
    %2084 = vmatprep.subr.mxu0 0.0
    %2085 = vmatpush1.msra.mxu0 %v479
    %2086 = vmatprep.subr.mxu0 0.0
    %2087 = vmatpush1.msra.mxu0 %v480
    %2088 = vmatprep.subr.mxu0 0.0
    %2089 = vmatpush1.msra.mxu0 %v481
    %2090 = vmatprep.mubr.f32.mxu0 %v972
    %2091 = vmatmul.mubr.f32.gmra.mrb[0].mxu0 %v970
    %v2092 = vpop.f32.mrb[0].mxu0
    %v2093 = vadd.f32 %v2023, %v2092
    %v2094 = vpop.f32.mrb[0].mxu0
    %2095 = vdwg.mxu0
    %2096 = vmatprep.subr.mxu0 0.0
    %2097 = vmatpush1.msra.mxu0 %v482
    %2098 = vmatprep.subr.mxu0 0.0
    %2099 = vmatpush1.msra.mxu0 %v483
    %2100 = vmatprep.subr.mxu0 0.0
    %2101 = vmatpush1.msra.mxu0 %v484
    %2102 = vmatprep.subr.mxu0 0.0
    %2103 = vmatpush1.msra.mxu0 %v485
    %2104 = vmatprep.subr.mxu0 0.0
    %2105 = vmatpush1.msra.mxu0 %v486
    %2106 = vmatprep.subr.mxu0 0.0
    %2107 = vmatpush1.msra.mxu0 %v487
    %2108 = vmatprep.subr.mxu0 0.0
    %2109 = vmatpush1.msra.mxu0 %v488
    %2110 = vmatprep.subr.mxu0 0.0
    %2111 = vmatpush1.msra.mxu0 %v489
    %2112 = vmatprep.subr.mxu0 0.0
    %2113 = vmatpush1.msra.mxu0 %v490
    %2114 = vmatprep.subr.mxu0 0.0
    %2115 = vmatpush1.msra.mxu0 %v491
    %2116 = vmatprep.subr.mxu0 0.0
    %2117 = vmatpush1.msra.mxu0 %v492
    %2118 = vmatprep.subr.mxu0 0.0
    %2119 = vmatpush1.msra.mxu0 %v493
    %2120 = vmatprep.subr.mxu0 0.0
    %2121 = vmatpush1.msra.mxu0 %v494
    %2122 = vmatprep.subr.mxu0 0.0
    %2123 = vmatpush1.msra.mxu0 %v495
    %2124 = vmatprep.subr.mxu0 0.0
    %2125 = vmatpush1.msra.mxu0 %v496
    %2126 = vmatprep.subr.mxu0 0.0
    %2127 = vmatpush1.msra.mxu0 %v497
    %2128 = vmatprep.subr.mxu0 0.0
    %2129 = vmatpush1.msra.mxu0 %v498
    %2130 = vmatprep.subr.mxu0 0.0
    %2131 = vmatpush1.msra.mxu0 %v499
    %2132 = vmatprep.subr.mxu0 0.0
    %2133 = vmatpush1.msra.mxu0 %v500
    %2134 = vmatprep.subr.mxu0 0.0
    %2135 = vmatpush1.msra.mxu0 %v501
    %2136 = vmatprep.subr.mxu0 0.0
    %2137 = vmatpush1.msra.mxu0 %v502
    %2138 = vmatprep.subr.mxu0 0.0
    %2139 = vmatpush1.msra.mxu0 %v503
    %2140 = vmatprep.subr.mxu0 0.0
    %2141 = vmatpush1.msra.mxu0 %v504
    %2142 = vmatprep.subr.mxu0 0.0
    %2143 = vmatpush1.msra.mxu0 %v505
    %2144 = vmatprep.subr.mxu0 0.0
    %2145 = vmatpush1.msra.mxu0 %v506
    %2146 = vmatprep.subr.mxu0 0.0
    %2147 = vmatpush1.msra.mxu0 %v507
    %2148 = vmatprep.subr.mxu0 0.0
    %2149 = vmatpush1.msra.mxu0 %v508
    %2150 = vmatprep.subr.mxu0 0.0
    %2151 = vmatpush1.msra.mxu0 %v509
    %2152 = vmatprep.subr.mxu0 0.0
    %2153 = vmatpush1.msra.mxu0 %v510
    %2154 = vmatprep.subr.mxu0 0.0
    %2155 = vmatpush1.msra.mxu0 %v511
    %2156 = vmatprep.subr.mxu0 0.0
    %2157 = vmatpush1.msra.mxu0 %v512
    %2158 = vmatprep.subr.mxu0 0.0
    %2159 = vmatpush1.msra.mxu0 %v513
    %2160 = vmatprep.mubr.f32.mxu0 %v988
    %2161 = vmatmul.mubr.f32.gmra.mrb[0].mxu0 %v980
    %v2162 = vpop.f32.mrb[0].mxu0
    %v2163 = vadd.f32 %v2093, %v2162
    %v2164 = vpop.f32.mrb[0].mxu0
    %2165 = vdwg.mxu0
    %2166 = vmatprep.subr.mxu0 0.0
    %2167 = vmatpush1.msra.mxu0 %v514
    %2168 = vmatprep.subr.mxu0 0.0
    %2169 = vmatpush1.msra.mxu0 %v515
    %2170 = vmatprep.subr.mxu0 0.0
    %2171 = vmatpush1.msra.mxu0 %v516
    %2172 = vmatprep.subr.mxu0 0.0
    %2173 = vmatpush1.msra.mxu0 %v517
    %2174 = vmatprep.subr.mxu0 0.0
    %2175 = vmatpush1.msra.mxu0 %v518
    %2176 = vmatprep.subr.mxu0 0.0
    %2177 = vmatpush1.msra.mxu0 %v519
    %2178 = vmatprep.subr.mxu0 0.0
    %2179 = vmatpush1.msra.mxu0 %v520
    %2180 = vmatprep.subr.mxu0 0.0
    %2181 = vmatpush1.msra.mxu0 %v521
    %2182 = vmatprep.subr.mxu0 0.0
    %2183 = vmatpush1.msra.mxu0 %v522
    %2184 = vmatprep.subr.mxu0 0.0
    %2185 = vmatpush1.msra.mxu0 %v523
    %2186 = vmatprep.subr.mxu0 0.0
    %2187 = vmatpush1.msra.mxu0 %v524
    %2188 = vmatprep.subr.mxu0 0.0
    %2189 = vmatpush1.msra.mxu0 %v525
    %2190 = vmatprep.subr.mxu0 0.0
    %2191 = vmatpush1.msra.mxu0 %v526
    %2192 = vmatprep.subr.mxu0 0.0
    %2193 = vmatpush1.msra.mxu0 %v527
    %2194 = vmatprep.subr.mxu0 0.0
    %2195 = vmatpush1.msra.mxu0 %v528
    %2196 = vmatprep.subr.mxu0 0.0
    %2197 = vmatpush1.msra.mxu0 %v529
    %2198 = vmatprep.subr.mxu0 0.0
    %2199 = vmatpush1.msra.mxu0 %v530
    %2200 = vmatprep.subr.mxu0 0.0
    %2201 = vmatpush1.msra.mxu0 %v531
    %2202 = vmatprep.subr.mxu0 0.0
    %2203 = vmatpush1.msra.mxu0 %v532
    %2204 = vmatprep.subr.mxu0 0.0
    %2205 = vmatpush1.msra.mxu0 %v533
    %2206 = vmatprep.subr.mxu0 0.0
    %2207 = vmatpush1.msra.mxu0 %v534
    %2208 = vmatprep.subr.mxu0 0.0
    %2209 = vmatpush1.msra.mxu0 %v535
    %2210 = vmatprep.subr.mxu0 0.0
    %2211 = vmatpush1.msra.mxu0 %v536
    %2212 = vmatprep.subr.mxu0 0.0
    %2213 = vmatpush1.msra.mxu0 %v537
    %2214 = vmatprep.subr.mxu0 0.0
    %2215 = vmatpush1.msra.mxu0 %v538
    %2216 = vmatprep.subr.mxu0 0.0
    %2217 = vmatpush1.msra.mxu0 %v539
    %2218 = vmatprep.subr.mxu0 0.0
    %2219 = vmatpush1.msra.mxu0 %v540
    %2220 = vmatprep.subr.mxu0 0.0
    %2221 = vmatpush1.msra.mxu0 %v541
    %2222 = vmatprep.subr.mxu0 0.0
    %2223 = vmatpush1.msra.mxu0 %v542
    %2224 = vmatprep.subr.mxu0 0.0
    %2225 = vmatpush1.msra.mxu0 %v543
    %2226 = vmatprep.subr.mxu0 0.0
    %2227 = vmatpush1.msra.mxu0 %v544
    %2228 = vmatprep.subr.mxu0 0.0
    %2229 = vmatpush1.msra.mxu0 %v545
    %2230 = vmatprep.mubr.f32.mxu0 %v989
    %2231 = vmatmul.mubr.f32.gmra.mrb[0].mxu0 %v987
    %v2232 = vpop.f32.mrb[0].mxu0
    %v2233 = vadd.f32 %v2163, %v2232
    %v2234 = vpop.f32.mrb[0].mxu0
    %2235 = vdwg.mxu0
    %2236 = vmatprep.subr.mxu0 0.0
    %2237 = vmatpush1.msra.mxu0 %v546
    %2238 = vmatprep.subr.mxu0 0.0
    %2239 = vmatpush1.msra.mxu0 %v547
    %2240 = vmatprep.subr.mxu0 0.0
    %2241 = vmatpush1.msra.mxu0 %v548
    %2242 = vmatprep.subr.mxu0 0.0
    %2243 = vmatpush1.msra.mxu0 %v549
    %2244 = vmatprep.subr.mxu0 0.0
    %2245 = vmatpush1.msra.mxu0 %v550
    %2246 = vmatprep.subr.mxu0 0.0
    %2247 = vmatpush1.msra.mxu0 %v551
    %2248 = vmatprep.subr.mxu0 0.0
    %2249 = vmatpush1.msra.mxu0 %v552
    %2250 = vmatprep.subr.mxu0 0.0
    %2251 = vmatpush1.msra.mxu0 %v553
    %2252 = vmatprep.subr.mxu0 0.0
    %2253 = vmatpush1.msra.mxu0 %v554
    %2254 = vmatprep.subr.mxu0 0.0
    %2255 = vmatpush1.msra.mxu0 %v555
    %2256 = vmatprep.subr.mxu0 0.0
    %2257 = vmatpush1.msra.mxu0 %v556
    %2258 = vmatprep.subr.mxu0 0.0
    %2259 = vmatpush1.msra.mxu0 %v557
    %2260 = vmatprep.subr.mxu0 0.0
    %2261 = vmatpush1.msra.mxu0 %v558
    %2262 = vmatprep.subr.mxu0 0.0
    %2263 = vmatpush1.msra.mxu0 %v559
    %2264 = vmatprep.subr.mxu0 0.0
    %2265 = vmatpush1.msra.mxu0 %v560
    %2266 = vmatprep.subr.mxu0 0.0
    %2267 = vmatpush1.msra.mxu0 %v561
    %2268 = vmatprep.subr.mxu0 0.0
    %2269 = vmatpush1.msra.mxu0 %v562
    %2270 = vmatprep.subr.mxu0 0.0
    %2271 = vmatpush1.msra.mxu0 %v563
    %2272 = vmatprep.subr.mxu0 0.0
    %2273 = vmatpush1.msra.mxu0 %v564
    %2274 = vmatprep.subr.mxu0 0.0
    %2275 = vmatpush1.msra.mxu0 %v565
    %2276 = vmatprep.subr.mxu0 0.0
    %2277 = vmatpush1.msra.mxu0 %v566
    %2278 = vmatprep.subr.mxu0 0.0
    %2279 = vmatpush1.msra.mxu0 %v567
    %2280 = vmatprep.subr.mxu0 0.0
    %2281 = vmatpush1.msra.mxu0 %v568
    %2282 = vmatprep.subr.mxu0 0.0
    %2283 = vmatpush1.msra.mxu0 %v569
    %2284 = vmatprep.subr.mxu0 0.0
    %2285 = vmatpush1.msra.mxu0 %v570
    %2286 = vmatprep.subr.mxu0 0.0
    %2287 = vmatpush1.msra.mxu0 %v571
    %2288 = vmatprep.subr.mxu0 0.0
    %2289 = vmatpush1.msra.mxu0 %v572
    %2290 = vmatprep.subr.mxu0 0.0
    %2291 = vmatpush1.msra.mxu0 %v573
    %2292 = vmatprep.subr.mxu0 0.0
    %2293 = vmatpush1.msra.mxu0 %v574
    %2294 = vmatprep.subr.mxu0 0.0
    %2295 = vmatpush1.msra.mxu0 %v575
    %2296 = vmatprep.subr.mxu0 0.0
    %2297 = vmatpush1.msra.mxu0 %v576
    %2298 = vmatprep.subr.mxu0 0.0
    %2299 = vmatpush1.msra.mxu0 %v577
    %2300 = vmatprep.mubr.f32.mxu0 %v1005
    %2301 = vmatmul.mubr.f32.gmra.mrb[0].mxu0 %v997
    %v2302 = vpop.f32.mrb[0].mxu0
    %v2303 = vadd.f32 %v2233, %v2302
    %v2304 = vpop.f32.mrb[0].mxu0
    %2305 = vdwg.mxu0
    %2306 = vmatprep.subr.mxu0 0.0
    %2307 = vmatpush1.msra.mxu0 %v578
    %2308 = vmatprep.subr.mxu0 0.0
    %2309 = vmatpush1.msra.mxu0 %v579
    %2310 = vmatprep.subr.mxu0 0.0
    %2311 = vmatpush1.msra.mxu0 %v580
    %2312 = vmatprep.subr.mxu0 0.0
    %2313 = vmatpush1.msra.mxu0 %v581
    %2314 = vmatprep.subr.mxu0 0.0
    %2315 = vmatpush1.msra.mxu0 %v582
    %2316 = vmatprep.subr.mxu0 0.0
    %2317 = vmatpush1.msra.mxu0 %v583
    %2318 = vmatprep.subr.mxu0 0.0
    %2319 = vmatpush1.msra.mxu0 %v584
    %2320 = vmatprep.subr.mxu0 0.0
    %2321 = vmatpush1.msra.mxu0 %v585
    %2322 = vmatprep.subr.mxu0 0.0
    %2323 = vmatpush1.msra.mxu0 %v586
    %2324 = vmatprep.subr.mxu0 0.0
    %2325 = vmatpush1.msra.mxu0 %v587
    %2326 = vmatprep.subr.mxu0 0.0
    %2327 = vmatpush1.msra.mxu0 %v588
    %2328 = vmatprep.subr.mxu0 0.0
    %2329 = vmatpush1.msra.mxu0 %v589
    %2330 = vmatprep.subr.mxu0 0.0
    %2331 = vmatpush1.msra.mxu0 %v590
    %2332 = vmatprep.subr.mxu0 0.0
    %2333 = vmatpush1.msra.mxu0 %v591
    %2334 = vmatprep.subr.mxu0 0.0
    %2335 = vmatpush1.msra.mxu0 %v592
    %2336 = vmatprep.subr.mxu0 0.0
    %2337 = vmatpush1.msra.mxu0 %v593
    %2338 = vmatprep.subr.mxu0 0.0
    %2339 = vmatpush1.msra.mxu0 %v594
    %2340 = vmatprep.subr.mxu0 0.0
    %2341 = vmatpush1.msra.mxu0 %v595
    %2342 = vmatprep.subr.mxu0 0.0
    %2343 = vmatpush1.msra.mxu0 %v596
    %2344 = vmatprep.subr.mxu0 0.0
    %2345 = vmatpush1.msra.mxu0 %v597
    %2346 = vmatprep.subr.mxu0 0.0
    %2347 = vmatpush1.msra.mxu0 %v598
    %2348 = vmatprep.subr.mxu0 0.0
    %2349 = vmatpush1.msra.mxu0 %v599
    %2350 = vmatprep.subr.mxu0 0.0
    %2351 = vmatpush1.msra.mxu0 %v600
    %2352 = vmatprep.subr.mxu0 0.0
    %2353 = vmatpush1.msra.mxu0 %v601
    %2354 = vmatprep.subr.mxu0 0.0
    %2355 = vmatpush1.msra.mxu0 %v602
    %2356 = vmatprep.subr.mxu0 0.0
    %2357 = vmatpush1.msra.mxu0 %v603
    %2358 = vmatprep.subr.mxu0 0.0
    %2359 = vmatpush1.msra.mxu0 %v604
    %2360 = vmatprep.subr.mxu0 0.0
    %2361 = vmatpush1.msra.mxu0 %v605
    %2362 = vmatprep.subr.mxu0 0.0
    %2363 = vmatpush1.msra.mxu0 %v606
    %2364 = vmatprep.subr.mxu0 0.0
    %2365 = vmatpush1.msra.mxu0 %v607
    %2366 = vmatprep.subr.mxu0 0.0
    %2367 = vmatpush1.msra.mxu0 %v608
    %2368 = vmatprep.subr.mxu0 0.0
    %2369 = vmatpush1.msra.mxu0 %v609
    %2370 = vmatprep.mubr.f32.mxu0 %v1006
    %2371 = vmatmul.mubr.f32.gmra.mrb[0].mxu0 %v1004
    %v2372 = vpop.f32.mrb[0].mxu0
    %v2373 = vadd.f32 %v2303, %v2372
    %v2374 = vpop.f32.mrb[0].mxu0
    %2375 = vdwg.mxu0
    %2376 = vmatprep.subr.mxu0 0.0
    %2377 = vmatpush1.msra.mxu0 %v610
    %2378 = vmatprep.subr.mxu0 0.0
    %2379 = vmatpush1.msra.mxu0 %v611
    %2380 = vmatprep.subr.mxu0 0.0
    %2381 = vmatpush1.msra.mxu0 %v612
    %2382 = vmatprep.subr.mxu0 0.0
    %2383 = vmatpush1.msra.mxu0 %v613
    %2384 = vmatprep.subr.mxu0 0.0
    %2385 = vmatpush1.msra.mxu0 %v614
    %2386 = vmatprep.subr.mxu0 0.0
    %2387 = vmatpush1.msra.mxu0 %v615
    %2388 = vmatprep.subr.mxu0 0.0
    %2389 = vmatpush1.msra.mxu0 %v616
    %2390 = vmatprep.subr.mxu0 0.0
    %2391 = vmatpush1.msra.mxu0 %v617
    %2392 = vmatprep.subr.mxu0 0.0
    %2393 = vmatpush1.msra.mxu0 %v618
    %2394 = vmatprep.subr.mxu0 0.0
    %2395 = vmatpush1.msra.mxu0 %v619
    %2396 = vmatprep.subr.mxu0 0.0
    %2397 = vmatpush1.msra.mxu0 %v620
    %2398 = vmatprep.subr.mxu0 0.0
    %2399 = vmatpush1.msra.mxu0 %v621
    %2400 = vmatprep.subr.mxu0 0.0
    %2401 = vmatpush1.msra.mxu0 %v622
    %2402 = vmatprep.subr.mxu0 0.0
    %2403 = vmatpush1.msra.mxu0 %v623
    %2404 = vmatprep.subr.mxu0 0.0
    %2405 = vmatpush1.msra.mxu0 %v624
    %2406 = vmatprep.subr.mxu0 0.0
    %2407 = vmatpush1.msra.mxu0 %v625
    %2408 = vmatprep.subr.mxu0 0.0
    %2409 = vmatpush1.msra.mxu0 %v626
    %2410 = vmatprep.subr.mxu0 0.0
    %2411 = vmatpush1.msra.mxu0 %v627
    %2412 = vmatprep.subr.mxu0 0.0
    %2413 = vmatpush1.msra.mxu0 %v628
    %2414 = vmatprep.subr.mxu0 0.0
    %2415 = vmatpush1.msra.mxu0 %v629
    %2416 = vmatprep.subr.mxu0 0.0
    %2417 = vmatpush1.msra.mxu0 %v630
    %2418 = vmatprep.subr.mxu0 0.0
    %2419 = vmatpush1.msra.mxu0 %v631
    %2420 = vmatprep.subr.mxu0 0.0
    %2421 = vmatpush1.msra.mxu0 %v632
    %2422 = vmatprep.subr.mxu0 0.0
    %2423 = vmatpush1.msra.mxu0 %v633
    %2424 = vmatprep.subr.mxu0 0.0
    %2425 = vmatpush1.msra.mxu0 %v634
    %2426 = vmatprep.subr.mxu0 0.0
    %2427 = vmatpush1.msra.mxu0 %v635
    %2428 = vmatprep.subr.mxu0 0.0
    %2429 = vmatpush1.msra.mxu0 %v636
    %2430 = vmatprep.subr.mxu0 0.0
    %2431 = vmatpush1.msra.mxu0 %v637
    %2432 = vmatprep.subr.mxu0 0.0
    %2433 = vmatpush1.msra.mxu0 %v638
    %2434 = vmatprep.subr.mxu0 0.0
    %2435 = vmatpush1.msra.mxu0 %v639
    %2436 = vmatprep.subr.mxu0 0.0
    %2437 = vmatpush1.msra.mxu0 %v640
    %2438 = vmatprep.subr.mxu0 0.0
    %2439 = vmatpush1.msra.mxu0 %v641
    %2440 = vmatprep.mubr.f32.mxu0 %v1022
    %2441 = vmatmul.mubr.f32.gmra.mrb[0].mxu0 %v1014
    %v2442 = vpop.f32.mrb[0].mxu0
    %v2443 = vadd.f32 %v2373, %v2442
    %v2444 = vpop.f32.mrb[0].mxu0
    %2445 = vdwg.mxu0
    %2446 = vmatprep.subr.mxu0 0.0
    %2447 = vmatpush1.msra.mxu0 %v642
    %2448 = vmatprep.subr.mxu0 0.0
    %2449 = vmatpush1.msra.mxu0 %v643
    %2450 = vmatprep.subr.mxu0 0.0
    %2451 = vmatpush1.msra.mxu0 %v644
    %2452 = vmatprep.subr.mxu0 0.0
    %2453 = vmatpush1.msra.mxu0 %v645
    %2454 = vmatprep.subr.mxu0 0.0
    %2455 = vmatpush1.msra.mxu0 %v646
    %2456 = vmatprep.subr.mxu0 0.0
    %2457 = vmatpush1.msra.mxu0 %v647
    %2458 = vmatprep.subr.mxu0 0.0
    %2459 = vmatpush1.msra.mxu0 %v648
    %2460 = vmatprep.subr.mxu0 0.0
    %2461 = vmatpush1.msra.mxu0 %v649
    %2462 = vmatprep.subr.mxu0 0.0
    %2463 = vmatpush1.msra.mxu0 %v650
    %2464 = vmatprep.subr.mxu0 0.0
    %2465 = vmatpush1.msra.mxu0 %v651
    %2466 = vmatprep.subr.mxu0 0.0
    %2467 = vmatpush1.msra.mxu0 %v652
    %2468 = vmatprep.subr.mxu0 0.0
    %2469 = vmatpush1.msra.mxu0 %v653
    %2470 = vmatprep.subr.mxu0 0.0
    %2471 = vmatpush1.msra.mxu0 %v654
    %2472 = vmatprep.subr.mxu0 0.0
    %2473 = vmatpush1.msra.mxu0 %v655
    %2474 = vmatprep.subr.mxu0 0.0
    %2475 = vmatpush1.msra.mxu0 %v656
    %2476 = vmatprep.subr.mxu0 0.0
    %2477 = vmatpush1.msra.mxu0 %v657
    %2478 = vmatprep.subr.mxu0 0.0
    %2479 = vmatpush1.msra.mxu0 %v658
    %2480 = vmatprep.subr.mxu0 0.0
    %2481 = vmatpush1.msra.mxu0 %v659
    %2482 = vmatprep.subr.mxu0 0.0
    %2483 = vmatpush1.msra.mxu0 %v660
    %2484 = vmatprep.subr.mxu0 0.0
    %2485 = vmatpush1.msra.mxu0 %v661
    %2486 = vmatprep.subr.mxu0 0.0
    %2487 = vmatpush1.msra.mxu0 %v662
    %2488 = vmatprep.subr.mxu0 0.0
    %2489 = vmatpush1.msra.mxu0 %v663
    %2490 = vmatprep.subr.mxu0 0.0
    %2491 = vmatpush1.msra.mxu0 %v664
    %2492 = vmatprep.subr.mxu0 0.0
    %2493 = vmatpush1.msra.mxu0 %v665
    %2494 = vmatprep.subr.mxu0 0.0
    %2495 = vmatpush1.msra.mxu0 %v666
    %2496 = vmatprep.subr.mxu0 0.0
    %2497 = vmatpush1.msra.mxu0 %v667
    %2498 = vmatprep.subr.mxu0 0.0
    %2499 = vmatpush1.msra.mxu0 %v668
    %2500 = vmatprep.subr.mxu0 0.0
    %2501 = vmatpush1.msra.mxu0 %v669
    %2502 = vmatprep.subr.mxu0 0.0
    %2503 = vmatpush1.msra.mxu0 %v670
    %2504 = vmatprep.subr.mxu0 0.0
    %2505 = vmatpush1.msra.mxu0 %v671
    %2506 = vmatprep.subr.mxu0 0.0
    %2507 = vmatpush1.msra.mxu0 %v672
    %2508 = vmatprep.subr.mxu0 0.0
    %2509 = vmatpush1.msra.mxu0 %v673
    %2510 = vmatprep.mubr.f32.mxu0 %v1023
    %2511 = vmatmul.mubr.f32.gmra.mrb[0].mxu0 %v1021
    %v2512 = vpop.f32.mrb[0].mxu0
    %v2513 = vadd.f32 %v2443, %v2512
    %v2514 = vpop.f32.mrb[0].mxu0
    %2515 = vdwg.mxu0
    %2516 = vmatprep.subr.mxu0 0.0
    %2517 = vmatpush1.msra.mxu0 %v674
    %2518 = vmatprep.subr.mxu0 0.0
    %2519 = vmatpush1.msra.mxu0 %v675
    %2520 = vmatprep.subr.mxu0 0.0
    %2521 = vmatpush1.msra.mxu0 %v676
    %2522 = vmatprep.subr.mxu0 0.0
    %2523 = vmatpush1.msra.mxu0 %v677
    %2524 = vmatprep.subr.mxu0 0.0
    %2525 = vmatpush1.msra.mxu0 %v678
    %2526 = vmatprep.subr.mxu0 0.0
    %2527 = vmatpush1.msra.mxu0 %v679
    %2528 = vmatprep.subr.mxu0 0.0
    %2529 = vmatpush1.msra.mxu0 %v680
    %2530 = vmatprep.subr.mxu0 0.0
    %2531 = vmatpush1.msra.mxu0 %v681
    %2532 = vmatprep.subr.mxu0 0.0
    %2533 = vmatpush1.msra.mxu0 %v682
    %2534 = vmatprep.subr.mxu0 0.0
    %2535 = vmatpush1.msra.mxu0 %v683
    %2536 = vmatprep.subr.mxu0 0.0
    %2537 = vmatpush1.msra.mxu0 %v684
    %2538 = vmatprep.subr.mxu0 0.0
    %2539 = vmatpush1.msra.mxu0 %v685
    %2540 = vmatprep.subr.mxu0 0.0
    %2541 = vmatpush1.msra.mxu0 %v686
    %2542 = vmatprep.subr.mxu0 0.0
    %2543 = vmatpush1.msra.mxu0 %v687
    %2544 = vmatprep.subr.mxu0 0.0
    %2545 = vmatpush1.msra.mxu0 %v688
    %2546 = vmatprep.subr.mxu0 0.0
    %2547 = vmatpush1.msra.mxu0 %v689
    %2548 = vmatprep.subr.mxu0 0.0
    %2549 = vmatpush1.msra.mxu0 %v690
    %2550 = vmatprep.subr.mxu0 0.0
    %2551 = vmatpush1.msra.mxu0 %v691
    %2552 = vmatprep.subr.mxu0 0.0
    %2553 = vmatpush1.msra.mxu0 %v692
    %2554 = vmatprep.subr.mxu0 0.0
    %2555 = vmatpush1.msra.mxu0 %v693
    %2556 = vmatprep.subr.mxu0 0.0
    %2557 = vmatpush1.msra.mxu0 %v694
    %2558 = vmatprep.subr.mxu0 0.0
    %2559 = vmatpush1.msra.mxu0 %v695
    %2560 = vmatprep.subr.mxu0 0.0
    %2561 = vmatpush1.msra.mxu0 %v696
    %2562 = vmatprep.subr.mxu0 0.0
    %2563 = vmatpush1.msra.mxu0 %v697
    %2564 = vmatprep.subr.mxu0 0.0
    %2565 = vmatpush1.msra.mxu0 %v698
    %2566 = vmatprep.subr.mxu0 0.0
    %2567 = vmatpush1.msra.mxu0 %v699
    %2568 = vmatprep.subr.mxu0 0.0
    %2569 = vmatpush1.msra.mxu0 %v700
    %2570 = vmatprep.subr.mxu0 0.0
    %2571 = vmatpush1.msra.mxu0 %v701
    %2572 = vmatprep.subr.mxu0 0.0
    %2573 = vmatpush1.msra.mxu0 %v702
    %2574 = vmatprep.subr.mxu0 0.0
    %2575 = vmatpush1.msra.mxu0 %v703
    %2576 = vmatprep.subr.mxu0 0.0
    %2577 = vmatpush1.msra.mxu0 %v704
    %2578 = vmatprep.subr.mxu0 0.0
    %2579 = vmatpush1.msra.mxu0 %v705
    %2580 = vmatprep.mubr.f32.mxu0 %v1039
    %2581 = vmatmul.mubr.f32.gmra.mrb[0].mxu0 %v1031
    %v2582 = vpop.f32.mrb[0].mxu0
    %v2583 = vadd.f32 %v2513, %v2582
    %v2584 = vpop.f32.mrb[0].mxu0
    %2585 = vdwg.mxu0
    %2586 = vmatprep.subr.mxu0 0.0
    %2587 = vmatpush1.msra.mxu0 %v706
    %2588 = vmatprep.subr.mxu0 0.0
    %2589 = vmatpush1.msra.mxu0 %v707
    %2590 = vmatprep.subr.mxu0 0.0
    %2591 = vmatpush1.msra.mxu0 %v708
    %2592 = vmatprep.subr.mxu0 0.0
    %2593 = vmatpush1.msra.mxu0 %v709
    %2594 = vmatprep.subr.mxu0 0.0
    %2595 = vmatpush1.msra.mxu0 %v710
    %2596 = vmatprep.subr.mxu0 0.0
    %2597 = vmatpush1.msra.mxu0 %v711
    %2598 = vmatprep.subr.mxu0 0.0
    %2599 = vmatpush1.msra.mxu0 %v712
    %2600 = vmatprep.subr.mxu0 0.0
    %2601 = vmatpush1.msra.mxu0 %v713
    %2602 = vmatprep.subr.mxu0 0.0
    %2603 = vmatpush1.msra.mxu0 %v714
    %2604 = vmatprep.subr.mxu0 0.0
    %2605 = vmatpush1.msra.mxu0 %v715
    %2606 = vmatprep.subr.mxu0 0.0
    %2607 = vmatpush1.msra.mxu0 %v716
    %2608 = vmatprep.subr.mxu0 0.0
    %2609 = vmatpush1.msra.mxu0 %v717
    %2610 = vmatprep.subr.mxu0 0.0
    %2611 = vmatpush1.msra.mxu0 %v718
    %2612 = vmatprep.subr.mxu0 0.0
    %2613 = vmatpush1.msra.mxu0 %v719
    %2614 = vmatprep.subr.mxu0 0.0
    %2615 = vmatpush1.msra.mxu0 %v720
    %2616 = vmatprep.subr.mxu0 0.0
    %2617 = vmatpush1.msra.mxu0 %v721
    %2618 = vmatprep.subr.mxu0 0.0
    %2619 = vmatpush1.msra.mxu0 %v722
    %2620 = vmatprep.subr.mxu0 0.0
    %2621 = vmatpush1.msra.mxu0 %v723
    %2622 = vmatprep.subr.mxu0 0.0
    %2623 = vmatpush1.msra.mxu0 %v724
    %2624 = vmatprep.subr.mxu0 0.0
    %2625 = vmatpush1.msra.mxu0 %v725
    %2626 = vmatprep.subr.mxu0 0.0
    %2627 = vmatpush1.msra.mxu0 %v726
    %2628 = vmatprep.subr.mxu0 0.0
    %2629 = vmatpush1.msra.mxu0 %v727
    %2630 = vmatprep.subr.mxu0 0.0
    %2631 = vmatpush1.msra.mxu0 %v728
    %2632 = vmatprep.subr.mxu0 0.0
    %2633 = vmatpush1.msra.mxu0 %v729
    %2634 = vmatprep.subr.mxu0 0.0
    %2635 = vmatpush1.msra.mxu0 %v730
    %2636 = vmatprep.subr.mxu0 0.0
    %2637 = vmatpush1.msra.mxu0 %v731
    %2638 = vmatprep.subr.mxu0 0.0
    %2639 = vmatpush1.msra.mxu0 %v732
    %2640 = vmatprep.subr.mxu0 0.0
    %2641 = vmatpush1.msra.mxu0 %v733
    %2642 = vmatprep.subr.mxu0 0.0
    %2643 = vmatpush1.msra.mxu0 %v734
    %2644 = vmatprep.subr.mxu0 0.0
    %2645 = vmatpush1.msra.mxu0 %v735
    %2646 = vmatprep.subr.mxu0 0.0
    %2647 = vmatpush1.msra.mxu0 %v736
    %2648 = vmatprep.subr.mxu0 0.0
    %2649 = vmatpush1.msra.mxu0 %v737
    %2650 = vmatprep.mubr.f32.mxu0 %v1040
    %2651 = vmatmul.mubr.f32.gmra.mrb[0].mxu0 %v1038
    %v2652 = vpop.f32.mrb[0].mxu0
    %v2653 = vadd.f32 %v2583, %v2652
    %v2654 = vpop.f32.mrb[0].mxu0
    %2655 = vdwg.mxu0
    %2656 = vmatprep.subr.mxu0 0.0
    %2657 = vmatpush1.msra.mxu0 %v738
    %2658 = vmatprep.subr.mxu0 0.0
    %2659 = vmatpush1.msra.mxu0 %v739
    %2660 = vmatprep.subr.mxu0 0.0
    %2661 = vmatpush1.msra.mxu0 %v740
    %2662 = vmatprep.subr.mxu0 0.0
    %2663 = vmatpush1.msra.mxu0 %v741
    %2664 = vmatprep.subr.mxu0 0.0
    %2665 = vmatpush1.msra.mxu0 %v742
    %2666 = vmatprep.subr.mxu0 0.0
    %2667 = vmatpush1.msra.mxu0 %v743
    %2668 = vmatprep.subr.mxu0 0.0
    %2669 = vmatpush1.msra.mxu0 %v744
    %2670 = vmatprep.subr.mxu0 0.0
    %2671 = vmatpush1.msra.mxu0 %v745
    %2672 = vmatprep.subr.mxu0 0.0
    %2673 = vmatpush1.msra.mxu0 %v746
    %2674 = vmatprep.subr.mxu0 0.0
    %2675 = vmatpush1.msra.mxu0 %v747
    %2676 = vmatprep.subr.mxu0 0.0
    %2677 = vmatpush1.msra.mxu0 %v748
    %2678 = vmatprep.subr.mxu0 0.0
    %2679 = vmatpush1.msra.mxu0 %v749
    %2680 = vmatprep.subr.mxu0 0.0
    %2681 = vmatpush1.msra.mxu0 %v750
    %2682 = vmatprep.subr.mxu0 0.0
    %2683 = vmatpush1.msra.mxu0 %v751
    %2684 = vmatprep.subr.mxu0 0.0
    %2685 = vmatpush1.msra.mxu0 %v752
    %2686 = vmatprep.subr.mxu0 0.0
    %2687 = vmatpush1.msra.mxu0 %v753
    %2688 = vmatprep.subr.mxu0 0.0
    %2689 = vmatpush1.msra.mxu0 %v754
    %2690 = vmatprep.subr.mxu0 0.0
    %2691 = vmatpush1.msra.mxu0 %v755
    %2692 = vmatprep.subr.mxu0 0.0
    %2693 = vmatpush1.msra.mxu0 %v756
    %2694 = vmatprep.subr.mxu0 0.0
    %2695 = vmatpush1.msra.mxu0 %v757
    %2696 = vmatprep.subr.mxu0 0.0
    %2697 = vmatpush1.msra.mxu0 %v758
    %2698 = vmatprep.subr.mxu0 0.0
    %2699 = vmatpush1.msra.mxu0 %v759
    %2700 = vmatprep.subr.mxu0 0.0
    %2701 = vmatpush1.msra.mxu0 %v760
    %2702 = vmatprep.subr.mxu0 0.0
    %2703 = vmatpush1.msra.mxu0 %v761
    %2704 = vmatprep.subr.mxu0 0.0
    %2705 = vmatpush1.msra.mxu0 %v762
    %2706 = vmatprep.subr.mxu0 0.0
    %2707 = vmatpush1.msra.mxu0 %v763
    %2708 = vmatprep.subr.mxu0 0.0
    %2709 = vmatpush1.msra.mxu0 %v764
    %2710 = vmatprep.subr.mxu0 0.0
    %2711 = vmatpush1.msra.mxu0 %v765
    %2712 = vmatprep.subr.mxu0 0.0
    %2713 = vmatpush1.msra.mxu0 %v766
    %2714 = vmatprep.subr.mxu0 0.0
    %2715 = vmatpush1.msra.mxu0 %v767
    %2716 = vmatprep.subr.mxu0 0.0
    %2717 = vmatpush1.msra.mxu0 %v768
    %2718 = vmatprep.subr.mxu0 0.0
    %2719 = vmatpush1.msra.mxu0 %v769
    %2720 = vmatprep.mubr.f32.mxu0 %v1056
    %2721 = vmatmul.mubr.f32.gmra.mrb[0].mxu0 %v1048
    %v2722 = vpop.f32.mrb[0].mxu0
    %v2723 = vadd.f32 %v2653, %v2722
    %v2724 = vpop.f32.mrb[0].mxu0
    %2725 = vdwg.mxu0
    %2726 = vmatprep.subr.mxu0 0.0
    %2727 = vmatpush1.msra.mxu0 %v770
    %2728 = vmatprep.subr.mxu0 0.0
    %2729 = vmatpush1.msra.mxu0 %v771
    %2730 = vmatprep.subr.mxu0 0.0
    %2731 = vmatpush1.msra.mxu0 %v772
    %2732 = vmatprep.subr.mxu0 0.0
    %2733 = vmatpush1.msra.mxu0 %v773
    %2734 = vmatprep.subr.mxu0 0.0
    %2735 = vmatpush1.msra.mxu0 %v774
    %2736 = vmatprep.subr.mxu0 0.0
    %2737 = vmatpush1.msra.mxu0 %v775
    %2738 = vmatprep.subr.mxu0 0.0
    %2739 = vmatpush1.msra.mxu0 %v776
    %2740 = vmatprep.subr.mxu0 0.0
    %2741 = vmatpush1.msra.mxu0 %v777
    %2742 = vmatprep.subr.mxu0 0.0
    %2743 = vmatpush1.msra.mxu0 %v778
    %2744 = vmatprep.subr.mxu0 0.0
    %2745 = vmatpush1.msra.mxu0 %v779
    %2746 = vmatprep.subr.mxu0 0.0
    %2747 = vmatpush1.msra.mxu0 %v780
    %2748 = vmatprep.subr.mxu0 0.0
    %2749 = vmatpush1.msra.mxu0 %v781
    %2750 = vmatprep.subr.mxu0 0.0
    %2751 = vmatpush1.msra.mxu0 %v782
    %2752 = vmatprep.subr.mxu0 0.0
    %2753 = vmatpush1.msra.mxu0 %v783
    %2754 = vmatprep.subr.mxu0 0.0
    %2755 = vmatpush1.msra.mxu0 %v784
    %2756 = vmatprep.subr.mxu0 0.0
    %2757 = vmatpush1.msra.mxu0 %v785
    %2758 = vmatprep.subr.mxu0 0.0
    %2759 = vmatpush1.msra.mxu0 %v786
    %2760 = vmatprep.subr.mxu0 0.0
    %2761 = vmatpush1.msra.mxu0 %v787
    %2762 = vmatprep.subr.mxu0 0.0
    %2763 = vmatpush1.msra.mxu0 %v788
    %2764 = vmatprep.subr.mxu0 0.0
    %2765 = vmatpush1.msra.mxu0 %v789
    %2766 = vmatprep.subr.mxu0 0.0
    %2767 = vmatpush1.msra.mxu0 %v790
    %2768 = vmatprep.subr.mxu0 0.0
    %2769 = vmatpush1.msra.mxu0 %v791
    %2770 = vmatprep.subr.mxu0 0.0
    %2771 = vmatpush1.msra.mxu0 %v792
    %2772 = vmatprep.subr.mxu0 0.0
    %2773 = vmatpush1.msra.mxu0 %v793
    %2774 = vmatprep.subr.mxu0 0.0
    %2775 = vmatpush1.msra.mxu0 %v794
    %2776 = vmatprep.subr.mxu0 0.0
    %2777 = vmatpush1.msra.mxu0 %v795
    %2778 = vmatprep.subr.mxu0 0.0
    %2779 = vmatpush1.msra.mxu0 %v796
    %2780 = vmatprep.subr.mxu0 0.0
    %2781 = vmatpush1.msra.mxu0 %v797
    %2782 = vmatprep.subr.mxu0 0.0
    %2783 = vmatpush1.msra.mxu0 %v798
    %2784 = vmatprep.subr.mxu0 0.0
    %2785 = vmatpush1.msra.mxu0 %v799
    %2786 = vmatprep.subr.mxu0 0.0
    %2787 = vmatpush1.msra.mxu0 %v800
    %2788 = vmatprep.subr.mxu0 0.0
    %2789 = vmatpush1.msra.mxu0 %v801
    %2790 = vmatprep.mubr.f32.mxu0 %v1057
    %2791 = vmatmul.mubr.f32.gmra.mrb[0].mxu0 %v1055
    %v2792 = vpop.f32.mrb[0].mxu0
    %v2793 = vadd.f32 %v2723, %v2792
    %v2794 = vpop.f32.mrb[0].mxu0
    %2795 = vdwg.mxu0
    %2796 = vmatprep.subr.mxu0 0.0
    %2797 = vmatpush1.msra.mxu0 %v802
    %2798 = vmatprep.subr.mxu0 0.0
    %2799 = vmatpush1.msra.mxu0 %v803
    %2800 = vmatprep.subr.mxu0 0.0
    %2801 = vmatpush1.msra.mxu0 %v804
    %2802 = vmatprep.subr.mxu0 0.0
    %2803 = vmatpush1.msra.mxu0 %v805
    %2804 = vmatprep.subr.mxu0 0.0
    %2805 = vmatpush1.msra.mxu0 %v806
    %2806 = vmatprep.subr.mxu0 0.0
    %2807 = vmatpush1.msra.mxu0 %v807
    %2808 = vmatprep.subr.mxu0 0.0
    %2809 = vmatpush1.msra.mxu0 %v808
    %2810 = vmatprep.subr.mxu0 0.0
    %2811 = vmatpush1.msra.mxu0 %v809
    %2812 = vmatprep.subr.mxu0 0.0
    %2813 = vmatpush1.msra.mxu0 %v810
    %2814 = vmatprep.subr.mxu0 0.0
    %2815 = vmatpush1.msra.mxu0 %v811
    %2816 = vmatprep.subr.mxu0 0.0
    %2817 = vmatpush1.msra.mxu0 %v812
    %2818 = vmatprep.subr.mxu0 0.0
    %2819 = vmatpush1.msra.mxu0 %v813
    %2820 = vmatprep.subr.mxu0 0.0
    %2821 = vmatpush1.msra.mxu0 %v814
    %2822 = vmatprep.subr.mxu0 0.0
    %2823 = vmatpush1.msra.mxu0 %v815
    %2824 = vmatprep.subr.mxu0 0.0
    %2825 = vmatpush1.msra.mxu0 %v816
    %2826 = vmatprep.subr.mxu0 0.0
    %2827 = vmatpush1.msra.mxu0 %v817
    %2828 = vmatprep.subr.mxu0 0.0
    %2829 = vmatpush1.msra.mxu0 %v818
    %2830 = vmatprep.subr.mxu0 0.0
    %2831 = vmatpush1.msra.mxu0 %v819
    %2832 = vmatprep.subr.mxu0 0.0
    %2833 = vmatpush1.msra.mxu0 %v820
    %2834 = vmatprep.subr.mxu0 0.0
    %2835 = vmatpush1.msra.mxu0 %v821
    %2836 = vmatprep.subr.mxu0 0.0
    %2837 = vmatpush1.msra.mxu0 %v822
    %2838 = vmatprep.subr.mxu0 0.0
    %2839 = vmatpush1.msra.mxu0 %v823
    %2840 = vmatprep.subr.mxu0 0.0
    %2841 = vmatpush1.msra.mxu0 %v824
    %2842 = vmatprep.subr.mxu0 0.0
    %2843 = vmatpush1.msra.mxu0 %v825
    %2844 = vmatprep.subr.mxu0 0.0
    %2845 = vmatpush1.msra.mxu0 %v826
    %2846 = vmatprep.subr.mxu0 0.0
    %2847 = vmatpush1.msra.mxu0 %v827
    %2848 = vmatprep.subr.mxu0 0.0
    %2849 = vmatpush1.msra.mxu0 %v828
    %2850 = vmatprep.subr.mxu0 0.0
    %2851 = vmatpush1.msra.mxu0 %v829
    %2852 = vmatprep.subr.mxu0 0.0
    %2853 = vmatpush1.msra.mxu0 %v830
    %2854 = vmatprep.subr.mxu0 0.0
    %2855 = vmatpush1.msra.mxu0 %v831
    %2856 = vmatprep.subr.mxu0 0.0
    %2857 = vmatpush1.msra.mxu0 %v832
    %2858 = vmatprep.subr.mxu0 0.0
    %2859 = vmatpush1.msra.mxu0 %v833
    %2860 = vmatprep.mubr.f32.mxu0 %v1065
    %2861 = vmatmul.mubr.f32.gmra.mrb[0].mxu0 %v1064
    %v2862 = vpop.f32.mrb[0].mxu0
    %v2863 = vadd.f32 %v2793, %v2862
    %v2864 = vpop.f32.mrb[0].mxu0
    %2865 = vdwg.mxu0
    %vm2866 = vcmp.ge.f32.partialorder %v2863, 0.0
    %v2867 = vmul.f32 %v2863, 0.01
    %v2868 = vsel %vm2866, %v2863, %v2867
    %v2869 = vld [vmem:[%s3] sm:$0xff]
    %v2870 = vld [vmem:[%s3 + $0x8] sm:$0xff]
    %v2871 = vld [vmem:[%s3 + $0x10] sm:$0xff]
    %v2872 = vld [vmem:[%s3 + $0x18] sm:$0xff]
    %v2873 = vld [vmem:[%s3 + $0x20] sm:$0xff]
    %v2874 = vld [vmem:[%s3 + $0x28] sm:$0xff]
    %v2875 = vld [vmem:[%s3 + $0x30] sm:$0xff]
    %v2876 = vld [vmem:[%s3 + $0x38] sm:$0xff]
    %v2877 = vld [vmem:[%s4] sm:$0x1]
    %v2879 = vlaneseq
    %v2880 = vshrl.u32 %v2879, 7
    %v2881 = vsub.s32 0, %v2880
    %v2882 = vrot.slane %v2877, %v2881
    %vm2884 = vcmask 523264
    %v2886 = vsel %vm2884, %v2868, 0
    %2888 = vmatprep.subr.mxu0 0.0
    %2889 = vmatpush1.msra.mxu0 %v2869
    %2890 = vmatprep.subr.mxu0 0.0
    %2891 = vmatpush1.msra.mxu0 %v2870
    %2892 = vmatprep.subr.mxu0 0.0
    %2893 = vmatpush1.msra.mxu0 %v2871
    %2894 = vmatprep.subr.mxu0 0.0
    %2895 = vmatpush1.msra.mxu0 %v2872
    %2896 = vmatprep.subr.mxu0 0.0
    %2897 = vmatpush1.msra.mxu0 %v2873
    %2898 = vmatprep.subr.mxu0 0.0
    %2899 = vmatpush1.msra.mxu0 %v2874
    %2900 = vmatprep.subr.mxu0 0.0
    %2901 = vmatpush1.msra.mxu0 %v2875
    %2902 = vmatprep.subr.mxu0 0.0
    %2903 = vmatpush1.msra.mxu0 %v2876
    %2904 = vmatprep.subr.mxu0 0.0
    %2905 = vmatpush1.msra.mxu0 0.0
    %2906 = vmatprep.subr.mxu0 0.0
    %2907 = vmatpush1.msra.mxu0 0.0
    %2908 = vmatprep.subr.mxu0 0.0
    %2909 = vmatpush1.msra.mxu0 0.0
    %2910 = vmatprep.subr.mxu0 0.0
    %2911 = vmatpush1.msra.mxu0 0.0
    %2912 = vmatprep.subr.mxu0 0.0
    %2913 = vmatpush1.msra.mxu0 0.0
    %2914 = vmatprep.subr.mxu0 0.0
    %2915 = vmatpush1.msra.mxu0 0.0
    %2916 = vmatprep.subr.mxu0 0.0
    %2917 = vmatpush1.msra.mxu0 0.0
    %2918 = vmatprep.subr.mxu0 0.0
    %2919 = vmatpush1.msra.mxu0 0.0
    %2920 = vmatprep.subr.mxu0 0.0
    %2921 = vmatpush1.msra.mxu0 0.0
    %2922 = vmatprep.subr.mxu0 0.0
    %2923 = vmatpush1.msra.mxu0 0.0
    %2924 = vmatprep.subr.mxu0 0.0
    %2925 = vmatpush1.msra.mxu0 0.0
    %2926 = vmatprep.subr.mxu0 0.0
    %2927 = vmatpush1.msra.mxu0 0.0
    %2928 = vmatprep.subr.mxu0 0.0
    %2929 = vmatpush1.msra.mxu0 0.0
    %2930 = vmatprep.subr.mxu0 0.0
    %2931 = vmatpush1.msra.mxu0 0.0
    %2932 = vmatprep.subr.mxu0 0.0
    %2933 = vmatpush1.msra.mxu0 0.0
    %2934 = vmatprep.subr.mxu0 0.0
    %2935 = vmatpush1.msra.mxu0 0.0
    %2936 = vmatprep.subr.mxu0 0.0
    %2937 = vmatpush1.msra.mxu0 0.0
    %2938 = vmatprep.subr.mxu0 0.0
    %2939 = vmatpush1.msra.mxu0 0.0
    %2940 = vmatprep.subr.mxu0 0.0
    %2941 = vmatpush1.msra.mxu0 0.0
    %2942 = vmatprep.subr.mxu0 0.0
    %2943 = vmatpush1.msra.mxu0 0.0
    %2944 = vmatprep.subr.mxu0 0.0
    %2945 = vmatpush1.msra.mxu0 0.0
    %2946 = vmatprep.subr.mxu0 0.0
    %2947 = vmatpush1.msra.mxu0 0.0
    %2948 = vmatprep.subr.mxu0 0.0
    %2949 = vmatpush1.msra.mxu0 0.0
    %2950 = vmatprep.subr.mxu0 0.0
    %2951 = vmatpush1.msra.mxu0 0.0
    %2952 = vmatprep.mubr.f32.mxu0 0.0
    %2953 = vmatmul.mubr.f32.gmra.mrb[0].mxu0 %v2886
    %v2954 = vpop.f32.mrb[0].mxu0
    %v2955 = vadd.f32 %v2882, %v2954
    %v2956 = vpop.f32.mrb[0].mxu0
    %2957 = vdwg.mxu0
    %vm2958 = vcmp.ge.f32.partialorder %v2955, 0.0
    %v2959 = vmul.f32 %v2955, 0.01
    %v2960 = vsel %vm2958, %v2955, %v2959
    %vm2961 = vcmask 33792
    %v2962 = vsel %vm2961, %v2960, -inf
    %2963 = vmax.xlane.f32.xlu0 %v2962
    %v2964 = vpop.xlane.xlu0 %2963
    %v2965 = vsub.f32 %v2960, %v2964
    %v2966 = vmul.f32 %v2965, 1.442695
    %v2967 = vpow.pop %v2966
    %v2968 = vsel %vm2961, %v2967, 0.0
    %2969 = vadd.xlane.f32.xlu0 %v2968
    %v2970 = vpop.xlane.xlu0 %2969
    %v2971 = vrcp.pop %v2970
    %v2972 = vmul.f32 %v2967, %v2971
    %2973 = vst.msk [vmem:[#allocation2] sm:$0x3] %vm2961, %v2972
    // Predicated region
    $region22: #{cnn3d_forward.3} parent=1 // pred_check
      _
    $region23: #{cnn3d_forward.3} parent=1 // pred_check_branch
      %2975 = sbr.rel (0) target = $region25
    $region24: #{cnn3d_forward.3} parent=1 // pred_region
      %s2977 = ssub.s32 32, 32
      %2978 = vsyncadd [#allocation3], %s2977
      %s2980 = sshll.u32 [#allocation2], 4
      %s2981 = int_to_ptr.vmem [resolvable:$true] %s2980
      %2983 = dma.vmem_to_hbm [thread:$0]  %s2981, 32, %s5, [#allocation3]
    $region25: #{cnn3d_forward.3} parent=1 // pred_fallthru
      _
    // Predicated region
    $region26: #{cnn3d_forward.3} parent=1 // pred_check
      _
    $region27: #{cnn3d_forward.3} parent=1 // pred_check_branch
      %2985 = sbr.rel (0) target = $region29
    $region28: #{cnn3d_forward.3} parent=1 // pred_region
      %2986 = dma.done [#allocation3], 32
    $region29: #{cnn3d_forward.3} parent=1 // pred_fallthru
      _
    %2987 = vsyncpa [#allocation3], 1

</llo_original>
